<compile_context>
chip_gen: v6e
topology: v6e:2x2x1
jax: 0.10.0
libtpu: 0.0.40
codegen_flags: <defaults>
</compile_context>

<pallas_src>
import functools

import jax
import jax.numpy as jnp
from jax.experimental import pallas as pl
from jax.experimental.pallas import tpu as pltpu


_PAD_COLS = 256   # widest conv input (cnn2's Cin); also hosts sp / a for cnn1
_AV_COL = 128     # lane-tile-aligned column base for the action channels in the scratch


# ------------------------------ fused forward kernel ---------------------------------

def _fused_forward_kernel(H, num, cdt,
                          s_ref, a_ref,
                          w1s_ref, w1a_ref, b1_ref,
                          w2_ref, b2_ref,
                          w3_ref, b3_ref,
                          wf1_ref, bf1_ref,
                          wf2_ref, bf2_ref,
                          wf3_ref, bf3_ref,
                          o_ref, pad_ref):
    """One batch element: 3x Conv1d(k=3,pad=1)+ReLU -> fc1/fc2(+ReLU) -> fc3 -> sigmoid."""

    # ---- in-kernel zero padding of the length dimension (no host jnp.pad) ----------
    pad_ref[...] = jnp.zeros_like(pad_ref)
    pad_ref[1:H + 1, 0:num] = s_ref[0]                        # state channels
    pad_ref[1:H + 1, _AV_COL:_AV_COL + num + 1] = a_ref[0]    # action channels

    def conv3tap(col, cin, w_ref):
        # (H+2, cin) padded strip -> three shifted (H, cin) @ (cin, cout) MXU matmuls.
        x = pad_ref[:, col:col + cin].astype(cdt)
        return (jnp.dot(x[0:H], w_ref[0], preferred_element_type=jnp.float32)
                + jnp.dot(x[1:H + 1], w_ref[1], preferred_element_type=jnp.float32)
                + jnp.dot(x[2:H + 2], w_ref[2], preferred_element_type=jnp.float32))

    # cnn1: torch's cat([sp, a], dim=2) is folded into the split weights.
    h1 = jnp.maximum(conv3tap(0, num, w1s_ref)
                     + conv3tap(_AV_COL, num + 1, w1a_ref)
                     + b1_ref[...], 0.0)                                  # (H, 256) f32
    # cnn2
    pad_ref[1:H + 1, :] = h1
    h2 = jnp.maximum(conv3tap(0, 256, w2_ref) + b2_ref[...], 0.0)         # (H, 128)
    # cnn3
    pad_ref[1:H + 1, 0:128] = h2
    h3 = jnp.maximum(conv3tap(0, 128, w3_ref) + b3_ref[...], 0.0)         # (H, 128)

    # fc1 over torch's channel-major flatten: fc1 weight was repacked to (H, 128, 1024),
    # so the channels-last conv output is consumed position-by-position (no transpose).
    acc = bf1_ref[...]                                                    # (1, 1024) f32
    for l in range(H):
        acc = acc + jnp.dot(h3[l:l + 1, :].astype(cdt), wf1_ref[l],
                            preferred_element_type=jnp.float32)
    e1 = jnp.maximum(acc, 0.0)                      # dropout is eval-mode identity

    e2 = jnp.maximum(jnp.dot(e1.astype(cdt), wf2_ref[...],
                             preferred_element_type=jnp.float32) + bf2_ref[...], 0.0)
    logits = jnp.dot(e2.astype(cdt), wf3_ref[...],
                     preferred_element_type=jnp.float32) + bf3_ref[...]
    o_ref[0] = jax.nn.sigmoid(logits).astype(o_ref.dtype)


def supervised_model_cnn_forward(params, s, a, horizon, num):
    """s: (B, horizon*num), a: (B, horizon*(num+1)) -> (B, num**2)."""
    assert num + 1 <= _AV_COL, "action channels must fit in the scratch column budget"
    B = s.shape[0]
    outsize = params["b_f3"].shape[-1]
    cdt = params["w_f1"].dtype

    s3 = s.reshape(B, horizon, num)        # free row-major reshapes (no data movement)
    a3 = a.reshape(B, horizon, num + 1)

    weights = (params["w_c1s"], params["w_c1a"], params["b_c1"],
               params["w_c2"], params["b_c2"],
               params["w_c3"], params["b_c3"],
               params["w_f1"], params["b_f1"],
               params["w_f2"], params["b_f2"],
               params["w_f3"], params["b_f3"])

    def whole(arr):                        # whole-array block, same block every grid step
        zeros = (0,) * arr.ndim
        return pl.BlockSpec(arr.shape, lambda b: zeros)

    out = pl.pallas_call(
        functools.partial(_fused_forward_kernel, horizon, num, cdt),
        out_shape=jax.ShapeDtypeStruct((B, 1, outsize), jnp.float32),
        grid=(B,),
        in_specs=[pl.BlockSpec((1, horizon, num), lambda b: (b, 0, 0)),
                  pl.BlockSpec((1, horizon, num + 1), lambda b: (b, 0, 0))]
                 + [whole(w) for w in weights],
        out_specs=pl.BlockSpec((1, 1, outsize), lambda b: (b, 0, 0)),
        scratch_shapes=[pltpu.VMEM((horizon + 2, _PAD_COLS), jnp.float32)],
        compiler_params=pltpu.CompilerParams(
            dimension_semantics=("parallel",),
            vmem_limit_bytes=32 * 1024 * 1024,   # headroom incl. v5e's 16 MiB default
        ),
    )(s3, a3, *weights)
    return out.reshape(B, outsize)


# ----------------------------- params: init / repack ---------------------------------

def init_torch_params(key, horizon, num):
    """PyTorch-convention shapes (Conv1d weight (Cout,Cin,K); Linear weight (Dout,Din))."""
    cin = 2 * num + 1
    outsize = num ** 2                     # ms=False
    ks = jax.random.split(key, 12)
    sc = 0.05
    n = lambda k, shape: jax.random.normal(k, shape, dtype=jnp.float32) * sc
    return {
        "cnn1.weight": n(ks[0], (256, cin, 3)),          "cnn1.bias": n(ks[1], (256,)),
        "cnn2.weight": n(ks[2], (128, 256, 3)),          "cnn2.bias": n(ks[3], (128,)),
        "cnn3.weight": n(ks[4], (128, 128, 3)),          "cnn3.bias": n(ks[5], (128,)),
        "fc1.weight":  n(ks[6], (1024, horizon * 128)),  "fc1.bias":  n(ks[7], (1024,)),
        "fc2.weight":  n(ks[8], (512, 1024)),            "fc2.bias":  n(ks[9], (512,)),
        "fc3.weight":  n(ks[10], (outsize, 512)),        "fc3.bias":  n(ks[11], (outsize,)),
    }


def pack_params(tp, horizon, num, weight_dtype=jnp.bfloat16):
    """One-time repack of PyTorch-layout weights into the kernel layout."""
    w1 = jnp.transpose(tp["cnn1.weight"], (2, 1, 0))     # (3, 2*num+1, 256): tap,Cin,Cout
    w2 = jnp.transpose(tp["cnn2.weight"], (2, 1, 0))     # (3, 256, 128)
    w3 = jnp.transpose(tp["cnn3.weight"], (2, 1, 0))     # (3, 128, 128)
    # fc1 consumes torch's flatten of (B, 128, H): flat[k] = c[k // H, k % H].
    # Repack to (H, 128, 1024) so the kernel contracts position-by-position on the
    # channels-last conv output (replaces the transpose+reshape glue).
    wf1 = jnp.transpose(tp["fc1.weight"].T.reshape(128, horizon, -1), (1, 0, 2))
    cast = lambda w: w.astype(weight_dtype)
    return {
        "w_c1s": cast(w1[:, :num, :]), "w_c1a": cast(w1[:, num:, :]),
        "b_c1": tp["cnn1.bias"].reshape(1, -1),
        "w_c2": cast(w2), "b_c2": tp["cnn2.bias"].reshape(1, -1),
        "w_c3": cast(w3), "b_c3": tp["cnn3.bias"].reshape(1, -1),
        "w_f1": cast(wf1), "b_f1": tp["fc1.bias"].reshape(1, -1),
        "w_f2": cast(tp["fc2.weight"].T), "b_f2": tp["fc2.bias"].reshape(1, -1),
        "w_f3": cast(tp["fc3.weight"].T), "b_f3": tp["fc3.bias"].reshape(1, -1),
    }


# ------------------------ pure-JAX f32 reference (PyTorch math) -----------------------

def reference_forward(tp, s, a, horizon, num):
    B = s.shape[0]
    sp = s.reshape(B, horizon, num)
    av = a.reshape(B, horizon, num + 1)
    e = jnp.concatenate([sp, av], axis=2)                # (B, H, 2*num+1)

    def conv1d_relu(x, w, b):                            # w: (Cout, Cin, 3) torch layout
        xp = jnp.pad(x, ((0, 0), (1, 1), (0, 0)))
        y = sum(jnp.einsum("blc,oc->blo", xp[:, k:k + horizon, :], w[:, :, k])
                for k in range(3)) + b
        return jnp.maximum(y, 0.0)

    c1 = conv1d_relu(e, tp["cnn1.weight"], tp["cnn1.bias"])
    c2 = conv1d_relu(c1, tp["cnn2.weight"], tp["cnn2.bias"])
    c3 = conv1d_relu(c2, tp["cnn3.weight"], tp["cnn3.bias"])

    flat = jnp.transpose(c3, (0, 2, 1)).reshape(B, horizon * 128)   # torch c.view order
    e1 = jnp.maximum(flat @ tp["fc1.weight"].T + tp["fc1.bias"], 0.0)
    e2 = jnp.maximum(e1 @ tp["fc2.weight"].T + tp["fc2.bias"], 0.0)
    return jax.nn.sigmoid(e2 @ tp["fc3.weight"].T + tp["fc3.bias"])


# --------------------------------------- main -----------------------------------------

if __name__ == "__main__":
    horizon, num, B = 8, 5, 2

    key = jax.random.PRNGKey(0)
    k_params, k_s, k_a = jax.random.split(key, 3)
    torch_params = init_torch_params(k_params, horizon, num)
    params = pack_params(torch_params, horizon, num, weight_dtype=jnp.bfloat16)

    s = jax.random.normal(k_s, (B, horizon * num), dtype=jnp.float32)        # (2, 40)
    a = jax.random.normal(k_a, (B, horizon * (num + 1)), dtype=jnp.float32)  # (2, 48)

    fwd = jax.jit(lambda p, s_, a_: supervised_model_cnn_forward(p, s_, a_, horizon, num))
    rec = jax.block_until_ready(fwd(params, s, a))

    assert rec.shape == (B, num ** 2), rec.shape
    assert bool(jnp.all(jnp.isfinite(rec))) and bool(jnp.all((rec >= 0) & (rec <= 1)))

    ref = reference_forward(torch_params, s, a, horizon, num)   # f32 PyTorch-math replica
    max_err = float(jnp.max(jnp.abs(rec - ref)))
    assert max_err < 2e-2, f"mismatch vs f32 reference: {max_err}"
    print("KERNEL_OK")
</pallas_src>

<mosaic_0001>
module attributes {stable_mosaic.version = 11 : i64} {
  func.func @_fused_forward_kernel(%arg0: i32, %arg1: memref<1x8x5xf32, #tpu.memory_space<vmem>>, %arg2: memref<1x8x6xf32, #tpu.memory_space<vmem>>, %arg3: memref<3x5x256xbf16, #tpu.memory_space<vmem>>, %arg4: memref<3x6x256xbf16, #tpu.memory_space<vmem>>, %arg5: memref<1x256xf32, #tpu.memory_space<vmem>>, %arg6: memref<3x256x128xbf16, #tpu.memory_space<vmem>>, %arg7: memref<1x128xf32, #tpu.memory_space<vmem>>, %arg8: memref<3x128x128xbf16, #tpu.memory_space<vmem>>, %arg9: memref<1x128xf32, #tpu.memory_space<vmem>>, %arg10: memref<8x128x1024xbf16, #tpu.memory_space<vmem>>, %arg11: memref<1x1024xf32, #tpu.memory_space<vmem>>, %arg12: memref<1024x512xbf16, #tpu.memory_space<vmem>>, %arg13: memref<1x512xf32, #tpu.memory_space<vmem>>, %arg14: memref<512x25xbf16, #tpu.memory_space<vmem>>, %arg15: memref<1x25xf32, #tpu.memory_space<vmem>>, %arg16: memref<1x1x25xf32, #tpu.memory_space<vmem>>, %arg17: memref<10x256xf32, #tpu.memory_space<vmem>>) attributes {dimension_semantics = [#tpu.dimension_semantics<parallel>], iteration_bounds = array<i64: 2>, scalar_prefetch = 0 : i64, scratch_operands = 1 : i64, tpu.core_type = #tpu.core_type<tc>, window_params = [{transform_indices = @transform_0, window_bounds = array<i64: 1, 8, 5>}, {transform_indices = @transform_1, window_bounds = array<i64: 1, 8, 6>}, {pipeline_mode = #tpu.pipeline_mode<synchronous>, transform_indices = @transform_2, window_bounds = array<i64: 3, 5, 256>}, {pipeline_mode = #tpu.pipeline_mode<synchronous>, transform_indices = @transform_3, window_bounds = array<i64: 3, 6, 256>}, {pipeline_mode = #tpu.pipeline_mode<synchronous>, transform_indices = @transform_4, window_bounds = array<i64: 1, 256>}, {pipeline_mode = #tpu.pipeline_mode<synchronous>, transform_indices = @transform_5, window_bounds = array<i64: 3, 256, 128>}, {pipeline_mode = #tpu.pipeline_mode<synchronous>, transform_indices = @transform_6, window_bounds = array<i64: 1, 128>}, {pipeline_mode = #tpu.pipeline_mode<synchronous>, transform_indices = @transform_7, window_bounds = array<i64: 3, 128, 128>}, {pipeline_mode = #tpu.pipeline_mode<synchronous>, transform_indices = @transform_8, window_bounds = array<i64: 1, 128>}, {pipeline_mode = #tpu.pipeline_mode<synchronous>, transform_indices = @transform_9, window_bounds = array<i64: 8, 128, 1024>}, {pipeline_mode = #tpu.pipeline_mode<synchronous>, transform_indices = @transform_10, window_bounds = array<i64: 1, 1024>}, {pipeline_mode = #tpu.pipeline_mode<synchronous>, transform_indices = @transform_11, window_bounds = array<i64: 1024, 512>}, {pipeline_mode = #tpu.pipeline_mode<synchronous>, transform_indices = @transform_12, window_bounds = array<i64: 1, 512>}, {pipeline_mode = #tpu.pipeline_mode<synchronous>, transform_indices = @transform_13, window_bounds = array<i64: 512, 25>}, {pipeline_mode = #tpu.pipeline_mode<synchronous>, transform_indices = @transform_14, window_bounds = array<i64: 1, 25>}, {transform_indices = @transform_15, window_bounds = array<i64: 1, 1, 25>}]} {
    %cst = arith.constant 0.000000e+00 : f32
    %0 = vector.broadcast %cst : f32 to vector<10x256xf32>
    %c0 = arith.constant 0 : index
    %c0_0 = arith.constant 0 : index
    %1 = vector.load %arg17[%c0, %c0_0] : memref<10x256xf32, #tpu.memory_space<vmem>>, vector<10x256xf32>
    tpu.vector_store %arg17[%c0, %c0_0], %0 {strides = array<i32>} : memref<10x256xf32, #tpu.memory_space<vmem>>, vector<10x256xf32>,
    %c0_1 = arith.constant 0 : index
    %c0_2 = arith.constant 0 : index
    %c0_3 = arith.constant 0 : index
    %2 = vector.load %arg1[%c0_1, %c0_2, %c0_3] : memref<1x8x5xf32, #tpu.memory_space<vmem>>, vector<1x8x5xf32>
    %3 = vector.shape_cast %2 : vector<1x8x5xf32> to vector<8x5xf32>
    %c1 = arith.constant 1 : index
    %c0_4 = arith.constant 0 : index
    %4 = vector.load %arg17[%c1, %c0_4] : memref<10x256xf32, #tpu.memory_space<vmem>>, vector<8x5xf32>
    tpu.vector_store %arg17[%c1, %c0_4], %3 {strides = array<i32>} : memref<10x256xf32, #tpu.memory_space<vmem>>, vector<8x5xf32>,
    %c0_5 = arith.constant 0 : index
    %c0_6 = arith.constant 0 : index
    %c0_7 = arith.constant 0 : index
    %5 = vector.load %arg2[%c0_5, %c0_6, %c0_7] : memref<1x8x6xf32, #tpu.memory_space<vmem>>, vector<1x8x6xf32>
    %6 = vector.shape_cast %5 : vector<1x8x6xf32> to vector<8x6xf32>
    %c1_8 = arith.constant 1 : index
    %c128 = arith.constant 128 : index
    %7 = vector.load %arg17[%c1_8, %c128] : memref<10x256xf32, #tpu.memory_space<vmem>>, vector<8x6xf32>
    tpu.vector_store %arg17[%c1_8, %c128], %6 {strides = array<i32>} : memref<10x256xf32, #tpu.memory_space<vmem>>, vector<8x6xf32>,
    %c0_9 = arith.constant 0 : index
    %c0_10 = arith.constant 0 : index
    %8 = vector.load %arg17[%c0_9, %c0_10] : memref<10x256xf32, #tpu.memory_space<vmem>>, vector<10x5xf32>
    %9 = arith.truncf %8 : vector<10x5xf32> to vector<10x5xbf16>
    %10 = vector.extract_strided_slice %9 {offsets = [0, 0], sizes = [8, 5], strides = [1, 1]} : vector<10x5xbf16> to vector<8x5xbf16>
    %c0_11 = arith.constant 0 : index
    %c0_12 = arith.constant 0 : index
    %c0_13 = arith.constant 0 : index
    %11 = vector.load %arg3[%c0_11, %c0_12, %c0_13] : memref<3x5x256xbf16, #tpu.memory_space<vmem>>, vector<1x5x256xbf16>
    %12 = vector.shape_cast %11 : vector<1x5x256xbf16> to vector<5x256xbf16>
    %cst_14 = arith.constant dense<0.000000e+00> : vector<8x256xf32>
    %13 = tpu.matmul %10, %12, %cst_14 {dimension_numbers = #tpu.dot_dimension_numbers<[1], [0], [0], [1], [0, 0, 1, 1], [], []>} : vector<8x5xbf16>, vector<5x256xbf16>, vector<8x256xf32> -> vector<8x256xf32>
    %14 = vector.extract_strided_slice %9 {offsets = [1, 0], sizes = [8, 5], strides = [1, 1]} : vector<10x5xbf16> to vector<8x5xbf16>
    %c1_15 = arith.constant 1 : index
    %c0_16 = arith.constant 0 : index
    %c0_17 = arith.constant 0 : index
    %15 = vector.load %arg3[%c1_15, %c0_16, %c0_17] : memref<3x5x256xbf16, #tpu.memory_space<vmem>>, vector<1x5x256xbf16>
    %16 = vector.shape_cast %15 : vector<1x5x256xbf16> to vector<5x256xbf16>
    %cst_18 = arith.constant dense<0.000000e+00> : vector<8x256xf32>
    %17 = tpu.matmul %14, %16, %cst_18 {dimension_numbers = #tpu.dot_dimension_numbers<[1], [0], [0], [1], [0, 0, 1, 1], [], []>} : vector<8x5xbf16>, vector<5x256xbf16>, vector<8x256xf32> -> vector<8x256xf32>
    %18 = arith.addf %13, %17 : vector<8x256xf32>
    %19 = vector.extract_strided_slice %9 {offsets = [2, 0], sizes = [8, 5], strides = [1, 1]} : vector<10x5xbf16> to vector<8x5xbf16>
    %c2 = arith.constant 2 : index
    %c0_19 = arith.constant 0 : index
    %c0_20 = arith.constant 0 : index
    %20 = vector.load %arg3[%c2, %c0_19, %c0_20] : memref<3x5x256xbf16, #tpu.memory_space<vmem>>, vector<1x5x256xbf16>
    %21 = vector.shape_cast %20 : vector<1x5x256xbf16> to vector<5x256xbf16>
    %cst_21 = arith.constant dense<0.000000e+00> : vector<8x256xf32>
    %22 = tpu.matmul %19, %21, %cst_21 {dimension_numbers = #tpu.dot_dimension_numbers<[1], [0], [0], [1], [0, 0, 1, 1], [], []>} : vector<8x5xbf16>, vector<5x256xbf16>, vector<8x256xf32> -> vector<8x256xf32>
    %23 = arith.addf %18, %22 : vector<8x256xf32>
    %c0_22 = arith.constant 0 : index
    %c128_23 = arith.constant 128 : index
    %24 = vector.load %arg17[%c0_22, %c128_23] : memref<10x256xf32, #tpu.memory_space<vmem>>, vector<10x6xf32>
    %25 = arith.truncf %24 : vector<10x6xf32> to vector<10x6xbf16>
    %26 = vector.extract_strided_slice %25 {offsets = [0, 0], sizes = [8, 6], strides = [1, 1]} : vector<10x6xbf16> to vector<8x6xbf16>
    %c0_24 = arith.constant 0 : index
    %c0_25 = arith.constant 0 : index
    %c0_26 = arith.constant 0 : index
    %27 = vector.load %arg4[%c0_24, %c0_25, %c0_26] : memref<3x6x256xbf16, #tpu.memory_space<vmem>>, vector<1x6x256xbf16>
    %28 = vector.shape_cast %27 : vector<1x6x256xbf16> to vector<6x256xbf16>
    %cst_27 = arith.constant dense<0.000000e+00> : vector<8x256xf32>
    %29 = tpu.matmul %26, %28, %cst_27 {dimension_numbers = #tpu.dot_dimension_numbers<[1], [0], [0], [1], [0, 0, 1, 1], [], []>} : vector<8x6xbf16>, vector<6x256xbf16>, vector<8x256xf32> -> vector<8x256xf32>
    %30 = vector.extract_strided_slice %25 {offsets = [1, 0], sizes = [8, 6], strides = [1, 1]} : vector<10x6xbf16> to vector<8x6xbf16>
    %c1_28 = arith.constant 1 : index
    %c0_29 = arith.constant 0 : index
    %c0_30 = arith.constant 0 : index
    %31 = vector.load %arg4[%c1_28, %c0_29, %c0_30] : memref<3x6x256xbf16, #tpu.memory_space<vmem>>, vector<1x6x256xbf16>
    %32 = vector.shape_cast %31 : vector<1x6x256xbf16> to vector<6x256xbf16>
    %cst_31 = arith.constant dense<0.000000e+00> : vector<8x256xf32>
    %33 = tpu.matmul %30, %32, %cst_31 {dimension_numbers = #tpu.dot_dimension_numbers<[1], [0], [0], [1], [0, 0, 1, 1], [], []>} : vector<8x6xbf16>, vector<6x256xbf16>, vector<8x256xf32> -> vector<8x256xf32>
    %34 = arith.addf %29, %33 : vector<8x256xf32>
    %35 = vector.extract_strided_slice %25 {offsets = [2, 0], sizes = [8, 6], strides = [1, 1]} : vector<10x6xbf16> to vector<8x6xbf16>
    %c2_32 = arith.constant 2 : index
    %c0_33 = arith.constant 0 : index
    %c0_34 = arith.constant 0 : index
    %36 = vector.load %arg4[%c2_32, %c0_33, %c0_34] : memref<3x6x256xbf16, #tpu.memory_space<vmem>>, vector<1x6x256xbf16>
    %37 = vector.shape_cast %36 : vector<1x6x256xbf16> to vector<6x256xbf16>
    %cst_35 = arith.constant dense<0.000000e+00> : vector<8x256xf32>
    %38 = tpu.matmul %35, %37, %cst_35 {dimension_numbers = #tpu.dot_dimension_numbers<[1], [0], [0], [1], [0, 0, 1, 1], [], []>} : vector<8x6xbf16>, vector<6x256xbf16>, vector<8x256xf32> -> vector<8x256xf32>
    %39 = arith.addf %34, %38 : vector<8x256xf32>
    %40 = arith.addf %23, %39 : vector<8x256xf32>
    %c0_36 = arith.constant 0 : index
    %c0_37 = arith.constant 0 : index
    %41 = vector.load %arg5[%c0_36, %c0_37] : memref<1x256xf32, #tpu.memory_space<vmem>>, vector<1x256xf32>
    %42 = vector.broadcast %41 : vector<1x256xf32> to vector<8x256xf32>
    %43 = arith.addf %40, %42 : vector<8x256xf32>
    %cst_38 = arith.constant 0.000000e+00 : f32
    %44 = vector.broadcast %cst_38 : f32 to vector<8x256xf32>
    %45 = arith.maximumf %43, %44 : vector<8x256xf32>
    %c1_39 = arith.constant 1 : index
    %c0_40 = arith.constant 0 : index
    %46 = vector.load %arg17[%c1_39, %c0_40] : memref<10x256xf32, #tpu.memory_space<vmem>>, vector<8x256xf32>
    tpu.vector_store %arg17[%c1_39, %c0_40], %45 {strides = array<i32>} : memref<10x256xf32, #tpu.memory_space<vmem>>, vector<8x256xf32>,
    %c0_41 = arith.constant 0 : index
    %c0_42 = arith.constant 0 : index
    %47 = vector.load %arg17[%c0_41, %c0_42] : memref<10x256xf32, #tpu.memory_space<vmem>>, vector<10x256xf32>
    %48 = arith.truncf %47 : vector<10x256xf32> to vector<10x256xbf16>
    %49 = vector.extract_strided_slice %48 {offsets = [0, 0], sizes = [8, 256], strides = [1, 1]} : vector<10x256xbf16> to vector<8x256xbf16>
    %c0_43 = arith.constant 0 : index
    %c0_44 = arith.constant 0 : index
    %c0_45 = arith.constant 0 : index
    %50 = vector.load %arg6[%c0_43, %c0_44, %c0_45] : memref<3x256x128xbf16, #tpu.memory_space<vmem>>, vector<1x256x128xbf16>
    %51 = vector.shape_cast %50 : vector<1x256x128xbf16> to vector<256x128xbf16>
    %cst_46 = arith.constant dense<0.000000e+00> : vector<8x128xf32>
    %52 = tpu.matmul %49, %51, %cst_46 {dimension_numbers = #tpu.dot_dimension_numbers<[1], [0], [0], [1], [0, 0, 1, 1], [], []>} : vector<8x256xbf16>, vector<256x128xbf16>, vector<8x128xf32> -> vector<8x128xf32>
    %53 = vector.extract_strided_slice %48 {offsets = [1, 0], sizes = [8, 256], strides = [1, 1]} : vector<10x256xbf16> to vector<8x256xbf16>
    %c1_47 = arith.constant 1 : index
    %c0_48 = arith.constant 0 : index
    %c0_49 = arith.constant 0 : index
    %54 = vector.load %arg6[%c1_47, %c0_48, %c0_49] : memref<3x256x128xbf16, #tpu.memory_space<vmem>>, vector<1x256x128xbf16>
    %55 = vector.shape_cast %54 : vector<1x256x128xbf16> to vector<256x128xbf16>
    %cst_50 = arith.constant dense<0.000000e+00> : vector<8x128xf32>
    %56 = tpu.matmul %53, %55, %cst_50 {dimension_numbers = #tpu.dot_dimension_numbers<[1], [0], [0], [1], [0, 0, 1, 1], [], []>} : vector<8x256xbf16>, vector<256x128xbf16>, vector<8x128xf32> -> vector<8x128xf32>
    %57 = arith.addf %52, %56 : vector<8x128xf32>
    %58 = vector.extract_strided_slice %48 {offsets = [2, 0], sizes = [8, 256], strides = [1, 1]} : vector<10x256xbf16> to vector<8x256xbf16>
    %c2_51 = arith.constant 2 : index
    %c0_52 = arith.constant 0 : index
    %c0_53 = arith.constant 0 : index
    %59 = vector.load %arg6[%c2_51, %c0_52, %c0_53] : memref<3x256x128xbf16, #tpu.memory_space<vmem>>, vector<1x256x128xbf16>
    %60 = vector.shape_cast %59 : vector<1x256x128xbf16> to vector<256x128xbf16>
    %cst_54 = arith.constant dense<0.000000e+00> : vector<8x128xf32>
    %61 = tpu.matmul %58, %60, %cst_54 {dimension_numbers = #tpu.dot_dimension_numbers<[1], [0], [0], [1], [0, 0, 1, 1], [], []>} : vector<8x256xbf16>, vector<256x128xbf16>, vector<8x128xf32> -> vector<8x128xf32>
    %62 = arith.addf %57, %61 : vector<8x128xf32>
    %c0_55 = arith.constant 0 : index
    %c0_56 = arith.constant 0 : index
    %63 = vector.load %arg7[%c0_55, %c0_56] : memref<1x128xf32, #tpu.memory_space<vmem>>, vector<1x128xf32>
    %64 = vector.broadcast %63 : vector<1x128xf32> to vector<8x128xf32>
    %65 = arith.addf %62, %64 : vector<8x128xf32>
    %cst_57 = arith.constant 0.000000e+00 : f32
    %66 = vector.broadcast %cst_57 : f32 to vector<8x128xf32>
    %67 = arith.maximumf %65, %66 : vector<8x128xf32>
    %c1_58 = arith.constant 1 : index
    %c0_59 = arith.constant 0 : index
    %68 = vector.load %arg17[%c1_58, %c0_59] : memref<10x256xf32, #tpu.memory_space<vmem>>, vector<8x128xf32>
    tpu.vector_store %arg17[%c1_58, %c0_59], %67 {strides = array<i32>} : memref<10x256xf32, #tpu.memory_space<vmem>>, vector<8x128xf32>,
    %c0_60 = arith.constant 0 : index
    %c0_61 = arith.constant 0 : index
    %69 = vector.load %arg17[%c0_60, %c0_61] : memref<10x256xf32, #tpu.memory_space<vmem>>, vector<10x128xf32>
    %70 = arith.truncf %69 : vector<10x128xf32> to vector<10x128xbf16>
    %71 = vector.extract_strided_slice %70 {offsets = [0, 0], sizes = [8, 128], strides = [1, 1]} : vector<10x128xbf16> to vector<8x128xbf16>
    %c0_62 = arith.constant 0 : index
    %c0_63 = arith.constant 0 : index
    %c0_64 = arith.constant 0 : index
    %72 = vector.load %arg8[%c0_62, %c0_63, %c0_64] : memref<3x128x128xbf16, #tpu.memory_space<vmem>>, vector<1x128x128xbf16>
    %73 = vector.shape_cast %72 : vector<1x128x128xbf16> to vector<128x128xbf16>
    %cst_65 = arith.constant dense<0.000000e+00> : vector<8x128xf32>
    %74 = tpu.matmul %71, %73, %cst_65 {dimension_numbers = #tpu.dot_dimension_numbers<[1], [0], [0], [1], [0, 0, 1, 1], [], []>} : vector<8x128xbf16>, vector<128x128xbf16>, vector<8x128xf32> -> vector<8x128xf32>
    %75 = vector.extract_strided_slice %70 {offsets = [1, 0], sizes = [8, 128], strides = [1, 1]} : vector<10x128xbf16> to vector<8x128xbf16>
    %c1_66 = arith.constant 1 : index
    %c0_67 = arith.constant 0 : index
    %c0_68 = arith.constant 0 : index
    %76 = vector.load %arg8[%c1_66, %c0_67, %c0_68] : memref<3x128x128xbf16, #tpu.memory_space<vmem>>, vector<1x128x128xbf16>
    %77 = vector.shape_cast %76 : vector<1x128x128xbf16> to vector<128x128xbf16>
    %cst_69 = arith.constant dense<0.000000e+00> : vector<8x128xf32>
    %78 = tpu.matmul %75, %77, %cst_69 {dimension_numbers = #tpu.dot_dimension_numbers<[1], [0], [0], [1], [0, 0, 1, 1], [], []>} : vector<8x128xbf16>, vector<128x128xbf16>, vector<8x128xf32> -> vector<8x128xf32>
    %79 = arith.addf %74, %78 : vector<8x128xf32>
    %80 = vector.extract_strided_slice %70 {offsets = [2, 0], sizes = [8, 128], strides = [1, 1]} : vector<10x128xbf16> to vector<8x128xbf16>
    %c2_70 = arith.constant 2 : index
    %c0_71 = arith.constant 0 : index
    %c0_72 = arith.constant 0 : index
    %81 = vector.load %arg8[%c2_70, %c0_71, %c0_72] : memref<3x128x128xbf16, #tpu.memory_space<vmem>>, vector<1x128x128xbf16>
    %82 = vector.shape_cast %81 : vector<1x128x128xbf16> to vector<128x128xbf16>
    %cst_73 = arith.constant dense<0.000000e+00> : vector<8x128xf32>
    %83 = tpu.matmul %80, %82, %cst_73 {dimension_numbers = #tpu.dot_dimension_numbers<[1], [0], [0], [1], [0, 0, 1, 1], [], []>} : vector<8x128xbf16>, vector<128x128xbf16>, vector<8x128xf32> -> vector<8x128xf32>
    %84 = arith.addf %79, %83 : vector<8x128xf32>
    %c0_74 = arith.constant 0 : index
    %c0_75 = arith.constant 0 : index
    %85 = vector.load %arg9[%c0_74, %c0_75] : memref<1x128xf32, #tpu.memory_space<vmem>>, vector<1x128xf32>
    %86 = vector.broadcast %85 : vector<1x128xf32> to vector<8x128xf32>
    %87 = arith.addf %84, %86 : vector<8x128xf32>
    %cst_76 = arith.constant 0.000000e+00 : f32
    %88 = vector.broadcast %cst_76 : f32 to vector<8x128xf32>
    %89 = arith.maximumf %87, %88 : vector<8x128xf32>
    %c0_77 = arith.constant 0 : index
    %c0_78 = arith.constant 0 : index
    %90 = vector.load %arg11[%c0_77, %c0_78] : memref<1x1024xf32, #tpu.memory_space<vmem>>, vector<1x1024xf32>
    %91 = vector.extract_strided_slice %89 {offsets = [0, 0], sizes = [1, 128], strides = [1, 1]} : vector<8x128xf32> to vector<1x128xf32>
    %92 = arith.truncf %91 : vector<1x128xf32> to vector<1x128xbf16>
    %c0_79 = arith.constant 0 : index
    %c0_80 = arith.constant 0 : index
    %c0_81 = arith.constant 0 : index
    %93 = vector.load %arg10[%c0_79, %c0_80, %c0_81] : memref<8x128x1024xbf16, #tpu.memory_space<vmem>>, vector<1x128x1024xbf16>
    %94 = vector.shape_cast %93 : vector<1x128x1024xbf16> to vector<128x1024xbf16>
    %cst_82 = arith.constant dense<0.000000e+00> : vector<1x1024xf32>
    %95 = tpu.matmul %92, %94, %cst_82 {dimension_numbers = #tpu.dot_dimension_numbers<[1], [0], [0], [1], [0, 0, 1, 1], [], []>} : vector<1x128xbf16>, vector<128x1024xbf16>, vector<1x1024xf32> -> vector<1x1024xf32>
    %96 = arith.addf %90, %95 : vector<1x1024xf32>
    %97 = vector.extract_strided_slice %89 {offsets = [1, 0], sizes = [1, 128], strides = [1, 1]} : vector<8x128xf32> to vector<1x128xf32>
    %98 = arith.truncf %97 : vector<1x128xf32> to vector<1x128xbf16>
    %c1_83 = arith.constant 1 : index
    %c0_84 = arith.constant 0 : index
    %c0_85 = arith.constant 0 : index
    %99 = vector.load %arg10[%c1_83, %c0_84, %c0_85] : memref<8x128x1024xbf16, #tpu.memory_space<vmem>>, vector<1x128x1024xbf16>
    %100 = vector.shape_cast %99 : vector<1x128x1024xbf16> to vector<128x1024xbf16>
    %cst_86 = arith.constant dense<0.000000e+00> : vector<1x1024xf32>
    %101 = tpu.matmul %98, %100, %cst_86 {dimension_numbers = #tpu.dot_dimension_numbers<[1], [0], [0], [1], [0, 0, 1, 1], [], []>} : vector<1x128xbf16>, vector<128x1024xbf16>, vector<1x1024xf32> -> vector<1x1024xf32>
    %102 = arith.addf %96, %101 : vector<1x1024xf32>
    %103 = vector.extract_strided_slice %89 {offsets = [2, 0], sizes = [1, 128], strides = [1, 1]} : vector<8x128xf32> to vector<1x128xf32>
    %104 = arith.truncf %103 : vector<1x128xf32> to vector<1x128xbf16>
    %c2_87 = arith.constant 2 : index
    %c0_88 = arith.constant 0 : index
    %c0_89 = arith.constant 0 : index
    %105 = vector.load %arg10[%c2_87, %c0_88, %c0_89] : memref<8x128x1024xbf16, #tpu.memory_space<vmem>>, vector<1x128x1024xbf16>
    %106 = vector.shape_cast %105 : vector<1x128x1024xbf16> to vector<128x1024xbf16>
    %cst_90 = arith.constant dense<0.000000e+00> : vector<1x1024xf32>
    %107 = tpu.matmul %104, %106, %cst_90 {dimension_numbers = #tpu.dot_dimension_numbers<[1], [0], [0], [1], [0, 0, 1, 1], [], []>} : vector<1x128xbf16>, vector<128x1024xbf16>, vector<1x1024xf32> -> vector<1x1024xf32>
    %108 = arith.addf %102, %107 : vector<1x1024xf32>
    %109 = vector.extract_strided_slice %89 {offsets = [3, 0], sizes = [1, 128], strides = [1, 1]} : vector<8x128xf32> to vector<1x128xf32>
    %110 = arith.truncf %109 : vector<1x128xf32> to vector<1x128xbf16>
    %c3 = arith.constant 3 : index
    %c0_91 = arith.constant 0 : index
    %c0_92 = arith.constant 0 : index
    %111 = vector.load %arg10[%c3, %c0_91, %c0_92] : memref<8x128x1024xbf16, #tpu.memory_space<vmem>>, vector<1x128x1024xbf16>
    %112 = vector.shape_cast %111 : vector<1x128x1024xbf16> to vector<128x1024xbf16>
    %cst_93 = arith.constant dense<0.000000e+00> : vector<1x1024xf32>
    %113 = tpu.matmul %110, %112, %cst_93 {dimension_numbers = #tpu.dot_dimension_numbers<[1], [0], [0], [1], [0, 0, 1, 1], [], []>} : vector<1x128xbf16>, vector<128x1024xbf16>, vector<1x1024xf32> -> vector<1x1024xf32>
    %114 = arith.addf %108, %113 : vector<1x1024xf32>
    %115 = vector.extract_strided_slice %89 {offsets = [4, 0], sizes = [1, 128], strides = [1, 1]} : vector<8x128xf32> to vector<1x128xf32>
    %116 = arith.truncf %115 : vector<1x128xf32> to vector<1x128xbf16>
    %c4 = arith.constant 4 : index
    %c0_94 = arith.constant 0 : index
    %c0_95 = arith.constant 0 : index
    %117 = vector.load %arg10[%c4, %c0_94, %c0_95] : memref<8x128x1024xbf16, #tpu.memory_space<vmem>>, vector<1x128x1024xbf16>
    %118 = vector.shape_cast %117 : vector<1x128x1024xbf16> to vector<128x1024xbf16>
    %cst_96 = arith.constant dense<0.000000e+00> : vector<1x1024xf32>
    %119 = tpu.matmul %116, %118, %cst_96 {dimension_numbers = #tpu.dot_dimension_numbers<[1], [0], [0], [1], [0, 0, 1, 1], [], []>} : vector<1x128xbf16>, vector<128x1024xbf16>, vector<1x1024xf32> -> vector<1x1024xf32>
    %120 = arith.addf %114, %119 : vector<1x1024xf32>
    %121 = vector.extract_strided_slice %89 {offsets = [5, 0], sizes = [1, 128], strides = [1, 1]} : vector<8x128xf32> to vector<1x128xf32>
    %122 = arith.truncf %121 : vector<1x128xf32> to vector<1x128xbf16>
    %c5 = arith.constant 5 : index
    %c0_97 = arith.constant 0 : index
    %c0_98 = arith.constant 0 : index
    %123 = vector.load %arg10[%c5, %c0_97, %c0_98] : memref<8x128x1024xbf16, #tpu.memory_space<vmem>>, vector<1x128x1024xbf16>
    %124 = vector.shape_cast %123 : vector<1x128x1024xbf16> to vector<128x1024xbf16>
    %cst_99 = arith.constant dense<0.000000e+00> : vector<1x1024xf32>
    %125 = tpu.matmul %122, %124, %cst_99 {dimension_numbers = #tpu.dot_dimension_numbers<[1], [0], [0], [1], [0, 0, 1, 1], [], []>} : vector<1x128xbf16>, vector<128x1024xbf16>, vector<1x1024xf32> -> vector<1x1024xf32>
    %126 = arith.addf %120, %125 : vector<1x1024xf32>
    %127 = vector.extract_strided_slice %89 {offsets = [6, 0], sizes = [1, 128], strides = [1, 1]} : vector<8x128xf32> to vector<1x128xf32>
    %128 = arith.truncf %127 : vector<1x128xf32> to vector<1x128xbf16>
    %c6 = arith.constant 6 : index
    %c0_100 = arith.constant 0 : index
    %c0_101 = arith.constant 0 : index
    %129 = vector.load %arg10[%c6, %c0_100, %c0_101] : memref<8x128x1024xbf16, #tpu.memory_space<vmem>>, vector<1x128x1024xbf16>
    %130 = vector.shape_cast %129 : vector<1x128x1024xbf16> to vector<128x1024xbf16>
    %cst_102 = arith.constant dense<0.000000e+00> : vector<1x1024xf32>
    %131 = tpu.matmul %128, %130, %cst_102 {dimension_numbers = #tpu.dot_dimension_numbers<[1], [0], [0], [1], [0, 0, 1, 1], [], []>} : vector<1x128xbf16>, vector<128x1024xbf16>, vector<1x1024xf32> -> vector<1x1024xf32>
    %132 = arith.addf %126, %131 : vector<1x1024xf32>
    %133 = vector.extract_strided_slice %89 {offsets = [7, 0], sizes = [1, 128], strides = [1, 1]} : vector<8x128xf32> to vector<1x128xf32>
    %134 = arith.truncf %133 : vector<1x128xf32> to vector<1x128xbf16>
    %c7 = arith.constant 7 : index
    %c0_103 = arith.constant 0 : index
    %c0_104 = arith.constant 0 : index
    %135 = vector.load %arg10[%c7, %c0_103, %c0_104] : memref<8x128x1024xbf16, #tpu.memory_space<vmem>>, vector<1x128x1024xbf16>
    %136 = vector.shape_cast %135 : vector<1x128x1024xbf16> to vector<128x1024xbf16>
    %cst_105 = arith.constant dense<0.000000e+00> : vector<1x1024xf32>
    %137 = tpu.matmul %134, %136, %cst_105 {dimension_numbers = #tpu.dot_dimension_numbers<[1], [0], [0], [1], [0, 0, 1, 1], [], []>} : vector<1x128xbf16>, vector<128x1024xbf16>, vector<1x1024xf32> -> vector<1x1024xf32>
    %138 = arith.addf %132, %137 : vector<1x1024xf32>
    %cst_106 = arith.constant 0.000000e+00 : f32
    %139 = vector.broadcast %cst_106 : f32 to vector<1x1024xf32>
    %140 = arith.maximumf %138, %139 : vector<1x1024xf32>
    %141 = arith.truncf %140 : vector<1x1024xf32> to vector<1x1024xbf16>
    %c0_107 = arith.constant 0 : index
    %c0_108 = arith.constant 0 : index
    %142 = vector.load %arg12[%c0_107, %c0_108] : memref<1024x512xbf16, #tpu.memory_space<vmem>>, vector<1024x512xbf16>
    %cst_109 = arith.constant dense<0.000000e+00> : vector<1x512xf32>
    %143 = tpu.matmul %141, %142, %cst_109 {dimension_numbers = #tpu.dot_dimension_numbers<[1], [0], [0], [1], [0, 0, 1, 1], [], []>} : vector<1x1024xbf16>, vector<1024x512xbf16>, vector<1x512xf32> -> vector<1x512xf32>
    %c0_110 = arith.constant 0 : index
    %c0_111 = arith.constant 0 : index
    %144 = vector.load %arg13[%c0_110, %c0_111] : memref<1x512xf32, #tpu.memory_space<vmem>>, vector<1x512xf32>
    %145 = arith.addf %143, %144 : vector<1x512xf32>
    %cst_112 = arith.constant 0.000000e+00 : f32
    %146 = vector.broadcast %cst_112 : f32 to vector<1x512xf32>
    %147 = arith.maximumf %145, %146 : vector<1x512xf32>
    %148 = arith.truncf %147 : vector<1x512xf32> to vector<1x512xbf16>
    %c0_113 = arith.constant 0 : index
    %c0_114 = arith.constant 0 : index
    %149 = vector.load %arg14[%c0_113, %c0_114] : memref<512x25xbf16, #tpu.memory_space<vmem>>, vector<512x25xbf16>
    %cst_115 = arith.constant dense<0.000000e+00> : vector<1x25xf32>
    %150 = tpu.matmul %148, %149, %cst_115 {dimension_numbers = #tpu.dot_dimension_numbers<[1], [0], [0], [1], [0, 0, 1, 1], [], []>} : vector<1x512xbf16>, vector<512x25xbf16>, vector<1x25xf32> -> vector<1x25xf32>
    %c0_116 = arith.constant 0 : index
    %c0_117 = arith.constant 0 : index
    %151 = vector.load %arg15[%c0_116, %c0_117] : memref<1x25xf32, #tpu.memory_space<vmem>>, vector<1x25xf32>
    %152 = arith.addf %150, %151 : vector<1x25xf32>
    %153 = arith.negf %152 : vector<1x25xf32>
    %154 = math.exp %153 : vector<1x25xf32>
    %cst_118 = arith.constant 1.000000e+00 : f32
    %155 = vector.broadcast %cst_118 : f32 to vector<1x25xf32>
    %156 = arith.addf %155, %154 : vector<1x25xf32>
    %157 = arith.divf %155, %156 : vector<1x25xf32>
    %c0_119 = arith.constant 0 : index
    %c0_120 = arith.constant 0 : index
    %c0_121 = arith.constant 0 : index
    %158 = vector.load %arg16[%c0_119, %c0_120, %c0_121] : memref<1x1x25xf32, #tpu.memory_space<vmem>>, vector<1x1x25xf32>
    %159 = vector.shape_cast %158 : vector<1x1x25xf32> to vector<1x25xf32>
    %160 = vector.shape_cast %157 : vector<1x25xf32> to vector<1x1x25xf32>
    tpu.vector_store %arg16[%c0_119, %c0_120, %c0_121], %160 {strides = array<i32>} : memref<1x1x25xf32, #tpu.memory_space<vmem>>, vector<1x1x25xf32>,
    return
  }
  func.func @transform_0(%arg0: i32) -> (i32, i32, i32) {
    %c0_i32 = arith.constant 0 : i32
    %c0_i32_0 = arith.constant 0 : i32
    %c0_i32_1 = arith.constant 0 : i32
    return %arg0, %c0_i32, %c0_i32_0 : i32, i32, i32
  }
  func.func @transform_1(%arg0: i32) -> (i32, i32, i32) {
    %c0_i32 = arith.constant 0 : i32
    %c0_i32_0 = arith.constant 0 : i32
    %c0_i32_1 = arith.constant 0 : i32
    return %arg0, %c0_i32, %c0_i32_0 : i32, i32, i32
  }
  func.func @transform_2(%arg0: i32) -> (i32, i32, i32) {
    %c0_i32 = arith.constant 0 : i32
    %c0_i32_0 = arith.constant 0 : i32
    %c0_i32_1 = arith.constant 0 : i32
    %c0_i32_2 = arith.constant 0 : i32
    return %c0_i32, %c0_i32_0, %c0_i32_1 : i32, i32, i32
  }
  func.func @transform_3(%arg0: i32) -> (i32, i32, i32) {
    %c0_i32 = arith.constant 0 : i32
    %c0_i32_0 = arith.constant 0 : i32
    %c0_i32_1 = arith.constant 0 : i32
    %c0_i32_2 = arith.constant 0 : i32
    return %c0_i32, %c0_i32_0, %c0_i32_1 : i32, i32, i32
  }
  func.func @transform_4(%arg0: i32) -> (i32, i32) {
    %c0_i32 = arith.constant 0 : i32
    %c0_i32_0 = arith.constant 0 : i32
    %c0_i32_1 = arith.constant 0 : i32
    return %c0_i32, %c0_i32_0 : i32, i32
  }
  func.func @transform_5(%arg0: i32) -> (i32, i32, i32) {
    %c0_i32 = arith.constant 0 : i32
    %c0_i32_0 = arith.constant 0 : i32
    %c0_i32_1 = arith.constant 0 : i32
    %c0_i32_2 = arith.constant 0 : i32
    return %c0_i32, %c0_i32_0, %c0_i32_1 : i32, i32, i32
  }
  func.func @transform_6(%arg0: i32) -> (i32, i32) {
    %c0_i32 = arith.constant 0 : i32
    %c0_i32_0 = arith.constant 0 : i32
    %c0_i32_1 = arith.constant 0 : i32
    return %c0_i32, %c0_i32_0 : i32, i32
  }
  func.func @transform_7(%arg0: i32) -> (i32, i32, i32) {
    %c0_i32 = arith.constant 0 : i32
    %c0_i32_0 = arith.constant 0 : i32
    %c0_i32_1 = arith.constant 0 : i32
    %c0_i32_2 = arith.constant 0 : i32
    return %c0_i32, %c0_i32_0, %c0_i32_1 : i32, i32, i32
  }
  func.func @transform_8(%arg0: i32) -> (i32, i32) {
    %c0_i32 = arith.constant 0 : i32
    %c0_i32_0 = arith.constant 0 : i32
    %c0_i32_1 = arith.constant 0 : i32
    return %c0_i32, %c0_i32_0 : i32, i32
  }
  func.func @transform_9(%arg0: i32) -> (i32, i32, i32) {
    %c0_i32 = arith.constant 0 : i32
    %c0_i32_0 = arith.constant 0 : i32
    %c0_i32_1 = arith.constant 0 : i32
    %c0_i32_2 = arith.constant 0 : i32
    return %c0_i32, %c0_i32_0, %c0_i32_1 : i32, i32, i32
  }
  func.func @transform_10(%arg0: i32) -> (i32, i32) {
    %c0_i32 = arith.constant 0 : i32
    %c0_i32_0 = arith.constant 0 : i32
    %c0_i32_1 = arith.constant 0 : i32
    return %c0_i32, %c0_i32_0 : i32, i32
  }
  func.func @transform_11(%arg0: i32) -> (i32, i32) {
    %c0_i32 = arith.constant 0 : i32
    %c0_i32_0 = arith.constant 0 : i32
    %c0_i32_1 = arith.constant 0 : i32
    return %c0_i32, %c0_i32_0 : i32, i32
  }
  func.func @transform_12(%arg0: i32) -> (i32, i32) {
    %c0_i32 = arith.constant 0 : i32
    %c0_i32_0 = arith.constant 0 : i32
    %c0_i32_1 = arith.constant 0 : i32
    return %c0_i32, %c0_i32_0 : i32, i32
  }
  func.func @transform_13(%arg0: i32) -> (i32, i32) {
    %c0_i32 = arith.constant 0 : i32
    %c0_i32_0 = arith.constant 0 : i32
    %c0_i32_1 = arith.constant 0 : i32
    return %c0_i32, %c0_i32_0 : i32, i32
  }
  func.func @transform_14(%arg0: i32) -> (i32, i32) {
    %c0_i32 = arith.constant 0 : i32
    %c0_i32_0 = arith.constant 0 : i32
    %c0_i32_1 = arith.constant 0 : i32
    return %c0_i32, %c0_i32_0 : i32, i32
  }
  func.func @transform_15(%arg0: i32) -> (i32, i32, i32) {
    %c0_i32 = arith.constant 0 : i32
    %c0_i32_0 = arith.constant 0 : i32
    %c0_i32_1 = arith.constant 0 : i32
    return %arg0, %c0_i32, %c0_i32_0 : i32, i32, i32
  }
}

</mosaic_0001>

<llo_original>
// kernel: _lambda_.1
$region0: #{_lambda_.1}
  #allocation0 [shape = 'u32[]', space=smem, size = 0x4, offset = 0x4, fixed_abs, tag = 'smem constant byte address 0x4 - core index']
  #allocation1 [shape = 'u32[144,128]{1,0:T(1,128)}', space=vmem, size = 0x12000, scoped, tag = 'internal scratch']
  #allocation2 [shape = 'f32[10,256]{1,0:T(8,128)}', space=vmem, size = 0x4000, scoped, tag = 'scratch operand']
  %s0 = inlined_call_operand.vmem [shape: f32[2,8,5], index: 0, kind: input, shape index: {}]
  %s1 = inlined_call_operand.vmem [shape: f32[2,8,6], index: 1, kind: input, shape index: {}]
  %s2 = inlined_call_operand.vmem [shape: bf16[3,5,256], index: 2, kind: input, shape index: {}]
  %s3 = inlined_call_operand.hbm [shape: bf16[3,6,256], index: 3, kind: input, shape index: {}]
  %s4 = inlined_call_operand.hbm [shape: f32[1,256], index: 4, kind: input, shape index: {}]
  %s5 = inlined_call_operand.hbm [shape: bf16[3,256,128], index: 5, kind: input, shape index: {}]
  %s6 = inlined_call_operand.hbm [shape: f32[1,128], index: 6, kind: input, shape index: {}]
  %s7 = inlined_call_operand.hbm [shape: bf16[3,128,128], index: 7, kind: input, shape index: {}]
  %s8 = inlined_call_operand.hbm [shape: f32[1,128], index: 8, kind: input, shape index: {}]
  %s9 = inlined_call_operand.hbm [shape: bf16[8,128,1024], index: 9, kind: input, shape index: {}]
  %s10 = inlined_call_operand.hbm [shape: f32[1,1024], index: 10, kind: input, shape index: {}]
  %s11 = inlined_call_operand.hbm [shape: bf16[1024,512], index: 11, kind: input, shape index: {}]
  %s12 = inlined_call_operand.hbm [shape: f32[1,512], index: 12, kind: input, shape index: {}]
  %s13 = inlined_call_operand.vmem [shape: bf16[512,25], index: 13, kind: input, shape index: {}]
  %s14 = inlined_call_operand.hbm [shape: f32[1,25], index: 14, kind: input, shape index: {}]
  %s15 = inlined_call_operand.hbm [shape: f32[2,1,25], index: 15, kind: output, shape index: {}]
  %s16 = sld [smem:[#allocation0]]
  $region137: #{_lambda_.1} parent=0
    _
  %s18 = ssub.s32 1, %s16
  %s19 = scalar_select 0, %s18, %s16
  $region1: #{_lambda_.1} parent=0
    #allocation3 [shape = 'u8[12288]{0}', space=vmem, size = 0x3000, scoped, tag = 'input window, operand 3, single buffered']
    #allocation4 [shape = 's32[2]{0}', space=sflag, size = 0x8, scoped, tag = 'scoped memory for _lambda_.1']
    #allocation5 [shape = 's32[2]{0}', space=sflag, size = 0x8, scoped, tag = 'scoped memory for _lambda_.1']
    #allocation6 [shape = 'u8[1024]{0}', space=vmem, size = 0x400, scoped, tag = 'input window, operand 4, single buffered']
    #allocation7 [shape = 's32[1]{0}', space=sflag, size = 0x4, scoped, tag = 'scoped memory for _lambda_.1']
    #allocation8 [shape = 'u8[196608]{0}', space=vmem, size = 0x30000, scoped, tag = 'input window, operand 5, single buffered']
    #allocation9 [shape = 'u8[512]{0}', space=vmem, size = 0x400, scoped, tag = 'input window, operand 6, single buffered']
    #allocation10 [shape = 's32[1]{0}', space=sflag, size = 0x4, scoped, tag = 'scoped memory for _lambda_.1']
    #allocation11 [shape = 'u8[98304]{0}', space=vmem, size = 0x18000, scoped, tag = 'input window, operand 7, single buffered']
    #allocation12 [shape = 'u8[512]{0}', space=vmem, size = 0x400, scoped, tag = 'input window, operand 8, single buffered']
    #allocation13 [shape = 's32[1]{0}', space=sflag, size = 0x4, scoped, tag = 'scoped memory for _lambda_.1']
    #allocation14 [shape = 'u8[2097152]{0}', space=vmem, size = 0x200000, scoped, tag = 'input window, operand 9, single buffered']
    #allocation15 [shape = 'u8[4096]{0}', space=vmem, size = 0x1000, scoped, tag = 'input window, operand 10, single buffered']
    #allocation16 [shape = 's32[1]{0}', space=sflag, size = 0x4, scoped, tag = 'scoped memory for _lambda_.1']
    #allocation17 [shape = 'u8[1048576]{0}', space=vmem, size = 0x100000, scoped, tag = 'input window, operand 11, single buffered']
    #allocation18 [shape = 'u8[2048]{0}', space=vmem, size = 0x800, scoped, tag = 'input window, operand 12, single buffered']
    #allocation19 [shape = 's32[1]{0}', space=sflag, size = 0x4, scoped, tag = 'scoped memory for _lambda_.1']
    #allocation20 [shape = 'u8[512]{0}', space=vmem, size = 0x400, scoped, tag = 'input window, operand 14, single buffered']
    #allocation21 [shape = 'u8[1024]{0}', space=vmem, size = 0x400, scoped, tag = 'output window, operand 0']
    %20 = vsyncpa [#allocation4], 0
    %21 = vsyncpa [#allocation7], 0
    %22 = vsyncpa [#allocation10], 0
    %23 = vsyncpa [#allocation13], 0
    %24 = vsyncpa [#allocation16], 0
    %25 = vsyncpa [#allocation19], 0
    %26 = vsyncpa [#allocation5], 0
    %s27 = scalar_lea.sflag [#allocation5], 1
    %28 = vsyncpa %s27, 0
    loop: start=0, step=1, limit=4
    $region2: #{_lambda_.1} parent=1 // loop_pre_header
      _
    $region3: #{_lambda_.1} parent=1 // loop_header
      %s30 = sphi 0, %s34
      %p31 = scmp.ge.s32.totalorder %s30, 4
      %s40 = sphi 0, %s42
      %s43 = sphi 0, %s40
      %s44 = sphi 0, %s43
      %s60 = sphi 0, %s44
      %s66 = sphi 0, %s68
      %s69 = sphi 0, %s66
      %s70 = sphi 0, %s69
      %s86 = sphi 0, %s70
      %s90 = sphi 0, %s90
      %s92 = sphi 0, %s90
      %s93 = sphi 0, %s92
      %s107 = sphi 0, %s93
      %s111 = sphi 0, %s111
      %s113 = sphi 0, %s111
      %s114 = sphi 0, %s113
      %s128 = sphi 0, %s114
      %s132 = sphi 0, %s132
      %s134 = sphi 0, %s132
      %s135 = sphi 0, %s134
      %s149 = sphi 0, %s135
      %s153 = sphi 0, %s153
      %s155 = sphi 0, %s153
      %s156 = sphi 0, %s155
      %s170 = sphi 0, %s156
      %s174 = sphi 0, %s174
      %s176 = sphi 0, %s174
      %s177 = sphi 0, %s176
      %s191 = sphi 0, %s177
      %s195 = sphi 0, %s195
      %s197 = sphi 0, %s195
      %s198 = sphi 0, %s197
      %s212 = sphi 0, %s198
      %s216 = sphi 0, %s216
      %s218 = sphi 0, %s216
      %s219 = sphi 0, %s218
      %s233 = sphi 0, %s219
      %s237 = sphi 0, %s237
      %s239 = sphi 0, %s237
      %s240 = sphi 0, %s239
      %s254 = sphi 0, %s240
      %s258 = sphi 0, %s258
      %s260 = sphi 0, %s258
      %s261 = sphi 0, %s260
      %s275 = sphi 0, %s261
      %s279 = sphi 0, %s279
      %s281 = sphi 0, %s279
      %s282 = sphi 0, %s281
      %s296 = sphi 0, %s282
      %s300 = sphi 0, %s300
      %s302 = sphi 0, %s300
      %s303 = sphi 0, %s302
      %s317 = sphi 0, %s303
      %s321 = sphi 0, %s321
      %s323 = sphi 0, %s321
      %s324 = sphi 0, %s323
      %s338 = sphi 0, %s324
      %s342 = sphi 0, %s342
      %s344 = sphi 0, %s342
      %s345 = sphi 0, %s344
      %s359 = sphi 0, %s345
      %s365 = sphi 0, %s367
      %s368 = sphi 0, %s365
      %s369 = sphi 0, %s368
      %s385 = sphi 0, %s369
    $region4: #{_lambda_.1} parent=1 // loop_header_branch
      %33 = sbr.rel (%p31) target = $region8
    $region5: #{_lambda_.1} parent=1 // loop_body
      %s35 = ssub.s32 %s30, 1
      %s36 = ssub.s32 %s30, 2
      %s37 = sadd.s32 %s30, 1
      %s38 = ssub.s32 %s30, %s37
      %p39 = scmp.eq.s32.totalorder %s38, 0
      %s41 = sadd.s32 %s40, 1
      %s42 = scalar_select %p39, %s40, %s41
      %p45 = pneg %p39
      %p46 = scmp.eq.s32.totalorder %s30, 1
      %p47 = por %p45, %p46
      %p48 = scmp.ne.s32.totalorder %s40, %s43
      %p49 = scmp.eq.s32.totalorder %s30, 0
      %p50 = por %p48, %p49
      %p51 = scmp.ne.s32.totalorder %s40, %s43
      %p52 = scmp.eq.s32.totalorder %s35, 1
      %p53 = por %p51, %p52
      %p54 = scmp.ne.s32.totalorder %s43, %s44
      %p55 = scmp.eq.s32.totalorder %s35, 0
      %p56 = por %p54, %p55
      %p57 = scmp.ne.s32.totalorder %s43, %s44
      %p58 = scmp.eq.s32.totalorder %s36, 1
      %p59 = por %p57, %p58
      %p61 = scmp.ne.s32.totalorder %s44, %s60
      %p62 = scmp.eq.s32.totalorder %s36, 0
      %p63 = por %p61, %p62
      %s64 = ssub.s32 %s30, %s37
      %p65 = scmp.eq.s32.totalorder %s64, 0
      %s67 = sadd.s32 %s66, 1
      %s68 = scalar_select %p65, %s66, %s67
      %p71 = pneg %p65
      %p72 = scmp.eq.s32.totalorder %s30, 1
      %p73 = por %p71, %p72
      %p74 = scmp.ne.s32.totalorder %s66, %s69
      %p75 = scmp.eq.s32.totalorder %s30, 0
      %p76 = por %p74, %p75
      %p77 = scmp.ne.s32.totalorder %s66, %s69
      %p78 = scmp.eq.s32.totalorder %s35, 1
      %p79 = por %p77, %p78
      %p80 = scmp.ne.s32.totalorder %s69, %s70
      %p81 = scmp.eq.s32.totalorder %s35, 0
      %p82 = por %p80, %p81
      %p83 = scmp.ne.s32.totalorder %s69, %s70
      %p84 = scmp.eq.s32.totalorder %s36, 1
      %p85 = por %p83, %p84
      %p87 = scmp.ne.s32.totalorder %s70, %s86
      %p88 = scmp.eq.s32.totalorder %s36, 0
      %p89 = por %p87, %p88
      %s91 = sadd.s32 %s90, 1
      %p94 = scmp.eq.s32.totalorder %s30, 1
      %p95 = scmp.ne.s32.totalorder %s90, %s92
      %p96 = scmp.eq.s32.totalorder %s30, 0
      %p97 = por %p95, %p96
      %p98 = scmp.ne.s32.totalorder %s90, %s92
      %p99 = scmp.eq.s32.totalorder %s35, 1
      %p100 = por %p98, %p99
      %p101 = scmp.ne.s32.totalorder %s92, %s93
      %p102 = scmp.eq.s32.totalorder %s35, 0
      %p103 = por %p101, %p102
      %p104 = scmp.ne.s32.totalorder %s92, %s93
      %p105 = scmp.eq.s32.totalorder %s36, 1
      %p106 = por %p104, %p105
      %p108 = scmp.ne.s32.totalorder %s93, %s107
      %p109 = scmp.eq.s32.totalorder %s36, 0
      %p110 = por %p108, %p109
      %s112 = sadd.s32 %s111, 1
      %p115 = scmp.eq.s32.totalorder %s30, 1
      %p116 = scmp.ne.s32.totalorder %s111, %s113
      %p117 = scmp.eq.s32.totalorder %s30, 0
      %p118 = por %p116, %p117
      %p119 = scmp.ne.s32.totalorder %s111, %s113
      %p120 = scmp.eq.s32.totalorder %s35, 1
      %p121 = por %p119, %p120
      %p122 = scmp.ne.s32.totalorder %s113, %s114
      %p123 = scmp.eq.s32.totalorder %s35, 0
      %p124 = por %p122, %p123
      %p125 = scmp.ne.s32.totalorder %s113, %s114
      %p126 = scmp.eq.s32.totalorder %s36, 1
      %p127 = por %p125, %p126
      %p129 = scmp.ne.s32.totalorder %s114, %s128
      %p130 = scmp.eq.s32.totalorder %s36, 0
      %p131 = por %p129, %p130
      %s133 = sadd.s32 %s132, 1
      %p136 = scmp.eq.s32.totalorder %s30, 1
      %p137 = scmp.ne.s32.totalorder %s132, %s134
      %p138 = scmp.eq.s32.totalorder %s30, 0
      %p139 = por %p137, %p138
      %p140 = scmp.ne.s32.totalorder %s132, %s134
      %p141 = scmp.eq.s32.totalorder %s35, 1
      %p142 = por %p140, %p141
      %p143 = scmp.ne.s32.totalorder %s134, %s135
      %p144 = scmp.eq.s32.totalorder %s35, 0
      %p145 = por %p143, %p144
      %p146 = scmp.ne.s32.totalorder %s134, %s135
      %p147 = scmp.eq.s32.totalorder %s36, 1
      %p148 = por %p146, %p147
      %p150 = scmp.ne.s32.totalorder %s135, %s149
      %p151 = scmp.eq.s32.totalorder %s36, 0
      %p152 = por %p150, %p151
      %s154 = sadd.s32 %s153, 1
      %p157 = scmp.eq.s32.totalorder %s30, 1
      %p158 = scmp.ne.s32.totalorder %s153, %s155
      %p159 = scmp.eq.s32.totalorder %s30, 0
      %p160 = por %p158, %p159
      %p161 = scmp.ne.s32.totalorder %s153, %s155
      %p162 = scmp.eq.s32.totalorder %s35, 1
      %p163 = por %p161, %p162
      %p164 = scmp.ne.s32.totalorder %s155, %s156
      %p165 = scmp.eq.s32.totalorder %s35, 0
      %p166 = por %p164, %p165
      %p167 = scmp.ne.s32.totalorder %s155, %s156
      %p168 = scmp.eq.s32.totalorder %s36, 1
      %p169 = por %p167, %p168
      %p171 = scmp.ne.s32.totalorder %s156, %s170
      %p172 = scmp.eq.s32.totalorder %s36, 0
      %p173 = por %p171, %p172
      %s175 = sadd.s32 %s174, 1
      %p178 = scmp.eq.s32.totalorder %s30, 1
      %p179 = scmp.ne.s32.totalorder %s174, %s176
      %p180 = scmp.eq.s32.totalorder %s30, 0
      %p181 = por %p179, %p180
      %p182 = scmp.ne.s32.totalorder %s174, %s176
      %p183 = scmp.eq.s32.totalorder %s35, 1
      %p184 = por %p182, %p183
      %p185 = scmp.ne.s32.totalorder %s176, %s177
      %p186 = scmp.eq.s32.totalorder %s35, 0
      %p187 = por %p185, %p186
      %p188 = scmp.ne.s32.totalorder %s176, %s177
      %p189 = scmp.eq.s32.totalorder %s36, 1
      %p190 = por %p188, %p189
      %p192 = scmp.ne.s32.totalorder %s177, %s191
      %p193 = scmp.eq.s32.totalorder %s36, 0
      %p194 = por %p192, %p193
      %s196 = sadd.s32 %s195, 1
      %p199 = scmp.eq.s32.totalorder %s30, 1
      %p200 = scmp.ne.s32.totalorder %s195, %s197
      %p201 = scmp.eq.s32.totalorder %s30, 0
      %p202 = por %p200, %p201
      %p203 = scmp.ne.s32.totalorder %s195, %s197
      %p204 = scmp.eq.s32.totalorder %s35, 1
      %p205 = por %p203, %p204
      %p206 = scmp.ne.s32.totalorder %s197, %s198
      %p207 = scmp.eq.s32.totalorder %s35, 0
      %p208 = por %p206, %p207
      %p209 = scmp.ne.s32.totalorder %s197, %s198
      %p210 = scmp.eq.s32.totalorder %s36, 1
      %p211 = por %p209, %p210
      %p213 = scmp.ne.s32.totalorder %s198, %s212
      %p214 = scmp.eq.s32.totalorder %s36, 0
      %p215 = por %p213, %p214
      %s217 = sadd.s32 %s216, 1
      %p220 = scmp.eq.s32.totalorder %s30, 1
      %p221 = scmp.ne.s32.totalorder %s216, %s218
      %p222 = scmp.eq.s32.totalorder %s30, 0
      %p223 = por %p221, %p222
      %p224 = scmp.ne.s32.totalorder %s216, %s218
      %p225 = scmp.eq.s32.totalorder %s35, 1
      %p226 = por %p224, %p225
      %p227 = scmp.ne.s32.totalorder %s218, %s219
      %p228 = scmp.eq.s32.totalorder %s35, 0
      %p229 = por %p227, %p228
      %p230 = scmp.ne.s32.totalorder %s218, %s219
      %p231 = scmp.eq.s32.totalorder %s36, 1
      %p232 = por %p230, %p231
      %p234 = scmp.ne.s32.totalorder %s219, %s233
      %p235 = scmp.eq.s32.totalorder %s36, 0
      %p236 = por %p234, %p235
      %s238 = sadd.s32 %s237, 1
      %p241 = scmp.eq.s32.totalorder %s30, 1
      %p242 = scmp.ne.s32.totalorder %s237, %s239
      %p243 = scmp.eq.s32.totalorder %s30, 0
      %p244 = por %p242, %p243
      %p245 = scmp.ne.s32.totalorder %s237, %s239
      %p246 = scmp.eq.s32.totalorder %s35, 1
      %p247 = por %p245, %p246
      %p248 = scmp.ne.s32.totalorder %s239, %s240
      %p249 = scmp.eq.s32.totalorder %s35, 0
      %p250 = por %p248, %p249
      %p251 = scmp.ne.s32.totalorder %s239, %s240
      %p252 = scmp.eq.s32.totalorder %s36, 1
      %p253 = por %p251, %p252
      %p255 = scmp.ne.s32.totalorder %s240, %s254
      %p256 = scmp.eq.s32.totalorder %s36, 0
      %p257 = por %p255, %p256
      %s259 = sadd.s32 %s258, 1
      %p262 = scmp.eq.s32.totalorder %s30, 1
      %p263 = scmp.ne.s32.totalorder %s258, %s260
      %p264 = scmp.eq.s32.totalorder %s30, 0
      %p265 = por %p263, %p264
      %p266 = scmp.ne.s32.totalorder %s258, %s260
      %p267 = scmp.eq.s32.totalorder %s35, 1
      %p268 = por %p266, %p267
      %p269 = scmp.ne.s32.totalorder %s260, %s261
      %p270 = scmp.eq.s32.totalorder %s35, 0
      %p271 = por %p269, %p270
      %p272 = scmp.ne.s32.totalorder %s260, %s261
      %p273 = scmp.eq.s32.totalorder %s36, 1
      %p274 = por %p272, %p273
      %p276 = scmp.ne.s32.totalorder %s261, %s275
      %p277 = scmp.eq.s32.totalorder %s36, 0
      %p278 = por %p276, %p277
      %s280 = sadd.s32 %s279, 1
      %p283 = scmp.eq.s32.totalorder %s30, 1
      %p284 = scmp.ne.s32.totalorder %s279, %s281
      %p285 = scmp.eq.s32.totalorder %s30, 0
      %p286 = por %p284, %p285
      %p287 = scmp.ne.s32.totalorder %s279, %s281
      %p288 = scmp.eq.s32.totalorder %s35, 1
      %p289 = por %p287, %p288
      %p290 = scmp.ne.s32.totalorder %s281, %s282
      %p291 = scmp.eq.s32.totalorder %s35, 0
      %p292 = por %p290, %p291
      %p293 = scmp.ne.s32.totalorder %s281, %s282
      %p294 = scmp.eq.s32.totalorder %s36, 1
      %p295 = por %p293, %p294
      %p297 = scmp.ne.s32.totalorder %s282, %s296
      %p298 = scmp.eq.s32.totalorder %s36, 0
      %p299 = por %p297, %p298
      %s301 = sadd.s32 %s300, 1
      %p304 = scmp.eq.s32.totalorder %s30, 1
      %p305 = scmp.ne.s32.totalorder %s300, %s302
      %p306 = scmp.eq.s32.totalorder %s30, 0
      %p307 = por %p305, %p306
      %p308 = scmp.ne.s32.totalorder %s300, %s302
      %p309 = scmp.eq.s32.totalorder %s35, 1
      %p310 = por %p308, %p309
      %p311 = scmp.ne.s32.totalorder %s302, %s303
      %p312 = scmp.eq.s32.totalorder %s35, 0
      %p313 = por %p311, %p312
      %p314 = scmp.ne.s32.totalorder %s302, %s303
      %p315 = scmp.eq.s32.totalorder %s36, 1
      %p316 = por %p314, %p315
      %p318 = scmp.ne.s32.totalorder %s303, %s317
      %p319 = scmp.eq.s32.totalorder %s36, 0
      %p320 = por %p318, %p319
      %s322 = sadd.s32 %s321, 1
      %p325 = scmp.eq.s32.totalorder %s30, 1
      %p326 = scmp.ne.s32.totalorder %s321, %s323
      %p327 = scmp.eq.s32.totalorder %s30, 0
      %p328 = por %p326, %p327
      %p329 = scmp.ne.s32.totalorder %s321, %s323
      %p330 = scmp.eq.s32.totalorder %s35, 1
      %p331 = por %p329, %p330
      %p332 = scmp.ne.s32.totalorder %s323, %s324
      %p333 = scmp.eq.s32.totalorder %s35, 0
      %p334 = por %p332, %p333
      %p335 = scmp.ne.s32.totalorder %s323, %s324
      %p336 = scmp.eq.s32.totalorder %s36, 1
      %p337 = por %p335, %p336
      %p339 = scmp.ne.s32.totalorder %s324, %s338
      %p340 = scmp.eq.s32.totalorder %s36, 0
      %p341 = por %p339, %p340
      %s343 = sadd.s32 %s342, 1
      %p346 = scmp.eq.s32.totalorder %s30, 1
      %p347 = scmp.ne.s32.totalorder %s342, %s344
      %p348 = scmp.eq.s32.totalorder %s30, 0
      %p349 = por %p347, %p348
      %p350 = scmp.ne.s32.totalorder %s342, %s344
      %p351 = scmp.eq.s32.totalorder %s35, 1
      %p352 = por %p350, %p351
      %p353 = scmp.ne.s32.totalorder %s344, %s345
      %p354 = scmp.eq.s32.totalorder %s35, 0
      %p355 = por %p353, %p354
      %p356 = scmp.ne.s32.totalorder %s344, %s345
      %p357 = scmp.eq.s32.totalorder %s36, 1
      %p358 = por %p356, %p357
      %p360 = scmp.ne.s32.totalorder %s345, %s359
      %p361 = scmp.eq.s32.totalorder %s36, 0
      %p362 = por %p360, %p361
      %s363 = ssub.s32 %s30, %s37
      %p364 = scmp.eq.s32.totalorder %s363, 0
      %s366 = sadd.s32 %s365, 1
      %s367 = scalar_select %p364, %s365, %s366
      %p370 = pneg %p364
      %p371 = scmp.eq.s32.totalorder %s30, 1
      %p372 = por %p370, %p371
      %p373 = scmp.ne.s32.totalorder %s365, %s368
      %p374 = scmp.eq.s32.totalorder %s30, 0
      %p375 = por %p373, %p374
      %p376 = scmp.ne.s32.totalorder %s365, %s368
      %p377 = scmp.eq.s32.totalorder %s35, 1
      %p378 = por %p376, %p377
      %p379 = scmp.ne.s32.totalorder %s368, %s369
      %p380 = scmp.eq.s32.totalorder %s35, 0
      %p381 = por %p379, %p380
      %p382 = scmp.ne.s32.totalorder %s368, %s369
      %p383 = scmp.eq.s32.totalorder %s36, 1
      %p384 = por %p382, %p383
      %p386 = scmp.ne.s32.totalorder %s369, %s385
      %p387 = scmp.eq.s32.totalorder %s36, 0
      %p388 = por %p386, %p387
      %p389 = scmp.le.s32.totalorder 1, %s30
      %p390 = scmp.lt.s32.totalorder %s30, 3
      %p391 = pnand %p389, %p390
      %p392 = pneg %p391
      // Predicated region
      $region9: #{_lambda_.1} parent=5 // pred_check
        _
      $region10: #{_lambda_.1} parent=5 // pred_check_branch
        %394 = sbr.rel (%p391) target = $region12
      $region11: #{_lambda_.1} parent=5 // pred_region
        %s395 = ssub.s32 %s30, 1
        // Predicated region
        $region13: #{_lambda_.1} parent=11 // pred_check
          %p396 = pneg %p103
        $region14: #{_lambda_.1} parent=11 // pred_check_branch
          %398 = sbr.rel (%p396) target = $region16
        $region15: #{_lambda_.1} parent=11 // pred_region
          _
        $region16: #{_lambda_.1} parent=11 // pred_fallthru
          _
        // Predicated region
        $region17: #{_lambda_.1} parent=11 // pred_check
          %p399 = pneg %p124
        $region18: #{_lambda_.1} parent=11 // pred_check_branch
          %401 = sbr.rel (%p399) target = $region20
        $region19: #{_lambda_.1} parent=11 // pred_region
          %s403 = ssub.s32 384, 384
          %404 = vsyncadd [#allocation4], %s403
          %s405 = sshll.u32 [#allocation3], 4
          %s406 = int_to_ptr.vmem [resolvable:$true] %s405
          %411 = dma.hbm_to_vmem [thread:$0]  %s3, 384, %s406, [#allocation4], 128, 128, 8
        $region20: #{_lambda_.1} parent=11 // pred_fallthru
          _
        // Predicated region
        $region21: #{_lambda_.1} parent=11 // pred_check
          %p412 = pneg %p145
        $region22: #{_lambda_.1} parent=11 // pred_check_branch
          %414 = sbr.rel (%p412) target = $region24
        $region23: #{_lambda_.1} parent=11 // pred_region
          %s416 = ssub.s32 32, 32
          %417 = vsyncadd [#allocation7], %s416
          %s419 = sshll.u32 [#allocation6], 4
          %s420 = int_to_ptr.vmem [resolvable:$true] %s419
          %422 = dma.hbm_to_vmem [thread:$0]  %s4, 32, %s420, [#allocation7]
        $region24: #{_lambda_.1} parent=11 // pred_fallthru
          _
        // Predicated region
        $region25: #{_lambda_.1} parent=11 // pred_check
          %p423 = pneg %p166
        $region26: #{_lambda_.1} parent=11 // pred_check_branch
          %425 = sbr.rel (%p423) target = $region28
        $region27: #{_lambda_.1} parent=11 // pred_region
          %s427 = ssub.s32 6144, 6144
          %428 = vsyncadd [#allocation7], %s427
          %s429 = sshll.u32 [#allocation8], 4
          %s430 = int_to_ptr.vmem [resolvable:$true] %s429
          %435 = dma.hbm_to_vmem [thread:$0]  %s5, 6144, %s430, [#allocation7], 64, 64, 4
        $region28: #{_lambda_.1} parent=11 // pred_fallthru
          _
        // Predicated region
        $region29: #{_lambda_.1} parent=11 // pred_check
          %p436 = pneg %p187
        $region30: #{_lambda_.1} parent=11 // pred_check_branch
          %438 = sbr.rel (%p436) target = $region32
        $region31: #{_lambda_.1} parent=11 // pred_region
          %s440 = ssub.s32 16, 16
          %441 = vsyncadd [#allocation10], %s440
          %s443 = sshll.u32 [#allocation9], 4
          %s444 = int_to_ptr.vmem [resolvable:$true] %s443
          %446 = dma.hbm_to_vmem [thread:$0]  %s6, 16, %s444, [#allocation10]
        $region32: #{_lambda_.1} parent=11 // pred_fallthru
          _
        // Predicated region
        $region33: #{_lambda_.1} parent=11 // pred_check
          %p447 = pneg %p208
        $region34: #{_lambda_.1} parent=11 // pred_check_branch
          %449 = sbr.rel (%p447) target = $region36
        $region35: #{_lambda_.1} parent=11 // pred_region
          %s451 = ssub.s32 3072, 3072
          %452 = vsyncadd [#allocation10], %s451
          %s453 = sshll.u32 [#allocation11], 4
          %s454 = int_to_ptr.vmem [resolvable:$true] %s453
          %459 = dma.hbm_to_vmem [thread:$0]  %s7, 3072, %s454, [#allocation10], 64, 64, 4
        $region36: #{_lambda_.1} parent=11 // pred_fallthru
          _
        // Predicated region
        $region37: #{_lambda_.1} parent=11 // pred_check
          %p460 = pneg %p229
        $region38: #{_lambda_.1} parent=11 // pred_check_branch
          %462 = sbr.rel (%p460) target = $region40
        $region39: #{_lambda_.1} parent=11 // pred_region
          %s464 = ssub.s32 16, 16
          %465 = vsyncadd [#allocation13], %s464
          %s467 = sshll.u32 [#allocation12], 4
          %s468 = int_to_ptr.vmem [resolvable:$true] %s467
          %470 = dma.hbm_to_vmem [thread:$0]  %s8, 16, %s468, [#allocation13]
        $region40: #{_lambda_.1} parent=11 // pred_fallthru
          _
        // Predicated region
        $region41: #{_lambda_.1} parent=11 // pred_check
          %p471 = pneg %p250
        $region42: #{_lambda_.1} parent=11 // pred_check_branch
          %473 = sbr.rel (%p471) target = $region44
        $region43: #{_lambda_.1} parent=11 // pred_region
          %s475 = ssub.s32 65536, 65536
          %476 = vsyncadd [#allocation13], %s475
          %s477 = sshll.u32 [#allocation14], 4
          %s478 = int_to_ptr.vmem [resolvable:$true] %s477
          %483 = dma.hbm_to_vmem [thread:$0]  %s9, 65536, %s478, [#allocation13], 512, 512, 32
        $region44: #{_lambda_.1} parent=11 // pred_fallthru
          _
        // Predicated region
        $region45: #{_lambda_.1} parent=11 // pred_check
          %p484 = pneg %p271
        $region46: #{_lambda_.1} parent=11 // pred_check_branch
          %486 = sbr.rel (%p484) target = $region48
        $region47: #{_lambda_.1} parent=11 // pred_region
          %s488 = ssub.s32 128, 128
          %489 = vsyncadd [#allocation16], %s488
          %s491 = sshll.u32 [#allocation15], 4
          %s492 = int_to_ptr.vmem [resolvable:$true] %s491
          %494 = dma.hbm_to_vmem [thread:$0]  %s10, 128, %s492, [#allocation16]
        $region48: #{_lambda_.1} parent=11 // pred_fallthru
          _
        // Predicated region
        $region49: #{_lambda_.1} parent=11 // pred_check
          %p495 = pneg %p292
        $region50: #{_lambda_.1} parent=11 // pred_check_branch
          %497 = sbr.rel (%p495) target = $region52
        $region51: #{_lambda_.1} parent=11 // pred_region
          %s499 = ssub.s32 32768, 32768
          %500 = vsyncadd [#allocation16], %s499
          %s501 = sshll.u32 [#allocation17], 4
          %s502 = int_to_ptr.vmem [resolvable:$true] %s501
          %507 = dma.hbm_to_vmem [thread:$0]  %s11, 32768, %s502, [#allocation16], 256, 256, 16
        $region52: #{_lambda_.1} parent=11 // pred_fallthru
          _
        // Predicated region
        $region53: #{_lambda_.1} parent=11 // pred_check
          %p508 = pneg %p313
        $region54: #{_lambda_.1} parent=11 // pred_check_branch
          %510 = sbr.rel (%p508) target = $region56
        $region55: #{_lambda_.1} parent=11 // pred_region
          %s512 = ssub.s32 64, 64
          %513 = vsyncadd [#allocation19], %s512
          %s515 = sshll.u32 [#allocation18], 4
          %s516 = int_to_ptr.vmem [resolvable:$true] %s515
          %518 = dma.hbm_to_vmem [thread:$0]  %s12, 64, %s516, [#allocation19]
        $region56: #{_lambda_.1} parent=11 // pred_fallthru
          _
        // Predicated region
        $region57: #{_lambda_.1} parent=11 // pred_check
          %p519 = pneg %p334
        $region58: #{_lambda_.1} parent=11 // pred_check_branch
          %521 = sbr.rel (%p519) target = $region60
        $region59: #{_lambda_.1} parent=11 // pred_region
          _
        $region60: #{_lambda_.1} parent=11 // pred_fallthru
          _
        // Predicated region
        $region61: #{_lambda_.1} parent=11 // pred_check
          %p522 = pneg %p355
        $region62: #{_lambda_.1} parent=11 // pred_check_branch
          %524 = sbr.rel (%p522) target = $region64
        $region63: #{_lambda_.1} parent=11 // pred_region
          %s526 = ssub.s32 16, 16
          %527 = vsyncadd [#allocation19], %s526
          %s529 = sshll.u32 [#allocation20], 4
          %s530 = int_to_ptr.vmem [resolvable:$true] %s529
          %532 = dma.hbm_to_vmem [thread:$0]  %s14, 16, %s530, [#allocation19]
        $region64: #{_lambda_.1} parent=11 // pred_fallthru
          _
      $region12: #{_lambda_.1} parent=5 // pred_fallthru
        _
      %p533 = scmp.lt.s32.totalorder %s30, 2
      // Predicated region
      $region65: #{_lambda_.1} parent=5 // pred_check
        %p534 = pneg %p533
      $region66: #{_lambda_.1} parent=5 // pred_check_branch
        %536 = sbr.rel (%p534) target = $region68
      $region67: #{_lambda_.1} parent=5 // pred_region
        // Predicated region
        $region69: #{_lambda_.1} parent=67 // pred_check
          %p537 = pneg %p50
        $region70: #{_lambda_.1} parent=67 // pred_check_branch
          %539 = sbr.rel (%p537) target = $region72
        $region71: #{_lambda_.1} parent=67 // pred_region
          %p540 = scmp.lt.s32.totalorder %s30, 1
          %s541 = scalar_select %p540, %s30, 1
          %s542 = smul.addr %s541, 8
          %s543 = scalar_lea.vmem %s0, %s542
        $region72: #{_lambda_.1} parent=67 // pred_fallthru
          _
        // Predicated region
        $region73: #{_lambda_.1} parent=67 // pred_check
          %p544 = pneg %p76
        $region74: #{_lambda_.1} parent=67 // pred_check_branch
          %546 = sbr.rel (%p544) target = $region76
        $region75: #{_lambda_.1} parent=67 // pred_region
          %p547 = scmp.lt.s32.totalorder %s30, 1
          %s548 = scalar_select %p547, %s30, 1
          %s549 = smul.addr %s548, 8
          %s550 = scalar_lea.vmem %s1, %s549
        $region76: #{_lambda_.1} parent=67 // pred_fallthru
          _
      $region68: #{_lambda_.1} parent=5 // pred_fallthru
        _
      %p551 = scmp.le.s32.totalorder 1, %s30
      %p552 = scmp.lt.s32.totalorder %s30, 3
      %p553 = pnand %p551, %p552
      %p554 = pneg %p553
      // Predicated region
      $region77: #{_lambda_.1} parent=5 // pred_check
        _
      $region78: #{_lambda_.1} parent=5 // pred_check_branch
        %556 = sbr.rel (%p553) target = $region80
      $region79: #{_lambda_.1} parent=5 // pred_region
        %s557 = ssub.s32 %s30, 1
        // Predicated region
        $region81: #{_lambda_.1} parent=79 // pred_check
          %p558 = pneg %p124
        $region82: #{_lambda_.1} parent=79 // pred_check_branch
          %560 = sbr.rel (%p558) target = $region84
        $region83: #{_lambda_.1} parent=79 // pred_region
          %561 = dma.done [#allocation4], 384
        $region84: #{_lambda_.1} parent=79 // pred_fallthru
          _
        // Predicated region
        $region85: #{_lambda_.1} parent=79 // pred_check
          %p562 = pneg %p145
        $region86: #{_lambda_.1} parent=79 // pred_check_branch
          %564 = sbr.rel (%p562) target = $region88
        $region87: #{_lambda_.1} parent=79 // pred_region
          %565 = dma.done [#allocation7], 32
        $region88: #{_lambda_.1} parent=79 // pred_fallthru
          _
        // Predicated region
        $region89: #{_lambda_.1} parent=79 // pred_check
          %p566 = pneg %p166
        $region90: #{_lambda_.1} parent=79 // pred_check_branch
          %568 = sbr.rel (%p566) target = $region92
        $region91: #{_lambda_.1} parent=79 // pred_region
          %569 = dma.done [#allocation7], 6144
        $region92: #{_lambda_.1} parent=79 // pred_fallthru
          _
        // Predicated region
        $region93: #{_lambda_.1} parent=79 // pred_check
          %p570 = pneg %p187
        $region94: #{_lambda_.1} parent=79 // pred_check_branch
          %572 = sbr.rel (%p570) target = $region96
        $region95: #{_lambda_.1} parent=79 // pred_region
          %573 = dma.done [#allocation10], 16
        $region96: #{_lambda_.1} parent=79 // pred_fallthru
          _
        // Predicated region
        $region97: #{_lambda_.1} parent=79 // pred_check
          %p574 = pneg %p208
        $region98: #{_lambda_.1} parent=79 // pred_check_branch
          %576 = sbr.rel (%p574) target = $region100
        $region99: #{_lambda_.1} parent=79 // pred_region
          %577 = dma.done [#allocation10], 3072
        $region100: #{_lambda_.1} parent=79 // pred_fallthru
          _
        // Predicated region
        $region101: #{_lambda_.1} parent=79 // pred_check
          %p578 = pneg %p229
        $region102: #{_lambda_.1} parent=79 // pred_check_branch
          %580 = sbr.rel (%p578) target = $region104
        $region103: #{_lambda_.1} parent=79 // pred_region
          %581 = dma.done [#allocation13], 16
        $region104: #{_lambda_.1} parent=79 // pred_fallthru
          _
        // Predicated region
        $region105: #{_lambda_.1} parent=79 // pred_check
          %p582 = pneg %p250
        $region106: #{_lambda_.1} parent=79 // pred_check_branch
          %584 = sbr.rel (%p582) target = $region108
        $region107: #{_lambda_.1} parent=79 // pred_region
          %585 = dma.done [#allocation13], 65536
        $region108: #{_lambda_.1} parent=79 // pred_fallthru
          _
        // Predicated region
        $region109: #{_lambda_.1} parent=79 // pred_check
          %p586 = pneg %p271
        $region110: #{_lambda_.1} parent=79 // pred_check_branch
          %588 = sbr.rel (%p586) target = $region112
        $region111: #{_lambda_.1} parent=79 // pred_region
          %589 = dma.done [#allocation16], 128
        $region112: #{_lambda_.1} parent=79 // pred_fallthru
          _
        // Predicated region
        $region113: #{_lambda_.1} parent=79 // pred_check
          %p590 = pneg %p292
        $region114: #{_lambda_.1} parent=79 // pred_check_branch
          %592 = sbr.rel (%p590) target = $region116
        $region115: #{_lambda_.1} parent=79 // pred_region
          %593 = dma.done [#allocation16], 32768
        $region116: #{_lambda_.1} parent=79 // pred_fallthru
          _
        // Predicated region
        $region117: #{_lambda_.1} parent=79 // pred_check
          %p594 = pneg %p313
        $region118: #{_lambda_.1} parent=79 // pred_check_branch
          %596 = sbr.rel (%p594) target = $region120
        $region119: #{_lambda_.1} parent=79 // pred_region
          %597 = dma.done [#allocation19], 64
        $region120: #{_lambda_.1} parent=79 // pred_fallthru
          _
        // Predicated region
        $region121: #{_lambda_.1} parent=79 // pred_check
          %p598 = pneg %p355
        $region122: #{_lambda_.1} parent=79 // pred_check_branch
          %600 = sbr.rel (%p598) target = $region124
        $region123: #{_lambda_.1} parent=79 // pred_region
          %601 = dma.done [#allocation19], 16
        $region124: #{_lambda_.1} parent=79 // pred_fallthru
          _
        %p602 = scmp.lt.s32.totalorder %s35, 1
        %s603 = scalar_select %p602, %s35, 1
        %s604 = smul.addr %s603, 8
        %s605 = scalar_lea.vmem %s0, %s604
        %p606 = pneg %p56
        %p607 = pneg %p53
        %p608 = scmp.lt.s32.totalorder %s35, 1
        %s609 = scalar_select %p608, %s35, 1
        %s610 = smul.addr %s609, 8
        %s611 = scalar_lea.vmem %s1, %s610
        %p612 = pneg %p82
        %p613 = pneg %p79
        %p614 = pneg %p103
        %p615 = pneg %p100
        %p616 = pneg %p124
        %p617 = pneg %p121
        %p618 = pneg %p145
        %p619 = pneg %p142
        %p620 = pneg %p166
        %p621 = pneg %p163
        %p622 = pneg %p187
        %p623 = pneg %p184
        %p624 = pneg %p208
        %p625 = pneg %p205
        %p626 = pneg %p229
        %p627 = pneg %p226
        %p628 = pneg %p250
        %p629 = pneg %p247
        %p630 = pneg %p271
        %p631 = pneg %p268
        %p632 = pneg %p292
        %p633 = pneg %p289
        %p634 = pneg %p313
        %p635 = pneg %p310
        %p636 = pneg %p334
        %p637 = pneg %p331
        %p638 = pneg %p355
        %p639 = pneg %p352
        %p640 = pneg %p381
        %p641 = pneg %p378
        %s642 = sand.u32 %s368, 1
        %s643 = scalar_lea.sflag [#allocation5], %s642
        %s644 = sand.u32 %s368, 1
        %s645 = scalar_lea.vmem [#allocation21], %s644
        %p646 = scmp.lt.s32.totalorder %s35, 1
        %s647 = scalar_select %p646, %s35, 1
        %s648 = smul.addr %s647, 8
        %s649 = scalar_lea.vmem %s0, %s648
        %p650 = scmp.lt.s32.totalorder %s35, 1
        %s651 = scalar_select %p650, %s35, 1
        %s652 = smul.addr %s651, 8
        %s653 = scalar_lea.vmem %s1, %s652
        %655 = vst [vmem:[#allocation2] sm:$0xff] 0.0
        %656 = vst [vmem:[#allocation2 + $0x8] sm:$0xff] 0.0
        %657 = vst [vmem:[#allocation2 + $0x10] sm:$0x3] 0.0
        %658 = vst [vmem:[#allocation2 + $0x18] sm:$0x3] 0.0
        %v659 = vld [vmem:[%s649] sm:$0xff]
        %v661 = vrot.slane %v659, 7
        %vm663 = vcmask 39937
        %664 = vst.msk [vmem:[#allocation2] sm:$0xfe] %vm663, %v661
        %vm665 = vcmask 32768
        %666 = vst.msk [vmem:[#allocation2 + $0x10] sm:$0x1] %vm665, %v661
        %v667 = vld [vmem:[%s653] sm:$0xff]
        %v669 = vrot.slane %v667, 7
        %vm671 = vcmask 48129
        %672 = vst.msk [vmem:[#allocation2 + $0x8] sm:$0xfe] %vm671, %v669
        %vm673 = vcmask 40960
        %674 = vst.msk [vmem:[#allocation2 + $0x18] sm:$0x1] %vm673, %v669
        %v675 = vld [vmem:[#allocation2] sm:$0xff]
        %v676 = vld [vmem:[#allocation2 + $0x10] sm:$0x3]
        %v677 = vpack.c.bf16 %v676, %v675
        %v678 = vld [vmem:[%s2] sm:$0x77]
        %s679 = scalar_lea.vmem %s2, 8
        %v680 = vld [vmem:[%s679] sm:$0x77]
        %v682 = vshrl.u32 %v677, 16
        %v684 = vshll.u32 %v677, 16
        %v686 = vrot.slane %v684, 1
        %v687 = vor.u32 %v682, %v686
        %v689 = vunpack.c.l.b16 %v680
        %v690 = vunpack.c.h.b16 %v680
        %v691 = vpack.c.b16 %v689, %v689
        %v692 = vpack.c.b16 %v690, %v690
        %vm693 = vcmask 39936
        %v695 = vsel %vm693, %v687, 0
        %vm697 = vcmask 1041408
        %vm698 = vcmask 1042432
        %v699 = vsel %vm697, 4294967295, 65535
        %v700 = vsel %vm698, %v699, 0
        %v702 = vand.u32 %v691, %v700
        %v705 = vand.u32 %v692, %v700
        %707 = vmatprep.subr.bf16.mxu0 0
        %708 = vmatpush1.bf16.msra.mxu0 0
        %709 = vmatprep.subr.bf16.mxu0 0
        %710 = vmatpush1.bf16.msra.mxu0 0
        %711 = vmatprep.subr.bf16.mxu0 0
        %712 = vmatpush1.bf16.msra.mxu0 0
        %713 = vmatprep.subr.bf16.mxu0 0
        %714 = vmatpush1.bf16.msra.mxu0 0
        %715 = vmatprep.subr.bf16.mxu0 0
        %716 = vmatpush1.bf16.msra.mxu0 0
        %717 = vmatprep.subr.bf16.mxu0 0
        %718 = vmatpush1.bf16.msra.mxu0 0
        %719 = vmatprep.subr.bf16.mxu0 0
        %720 = vmatpush1.bf16.msra.mxu0 0
        %721 = vmatprep.subr.bf16.mxu0 %v705
        %722 = vmatpush1.bf16.msra.mxu0 %v702
        %723 = vmatprep.subr.bf16.mxu0 0
        %724 = vmatpush2.bf16.msra.mxu0 0
        %725 = vmatprep.subr.bf16.mxu0 0
        %726 = vmatpush2.bf16.msra.mxu0 0
        %727 = vmatprep.subr.bf16.mxu0 0
        %728 = vmatpush2.bf16.msra.mxu0 0
        %729 = vmatprep.subr.bf16.mxu0 0
        %730 = vmatpush2.bf16.msra.mxu0 0
        %731 = vmatprep.subr.bf16.mxu0 0
        %732 = vmatpush2.bf16.msra.mxu0 0
        %733 = vmatprep.subr.bf16.mxu0 0
        %734 = vmatpush2.bf16.msra.mxu0 0
        %735 = vmatprep.subr.bf16.mxu0 0
        %736 = vmatpush2.bf16.msra.mxu0 0
        %737 = vmatprep.subr.bf16.mxu0 0
        %738 = vmatpush2.bf16.msra.mxu0 0
        %739 = vmatprep.mubr.bf16.mxu0 0
        %740 = vmatmul.mubr.bf16.gmra.mxu0 %v695
        %v741 = vpop.f32.mrf.mxu0
        %v742 = vadd.f32 0.0, %v741
        %v743 = vpop.f32.mrf.mxu0
        %v744 = vadd.f32 0.0, %v743
        %v745 = vpop.f32.mrf.mxu0
        %v746 = vpop.f32.mrf.mxu0
        %747 = vdwg.mxu0
        %v749 = vunpack.c.l.b16 %v678
        %v750 = vunpack.c.h.b16 %v678
        %v751 = vpack.c.b16 %v749, %v749
        %v752 = vpack.c.b16 %v750, %v750
        %v753 = vsel %vm693, %v677, 0
        %v756 = vand.u32 %v751, %v700
        %v759 = vand.u32 %v752, %v700
        %761 = vmatprep.subr.bf16.mxu0 0
        %762 = vmatpush1.bf16.msra.mxu0 0
        %763 = vmatprep.subr.bf16.mxu0 0
        %764 = vmatpush1.bf16.msra.mxu0 0
        %765 = vmatprep.subr.bf16.mxu0 0
        %766 = vmatpush1.bf16.msra.mxu0 0
        %767 = vmatprep.subr.bf16.mxu0 0
        %768 = vmatpush1.bf16.msra.mxu0 0
        %769 = vmatprep.subr.bf16.mxu0 0
        %770 = vmatpush1.bf16.msra.mxu0 0
        %771 = vmatprep.subr.bf16.mxu0 0
        %772 = vmatpush1.bf16.msra.mxu0 0
        %773 = vmatprep.subr.bf16.mxu0 0
        %774 = vmatpush1.bf16.msra.mxu0 0
        %775 = vmatprep.subr.bf16.mxu0 %v759
        %776 = vmatpush1.bf16.msra.mxu0 %v756
        %777 = vmatprep.subr.bf16.mxu0 0
        %778 = vmatpush2.bf16.msra.mxu0 0
        %779 = vmatprep.subr.bf16.mxu0 0
        %780 = vmatpush2.bf16.msra.mxu0 0
        %781 = vmatprep.subr.bf16.mxu0 0
        %782 = vmatpush2.bf16.msra.mxu0 0
        %783 = vmatprep.subr.bf16.mxu0 0
        %784 = vmatpush2.bf16.msra.mxu0 0
        %785 = vmatprep.subr.bf16.mxu0 0
        %786 = vmatpush2.bf16.msra.mxu0 0
        %787 = vmatprep.subr.bf16.mxu0 0
        %788 = vmatpush2.bf16.msra.mxu0 0
        %789 = vmatprep.subr.bf16.mxu0 0
        %790 = vmatpush2.bf16.msra.mxu0 0
        %791 = vmatprep.subr.bf16.mxu0 0
        %792 = vmatpush2.bf16.msra.mxu0 0
        %793 = vmatprep.mubr.bf16.mxu0 0
        %794 = vmatmul.mubr.bf16.gmra.mxu0 %v753
        %v795 = vpop.f32.mrf.mxu0
        %v796 = vadd.f32 %v742, %v795
        %v797 = vpop.f32.mrf.mxu0
        %v798 = vadd.f32 %v744, %v797
        %v799 = vpop.f32.mrf.mxu0
        %v800 = vpop.f32.mrf.mxu0
        %801 = vdwg.mxu0
        %s802 = scalar_lea.vmem %s2, 16
        %v803 = vld [vmem:[%s802] sm:$0x77]
        %v805 = vrot.slane %v677, 1
        %v807 = vunpack.c.l.b16 %v803
        %v808 = vunpack.c.h.b16 %v803
        %v809 = vpack.c.b16 %v807, %v807
        %v810 = vpack.c.b16 %v808, %v808
        %v812 = vsel %vm693, %v805, 0
        %v815 = vand.u32 %v809, %v700
        %v818 = vand.u32 %v810, %v700
        %820 = vmatprep.subr.bf16.mxu0 0
        %821 = vmatpush1.bf16.msra.mxu0 0
        %822 = vmatprep.subr.bf16.mxu0 0
        %823 = vmatpush1.bf16.msra.mxu0 0
        %824 = vmatprep.subr.bf16.mxu0 0
        %825 = vmatpush1.bf16.msra.mxu0 0
        %826 = vmatprep.subr.bf16.mxu0 0
        %827 = vmatpush1.bf16.msra.mxu0 0
        %828 = vmatprep.subr.bf16.mxu0 0
        %829 = vmatpush1.bf16.msra.mxu0 0
        %830 = vmatprep.subr.bf16.mxu0 0
        %831 = vmatpush1.bf16.msra.mxu0 0
        %832 = vmatprep.subr.bf16.mxu0 0
        %833 = vmatpush1.bf16.msra.mxu0 0
        %834 = vmatprep.subr.bf16.mxu0 %v818
        %835 = vmatpush1.bf16.msra.mxu0 %v815
        %836 = vmatprep.subr.bf16.mxu0 0
        %837 = vmatpush2.bf16.msra.mxu0 0
        %838 = vmatprep.subr.bf16.mxu0 0
        %839 = vmatpush2.bf16.msra.mxu0 0
        %840 = vmatprep.subr.bf16.mxu0 0
        %841 = vmatpush2.bf16.msra.mxu0 0
        %842 = vmatprep.subr.bf16.mxu0 0
        %843 = vmatpush2.bf16.msra.mxu0 0
        %844 = vmatprep.subr.bf16.mxu0 0
        %845 = vmatpush2.bf16.msra.mxu0 0
        %846 = vmatprep.subr.bf16.mxu0 0
        %847 = vmatpush2.bf16.msra.mxu0 0
        %848 = vmatprep.subr.bf16.mxu0 0
        %849 = vmatpush2.bf16.msra.mxu0 0
        %850 = vmatprep.subr.bf16.mxu0 0
        %851 = vmatpush2.bf16.msra.mxu0 0
        %852 = vmatprep.mubr.bf16.mxu0 0
        %853 = vmatmul.mubr.bf16.gmra.mxu0 %v812
        %v854 = vpop.f32.mrf.mxu0
        %v855 = vadd.f32 0.0, %v854
        %v856 = vpop.f32.mrf.mxu0
        %v857 = vadd.f32 0.0, %v856
        %v858 = vpop.f32.mrf.mxu0
        %v859 = vpop.f32.mrf.mxu0
        %860 = vdwg.mxu0
        %v861 = vadd.f32 %v796, %v855
        %v862 = vadd.f32 %v798, %v857
        %v863 = vld [vmem:[#allocation2 + $0x8] sm:$0xff]
        %v864 = vld [vmem:[#allocation2 + $0x18] sm:$0x3]
        %v865 = vpack.c.bf16 %v864, %v863
        %v866 = vld [vmem:[#allocation3] sm:$0x77]
        %s867 = scalar_lea.vmem [#allocation3], 8
        %v868 = vld [vmem:[%s867] sm:$0x77]
        %v870 = vshrl.u32 %v865, 16
        %v872 = vshll.u32 %v865, 16
        %v874 = vrot.slane %v872, 1
        %v875 = vor.u32 %v870, %v874
        %v877 = vunpack.c.l.b16 %v868
        %v878 = vunpack.c.h.b16 %v868
        %v879 = vpack.c.b16 %v877, %v877
        %v880 = vpack.c.b16 %v878, %v878
        %vm881 = vcmask 48128
        %v883 = vsel %vm881, %v875, 0
        %v886 = vsel %vm698, %v879, 0
        %v889 = vsel %vm698, %v880, 0
        %891 = vmatprep.subr.bf16.mxu0 0
        %892 = vmatpush1.bf16.msra.mxu0 0
        %893 = vmatprep.subr.bf16.mxu0 0
        %894 = vmatpush1.bf16.msra.mxu0 0
        %895 = vmatprep.subr.bf16.mxu0 0
        %896 = vmatpush1.bf16.msra.mxu0 0
        %897 = vmatprep.subr.bf16.mxu0 0
        %898 = vmatpush1.bf16.msra.mxu0 0
        %899 = vmatprep.subr.bf16.mxu0 0
        %900 = vmatpush1.bf16.msra.mxu0 0
        %901 = vmatprep.subr.bf16.mxu0 0
        %902 = vmatpush1.bf16.msra.mxu0 0
        %903 = vmatprep.subr.bf16.mxu0 0
        %904 = vmatpush1.bf16.msra.mxu0 0
        %905 = vmatprep.subr.bf16.mxu0 %v889
        %906 = vmatpush1.bf16.msra.mxu0 %v886
        %907 = vmatprep.subr.bf16.mxu0 0
        %908 = vmatpush2.bf16.msra.mxu0 0
        %909 = vmatprep.subr.bf16.mxu0 0
        %910 = vmatpush2.bf16.msra.mxu0 0
        %911 = vmatprep.subr.bf16.mxu0 0
        %912 = vmatpush2.bf16.msra.mxu0 0
        %913 = vmatprep.subr.bf16.mxu0 0
        %914 = vmatpush2.bf16.msra.mxu0 0
        %915 = vmatprep.subr.bf16.mxu0 0
        %916 = vmatpush2.bf16.msra.mxu0 0
        %917 = vmatprep.subr.bf16.mxu0 0
        %918 = vmatpush2.bf16.msra.mxu0 0
        %919 = vmatprep.subr.bf16.mxu0 0
        %920 = vmatpush2.bf16.msra.mxu0 0
        %921 = vmatprep.subr.bf16.mxu0 0
        %922 = vmatpush2.bf16.msra.mxu0 0
        %923 = vmatprep.mubr.bf16.mxu0 0
        %924 = vmatmul.mubr.bf16.gmra.mxu0 %v883
        %v925 = vpop.f32.mrf.mxu0
        %v926 = vadd.f32 0.0, %v925
        %v927 = vpop.f32.mrf.mxu0
        %v928 = vadd.f32 0.0, %v927
        %v929 = vpop.f32.mrf.mxu0
        %v930 = vpop.f32.mrf.mxu0
        %931 = vdwg.mxu0
        %v933 = vunpack.c.l.b16 %v866
        %v934 = vunpack.c.h.b16 %v866
        %v935 = vpack.c.b16 %v933, %v933
        %v936 = vpack.c.b16 %v934, %v934
        %v937 = vsel %vm881, %v865, 0
        %v940 = vsel %vm698, %v935, 0
        %v943 = vsel %vm698, %v936, 0
        %945 = vmatprep.subr.bf16.mxu0 0
        %946 = vmatpush1.bf16.msra.mxu0 0
        %947 = vmatprep.subr.bf16.mxu0 0
        %948 = vmatpush1.bf16.msra.mxu0 0
        %949 = vmatprep.subr.bf16.mxu0 0
        %950 = vmatpush1.bf16.msra.mxu0 0
        %951 = vmatprep.subr.bf16.mxu0 0
        %952 = vmatpush1.bf16.msra.mxu0 0
        %953 = vmatprep.subr.bf16.mxu0 0
        %954 = vmatpush1.bf16.msra.mxu0 0
        %955 = vmatprep.subr.bf16.mxu0 0
        %956 = vmatpush1.bf16.msra.mxu0 0
        %957 = vmatprep.subr.bf16.mxu0 0
        %958 = vmatpush1.bf16.msra.mxu0 0
        %959 = vmatprep.subr.bf16.mxu0 %v943
        %960 = vmatpush1.bf16.msra.mxu0 %v940
        %961 = vmatprep.subr.bf16.mxu0 0
        %962 = vmatpush2.bf16.msra.mxu0 0
        %963 = vmatprep.subr.bf16.mxu0 0
        %964 = vmatpush2.bf16.msra.mxu0 0
        %965 = vmatprep.subr.bf16.mxu0 0
        %966 = vmatpush2.bf16.msra.mxu0 0
        %967 = vmatprep.subr.bf16.mxu0 0
        %968 = vmatpush2.bf16.msra.mxu0 0
        %969 = vmatprep.subr.bf16.mxu0 0
        %970 = vmatpush2.bf16.msra.mxu0 0
        %971 = vmatprep.subr.bf16.mxu0 0
        %972 = vmatpush2.bf16.msra.mxu0 0
        %973 = vmatprep.subr.bf16.mxu0 0
        %974 = vmatpush2.bf16.msra.mxu0 0
        %975 = vmatprep.subr.bf16.mxu0 0
        %976 = vmatpush2.bf16.msra.mxu0 0
        %977 = vmatprep.mubr.bf16.mxu0 0
        %978 = vmatmul.mubr.bf16.gmra.mxu0 %v937
        %v979 = vpop.f32.mrf.mxu0
        %v980 = vadd.f32 %v926, %v979
        %v981 = vpop.f32.mrf.mxu0
        %v982 = vadd.f32 %v928, %v981
        %v983 = vpop.f32.mrf.mxu0
        %v984 = vpop.f32.mrf.mxu0
        %985 = vdwg.mxu0
        %s986 = scalar_lea.vmem [#allocation3], 16
        %v987 = vld [vmem:[%s986] sm:$0x77]
        %v989 = vrot.slane %v865, 1
        %v991 = vunpack.c.l.b16 %v987
        %v992 = vunpack.c.h.b16 %v987
        %v993 = vpack.c.b16 %v991, %v991
        %v994 = vpack.c.b16 %v992, %v992
        %v996 = vsel %vm881, %v989, 0
        %v999 = vsel %vm698, %v993, 0
        %v1002 = vsel %vm698, %v994, 0
        %1004 = vmatprep.subr.bf16.mxu0 0
        %1005 = vmatpush1.bf16.msra.mxu0 0
        %1006 = vmatprep.subr.bf16.mxu0 0
        %1007 = vmatpush1.bf16.msra.mxu0 0
        %1008 = vmatprep.subr.bf16.mxu0 0
        %1009 = vmatpush1.bf16.msra.mxu0 0
        %1010 = vmatprep.subr.bf16.mxu0 0
        %1011 = vmatpush1.bf16.msra.mxu0 0
        %1012 = vmatprep.subr.bf16.mxu0 0
        %1013 = vmatpush1.bf16.msra.mxu0 0
        %1014 = vmatprep.subr.bf16.mxu0 0
        %1015 = vmatpush1.bf16.msra.mxu0 0
        %1016 = vmatprep.subr.bf16.mxu0 0
        %1017 = vmatpush1.bf16.msra.mxu0 0
        %1018 = vmatprep.subr.bf16.mxu0 %v1002
        %1019 = vmatpush1.bf16.msra.mxu0 %v999
        %1020 = vmatprep.subr.bf16.mxu0 0
        %1021 = vmatpush2.bf16.msra.mxu0 0
        %1022 = vmatprep.subr.bf16.mxu0 0
        %1023 = vmatpush2.bf16.msra.mxu0 0
        %1024 = vmatprep.subr.bf16.mxu0 0
        %1025 = vmatpush2.bf16.msra.mxu0 0
        %1026 = vmatprep.subr.bf16.mxu0 0
        %1027 = vmatpush2.bf16.msra.mxu0 0
        %1028 = vmatprep.subr.bf16.mxu0 0
        %1029 = vmatpush2.bf16.msra.mxu0 0
        %1030 = vmatprep.subr.bf16.mxu0 0
        %1031 = vmatpush2.bf16.msra.mxu0 0
        %1032 = vmatprep.subr.bf16.mxu0 0
        %1033 = vmatpush2.bf16.msra.mxu0 0
        %1034 = vmatprep.subr.bf16.mxu0 0
        %1035 = vmatpush2.bf16.msra.mxu0 0
        %1036 = vmatprep.mubr.bf16.mxu0 0
        %1037 = vmatmul.mubr.bf16.gmra.mxu0 %v996
        %v1038 = vpop.f32.mrf.mxu0
        %v1039 = vadd.f32 0.0, %v1038
        %v1040 = vpop.f32.mrf.mxu0
        %v1041 = vadd.f32 0.0, %v1040
        %v1042 = vpop.f32.mrf.mxu0
        %v1043 = vpop.f32.mrf.mxu0
        %1044 = vdwg.mxu0
        %v1045 = vadd.f32 %v980, %v1039
        %v1046 = vadd.f32 %v982, %v1041
        %v1047 = vadd.f32 %v861, %v1045
        %v1048 = vadd.f32 %v862, %v1046
        %v1049 = vld [vmem:[#allocation6] sm:$0x3]
        %v1051 = vlaneseq
        %v1052 = vshrl.u32 %v1051, 7
        %v1053 = vsub.s32 0, %v1052
        %v1054 = vrot.slane %v1049, %v1053
        %v1055 = vlaneseq
        %v1056 = vshrl.u32 %v1055, 7
        %v1057 = vsub.s32 1, %v1056
        %v1058 = vrot.slane %v1049, %v1057
        %v1061 = vadd.f32 %v1047, %v1054
        %v1062 = vadd.f32 %v1048, %v1058
        %v1063 = vmax.f32 %v1061, 0.0
        %v1064 = vmax.f32 %v1062, 0.0
        %v1067 = vrot.slane %v1063, 7
        %v1068 = vrot.slane %v1064, 7
        %1071 = vst [vmem:[#allocation2] sm:$0xfe] %v1067
        %1072 = vst [vmem:[#allocation2 + $0x8] sm:$0xfe] %v1068
        %1073 = vst [vmem:[#allocation2 + $0x10] sm:$0x1] %v1067
        %1074 = vst [vmem:[#allocation2 + $0x18] sm:$0x1] %v1068
        %v1075 = vld [vmem:[#allocation2] sm:$0xff]
        %v1076 = vld [vmem:[#allocation2 + $0x8] sm:$0xff]
        %v1077 = vld [vmem:[#allocation2 + $0x10] sm:$0x3]
        %v1078 = vld [vmem:[#allocation2 + $0x18] sm:$0x3]
        %v1079 = vpack.c.bf16 %v1077, %v1075
        %v1080 = vpack.c.bf16 %v1078, %v1076
        %v1081 = vld [vmem:[#allocation8] sm:$0xf]
        %v1082 = vld [vmem:[#allocation8 + $0x4] sm:$0xf]
        %v1083 = vld [vmem:[#allocation8 + $0x8] sm:$0xf]
        %v1084 = vld [vmem:[#allocation8 + $0xc] sm:$0xf]
        %v1085 = vld [vmem:[#allocation8 + $0x10] sm:$0xf]
        %v1086 = vld [vmem:[#allocation8 + $0x14] sm:$0xf]
        %v1087 = vld [vmem:[#allocation8 + $0x18] sm:$0xf]
        %v1088 = vld [vmem:[#allocation8 + $0x1c] sm:$0xf]
        %v1089 = vld [vmem:[#allocation8 + $0x20] sm:$0xf]
        %v1090 = vld [vmem:[#allocation8 + $0x24] sm:$0xf]
        %v1091 = vld [vmem:[#allocation8 + $0x28] sm:$0xf]
        %v1092 = vld [vmem:[#allocation8 + $0x2c] sm:$0xf]
        %v1093 = vld [vmem:[#allocation8 + $0x30] sm:$0xf]
        %v1094 = vld [vmem:[#allocation8 + $0x34] sm:$0xf]
        %v1095 = vld [vmem:[#allocation8 + $0x38] sm:$0xf]
        %v1096 = vld [vmem:[#allocation8 + $0x3c] sm:$0xf]
        %v1097 = vld [vmem:[#allocation8 + $0x40] sm:$0xf]
        %v1098 = vld [vmem:[#allocation8 + $0x44] sm:$0xf]
        %v1099 = vld [vmem:[#allocation8 + $0x48] sm:$0xf]
        %v1100 = vld [vmem:[#allocation8 + $0x4c] sm:$0xf]
        %v1101 = vld [vmem:[#allocation8 + $0x50] sm:$0xf]
        %v1102 = vld [vmem:[#allocation8 + $0x54] sm:$0xf]
        %v1103 = vld [vmem:[#allocation8 + $0x58] sm:$0xf]
        %v1104 = vld [vmem:[#allocation8 + $0x5c] sm:$0xf]
        %v1105 = vld [vmem:[#allocation8 + $0x60] sm:$0xf]
        %v1106 = vld [vmem:[#allocation8 + $0x64] sm:$0xf]
        %v1107 = vld [vmem:[#allocation8 + $0x68] sm:$0xf]
        %v1108 = vld [vmem:[#allocation8 + $0x6c] sm:$0xf]
        %v1109 = vld [vmem:[#allocation8 + $0x70] sm:$0xf]
        %v1110 = vld [vmem:[#allocation8 + $0x74] sm:$0xf]
        %v1111 = vld [vmem:[#allocation8 + $0x78] sm:$0xf]
        %v1112 = vld [vmem:[#allocation8 + $0x7c] sm:$0xf]
        %s1113 = scalar_lea.vmem [#allocation8], 128
        %v1114 = vld [vmem:[%s1113] sm:$0xf]
        %v1115 = vld [vmem:[%s1113 + $0x4] sm:$0xf]
        %v1116 = vld [vmem:[%s1113 + $0x8] sm:$0xf]
        %v1117 = vld [vmem:[%s1113 + $0xc] sm:$0xf]
        %v1118 = vld [vmem:[%s1113 + $0x10] sm:$0xf]
        %v1119 = vld [vmem:[%s1113 + $0x14] sm:$0xf]
        %v1120 = vld [vmem:[%s1113 + $0x18] sm:$0xf]
        %v1121 = vld [vmem:[%s1113 + $0x1c] sm:$0xf]
        %v1122 = vld [vmem:[%s1113 + $0x20] sm:$0xf]
        %v1123 = vld [vmem:[%s1113 + $0x24] sm:$0xf]
        %v1124 = vld [vmem:[%s1113 + $0x28] sm:$0xf]
        %v1125 = vld [vmem:[%s1113 + $0x2c] sm:$0xf]
        %v1126 = vld [vmem:[%s1113 + $0x30] sm:$0xf]
        %v1127 = vld [vmem:[%s1113 + $0x34] sm:$0xf]
        %v1128 = vld [vmem:[%s1113 + $0x38] sm:$0xf]
        %v1129 = vld [vmem:[%s1113 + $0x3c] sm:$0xf]
        %v1130 = vld [vmem:[%s1113 + $0x40] sm:$0xf]
        %v1131 = vld [vmem:[%s1113 + $0x44] sm:$0xf]
        %v1132 = vld [vmem:[%s1113 + $0x48] sm:$0xf]
        %v1133 = vld [vmem:[%s1113 + $0x4c] sm:$0xf]
        %v1134 = vld [vmem:[%s1113 + $0x50] sm:$0xf]
        %v1135 = vld [vmem:[%s1113 + $0x54] sm:$0xf]
        %v1136 = vld [vmem:[%s1113 + $0x58] sm:$0xf]
        %v1137 = vld [vmem:[%s1113 + $0x5c] sm:$0xf]
        %v1138 = vld [vmem:[%s1113 + $0x60] sm:$0xf]
        %v1139 = vld [vmem:[%s1113 + $0x64] sm:$0xf]
        %v1140 = vld [vmem:[%s1113 + $0x68] sm:$0xf]
        %v1141 = vld [vmem:[%s1113 + $0x6c] sm:$0xf]
        %v1142 = vld [vmem:[%s1113 + $0x70] sm:$0xf]
        %v1143 = vld [vmem:[%s1113 + $0x74] sm:$0xf]
        %v1144 = vld [vmem:[%s1113 + $0x78] sm:$0xf]
        %v1145 = vld [vmem:[%s1113 + $0x7c] sm:$0xf]
        %v1147 = vshrl.u32 %v1079, 16
        %v1149 = vshll.u32 %v1079, 16
        %v1151 = vrot.slane %v1149, 1
        %v1152 = vor.u32 %v1147, %v1151
        %v1154 = vshrl.u32 %v1080, 16
        %v1156 = vshll.u32 %v1080, 16
        %v1158 = vrot.slane %v1156, 1
        %v1159 = vor.u32 %v1154, %v1158
        %v1194 = vunpack.c.l.b16 %v1114
        %v1195 = vunpack.c.l.b16 %v1115
        %v1196 = vunpack.c.l.b16 %v1116
        %v1197 = vunpack.c.l.b16 %v1117
        %v1198 = vunpack.c.l.b16 %v1118
        %v1199 = vunpack.c.l.b16 %v1119
        %v1200 = vunpack.c.l.b16 %v1120
        %v1201 = vunpack.c.l.b16 %v1121
        %v1202 = vunpack.c.l.b16 %v1122
        %v1203 = vunpack.c.l.b16 %v1123
        %v1204 = vunpack.c.l.b16 %v1124
        %v1205 = vunpack.c.l.b16 %v1125
        %v1206 = vunpack.c.l.b16 %v1126
        %v1207 = vunpack.c.l.b16 %v1127
        %v1208 = vunpack.c.l.b16 %v1128
        %v1209 = vunpack.c.l.b16 %v1129
        %v1210 = vunpack.c.l.b16 %v1130
        %v1211 = vunpack.c.l.b16 %v1131
        %v1212 = vunpack.c.l.b16 %v1132
        %v1213 = vunpack.c.l.b16 %v1133
        %v1214 = vunpack.c.l.b16 %v1134
        %v1215 = vunpack.c.l.b16 %v1135
        %v1216 = vunpack.c.l.b16 %v1136
        %v1217 = vunpack.c.l.b16 %v1137
        %v1218 = vunpack.c.l.b16 %v1138
        %v1219 = vunpack.c.l.b16 %v1139
        %v1220 = vunpack.c.l.b16 %v1140
        %v1221 = vunpack.c.l.b16 %v1141
        %v1222 = vunpack.c.l.b16 %v1142
        %v1223 = vunpack.c.l.b16 %v1143
        %v1224 = vunpack.c.l.b16 %v1144
        %v1225 = vunpack.c.l.b16 %v1145
        %v1226 = vpack.c.b16 %v1195, %v1194
        %v1227 = vpack.c.b16 %v1197, %v1196
        %v1228 = vpack.c.b16 %v1199, %v1198
        %v1229 = vpack.c.b16 %v1201, %v1200
        %v1230 = vpack.c.b16 %v1203, %v1202
        %v1231 = vpack.c.b16 %v1205, %v1204
        %v1232 = vpack.c.b16 %v1207, %v1206
        %v1233 = vpack.c.b16 %v1209, %v1208
        %v1234 = vpack.c.b16 %v1211, %v1210
        %v1235 = vpack.c.b16 %v1213, %v1212
        %v1236 = vpack.c.b16 %v1215, %v1214
        %v1237 = vpack.c.b16 %v1217, %v1216
        %v1238 = vpack.c.b16 %v1219, %v1218
        %v1239 = vpack.c.b16 %v1221, %v1220
        %v1240 = vpack.c.b16 %v1223, %v1222
        %v1241 = vpack.c.b16 %v1225, %v1224
        %1258 = vmatprep.subr.bf16.mxu0 0
        %1259 = vmatpush1.bf16.msra.mxu0 %v1233
        %1260 = vmatprep.subr.bf16.mxu0 0
        %1261 = vmatpush1.bf16.msra.mxu0 %v1232
        %1262 = vmatprep.subr.bf16.mxu0 0
        %1263 = vmatpush1.bf16.msra.mxu0 %v1231
        %1264 = vmatprep.subr.bf16.mxu0 0
        %1265 = vmatpush1.bf16.msra.mxu0 %v1230
        %1266 = vmatprep.subr.bf16.mxu0 0
        %1267 = vmatpush1.bf16.msra.mxu0 %v1229
        %1268 = vmatprep.subr.bf16.mxu0 0
        %1269 = vmatpush1.bf16.msra.mxu0 %v1228
        %1270 = vmatprep.subr.bf16.mxu0 0
        %1271 = vmatpush1.bf16.msra.mxu0 %v1227
        %1272 = vmatprep.subr.bf16.mxu0 0
        %1273 = vmatpush1.bf16.msra.mxu0 %v1226
        %1274 = vmatprep.subr.bf16.mxu0 0
        %1275 = vmatpush2.bf16.msra.mxu0 %v1241
        %1276 = vmatprep.subr.bf16.mxu0 0
        %1277 = vmatpush2.bf16.msra.mxu0 %v1240
        %1278 = vmatprep.subr.bf16.mxu0 0
        %1279 = vmatpush2.bf16.msra.mxu0 %v1239
        %1280 = vmatprep.subr.bf16.mxu0 0
        %1281 = vmatpush2.bf16.msra.mxu0 %v1238
        %1282 = vmatprep.subr.bf16.mxu0 0
        %1283 = vmatpush2.bf16.msra.mxu0 %v1237
        %1284 = vmatprep.subr.bf16.mxu0 0
        %1285 = vmatpush2.bf16.msra.mxu0 %v1236
        %1286 = vmatprep.subr.bf16.mxu0 0
        %1287 = vmatpush2.bf16.msra.mxu0 %v1235
        %1288 = vmatprep.subr.bf16.mxu0 0
        %1289 = vmatpush2.bf16.msra.mxu0 %v1234
        %1290 = vmatprep.mubr.bf16.mxu0 %v1159
        %1291 = vmatmul.mubr.bf16.gmra.mxu0 %v1152
        %v1292 = vpop.f32.mrf.mxu0
        %v1293 = vadd.f32 0.0, %v1292
        %v1294 = vpop.f32.mrf.mxu0
        %v1295 = vpop.f32.mrf.mxu0
        %v1296 = vpop.f32.mrf.mxu0
        %1297 = vdwg.mxu0
        %v1330 = vunpack.c.l.b16 %v1081
        %v1331 = vunpack.c.l.b16 %v1082
        %v1332 = vunpack.c.l.b16 %v1083
        %v1333 = vunpack.c.l.b16 %v1084
        %v1334 = vunpack.c.l.b16 %v1085
        %v1335 = vunpack.c.l.b16 %v1086
        %v1336 = vunpack.c.l.b16 %v1087
        %v1337 = vunpack.c.l.b16 %v1088
        %v1338 = vunpack.c.l.b16 %v1089
        %v1339 = vunpack.c.l.b16 %v1090
        %v1340 = vunpack.c.l.b16 %v1091
        %v1341 = vunpack.c.l.b16 %v1092
        %v1342 = vunpack.c.l.b16 %v1093
        %v1343 = vunpack.c.l.b16 %v1094
        %v1344 = vunpack.c.l.b16 %v1095
        %v1345 = vunpack.c.l.b16 %v1096
        %v1346 = vunpack.c.l.b16 %v1097
        %v1347 = vunpack.c.l.b16 %v1098
        %v1348 = vunpack.c.l.b16 %v1099
        %v1349 = vunpack.c.l.b16 %v1100
        %v1350 = vunpack.c.l.b16 %v1101
        %v1351 = vunpack.c.l.b16 %v1102
        %v1352 = vunpack.c.l.b16 %v1103
        %v1353 = vunpack.c.l.b16 %v1104
        %v1354 = vunpack.c.l.b16 %v1105
        %v1355 = vunpack.c.l.b16 %v1106
        %v1356 = vunpack.c.l.b16 %v1107
        %v1357 = vunpack.c.l.b16 %v1108
        %v1358 = vunpack.c.l.b16 %v1109
        %v1359 = vunpack.c.l.b16 %v1110
        %v1360 = vunpack.c.l.b16 %v1111
        %v1361 = vunpack.c.l.b16 %v1112
        %v1362 = vpack.c.b16 %v1331, %v1330
        %v1363 = vpack.c.b16 %v1333, %v1332
        %v1364 = vpack.c.b16 %v1335, %v1334
        %v1365 = vpack.c.b16 %v1337, %v1336
        %v1366 = vpack.c.b16 %v1339, %v1338
        %v1367 = vpack.c.b16 %v1341, %v1340
        %v1368 = vpack.c.b16 %v1343, %v1342
        %v1369 = vpack.c.b16 %v1345, %v1344
        %v1370 = vpack.c.b16 %v1347, %v1346
        %v1371 = vpack.c.b16 %v1349, %v1348
        %v1372 = vpack.c.b16 %v1351, %v1350
        %v1373 = vpack.c.b16 %v1353, %v1352
        %v1374 = vpack.c.b16 %v1355, %v1354
        %v1375 = vpack.c.b16 %v1357, %v1356
        %v1376 = vpack.c.b16 %v1359, %v1358
        %v1377 = vpack.c.b16 %v1361, %v1360
        %1394 = vmatprep.subr.bf16.mxu0 0
        %1395 = vmatpush1.bf16.msra.mxu0 %v1369
        %1396 = vmatprep.subr.bf16.mxu0 0
        %1397 = vmatpush1.bf16.msra.mxu0 %v1368
        %1398 = vmatprep.subr.bf16.mxu0 0
        %1399 = vmatpush1.bf16.msra.mxu0 %v1367
        %1400 = vmatprep.subr.bf16.mxu0 0
        %1401 = vmatpush1.bf16.msra.mxu0 %v1366
        %1402 = vmatprep.subr.bf16.mxu0 0
        %1403 = vmatpush1.bf16.msra.mxu0 %v1365
        %1404 = vmatprep.subr.bf16.mxu0 0
        %1405 = vmatpush1.bf16.msra.mxu0 %v1364
        %1406 = vmatprep.subr.bf16.mxu0 0
        %1407 = vmatpush1.bf16.msra.mxu0 %v1363
        %1408 = vmatprep.subr.bf16.mxu0 0
        %1409 = vmatpush1.bf16.msra.mxu0 %v1362
        %1410 = vmatprep.subr.bf16.mxu0 0
        %1411 = vmatpush2.bf16.msra.mxu0 %v1377
        %1412 = vmatprep.subr.bf16.mxu0 0
        %1413 = vmatpush2.bf16.msra.mxu0 %v1376
        %1414 = vmatprep.subr.bf16.mxu0 0
        %1415 = vmatpush2.bf16.msra.mxu0 %v1375
        %1416 = vmatprep.subr.bf16.mxu0 0
        %1417 = vmatpush2.bf16.msra.mxu0 %v1374
        %1418 = vmatprep.subr.bf16.mxu0 0
        %1419 = vmatpush2.bf16.msra.mxu0 %v1373
        %1420 = vmatprep.subr.bf16.mxu0 0
        %1421 = vmatpush2.bf16.msra.mxu0 %v1372
        %1422 = vmatprep.subr.bf16.mxu0 0
        %1423 = vmatpush2.bf16.msra.mxu0 %v1371
        %1424 = vmatprep.subr.bf16.mxu0 0
        %1425 = vmatpush2.bf16.msra.mxu0 %v1370
        %1426 = vmatprep.mubr.bf16.mxu0 %v1080
        %1427 = vmatmul.mubr.bf16.gmra.mxu0 %v1079
        %v1428 = vpop.f32.mrf.mxu0
        %v1429 = vadd.f32 %v1293, %v1428
        %v1430 = vpop.f32.mrf.mxu0
        %v1431 = vpop.f32.mrf.mxu0
        %v1432 = vpop.f32.mrf.mxu0
        %1433 = vdwg.mxu0
        %s1434 = scalar_lea.vmem [#allocation8], 256
        %v1435 = vld [vmem:[%s1434] sm:$0xf]
        %v1436 = vld [vmem:[%s1434 + $0x4] sm:$0xf]
        %v1437 = vld [vmem:[%s1434 + $0x8] sm:$0xf]
        %v1438 = vld [vmem:[%s1434 + $0xc] sm:$0xf]
        %v1439 = vld [vmem:[%s1434 + $0x10] sm:$0xf]
        %v1440 = vld [vmem:[%s1434 + $0x14] sm:$0xf]
        %v1441 = vld [vmem:[%s1434 + $0x18] sm:$0xf]
        %v1442 = vld [vmem:[%s1434 + $0x1c] sm:$0xf]
        %v1443 = vld [vmem:[%s1434 + $0x20] sm:$0xf]
        %v1444 = vld [vmem:[%s1434 + $0x24] sm:$0xf]
        %v1445 = vld [vmem:[%s1434 + $0x28] sm:$0xf]
        %v1446 = vld [vmem:[%s1434 + $0x2c] sm:$0xf]
        %v1447 = vld [vmem:[%s1434 + $0x30] sm:$0xf]
        %v1448 = vld [vmem:[%s1434 + $0x34] sm:$0xf]
        %v1449 = vld [vmem:[%s1434 + $0x38] sm:$0xf]
        %v1450 = vld [vmem:[%s1434 + $0x3c] sm:$0xf]
        %v1451 = vld [vmem:[%s1434 + $0x40] sm:$0xf]
        %v1452 = vld [vmem:[%s1434 + $0x44] sm:$0xf]
        %v1453 = vld [vmem:[%s1434 + $0x48] sm:$0xf]
        %v1454 = vld [vmem:[%s1434 + $0x4c] sm:$0xf]
        %v1455 = vld [vmem:[%s1434 + $0x50] sm:$0xf]
        %v1456 = vld [vmem:[%s1434 + $0x54] sm:$0xf]
        %v1457 = vld [vmem:[%s1434 + $0x58] sm:$0xf]
        %v1458 = vld [vmem:[%s1434 + $0x5c] sm:$0xf]
        %v1459 = vld [vmem:[%s1434 + $0x60] sm:$0xf]
        %v1460 = vld [vmem:[%s1434 + $0x64] sm:$0xf]
        %v1461 = vld [vmem:[%s1434 + $0x68] sm:$0xf]
        %v1462 = vld [vmem:[%s1434 + $0x6c] sm:$0xf]
        %v1463 = vld [vmem:[%s1434 + $0x70] sm:$0xf]
        %v1464 = vld [vmem:[%s1434 + $0x74] sm:$0xf]
        %v1465 = vld [vmem:[%s1434 + $0x78] sm:$0xf]
        %v1466 = vld [vmem:[%s1434 + $0x7c] sm:$0xf]
        %v1469 = vrot.slane %v1079, 1
        %v1470 = vrot.slane %v1080, 1
        %v1505 = vunpack.c.l.b16 %v1435
        %v1506 = vunpack.c.l.b16 %v1436
        %v1507 = vunpack.c.l.b16 %v1437
        %v1508 = vunpack.c.l.b16 %v1438
        %v1509 = vunpack.c.l.b16 %v1439
        %v1510 = vunpack.c.l.b16 %v1440
        %v1511 = vunpack.c.l.b16 %v1441
        %v1512 = vunpack.c.l.b16 %v1442
        %v1513 = vunpack.c.l.b16 %v1443
        %v1514 = vunpack.c.l.b16 %v1444
        %v1515 = vunpack.c.l.b16 %v1445
        %v1516 = vunpack.c.l.b16 %v1446
        %v1517 = vunpack.c.l.b16 %v1447
        %v1518 = vunpack.c.l.b16 %v1448
        %v1519 = vunpack.c.l.b16 %v1449
        %v1520 = vunpack.c.l.b16 %v1450
        %v1521 = vunpack.c.l.b16 %v1451
        %v1522 = vunpack.c.l.b16 %v1452
        %v1523 = vunpack.c.l.b16 %v1453
        %v1524 = vunpack.c.l.b16 %v1454
        %v1525 = vunpack.c.l.b16 %v1455
        %v1526 = vunpack.c.l.b16 %v1456
        %v1527 = vunpack.c.l.b16 %v1457
        %v1528 = vunpack.c.l.b16 %v1458
        %v1529 = vunpack.c.l.b16 %v1459
        %v1530 = vunpack.c.l.b16 %v1460
        %v1531 = vunpack.c.l.b16 %v1461
        %v1532 = vunpack.c.l.b16 %v1462
        %v1533 = vunpack.c.l.b16 %v1463
        %v1534 = vunpack.c.l.b16 %v1464
        %v1535 = vunpack.c.l.b16 %v1465
        %v1536 = vunpack.c.l.b16 %v1466
        %v1537 = vpack.c.b16 %v1506, %v1505
        %v1538 = vpack.c.b16 %v1508, %v1507
        %v1539 = vpack.c.b16 %v1510, %v1509
        %v1540 = vpack.c.b16 %v1512, %v1511
        %v1541 = vpack.c.b16 %v1514, %v1513
        %v1542 = vpack.c.b16 %v1516, %v1515
        %v1543 = vpack.c.b16 %v1518, %v1517
        %v1544 = vpack.c.b16 %v1520, %v1519
        %v1545 = vpack.c.b16 %v1522, %v1521
        %v1546 = vpack.c.b16 %v1524, %v1523
        %v1547 = vpack.c.b16 %v1526, %v1525
        %v1548 = vpack.c.b16 %v1528, %v1527
        %v1549 = vpack.c.b16 %v1530, %v1529
        %v1550 = vpack.c.b16 %v1532, %v1531
        %v1551 = vpack.c.b16 %v1534, %v1533
        %v1552 = vpack.c.b16 %v1536, %v1535
        %1569 = vmatprep.subr.bf16.mxu0 0
        %1570 = vmatpush1.bf16.msra.mxu0 %v1544
        %1571 = vmatprep.subr.bf16.mxu0 0
        %1572 = vmatpush1.bf16.msra.mxu0 %v1543
        %1573 = vmatprep.subr.bf16.mxu0 0
        %1574 = vmatpush1.bf16.msra.mxu0 %v1542
        %1575 = vmatprep.subr.bf16.mxu0 0
        %1576 = vmatpush1.bf16.msra.mxu0 %v1541
        %1577 = vmatprep.subr.bf16.mxu0 0
        %1578 = vmatpush1.bf16.msra.mxu0 %v1540
        %1579 = vmatprep.subr.bf16.mxu0 0
        %1580 = vmatpush1.bf16.msra.mxu0 %v1539
        %1581 = vmatprep.subr.bf16.mxu0 0
        %1582 = vmatpush1.bf16.msra.mxu0 %v1538
        %1583 = vmatprep.subr.bf16.mxu0 0
        %1584 = vmatpush1.bf16.msra.mxu0 %v1537
        %1585 = vmatprep.subr.bf16.mxu0 0
        %1586 = vmatpush2.bf16.msra.mxu0 %v1552
        %1587 = vmatprep.subr.bf16.mxu0 0
        %1588 = vmatpush2.bf16.msra.mxu0 %v1551
        %1589 = vmatprep.subr.bf16.mxu0 0
        %1590 = vmatpush2.bf16.msra.mxu0 %v1550
        %1591 = vmatprep.subr.bf16.mxu0 0
        %1592 = vmatpush2.bf16.msra.mxu0 %v1549
        %1593 = vmatprep.subr.bf16.mxu0 0
        %1594 = vmatpush2.bf16.msra.mxu0 %v1548
        %1595 = vmatprep.subr.bf16.mxu0 0
        %1596 = vmatpush2.bf16.msra.mxu0 %v1547
        %1597 = vmatprep.subr.bf16.mxu0 0
        %1598 = vmatpush2.bf16.msra.mxu0 %v1546
        %1599 = vmatprep.subr.bf16.mxu0 0
        %1600 = vmatpush2.bf16.msra.mxu0 %v1545
        %1601 = vmatprep.mubr.bf16.mxu0 %v1470
        %1602 = vmatmul.mubr.bf16.gmra.mxu0 %v1469
        %v1603 = vpop.f32.mrf.mxu0
        %v1604 = vadd.f32 0.0, %v1603
        %v1605 = vpop.f32.mrf.mxu0
        %v1606 = vpop.f32.mrf.mxu0
        %v1607 = vpop.f32.mrf.mxu0
        %1608 = vdwg.mxu0
        %v1609 = vadd.f32 %v1429, %v1604
        %v1610 = vld [vmem:[#allocation9] sm:$0x1]
        %v1612 = vlaneseq
        %v1613 = vshrl.u32 %v1612, 7
        %v1614 = vsub.s32 0, %v1613
        %v1615 = vrot.slane %v1610, %v1614
        %v1617 = vadd.f32 %v1609, %v1615
        %v1618 = vmax.f32 %v1617, 0.0
        %v1620 = vrot.slane %v1618, 7
        %1622 = vst [vmem:[#allocation2] sm:$0xfe] %v1620
        %1623 = vst [vmem:[#allocation2 + $0x10] sm:$0x1] %v1620
        %v1624 = vld [vmem:[#allocation2] sm:$0xff]
        %v1625 = vld [vmem:[#allocation2 + $0x10] sm:$0x3]
        %v1626 = vpack.c.bf16 %v1625, %v1624
        %v1627 = vld [vmem:[#allocation11] sm:$0xf]
        %v1628 = vld [vmem:[#allocation11 + $0x4] sm:$0xf]
        %v1629 = vld [vmem:[#allocation11 + $0x8] sm:$0xf]
        %v1630 = vld [vmem:[#allocation11 + $0xc] sm:$0xf]
        %v1631 = vld [vmem:[#allocation11 + $0x10] sm:$0xf]
        %v1632 = vld [vmem:[#allocation11 + $0x14] sm:$0xf]
        %v1633 = vld [vmem:[#allocation11 + $0x18] sm:$0xf]
        %v1634 = vld [vmem:[#allocation11 + $0x1c] sm:$0xf]
        %v1635 = vld [vmem:[#allocation11 + $0x20] sm:$0xf]
        %v1636 = vld [vmem:[#allocation11 + $0x24] sm:$0xf]
        %v1637 = vld [vmem:[#allocation11 + $0x28] sm:$0xf]
        %v1638 = vld [vmem:[#allocation11 + $0x2c] sm:$0xf]
        %v1639 = vld [vmem:[#allocation11 + $0x30] sm:$0xf]
        %v1640 = vld [vmem:[#allocation11 + $0x34] sm:$0xf]
        %v1641 = vld [vmem:[#allocation11 + $0x38] sm:$0xf]
        %v1642 = vld [vmem:[#allocation11 + $0x3c] sm:$0xf]
        %s1643 = scalar_lea.vmem [#allocation11], 64
        %v1644 = vld [vmem:[%s1643] sm:$0xf]
        %v1645 = vld [vmem:[%s1643 + $0x4] sm:$0xf]
        %v1646 = vld [vmem:[%s1643 + $0x8] sm:$0xf]
        %v1647 = vld [vmem:[%s1643 + $0xc] sm:$0xf]
        %v1648 = vld [vmem:[%s1643 + $0x10] sm:$0xf]
        %v1649 = vld [vmem:[%s1643 + $0x14] sm:$0xf]
        %v1650 = vld [vmem:[%s1643 + $0x18] sm:$0xf]
        %v1651 = vld [vmem:[%s1643 + $0x1c] sm:$0xf]
        %v1652 = vld [vmem:[%s1643 + $0x20] sm:$0xf]
        %v1653 = vld [vmem:[%s1643 + $0x24] sm:$0xf]
        %v1654 = vld [vmem:[%s1643 + $0x28] sm:$0xf]
        %v1655 = vld [vmem:[%s1643 + $0x2c] sm:$0xf]
        %v1656 = vld [vmem:[%s1643 + $0x30] sm:$0xf]
        %v1657 = vld [vmem:[%s1643 + $0x34] sm:$0xf]
        %v1658 = vld [vmem:[%s1643 + $0x38] sm:$0xf]
        %v1659 = vld [vmem:[%s1643 + $0x3c] sm:$0xf]
        %v1661 = vshrl.u32 %v1626, 16
        %v1663 = vshll.u32 %v1626, 16
        %v1665 = vrot.slane %v1663, 1
        %v1666 = vor.u32 %v1661, %v1665
        %v1684 = vunpack.c.l.b16 %v1644
        %v1685 = vunpack.c.l.b16 %v1645
        %v1686 = vunpack.c.l.b16 %v1646
        %v1687 = vunpack.c.l.b16 %v1647
        %v1688 = vunpack.c.l.b16 %v1648
        %v1689 = vunpack.c.l.b16 %v1649
        %v1690 = vunpack.c.l.b16 %v1650
        %v1691 = vunpack.c.l.b16 %v1651
        %v1692 = vunpack.c.l.b16 %v1652
        %v1693 = vunpack.c.l.b16 %v1653
        %v1694 = vunpack.c.l.b16 %v1654
        %v1695 = vunpack.c.l.b16 %v1655
        %v1696 = vunpack.c.l.b16 %v1656
        %v1697 = vunpack.c.l.b16 %v1657
        %v1698 = vunpack.c.l.b16 %v1658
        %v1699 = vunpack.c.l.b16 %v1659
        %v1700 = vpack.c.b16 %v1685, %v1684
        %v1701 = vpack.c.b16 %v1687, %v1686
        %v1702 = vpack.c.b16 %v1689, %v1688
        %v1703 = vpack.c.b16 %v1691, %v1690
        %v1704 = vpack.c.b16 %v1693, %v1692
        %v1705 = vpack.c.b16 %v1695, %v1694
        %v1706 = vpack.c.b16 %v1697, %v1696
        %v1707 = vpack.c.b16 %v1699, %v1698
        %1716 = vmatprep.subr.bf16.mxu0 0
        %1717 = vmatpush1.bf16.msra.mxu0 %v1707
        %1718 = vmatprep.subr.bf16.mxu0 0
        %1719 = vmatpush1.bf16.msra.mxu0 %v1706
        %1720 = vmatprep.subr.bf16.mxu0 0
        %1721 = vmatpush1.bf16.msra.mxu0 %v1705
        %1722 = vmatprep.subr.bf16.mxu0 0
        %1723 = vmatpush1.bf16.msra.mxu0 %v1704
        %1724 = vmatprep.subr.bf16.mxu0 0
        %1725 = vmatpush1.bf16.msra.mxu0 %v1703
        %1726 = vmatprep.subr.bf16.mxu0 0
        %1727 = vmatpush1.bf16.msra.mxu0 %v1702
        %1728 = vmatprep.subr.bf16.mxu0 0
        %1729 = vmatpush1.bf16.msra.mxu0 %v1701
        %1730 = vmatprep.subr.bf16.mxu0 0
        %1731 = vmatpush1.bf16.msra.mxu0 %v1700
        %1732 = vmatprep.subr.bf16.mxu0 0
        %1733 = vmatpush2.bf16.msra.mxu0 0
        %1734 = vmatprep.subr.bf16.mxu0 0
        %1735 = vmatpush2.bf16.msra.mxu0 0
        %1736 = vmatprep.subr.bf16.mxu0 0
        %1737 = vmatpush2.bf16.msra.mxu0 0
        %1738 = vmatprep.subr.bf16.mxu0 0
        %1739 = vmatpush2.bf16.msra.mxu0 0
        %1740 = vmatprep.subr.bf16.mxu0 0
        %1741 = vmatpush2.bf16.msra.mxu0 0
        %1742 = vmatprep.subr.bf16.mxu0 0
        %1743 = vmatpush2.bf16.msra.mxu0 0
        %1744 = vmatprep.subr.bf16.mxu0 0
        %1745 = vmatpush2.bf16.msra.mxu0 0
        %1746 = vmatprep.subr.bf16.mxu0 0
        %1747 = vmatpush2.bf16.msra.mxu0 0
        %1748 = vmatprep.mubr.bf16.mxu0 0
        %1749 = vmatmul.mubr.bf16.gmra.mxu0 %v1666
        %v1750 = vpop.f32.mrf.mxu0
        %v1751 = vadd.f32 0.0, %v1750
        %v1752 = vpop.f32.mrf.mxu0
        %v1753 = vpop.f32.mrf.mxu0
        %v1754 = vpop.f32.mrf.mxu0
        %1755 = vdwg.mxu0
        %v1772 = vunpack.c.l.b16 %v1627
        %v1773 = vunpack.c.l.b16 %v1628
        %v1774 = vunpack.c.l.b16 %v1629
        %v1775 = vunpack.c.l.b16 %v1630
        %v1776 = vunpack.c.l.b16 %v1631
        %v1777 = vunpack.c.l.b16 %v1632
        %v1778 = vunpack.c.l.b16 %v1633
        %v1779 = vunpack.c.l.b16 %v1634
        %v1780 = vunpack.c.l.b16 %v1635
        %v1781 = vunpack.c.l.b16 %v1636
        %v1782 = vunpack.c.l.b16 %v1637
        %v1783 = vunpack.c.l.b16 %v1638
        %v1784 = vunpack.c.l.b16 %v1639
        %v1785 = vunpack.c.l.b16 %v1640
        %v1786 = vunpack.c.l.b16 %v1641
        %v1787 = vunpack.c.l.b16 %v1642
        %v1788 = vpack.c.b16 %v1773, %v1772
        %v1789 = vpack.c.b16 %v1775, %v1774
        %v1790 = vpack.c.b16 %v1777, %v1776
        %v1791 = vpack.c.b16 %v1779, %v1778
        %v1792 = vpack.c.b16 %v1781, %v1780
        %v1793 = vpack.c.b16 %v1783, %v1782
        %v1794 = vpack.c.b16 %v1785, %v1784
        %v1795 = vpack.c.b16 %v1787, %v1786
        %1804 = vmatprep.subr.bf16.mxu0 0
        %1805 = vmatpush1.bf16.msra.mxu0 %v1795
        %1806 = vmatprep.subr.bf16.mxu0 0
        %1807 = vmatpush1.bf16.msra.mxu0 %v1794
        %1808 = vmatprep.subr.bf16.mxu0 0
        %1809 = vmatpush1.bf16.msra.mxu0 %v1793
        %1810 = vmatprep.subr.bf16.mxu0 0
        %1811 = vmatpush1.bf16.msra.mxu0 %v1792
        %1812 = vmatprep.subr.bf16.mxu0 0
        %1813 = vmatpush1.bf16.msra.mxu0 %v1791
        %1814 = vmatprep.subr.bf16.mxu0 0
        %1815 = vmatpush1.bf16.msra.mxu0 %v1790
        %1816 = vmatprep.subr.bf16.mxu0 0
        %1817 = vmatpush1.bf16.msra.mxu0 %v1789
        %1818 = vmatprep.subr.bf16.mxu0 0
        %1819 = vmatpush1.bf16.msra.mxu0 %v1788
        %1820 = vmatprep.subr.bf16.mxu0 0
        %1821 = vmatpush2.bf16.msra.mxu0 0
        %1822 = vmatprep.subr.bf16.mxu0 0
        %1823 = vmatpush2.bf16.msra.mxu0 0
        %1824 = vmatprep.subr.bf16.mxu0 0
        %1825 = vmatpush2.bf16.msra.mxu0 0
        %1826 = vmatprep.subr.bf16.mxu0 0
        %1827 = vmatpush2.bf16.msra.mxu0 0
        %1828 = vmatprep.subr.bf16.mxu0 0
        %1829 = vmatpush2.bf16.msra.mxu0 0
        %1830 = vmatprep.subr.bf16.mxu0 0
        %1831 = vmatpush2.bf16.msra.mxu0 0
        %1832 = vmatprep.subr.bf16.mxu0 0
        %1833 = vmatpush2.bf16.msra.mxu0 0
        %1834 = vmatprep.subr.bf16.mxu0 0
        %1835 = vmatpush2.bf16.msra.mxu0 0
        %1836 = vmatprep.mubr.bf16.mxu0 0
        %1837 = vmatmul.mubr.bf16.gmra.mxu0 %v1626
        %v1838 = vpop.f32.mrf.mxu0
        %v1839 = vadd.f32 %v1751, %v1838
        %v1840 = vpop.f32.mrf.mxu0
        %v1841 = vpop.f32.mrf.mxu0
        %v1842 = vpop.f32.mrf.mxu0
        %1843 = vdwg.mxu0
        %s1844 = scalar_lea.vmem [#allocation11], 128
        %v1845 = vld [vmem:[%s1844] sm:$0xf]
        %v1846 = vld [vmem:[%s1844 + $0x4] sm:$0xf]
        %v1847 = vld [vmem:[%s1844 + $0x8] sm:$0xf]
        %v1848 = vld [vmem:[%s1844 + $0xc] sm:$0xf]
        %v1849 = vld [vmem:[%s1844 + $0x10] sm:$0xf]
        %v1850 = vld [vmem:[%s1844 + $0x14] sm:$0xf]
        %v1851 = vld [vmem:[%s1844 + $0x18] sm:$0xf]
        %v1852 = vld [vmem:[%s1844 + $0x1c] sm:$0xf]
        %v1853 = vld [vmem:[%s1844 + $0x20] sm:$0xf]
        %v1854 = vld [vmem:[%s1844 + $0x24] sm:$0xf]
        %v1855 = vld [vmem:[%s1844 + $0x28] sm:$0xf]
        %v1856 = vld [vmem:[%s1844 + $0x2c] sm:$0xf]
        %v1857 = vld [vmem:[%s1844 + $0x30] sm:$0xf]
        %v1858 = vld [vmem:[%s1844 + $0x34] sm:$0xf]
        %v1859 = vld [vmem:[%s1844 + $0x38] sm:$0xf]
        %v1860 = vld [vmem:[%s1844 + $0x3c] sm:$0xf]
        %v1862 = vrot.slane %v1626, 1
        %v1880 = vunpack.c.l.b16 %v1845
        %v1881 = vunpack.c.l.b16 %v1846
        %v1882 = vunpack.c.l.b16 %v1847
        %v1883 = vunpack.c.l.b16 %v1848
        %v1884 = vunpack.c.l.b16 %v1849
        %v1885 = vunpack.c.l.b16 %v1850
        %v1886 = vunpack.c.l.b16 %v1851
        %v1887 = vunpack.c.l.b16 %v1852
        %v1888 = vunpack.c.l.b16 %v1853
        %v1889 = vunpack.c.l.b16 %v1854
        %v1890 = vunpack.c.l.b16 %v1855
        %v1891 = vunpack.c.l.b16 %v1856
        %v1892 = vunpack.c.l.b16 %v1857
        %v1893 = vunpack.c.l.b16 %v1858
        %v1894 = vunpack.c.l.b16 %v1859
        %v1895 = vunpack.c.l.b16 %v1860
        %v1896 = vpack.c.b16 %v1881, %v1880
        %v1897 = vpack.c.b16 %v1883, %v1882
        %v1898 = vpack.c.b16 %v1885, %v1884
        %v1899 = vpack.c.b16 %v1887, %v1886
        %v1900 = vpack.c.b16 %v1889, %v1888
        %v1901 = vpack.c.b16 %v1891, %v1890
        %v1902 = vpack.c.b16 %v1893, %v1892
        %v1903 = vpack.c.b16 %v1895, %v1894
        %1912 = vmatprep.subr.bf16.mxu0 0
        %1913 = vmatpush1.bf16.msra.mxu0 %v1903
        %1914 = vmatprep.subr.bf16.mxu0 0
        %1915 = vmatpush1.bf16.msra.mxu0 %v1902
        %1916 = vmatprep.subr.bf16.mxu0 0
        %1917 = vmatpush1.bf16.msra.mxu0 %v1901
        %1918 = vmatprep.subr.bf16.mxu0 0
        %1919 = vmatpush1.bf16.msra.mxu0 %v1900
        %1920 = vmatprep.subr.bf16.mxu0 0
        %1921 = vmatpush1.bf16.msra.mxu0 %v1899
        %1922 = vmatprep.subr.bf16.mxu0 0
        %1923 = vmatpush1.bf16.msra.mxu0 %v1898
        %1924 = vmatprep.subr.bf16.mxu0 0
        %1925 = vmatpush1.bf16.msra.mxu0 %v1897
        %1926 = vmatprep.subr.bf16.mxu0 0
        %1927 = vmatpush1.bf16.msra.mxu0 %v1896
        %1928 = vmatprep.subr.bf16.mxu0 0
        %1929 = vmatpush2.bf16.msra.mxu0 0
        %1930 = vmatprep.subr.bf16.mxu0 0
        %1931 = vmatpush2.bf16.msra.mxu0 0
        %1932 = vmatprep.subr.bf16.mxu0 0
        %1933 = vmatpush2.bf16.msra.mxu0 0
        %1934 = vmatprep.subr.bf16.mxu0 0
        %1935 = vmatpush2.bf16.msra.mxu0 0
        %1936 = vmatprep.subr.bf16.mxu0 0
        %1937 = vmatpush2.bf16.msra.mxu0 0
        %1938 = vmatprep.subr.bf16.mxu0 0
        %1939 = vmatpush2.bf16.msra.mxu0 0
        %1940 = vmatprep.subr.bf16.mxu0 0
        %1941 = vmatpush2.bf16.msra.mxu0 0
        %1942 = vmatprep.subr.bf16.mxu0 0
        %1943 = vmatpush2.bf16.msra.mxu0 0
        %1944 = vmatprep.mubr.bf16.mxu0 0
        %1945 = vmatmul.mubr.bf16.gmra.mxu0 %v1862
        %v1946 = vpop.f32.mrf.mxu0
        %v1947 = vadd.f32 0.0, %v1946
        %v1948 = vpop.f32.mrf.mxu0
        %v1949 = vpop.f32.mrf.mxu0
        %v1950 = vpop.f32.mrf.mxu0
        %1951 = vdwg.mxu0
        %v1952 = vadd.f32 %v1839, %v1947
        %v1953 = vld [vmem:[#allocation12] sm:$0x1]
        %v1955 = vlaneseq
        %v1956 = vshrl.u32 %v1955, 7
        %v1957 = vsub.s32 0, %v1956
        %v1958 = vrot.slane %v1953, %v1957
        %v1960 = vadd.f32 %v1952, %v1958
        %v1961 = vmax.f32 %v1960, 0.0
        %v1962 = vld [vmem:[#allocation15] sm:$0xff]
        %v1963 = vpack.c.bf16 %v1961, %v1961
        %v1964 = vld [vmem:[#allocation14] sm:$0xff]
        %v1965 = vld [vmem:[#allocation14 + $0x8] sm:$0xff]
        %v1966 = vld [vmem:[#allocation14 + $0x10] sm:$0xff]
        %v1967 = vld [vmem:[#allocation14 + $0x18] sm:$0xff]
        %v1968 = vld [vmem:[#allocation14 + $0x20] sm:$0xff]
        %v1969 = vld [vmem:[#allocation14 + $0x28] sm:$0xff]
        %v1970 = vld [vmem:[#allocation14 + $0x30] sm:$0xff]
        %v1971 = vld [vmem:[#allocation14 + $0x38] sm:$0xff]
        %v1972 = vld [vmem:[#allocation14 + $0x40] sm:$0xff]
        %v1973 = vld [vmem:[#allocation14 + $0x48] sm:$0xff]
        %v1974 = vld [vmem:[#allocation14 + $0x50] sm:$0xff]
        %v1975 = vld [vmem:[#allocation14 + $0x58] sm:$0xff]
        %v1976 = vld [vmem:[#allocation14 + $0x60] sm:$0xff]
        %v1977 = vld [vmem:[#allocation14 + $0x68] sm:$0xff]
        %v1978 = vld [vmem:[#allocation14 + $0x70] sm:$0xff]
        %v1979 = vld [vmem:[#allocation14 + $0x78] sm:$0xff]
        %v1980 = vld [vmem:[#allocation14 + $0x80] sm:$0xff]
        %v1981 = vld [vmem:[#allocation14 + $0x88] sm:$0xff]
        %v1982 = vld [vmem:[#allocation14 + $0x90] sm:$0xff]
        %v1983 = vld [vmem:[#allocation14 + $0x98] sm:$0xff]
        %v1984 = vld [vmem:[#allocation14 + $0xa0] sm:$0xff]
        %v1985 = vld [vmem:[#allocation14 + $0xa8] sm:$0xff]
        %v1986 = vld [vmem:[#allocation14 + $0xb0] sm:$0xff]
        %v1987 = vld [vmem:[#allocation14 + $0xb8] sm:$0xff]
        %v1988 = vld [vmem:[#allocation14 + $0xc0] sm:$0xff]
        %v1989 = vld [vmem:[#allocation14 + $0xc8] sm:$0xff]
        %v1990 = vld [vmem:[#allocation14 + $0xd0] sm:$0xff]
        %v1991 = vld [vmem:[#allocation14 + $0xd8] sm:$0xff]
        %v1992 = vld [vmem:[#allocation14 + $0xe0] sm:$0xff]
        %v1993 = vld [vmem:[#allocation14 + $0xe8] sm:$0xff]
        %v1994 = vld [vmem:[#allocation14 + $0xf0] sm:$0xff]
        %v1995 = vld [vmem:[#allocation14 + $0xf8] sm:$0xff]
        %v1996 = vld [vmem:[#allocation14 + $0x100] sm:$0xff]
        %v1997 = vld [vmem:[#allocation14 + $0x108] sm:$0xff]
        %v1998 = vld [vmem:[#allocation14 + $0x110] sm:$0xff]
        %v1999 = vld [vmem:[#allocation14 + $0x118] sm:$0xff]
        %v2000 = vld [vmem:[#allocation14 + $0x120] sm:$0xff]
        %v2001 = vld [vmem:[#allocation14 + $0x128] sm:$0xff]
        %v2002 = vld [vmem:[#allocation14 + $0x130] sm:$0xff]
        %v2003 = vld [vmem:[#allocation14 + $0x138] sm:$0xff]
        %v2004 = vld [vmem:[#allocation14 + $0x140] sm:$0xff]
        %v2005 = vld [vmem:[#allocation14 + $0x148] sm:$0xff]
        %v2006 = vld [vmem:[#allocation14 + $0x150] sm:$0xff]
        %v2007 = vld [vmem:[#allocation14 + $0x158] sm:$0xff]
        %v2008 = vld [vmem:[#allocation14 + $0x160] sm:$0xff]
        %v2009 = vld [vmem:[#allocation14 + $0x168] sm:$0xff]
        %v2010 = vld [vmem:[#allocation14 + $0x170] sm:$0xff]
        %v2011 = vld [vmem:[#allocation14 + $0x178] sm:$0xff]
        %v2012 = vld [vmem:[#allocation14 + $0x180] sm:$0xff]
        %v2013 = vld [vmem:[#allocation14 + $0x188] sm:$0xff]
        %v2014 = vld [vmem:[#allocation14 + $0x190] sm:$0xff]
        %v2015 = vld [vmem:[#allocation14 + $0x198] sm:$0xff]
        %v2016 = vld [vmem:[#allocation14 + $0x1a0] sm:$0xff]
        %v2017 = vld [vmem:[#allocation14 + $0x1a8] sm:$0xff]
        %v2018 = vld [vmem:[#allocation14 + $0x1b0] sm:$0xff]
        %v2019 = vld [vmem:[#allocation14 + $0x1b8] sm:$0xff]
        %v2020 = vld [vmem:[#allocation14 + $0x1c0] sm:$0xff]
        %v2021 = vld [vmem:[#allocation14 + $0x1c8] sm:$0xff]
        %v2022 = vld [vmem:[#allocation14 + $0x1d0] sm:$0xff]
        %v2023 = vld [vmem:[#allocation14 + $0x1d8] sm:$0xff]
        %v2024 = vld [vmem:[#allocation14 + $0x1e0] sm:$0xff]
        %v2025 = vld [vmem:[#allocation14 + $0x1e8] sm:$0xff]
        %v2026 = vld [vmem:[#allocation14 + $0x1f0] sm:$0xff]
        %v2027 = vld [vmem:[#allocation14 + $0x1f8] sm:$0xff]
        %v2092 = vunpack.c.l.b16 %v1964
        %v2093 = vunpack.c.h.b16 %v1964
        %v2094 = vunpack.c.l.b16 %v1965
        %v2095 = vunpack.c.h.b16 %v1965
        %v2096 = vunpack.c.l.b16 %v1966
        %v2097 = vunpack.c.h.b16 %v1966
        %v2098 = vunpack.c.l.b16 %v1967
        %v2099 = vunpack.c.h.b16 %v1967
        %v2100 = vunpack.c.l.b16 %v1968
        %v2101 = vunpack.c.h.b16 %v1968
        %v2102 = vunpack.c.l.b16 %v1969
        %v2103 = vunpack.c.h.b16 %v1969
        %v2104 = vunpack.c.l.b16 %v1970
        %v2105 = vunpack.c.h.b16 %v1970
        %v2106 = vunpack.c.l.b16 %v1971
        %v2107 = vunpack.c.h.b16 %v1971
        %v2108 = vunpack.c.l.b16 %v1972
        %v2109 = vunpack.c.h.b16 %v1972
        %v2110 = vunpack.c.l.b16 %v1973
        %v2111 = vunpack.c.h.b16 %v1973
        %v2112 = vunpack.c.l.b16 %v1974
        %v2113 = vunpack.c.h.b16 %v1974
        %v2114 = vunpack.c.l.b16 %v1975
        %v2115 = vunpack.c.h.b16 %v1975
        %v2116 = vunpack.c.l.b16 %v1976
        %v2117 = vunpack.c.h.b16 %v1976
        %v2118 = vunpack.c.l.b16 %v1977
        %v2119 = vunpack.c.h.b16 %v1977
        %v2120 = vunpack.c.l.b16 %v1978
        %v2121 = vunpack.c.h.b16 %v1978
        %v2122 = vunpack.c.l.b16 %v1979
        %v2123 = vunpack.c.h.b16 %v1979
        %v2124 = vunpack.c.l.b16 %v1980
        %v2125 = vunpack.c.h.b16 %v1980
        %v2126 = vunpack.c.l.b16 %v1981
        %v2127 = vunpack.c.h.b16 %v1981
        %v2128 = vunpack.c.l.b16 %v1982
        %v2129 = vunpack.c.h.b16 %v1982
        %v2130 = vunpack.c.l.b16 %v1983
        %v2131 = vunpack.c.h.b16 %v1983
        %v2132 = vunpack.c.l.b16 %v1984
        %v2133 = vunpack.c.h.b16 %v1984
        %v2134 = vunpack.c.l.b16 %v1985
        %v2135 = vunpack.c.h.b16 %v1985
        %v2136 = vunpack.c.l.b16 %v1986
        %v2137 = vunpack.c.h.b16 %v1986
        %v2138 = vunpack.c.l.b16 %v1987
        %v2139 = vunpack.c.h.b16 %v1987
        %v2140 = vunpack.c.l.b16 %v1988
        %v2141 = vunpack.c.h.b16 %v1988
        %v2142 = vunpack.c.l.b16 %v1989
        %v2143 = vunpack.c.h.b16 %v1989
        %v2144 = vunpack.c.l.b16 %v1990
        %v2145 = vunpack.c.h.b16 %v1990
        %v2146 = vunpack.c.l.b16 %v1991
        %v2147 = vunpack.c.h.b16 %v1991
        %v2148 = vunpack.c.l.b16 %v1992
        %v2149 = vunpack.c.h.b16 %v1992
        %v2150 = vunpack.c.l.b16 %v1993
        %v2151 = vunpack.c.h.b16 %v1993
        %v2152 = vunpack.c.l.b16 %v1994
        %v2153 = vunpack.c.h.b16 %v1994
        %v2154 = vunpack.c.l.b16 %v1995
        %v2155 = vunpack.c.h.b16 %v1995
        %v2156 = vunpack.c.l.b16 %v1996
        %v2157 = vunpack.c.h.b16 %v1996
        %v2158 = vunpack.c.l.b16 %v1997
        %v2159 = vunpack.c.h.b16 %v1997
        %v2160 = vunpack.c.l.b16 %v1998
        %v2161 = vunpack.c.h.b16 %v1998
        %v2162 = vunpack.c.l.b16 %v1999
        %v2163 = vunpack.c.h.b16 %v1999
        %v2164 = vunpack.c.l.b16 %v2000
        %v2165 = vunpack.c.h.b16 %v2000
        %v2166 = vunpack.c.l.b16 %v2001
        %v2167 = vunpack.c.h.b16 %v2001
        %v2168 = vunpack.c.l.b16 %v2002
        %v2169 = vunpack.c.h.b16 %v2002
        %v2170 = vunpack.c.l.b16 %v2003
        %v2171 = vunpack.c.h.b16 %v2003
        %v2172 = vunpack.c.l.b16 %v2004
        %v2173 = vunpack.c.h.b16 %v2004
        %v2174 = vunpack.c.l.b16 %v2005
        %v2175 = vunpack.c.h.b16 %v2005
        %v2176 = vunpack.c.l.b16 %v2006
        %v2177 = vunpack.c.h.b16 %v2006
        %v2178 = vunpack.c.l.b16 %v2007
        %v2179 = vunpack.c.h.b16 %v2007
        %v2180 = vunpack.c.l.b16 %v2008
        %v2181 = vunpack.c.h.b16 %v2008
        %v2182 = vunpack.c.l.b16 %v2009
        %v2183 = vunpack.c.h.b16 %v2009
        %v2184 = vunpack.c.l.b16 %v2010
        %v2185 = vunpack.c.h.b16 %v2010
        %v2186 = vunpack.c.l.b16 %v2011
        %v2187 = vunpack.c.h.b16 %v2011
        %v2188 = vunpack.c.l.b16 %v2012
        %v2189 = vunpack.c.h.b16 %v2012
        %v2190 = vunpack.c.l.b16 %v2013
        %v2191 = vunpack.c.h.b16 %v2013
        %v2192 = vunpack.c.l.b16 %v2014
        %v2193 = vunpack.c.h.b16 %v2014
        %v2194 = vunpack.c.l.b16 %v2015
        %v2195 = vunpack.c.h.b16 %v2015
        %v2196 = vunpack.c.l.b16 %v2016
        %v2197 = vunpack.c.h.b16 %v2016
        %v2198 = vunpack.c.l.b16 %v2017
        %v2199 = vunpack.c.h.b16 %v2017
        %v2200 = vunpack.c.l.b16 %v2018
        %v2201 = vunpack.c.h.b16 %v2018
        %v2202 = vunpack.c.l.b16 %v2019
        %v2203 = vunpack.c.h.b16 %v2019
        %v2204 = vunpack.c.l.b16 %v2020
        %v2205 = vunpack.c.h.b16 %v2020
        %v2206 = vunpack.c.l.b16 %v2021
        %v2207 = vunpack.c.h.b16 %v2021
        %v2208 = vunpack.c.l.b16 %v2022
        %v2209 = vunpack.c.h.b16 %v2022
        %v2210 = vunpack.c.l.b16 %v2023
        %v2211 = vunpack.c.h.b16 %v2023
        %v2212 = vunpack.c.l.b16 %v2024
        %v2213 = vunpack.c.h.b16 %v2024
        %v2214 = vunpack.c.l.b16 %v2025
        %v2215 = vunpack.c.h.b16 %v2025
        %v2216 = vunpack.c.l.b16 %v2026
        %v2217 = vunpack.c.h.b16 %v2026
        %v2218 = vunpack.c.l.b16 %v2027
        %v2219 = vunpack.c.h.b16 %v2027
        %v2220 = vpack.c.b16 %v2100, %v2092
        %v2221 = vpack.c.b16 %v2101, %v2093
        %v2222 = vpack.c.b16 %v2102, %v2094
        %v2223 = vpack.c.b16 %v2103, %v2095
        %v2224 = vpack.c.b16 %v2104, %v2096
        %v2225 = vpack.c.b16 %v2105, %v2097
        %v2226 = vpack.c.b16 %v2106, %v2098
        %v2227 = vpack.c.b16 %v2107, %v2099
        %v2228 = vpack.c.b16 %v2116, %v2108
        %v2229 = vpack.c.b16 %v2117, %v2109
        %v2230 = vpack.c.b16 %v2118, %v2110
        %v2231 = vpack.c.b16 %v2119, %v2111
        %v2232 = vpack.c.b16 %v2120, %v2112
        %v2233 = vpack.c.b16 %v2121, %v2113
        %v2234 = vpack.c.b16 %v2122, %v2114
        %v2235 = vpack.c.b16 %v2123, %v2115
        %v2236 = vpack.c.b16 %v2132, %v2124
        %v2237 = vpack.c.b16 %v2133, %v2125
        %v2238 = vpack.c.b16 %v2134, %v2126
        %v2239 = vpack.c.b16 %v2135, %v2127
        %v2240 = vpack.c.b16 %v2136, %v2128
        %v2241 = vpack.c.b16 %v2137, %v2129
        %v2242 = vpack.c.b16 %v2138, %v2130
        %v2243 = vpack.c.b16 %v2139, %v2131
        %v2244 = vpack.c.b16 %v2148, %v2140
        %v2245 = vpack.c.b16 %v2149, %v2141
        %v2246 = vpack.c.b16 %v2150, %v2142
        %v2247 = vpack.c.b16 %v2151, %v2143
        %v2248 = vpack.c.b16 %v2152, %v2144
        %v2249 = vpack.c.b16 %v2153, %v2145
        %v2250 = vpack.c.b16 %v2154, %v2146
        %v2251 = vpack.c.b16 %v2155, %v2147
        %v2252 = vpack.c.b16 %v2164, %v2156
        %v2253 = vpack.c.b16 %v2165, %v2157
        %v2254 = vpack.c.b16 %v2166, %v2158
        %v2255 = vpack.c.b16 %v2167, %v2159
        %v2256 = vpack.c.b16 %v2168, %v2160
        %v2257 = vpack.c.b16 %v2169, %v2161
        %v2258 = vpack.c.b16 %v2170, %v2162
        %v2259 = vpack.c.b16 %v2171, %v2163
        %v2260 = vpack.c.b16 %v2180, %v2172
        %v2261 = vpack.c.b16 %v2181, %v2173
        %v2262 = vpack.c.b16 %v2182, %v2174
        %v2263 = vpack.c.b16 %v2183, %v2175
        %v2264 = vpack.c.b16 %v2184, %v2176
        %v2265 = vpack.c.b16 %v2185, %v2177
        %v2266 = vpack.c.b16 %v2186, %v2178
        %v2267 = vpack.c.b16 %v2187, %v2179
        %v2268 = vpack.c.b16 %v2196, %v2188
        %v2269 = vpack.c.b16 %v2197, %v2189
        %v2270 = vpack.c.b16 %v2198, %v2190
        %v2271 = vpack.c.b16 %v2199, %v2191
        %v2272 = vpack.c.b16 %v2200, %v2192
        %v2273 = vpack.c.b16 %v2201, %v2193
        %v2274 = vpack.c.b16 %v2202, %v2194
        %v2275 = vpack.c.b16 %v2203, %v2195
        %v2276 = vpack.c.b16 %v2212, %v2204
        %v2277 = vpack.c.b16 %v2213, %v2205
        %v2278 = vpack.c.b16 %v2214, %v2206
        %v2279 = vpack.c.b16 %v2215, %v2207
        %v2280 = vpack.c.b16 %v2216, %v2208
        %v2281 = vpack.c.b16 %v2217, %v2209
        %v2282 = vpack.c.b16 %v2218, %v2210
        %v2283 = vpack.c.b16 %v2219, %v2211
        %2348 = vmatprep.subr.bf16.mxu0 %v2277
        %2349 = vmatpush1.bf16.msra.mxu0 %v2276
        %2350 = vmatprep.subr.bf16.mxu0 %v2269
        %2351 = vmatpush1.bf16.msra.mxu0 %v2268
        %2352 = vmatprep.subr.bf16.mxu0 %v2261
        %2353 = vmatpush1.bf16.msra.mxu0 %v2260
        %2354 = vmatprep.subr.bf16.mxu0 %v2253
        %2355 = vmatpush1.bf16.msra.mxu0 %v2252
        %2356 = vmatprep.subr.bf16.mxu0 %v2245
        %2357 = vmatpush1.bf16.msra.mxu0 %v2244
        %2358 = vmatprep.subr.bf16.mxu0 %v2237
        %2359 = vmatpush1.bf16.msra.mxu0 %v2236
        %2360 = vmatprep.subr.bf16.mxu0 %v2229
        %2361 = vmatpush1.bf16.msra.mxu0 %v2228
        %2362 = vmatprep.subr.bf16.mxu0 %v2221
        %2363 = vmatpush1.bf16.msra.mxu0 %v2220
        %2364 = vmatprep.subr.bf16.mxu0 0
        %2365 = vmatpush2.bf16.msra.mxu0 0
        %2366 = vmatprep.subr.bf16.mxu0 0
        %2367 = vmatpush2.bf16.msra.mxu0 0
        %2368 = vmatprep.subr.bf16.mxu0 0
        %2369 = vmatpush2.bf16.msra.mxu0 0
        %2370 = vmatprep.subr.bf16.mxu0 0
        %2371 = vmatpush2.bf16.msra.mxu0 0
        %2372 = vmatprep.subr.bf16.mxu0 0
        %2373 = vmatpush2.bf16.msra.mxu0 0
        %2374 = vmatprep.subr.bf16.mxu0 0
        %2375 = vmatpush2.bf16.msra.mxu0 0
        %2376 = vmatprep.subr.bf16.mxu0 0
        %2377 = vmatpush2.bf16.msra.mxu0 0
        %2378 = vmatprep.subr.bf16.mxu0 0
        %2379 = vmatpush2.bf16.msra.mxu0 0
        %2380 = vmatprep.mubr.bf16.mxu0 0
        %2381 = vmatmul.mubr.bf16.gmra.mxu0 %v1963
        %v2382 = vpop.f32.mrf.mxu0
        %v2383 = vadd.f32 0.0, %v2382
        %v2384 = vpop.f32.mrf.mxu0
        %v2385 = vadd.f32 0.0, %v2384
        %v2386 = vpop.f32.mrf.mxu0
        %v2387 = vpop.f32.mrf.mxu0
        %2388 = vdwg.mxu0
        %2389 = vmatprep.subr.bf16.mxu0 %v2279
        %2390 = vmatpush1.bf16.msra.mxu0 %v2278
        %2391 = vmatprep.subr.bf16.mxu0 %v2271
        %2392 = vmatpush1.bf16.msra.mxu0 %v2270
        %2393 = vmatprep.subr.bf16.mxu0 %v2263
        %2394 = vmatpush1.bf16.msra.mxu0 %v2262
        %2395 = vmatprep.subr.bf16.mxu0 %v2255
        %2396 = vmatpush1.bf16.msra.mxu0 %v2254
        %2397 = vmatprep.subr.bf16.mxu0 %v2247
        %2398 = vmatpush1.bf16.msra.mxu0 %v2246
        %2399 = vmatprep.subr.bf16.mxu0 %v2239
        %2400 = vmatpush1.bf16.msra.mxu0 %v2238
        %2401 = vmatprep.subr.bf16.mxu0 %v2231
        %2402 = vmatpush1.bf16.msra.mxu0 %v2230
        %2403 = vmatprep.subr.bf16.mxu0 %v2223
        %2404 = vmatpush1.bf16.msra.mxu0 %v2222
        %2405 = vmatprep.subr.bf16.mxu0 0
        %2406 = vmatpush2.bf16.msra.mxu0 0
        %2407 = vmatprep.subr.bf16.mxu0 0
        %2408 = vmatpush2.bf16.msra.mxu0 0
        %2409 = vmatprep.subr.bf16.mxu0 0
        %2410 = vmatpush2.bf16.msra.mxu0 0
        %2411 = vmatprep.subr.bf16.mxu0 0
        %2412 = vmatpush2.bf16.msra.mxu0 0
        %2413 = vmatprep.subr.bf16.mxu0 0
        %2414 = vmatpush2.bf16.msra.mxu0 0
        %2415 = vmatprep.subr.bf16.mxu0 0
        %2416 = vmatpush2.bf16.msra.mxu0 0
        %2417 = vmatprep.subr.bf16.mxu0 0
        %2418 = vmatpush2.bf16.msra.mxu0 0
        %2419 = vmatprep.subr.bf16.mxu0 0
        %2420 = vmatpush2.bf16.msra.mxu0 0
        %2421 = vmatprep.mubr.bf16.mxu0 0
        %2422 = vmatmul.mubr.bf16.gmra.mxu0 %v1963
        %v2423 = vpop.f32.mrf.mxu0
        %v2424 = vadd.f32 0.0, %v2423
        %v2425 = vpop.f32.mrf.mxu0
        %v2426 = vadd.f32 0.0, %v2425
        %v2427 = vpop.f32.mrf.mxu0
        %v2428 = vpop.f32.mrf.mxu0
        %2429 = vdwg.mxu0
        %2430 = vmatprep.subr.bf16.mxu0 %v2281
        %2431 = vmatpush1.bf16.msra.mxu0 %v2280
        %2432 = vmatprep.subr.bf16.mxu0 %v2273
        %2433 = vmatpush1.bf16.msra.mxu0 %v2272
        %2434 = vmatprep.subr.bf16.mxu0 %v2265
        %2435 = vmatpush1.bf16.msra.mxu0 %v2264
        %2436 = vmatprep.subr.bf16.mxu0 %v2257
        %2437 = vmatpush1.bf16.msra.mxu0 %v2256
        %2438 = vmatprep.subr.bf16.mxu0 %v2249
        %2439 = vmatpush1.bf16.msra.mxu0 %v2248
        %2440 = vmatprep.subr.bf16.mxu0 %v2241
        %2441 = vmatpush1.bf16.msra.mxu0 %v2240
        %2442 = vmatprep.subr.bf16.mxu0 %v2233
        %2443 = vmatpush1.bf16.msra.mxu0 %v2232
        %2444 = vmatprep.subr.bf16.mxu0 %v2225
        %2445 = vmatpush1.bf16.msra.mxu0 %v2224
        %2446 = vmatprep.subr.bf16.mxu0 0
        %2447 = vmatpush2.bf16.msra.mxu0 0
        %2448 = vmatprep.subr.bf16.mxu0 0
        %2449 = vmatpush2.bf16.msra.mxu0 0
        %2450 = vmatprep.subr.bf16.mxu0 0
        %2451 = vmatpush2.bf16.msra.mxu0 0
        %2452 = vmatprep.subr.bf16.mxu0 0
        %2453 = vmatpush2.bf16.msra.mxu0 0
        %2454 = vmatprep.subr.bf16.mxu0 0
        %2455 = vmatpush2.bf16.msra.mxu0 0
        %2456 = vmatprep.subr.bf16.mxu0 0
        %2457 = vmatpush2.bf16.msra.mxu0 0
        %2458 = vmatprep.subr.bf16.mxu0 0
        %2459 = vmatpush2.bf16.msra.mxu0 0
        %2460 = vmatprep.subr.bf16.mxu0 0
        %2461 = vmatpush2.bf16.msra.mxu0 0
        %2462 = vmatprep.mubr.bf16.mxu0 0
        %2463 = vmatmul.mubr.bf16.gmra.mxu0 %v1963
        %v2464 = vpop.f32.mrf.mxu0
        %v2465 = vadd.f32 0.0, %v2464
        %v2466 = vpop.f32.mrf.mxu0
        %v2467 = vadd.f32 0.0, %v2466
        %v2468 = vpop.f32.mrf.mxu0
        %v2469 = vpop.f32.mrf.mxu0
        %2470 = vdwg.mxu0
        %2471 = vmatprep.subr.bf16.mxu0 %v2283
        %2472 = vmatpush1.bf16.msra.mxu0 %v2282
        %2473 = vmatprep.subr.bf16.mxu0 %v2275
        %2474 = vmatpush1.bf16.msra.mxu0 %v2274
        %2475 = vmatprep.subr.bf16.mxu0 %v2267
        %2476 = vmatpush1.bf16.msra.mxu0 %v2266
        %2477 = vmatprep.subr.bf16.mxu0 %v2259
        %2478 = vmatpush1.bf16.msra.mxu0 %v2258
        %2479 = vmatprep.subr.bf16.mxu0 %v2251
        %2480 = vmatpush1.bf16.msra.mxu0 %v2250
        %2481 = vmatprep.subr.bf16.mxu0 %v2243
        %2482 = vmatpush1.bf16.msra.mxu0 %v2242
        %2483 = vmatprep.subr.bf16.mxu0 %v2235
        %2484 = vmatpush1.bf16.msra.mxu0 %v2234
        %2485 = vmatprep.subr.bf16.mxu0 %v2227
        %2486 = vmatpush1.bf16.msra.mxu0 %v2226
        %2487 = vmatprep.subr.bf16.mxu0 0
        %2488 = vmatpush2.bf16.msra.mxu0 0
        %2489 = vmatprep.subr.bf16.mxu0 0
        %2490 = vmatpush2.bf16.msra.mxu0 0
        %2491 = vmatprep.subr.bf16.mxu0 0
        %2492 = vmatpush2.bf16.msra.mxu0 0
        %2493 = vmatprep.subr.bf16.mxu0 0
        %2494 = vmatpush2.bf16.msra.mxu0 0
        %2495 = vmatprep.subr.bf16.mxu0 0
        %2496 = vmatpush2.bf16.msra.mxu0 0
        %2497 = vmatprep.subr.bf16.mxu0 0
        %2498 = vmatpush2.bf16.msra.mxu0 0
        %2499 = vmatprep.subr.bf16.mxu0 0
        %2500 = vmatpush2.bf16.msra.mxu0 0
        %2501 = vmatprep.subr.bf16.mxu0 0
        %2502 = vmatpush2.bf16.msra.mxu0 0
        %2503 = vmatprep.mubr.bf16.mxu0 0
        %2504 = vmatmul.mubr.bf16.gmra.mxu0 %v1963
        %v2505 = vpop.f32.mrf.mxu0
        %v2506 = vadd.f32 0.0, %v2505
        %v2507 = vpop.f32.mrf.mxu0
        %v2508 = vadd.f32 0.0, %v2507
        %v2509 = vpop.f32.mrf.mxu0
        %v2510 = vpop.f32.mrf.mxu0
        %2511 = vdwg.mxu0
        %v2520 = vcombine.low %v2383, %v2385
        %v2521 = vcombine.low %v2424, %v2426
        %v2522 = vcombine.low %v2465, %v2467
        %v2523 = vcombine.low %v2506, %v2508
        %v2525 = vunpack.c.l.s4 1966171168
        %v2526 = vunpack.c.0.s8 %v2525
        %v2527 = vlaneseq
        %v2528 = vshrl.u32 %v2527, 7
        %v2529 = vsub.s32 %v2526, %v2528
        %v2530 = vrot.slane %v2520, %v2529
        %v2532 = vunpack.c.l.s4 1966171168
        %v2533 = vunpack.c.0.s8 %v2532
        %v2534 = vlaneseq
        %v2535 = vshrl.u32 %v2534, 7
        %v2536 = vsub.s32 %v2533, %v2535
        %v2537 = vrot.slane %v2521, %v2536
        %v2539 = vunpack.c.l.s4 1966171168
        %v2540 = vunpack.c.0.s8 %v2539
        %v2541 = vlaneseq
        %v2542 = vshrl.u32 %v2541, 7
        %v2543 = vsub.s32 %v2540, %v2542
        %v2544 = vrot.slane %v2522, %v2543
        %v2546 = vunpack.c.l.s4 1966171168
        %v2547 = vunpack.c.0.s8 %v2546
        %v2548 = vlaneseq
        %v2549 = vshrl.u32 %v2548, 7
        %v2550 = vsub.s32 %v2547, %v2549
        %v2551 = vrot.slane %v2523, %v2550
        %v2552 = vcombine.low %v2530, %v2537
        %v2553 = vcombine.low %v2544, %v2551
        %v2555 = vunpack.c.l.s4 1966171168
        %v2556 = vunpack.c.0.s8 %v2555
        %v2557 = vlaneseq
        %v2558 = vshrl.u32 %v2557, 7
        %v2559 = vsub.s32 %v2556, %v2558
        %v2560 = vrot.slane %v2552, %v2559
        %v2562 = vunpack.c.l.s4 1966171168
        %v2563 = vunpack.c.0.s8 %v2562
        %v2564 = vlaneseq
        %v2565 = vshrl.u32 %v2564, 7
        %v2566 = vsub.s32 %v2563, %v2565
        %v2567 = vrot.slane %v2553, %v2566
        %v2568 = vcombine.low %v2560, %v2567
        %v2570 = vadd.f32 %v1962, %v2568
        %s2571 = scalar_lea.vmem [#allocation14], 512
        %v2572 = vld [vmem:[%s2571] sm:$0xff]
        %v2573 = vld [vmem:[%s2571 + $0x8] sm:$0xff]
        %v2574 = vld [vmem:[%s2571 + $0x10] sm:$0xff]
        %v2575 = vld [vmem:[%s2571 + $0x18] sm:$0xff]
        %v2576 = vld [vmem:[%s2571 + $0x20] sm:$0xff]
        %v2577 = vld [vmem:[%s2571 + $0x28] sm:$0xff]
        %v2578 = vld [vmem:[%s2571 + $0x30] sm:$0xff]
        %v2579 = vld [vmem:[%s2571 + $0x38] sm:$0xff]
        %v2580 = vld [vmem:[%s2571 + $0x40] sm:$0xff]
        %v2581 = vld [vmem:[%s2571 + $0x48] sm:$0xff]
        %v2582 = vld [vmem:[%s2571 + $0x50] sm:$0xff]
        %v2583 = vld [vmem:[%s2571 + $0x58] sm:$0xff]
        %v2584 = vld [vmem:[%s2571 + $0x60] sm:$0xff]
        %v2585 = vld [vmem:[%s2571 + $0x68] sm:$0xff]
        %v2586 = vld [vmem:[%s2571 + $0x70] sm:$0xff]
        %v2587 = vld [vmem:[%s2571 + $0x78] sm:$0xff]
        %v2588 = vld [vmem:[%s2571 + $0x80] sm:$0xff]
        %v2589 = vld [vmem:[%s2571 + $0x88] sm:$0xff]
        %v2590 = vld [vmem:[%s2571 + $0x90] sm:$0xff]
        %v2591 = vld [vmem:[%s2571 + $0x98] sm:$0xff]
        %v2592 = vld [vmem:[%s2571 + $0xa0] sm:$0xff]
        %v2593 = vld [vmem:[%s2571 + $0xa8] sm:$0xff]
        %v2594 = vld [vmem:[%s2571 + $0xb0] sm:$0xff]
        %v2595 = vld [vmem:[%s2571 + $0xb8] sm:$0xff]
        %v2596 = vld [vmem:[%s2571 + $0xc0] sm:$0xff]
        %v2597 = vld [vmem:[%s2571 + $0xc8] sm:$0xff]
        %v2598 = vld [vmem:[%s2571 + $0xd0] sm:$0xff]
        %v2599 = vld [vmem:[%s2571 + $0xd8] sm:$0xff]
        %v2600 = vld [vmem:[%s2571 + $0xe0] sm:$0xff]
        %v2601 = vld [vmem:[%s2571 + $0xe8] sm:$0xff]
        %v2602 = vld [vmem:[%s2571 + $0xf0] sm:$0xff]
        %v2603 = vld [vmem:[%s2571 + $0xf8] sm:$0xff]
        %v2604 = vld [vmem:[%s2571 + $0x100] sm:$0xff]
        %v2605 = vld [vmem:[%s2571 + $0x108] sm:$0xff]
        %v2606 = vld [vmem:[%s2571 + $0x110] sm:$0xff]
        %v2607 = vld [vmem:[%s2571 + $0x118] sm:$0xff]
        %v2608 = vld [vmem:[%s2571 + $0x120] sm:$0xff]
        %v2609 = vld [vmem:[%s2571 + $0x128] sm:$0xff]
        %v2610 = vld [vmem:[%s2571 + $0x130] sm:$0xff]
        %v2611 = vld [vmem:[%s2571 + $0x138] sm:$0xff]
        %v2612 = vld [vmem:[%s2571 + $0x140] sm:$0xff]
        %v2613 = vld [vmem:[%s2571 + $0x148] sm:$0xff]
        %v2614 = vld [vmem:[%s2571 + $0x150] sm:$0xff]
        %v2615 = vld [vmem:[%s2571 + $0x158] sm:$0xff]
        %v2616 = vld [vmem:[%s2571 + $0x160] sm:$0xff]
        %v2617 = vld [vmem:[%s2571 + $0x168] sm:$0xff]
        %v2618 = vld [vmem:[%s2571 + $0x170] sm:$0xff]
        %v2619 = vld [vmem:[%s2571 + $0x178] sm:$0xff]
        %v2620 = vld [vmem:[%s2571 + $0x180] sm:$0xff]
        %v2621 = vld [vmem:[%s2571 + $0x188] sm:$0xff]
        %v2622 = vld [vmem:[%s2571 + $0x190] sm:$0xff]
        %v2623 = vld [vmem:[%s2571 + $0x198] sm:$0xff]
        %v2624 = vld [vmem:[%s2571 + $0x1a0] sm:$0xff]
        %v2625 = vld [vmem:[%s2571 + $0x1a8] sm:$0xff]
        %v2626 = vld [vmem:[%s2571 + $0x1b0] sm:$0xff]
        %v2627 = vld [vmem:[%s2571 + $0x1b8] sm:$0xff]
        %v2628 = vld [vmem:[%s2571 + $0x1c0] sm:$0xff]
        %v2629 = vld [vmem:[%s2571 + $0x1c8] sm:$0xff]
        %v2630 = vld [vmem:[%s2571 + $0x1d0] sm:$0xff]
        %v2631 = vld [vmem:[%s2571 + $0x1d8] sm:$0xff]
        %v2632 = vld [vmem:[%s2571 + $0x1e0] sm:$0xff]
        %v2633 = vld [vmem:[%s2571 + $0x1e8] sm:$0xff]
        %v2634 = vld [vmem:[%s2571 + $0x1f0] sm:$0xff]
        %v2635 = vld [vmem:[%s2571 + $0x1f8] sm:$0xff]
        %v2637 = vshrl.u32 %v1963, 16
        %v2704 = vunpack.c.l.b16 %v2572
        %v2705 = vunpack.c.h.b16 %v2572
        %v2706 = vunpack.c.l.b16 %v2573
        %v2707 = vunpack.c.h.b16 %v2573
        %v2708 = vunpack.c.l.b16 %v2574
        %v2709 = vunpack.c.h.b16 %v2574
        %v2710 = vunpack.c.l.b16 %v2575
        %v2711 = vunpack.c.h.b16 %v2575
        %v2712 = vunpack.c.l.b16 %v2576
        %v2713 = vunpack.c.h.b16 %v2576
        %v2714 = vunpack.c.l.b16 %v2577
        %v2715 = vunpack.c.h.b16 %v2577
        %v2716 = vunpack.c.l.b16 %v2578
        %v2717 = vunpack.c.h.b16 %v2578
        %v2718 = vunpack.c.l.b16 %v2579
        %v2719 = vunpack.c.h.b16 %v2579
        %v2720 = vunpack.c.l.b16 %v2580
        %v2721 = vunpack.c.h.b16 %v2580
        %v2722 = vunpack.c.l.b16 %v2581
        %v2723 = vunpack.c.h.b16 %v2581
        %v2724 = vunpack.c.l.b16 %v2582
        %v2725 = vunpack.c.h.b16 %v2582
        %v2726 = vunpack.c.l.b16 %v2583
        %v2727 = vunpack.c.h.b16 %v2583
        %v2728 = vunpack.c.l.b16 %v2584
        %v2729 = vunpack.c.h.b16 %v2584
        %v2730 = vunpack.c.l.b16 %v2585
        %v2731 = vunpack.c.h.b16 %v2585
        %v2732 = vunpack.c.l.b16 %v2586
        %v2733 = vunpack.c.h.b16 %v2586
        %v2734 = vunpack.c.l.b16 %v2587
        %v2735 = vunpack.c.h.b16 %v2587
        %v2736 = vunpack.c.l.b16 %v2588
        %v2737 = vunpack.c.h.b16 %v2588
        %v2738 = vunpack.c.l.b16 %v2589
        %v2739 = vunpack.c.h.b16 %v2589
        %v2740 = vunpack.c.l.b16 %v2590
        %v2741 = vunpack.c.h.b16 %v2590
        %v2742 = vunpack.c.l.b16 %v2591
        %v2743 = vunpack.c.h.b16 %v2591
        %v2744 = vunpack.c.l.b16 %v2592
        %v2745 = vunpack.c.h.b16 %v2592
        %v2746 = vunpack.c.l.b16 %v2593
        %v2747 = vunpack.c.h.b16 %v2593
        %v2748 = vunpack.c.l.b16 %v2594
        %v2749 = vunpack.c.h.b16 %v2594
        %v2750 = vunpack.c.l.b16 %v2595
        %v2751 = vunpack.c.h.b16 %v2595
        %v2752 = vunpack.c.l.b16 %v2596
        %v2753 = vunpack.c.h.b16 %v2596
        %v2754 = vunpack.c.l.b16 %v2597
        %v2755 = vunpack.c.h.b16 %v2597
        %v2756 = vunpack.c.l.b16 %v2598
        %v2757 = vunpack.c.h.b16 %v2598
        %v2758 = vunpack.c.l.b16 %v2599
        %v2759 = vunpack.c.h.b16 %v2599
        %v2760 = vunpack.c.l.b16 %v2600
        %v2761 = vunpack.c.h.b16 %v2600
        %v2762 = vunpack.c.l.b16 %v2601
        %v2763 = vunpack.c.h.b16 %v2601
        %v2764 = vunpack.c.l.b16 %v2602
        %v2765 = vunpack.c.h.b16 %v2602
        %v2766 = vunpack.c.l.b16 %v2603
        %v2767 = vunpack.c.h.b16 %v2603
        %v2768 = vunpack.c.l.b16 %v2604
        %v2769 = vunpack.c.h.b16 %v2604
        %v2770 = vunpack.c.l.b16 %v2605
        %v2771 = vunpack.c.h.b16 %v2605
        %v2772 = vunpack.c.l.b16 %v2606
        %v2773 = vunpack.c.h.b16 %v2606
        %v2774 = vunpack.c.l.b16 %v2607
        %v2775 = vunpack.c.h.b16 %v2607
        %v2776 = vunpack.c.l.b16 %v2608
        %v2777 = vunpack.c.h.b16 %v2608
        %v2778 = vunpack.c.l.b16 %v2609
        %v2779 = vunpack.c.h.b16 %v2609
        %v2780 = vunpack.c.l.b16 %v2610
        %v2781 = vunpack.c.h.b16 %v2610
        %v2782 = vunpack.c.l.b16 %v2611
        %v2783 = vunpack.c.h.b16 %v2611
        %v2784 = vunpack.c.l.b16 %v2612
        %v2785 = vunpack.c.h.b16 %v2612
        %v2786 = vunpack.c.l.b16 %v2613
        %v2787 = vunpack.c.h.b16 %v2613
        %v2788 = vunpack.c.l.b16 %v2614
        %v2789 = vunpack.c.h.b16 %v2614
        %v2790 = vunpack.c.l.b16 %v2615
        %v2791 = vunpack.c.h.b16 %v2615
        %v2792 = vunpack.c.l.b16 %v2616
        %v2793 = vunpack.c.h.b16 %v2616
        %v2794 = vunpack.c.l.b16 %v2617
        %v2795 = vunpack.c.h.b16 %v2617
        %v2796 = vunpack.c.l.b16 %v2618
        %v2797 = vunpack.c.h.b16 %v2618
        %v2798 = vunpack.c.l.b16 %v2619
        %v2799 = vunpack.c.h.b16 %v2619
        %v2800 = vunpack.c.l.b16 %v2620
        %v2801 = vunpack.c.h.b16 %v2620
        %v2802 = vunpack.c.l.b16 %v2621
        %v2803 = vunpack.c.h.b16 %v2621
        %v2804 = vunpack.c.l.b16 %v2622
        %v2805 = vunpack.c.h.b16 %v2622
        %v2806 = vunpack.c.l.b16 %v2623
        %v2807 = vunpack.c.h.b16 %v2623
        %v2808 = vunpack.c.l.b16 %v2624
        %v2809 = vunpack.c.h.b16 %v2624
        %v2810 = vunpack.c.l.b16 %v2625
        %v2811 = vunpack.c.h.b16 %v2625
        %v2812 = vunpack.c.l.b16 %v2626
        %v2813 = vunpack.c.h.b16 %v2626
        %v2814 = vunpack.c.l.b16 %v2627
        %v2815 = vunpack.c.h.b16 %v2627
        %v2816 = vunpack.c.l.b16 %v2628
        %v2817 = vunpack.c.h.b16 %v2628
        %v2818 = vunpack.c.l.b16 %v2629
        %v2819 = vunpack.c.h.b16 %v2629
        %v2820 = vunpack.c.l.b16 %v2630
        %v2821 = vunpack.c.h.b16 %v2630
        %v2822 = vunpack.c.l.b16 %v2631
        %v2823 = vunpack.c.h.b16 %v2631
        %v2824 = vunpack.c.l.b16 %v2632
        %v2825 = vunpack.c.h.b16 %v2632
        %v2826 = vunpack.c.l.b16 %v2633
        %v2827 = vunpack.c.h.b16 %v2633
        %v2828 = vunpack.c.l.b16 %v2634
        %v2829 = vunpack.c.h.b16 %v2634
        %v2830 = vunpack.c.l.b16 %v2635
        %v2831 = vunpack.c.h.b16 %v2635
        %v2832 = vpack.c.b16 %v2712, %v2704
        %v2833 = vpack.c.b16 %v2713, %v2705
        %v2834 = vpack.c.b16 %v2714, %v2706
        %v2835 = vpack.c.b16 %v2715, %v2707
        %v2836 = vpack.c.b16 %v2716, %v2708
        %v2837 = vpack.c.b16 %v2717, %v2709
        %v2838 = vpack.c.b16 %v2718, %v2710
        %v2839 = vpack.c.b16 %v2719, %v2711
        %v2840 = vpack.c.b16 %v2728, %v2720
        %v2841 = vpack.c.b16 %v2729, %v2721
        %v2842 = vpack.c.b16 %v2730, %v2722
        %v2843 = vpack.c.b16 %v2731, %v2723
        %v2844 = vpack.c.b16 %v2732, %v2724
        %v2845 = vpack.c.b16 %v2733, %v2725
        %v2846 = vpack.c.b16 %v2734, %v2726
        %v2847 = vpack.c.b16 %v2735, %v2727
        %v2848 = vpack.c.b16 %v2744, %v2736
        %v2849 = vpack.c.b16 %v2745, %v2737
        %v2850 = vpack.c.b16 %v2746, %v2738
        %v2851 = vpack.c.b16 %v2747, %v2739
        %v2852 = vpack.c.b16 %v2748, %v2740
        %v2853 = vpack.c.b16 %v2749, %v2741
        %v2854 = vpack.c.b16 %v2750, %v2742
        %v2855 = vpack.c.b16 %v2751, %v2743
        %v2856 = vpack.c.b16 %v2760, %v2752
        %v2857 = vpack.c.b16 %v2761, %v2753
        %v2858 = vpack.c.b16 %v2762, %v2754
        %v2859 = vpack.c.b16 %v2763, %v2755
        %v2860 = vpack.c.b16 %v2764, %v2756
        %v2861 = vpack.c.b16 %v2765, %v2757
        %v2862 = vpack.c.b16 %v2766, %v2758
        %v2863 = vpack.c.b16 %v2767, %v2759
        %v2864 = vpack.c.b16 %v2776, %v2768
        %v2865 = vpack.c.b16 %v2777, %v2769
        %v2866 = vpack.c.b16 %v2778, %v2770
        %v2867 = vpack.c.b16 %v2779, %v2771
        %v2868 = vpack.c.b16 %v2780, %v2772
        %v2869 = vpack.c.b16 %v2781, %v2773
        %v2870 = vpack.c.b16 %v2782, %v2774
        %v2871 = vpack.c.b16 %v2783, %v2775
        %v2872 = vpack.c.b16 %v2792, %v2784
        %v2873 = vpack.c.b16 %v2793, %v2785
        %v2874 = vpack.c.b16 %v2794, %v2786
        %v2875 = vpack.c.b16 %v2795, %v2787
        %v2876 = vpack.c.b16 %v2796, %v2788
        %v2877 = vpack.c.b16 %v2797, %v2789
        %v2878 = vpack.c.b16 %v2798, %v2790
        %v2879 = vpack.c.b16 %v2799, %v2791
        %v2880 = vpack.c.b16 %v2808, %v2800
        %v2881 = vpack.c.b16 %v2809, %v2801
        %v2882 = vpack.c.b16 %v2810, %v2802
        %v2883 = vpack.c.b16 %v2811, %v2803
        %v2884 = vpack.c.b16 %v2812, %v2804
        %v2885 = vpack.c.b16 %v2813, %v2805
        %v2886 = vpack.c.b16 %v2814, %v2806
        %v2887 = vpack.c.b16 %v2815, %v2807
        %v2888 = vpack.c.b16 %v2824, %v2816
        %v2889 = vpack.c.b16 %v2825, %v2817
        %v2890 = vpack.c.b16 %v2826, %v2818
        %v2891 = vpack.c.b16 %v2827, %v2819
        %v2892 = vpack.c.b16 %v2828, %v2820
        %v2893 = vpack.c.b16 %v2829, %v2821
        %v2894 = vpack.c.b16 %v2830, %v2822
        %v2895 = vpack.c.b16 %v2831, %v2823
        %2960 = vmatprep.subr.bf16.mxu0 %v2889
        %2961 = vmatpush1.bf16.msra.mxu0 %v2888
        %2962 = vmatprep.subr.bf16.mxu0 %v2881
        %2963 = vmatpush1.bf16.msra.mxu0 %v2880
        %2964 = vmatprep.subr.bf16.mxu0 %v2873
        %2965 = vmatpush1.bf16.msra.mxu0 %v2872
        %2966 = vmatprep.subr.bf16.mxu0 %v2865
        %2967 = vmatpush1.bf16.msra.mxu0 %v2864
        %2968 = vmatprep.subr.bf16.mxu0 %v2857
        %2969 = vmatpush1.bf16.msra.mxu0 %v2856
        %2970 = vmatprep.subr.bf16.mxu0 %v2849
        %2971 = vmatpush1.bf16.msra.mxu0 %v2848
        %2972 = vmatprep.subr.bf16.mxu0 %v2841
        %2973 = vmatpush1.bf16.msra.mxu0 %v2840
        %2974 = vmatprep.subr.bf16.mxu0 %v2833
        %2975 = vmatpush1.bf16.msra.mxu0 %v2832
        %2976 = vmatprep.subr.bf16.mxu0 0
        %2977 = vmatpush2.bf16.msra.mxu0 0
        %2978 = vmatprep.subr.bf16.mxu0 0
        %2979 = vmatpush2.bf16.msra.mxu0 0
        %2980 = vmatprep.subr.bf16.mxu0 0
        %2981 = vmatpush2.bf16.msra.mxu0 0
        %2982 = vmatprep.subr.bf16.mxu0 0
        %2983 = vmatpush2.bf16.msra.mxu0 0
        %2984 = vmatprep.subr.bf16.mxu0 0
        %2985 = vmatpush2.bf16.msra.mxu0 0
        %2986 = vmatprep.subr.bf16.mxu0 0
        %2987 = vmatpush2.bf16.msra.mxu0 0
        %2988 = vmatprep.subr.bf16.mxu0 0
        %2989 = vmatpush2.bf16.msra.mxu0 0
        %2990 = vmatprep.subr.bf16.mxu0 0
        %2991 = vmatpush2.bf16.msra.mxu0 0
        %2992 = vmatprep.mubr.bf16.mxu0 0
        %2993 = vmatmul.mubr.bf16.gmra.mxu0 %v2637
        %v2994 = vpop.f32.mrf.mxu0
        %v2995 = vadd.f32 0.0, %v2994
        %v2996 = vpop.f32.mrf.mxu0
        %v2997 = vadd.f32 0.0, %v2996
        %v2998 = vpop.f32.mrf.mxu0
        %v2999 = vpop.f32.mrf.mxu0
        %3000 = vdwg.mxu0
        %3001 = vmatprep.subr.bf16.mxu0 %v2891
        %3002 = vmatpush1.bf16.msra.mxu0 %v2890
        %3003 = vmatprep.subr.bf16.mxu0 %v2883
        %3004 = vmatpush1.bf16.msra.mxu0 %v2882
        %3005 = vmatprep.subr.bf16.mxu0 %v2875
        %3006 = vmatpush1.bf16.msra.mxu0 %v2874
        %3007 = vmatprep.subr.bf16.mxu0 %v2867
        %3008 = vmatpush1.bf16.msra.mxu0 %v2866
        %3009 = vmatprep.subr.bf16.mxu0 %v2859
        %3010 = vmatpush1.bf16.msra.mxu0 %v2858
        %3011 = vmatprep.subr.bf16.mxu0 %v2851
        %3012 = vmatpush1.bf16.msra.mxu0 %v2850
        %3013 = vmatprep.subr.bf16.mxu0 %v2843
        %3014 = vmatpush1.bf16.msra.mxu0 %v2842
        %3015 = vmatprep.subr.bf16.mxu0 %v2835
        %3016 = vmatpush1.bf16.msra.mxu0 %v2834
        %3017 = vmatprep.subr.bf16.mxu0 0
        %3018 = vmatpush2.bf16.msra.mxu0 0
        %3019 = vmatprep.subr.bf16.mxu0 0
        %3020 = vmatpush2.bf16.msra.mxu0 0
        %3021 = vmatprep.subr.bf16.mxu0 0
        %3022 = vmatpush2.bf16.msra.mxu0 0
        %3023 = vmatprep.subr.bf16.mxu0 0
        %3024 = vmatpush2.bf16.msra.mxu0 0
        %3025 = vmatprep.subr.bf16.mxu0 0
        %3026 = vmatpush2.bf16.msra.mxu0 0
        %3027 = vmatprep.subr.bf16.mxu0 0
        %3028 = vmatpush2.bf16.msra.mxu0 0
        %3029 = vmatprep.subr.bf16.mxu0 0
        %3030 = vmatpush2.bf16.msra.mxu0 0
        %3031 = vmatprep.subr.bf16.mxu0 0
        %3032 = vmatpush2.bf16.msra.mxu0 0
        %3033 = vmatprep.mubr.bf16.mxu0 0
        %3034 = vmatmul.mubr.bf16.gmra.mxu0 %v2637
        %v3035 = vpop.f32.mrf.mxu0
        %v3036 = vadd.f32 0.0, %v3035
        %v3037 = vpop.f32.mrf.mxu0
        %v3038 = vadd.f32 0.0, %v3037
        %v3039 = vpop.f32.mrf.mxu0
        %v3040 = vpop.f32.mrf.mxu0
        %3041 = vdwg.mxu0
        %3042 = vmatprep.subr.bf16.mxu0 %v2893
        %3043 = vmatpush1.bf16.msra.mxu0 %v2892
        %3044 = vmatprep.subr.bf16.mxu0 %v2885
        %3045 = vmatpush1.bf16.msra.mxu0 %v2884
        %3046 = vmatprep.subr.bf16.mxu0 %v2877
        %3047 = vmatpush1.bf16.msra.mxu0 %v2876
        %3048 = vmatprep.subr.bf16.mxu0 %v2869
        %3049 = vmatpush1.bf16.msra.mxu0 %v2868
        %3050 = vmatprep.subr.bf16.mxu0 %v2861
        %3051 = vmatpush1.bf16.msra.mxu0 %v2860
        %3052 = vmatprep.subr.bf16.mxu0 %v2853
        %3053 = vmatpush1.bf16.msra.mxu0 %v2852
        %3054 = vmatprep.subr.bf16.mxu0 %v2845
        %3055 = vmatpush1.bf16.msra.mxu0 %v2844
        %3056 = vmatprep.subr.bf16.mxu0 %v2837
        %3057 = vmatpush1.bf16.msra.mxu0 %v2836
        %3058 = vmatprep.subr.bf16.mxu0 0
        %3059 = vmatpush2.bf16.msra.mxu0 0
        %3060 = vmatprep.subr.bf16.mxu0 0
        %3061 = vmatpush2.bf16.msra.mxu0 0
        %3062 = vmatprep.subr.bf16.mxu0 0
        %3063 = vmatpush2.bf16.msra.mxu0 0
        %3064 = vmatprep.subr.bf16.mxu0 0
        %3065 = vmatpush2.bf16.msra.mxu0 0
        %3066 = vmatprep.subr.bf16.mxu0 0
        %3067 = vmatpush2.bf16.msra.mxu0 0
        %3068 = vmatprep.subr.bf16.mxu0 0
        %3069 = vmatpush2.bf16.msra.mxu0 0
        %3070 = vmatprep.subr.bf16.mxu0 0
        %3071 = vmatpush2.bf16.msra.mxu0 0
        %3072 = vmatprep.subr.bf16.mxu0 0
        %3073 = vmatpush2.bf16.msra.mxu0 0
        %3074 = vmatprep.mubr.bf16.mxu0 0
        %3075 = vmatmul.mubr.bf16.gmra.mxu0 %v2637
        %v3076 = vpop.f32.mrf.mxu0
        %v3077 = vadd.f32 0.0, %v3076
        %v3078 = vpop.f32.mrf.mxu0
        %v3079 = vadd.f32 0.0, %v3078
        %v3080 = vpop.f32.mrf.mxu0
        %v3081 = vpop.f32.mrf.mxu0
        %3082 = vdwg.mxu0
        %3083 = vmatprep.subr.bf16.mxu0 %v2895
        %3084 = vmatpush1.bf16.msra.mxu0 %v2894
        %3085 = vmatprep.subr.bf16.mxu0 %v2887
        %3086 = vmatpush1.bf16.msra.mxu0 %v2886
        %3087 = vmatprep.subr.bf16.mxu0 %v2879
        %3088 = vmatpush1.bf16.msra.mxu0 %v2878
        %3089 = vmatprep.subr.bf16.mxu0 %v2871
        %3090 = vmatpush1.bf16.msra.mxu0 %v2870
        %3091 = vmatprep.subr.bf16.mxu0 %v2863
        %3092 = vmatpush1.bf16.msra.mxu0 %v2862
        %3093 = vmatprep.subr.bf16.mxu0 %v2855
        %3094 = vmatpush1.bf16.msra.mxu0 %v2854
        %3095 = vmatprep.subr.bf16.mxu0 %v2847
        %3096 = vmatpush1.bf16.msra.mxu0 %v2846
        %3097 = vmatprep.subr.bf16.mxu0 %v2839
        %3098 = vmatpush1.bf16.msra.mxu0 %v2838
        %3099 = vmatprep.subr.bf16.mxu0 0
        %3100 = vmatpush2.bf16.msra.mxu0 0
        %3101 = vmatprep.subr.bf16.mxu0 0
        %3102 = vmatpush2.bf16.msra.mxu0 0
        %3103 = vmatprep.subr.bf16.mxu0 0
        %3104 = vmatpush2.bf16.msra.mxu0 0
        %3105 = vmatprep.subr.bf16.mxu0 0
        %3106 = vmatpush2.bf16.msra.mxu0 0
        %3107 = vmatprep.subr.bf16.mxu0 0
        %3108 = vmatpush2.bf16.msra.mxu0 0
        %3109 = vmatprep.subr.bf16.mxu0 0
        %3110 = vmatpush2.bf16.msra.mxu0 0
        %3111 = vmatprep.subr.bf16.mxu0 0
        %3112 = vmatpush2.bf16.msra.mxu0 0
        %3113 = vmatprep.subr.bf16.mxu0 0
        %3114 = vmatpush2.bf16.msra.mxu0 0
        %3115 = vmatprep.mubr.bf16.mxu0 0
        %3116 = vmatmul.mubr.bf16.gmra.mxu0 %v2637
        %v3117 = vpop.f32.mrf.mxu0
        %v3118 = vadd.f32 0.0, %v3117
        %v3119 = vpop.f32.mrf.mxu0
        %v3120 = vadd.f32 0.0, %v3119
        %v3121 = vpop.f32.mrf.mxu0
        %v3122 = vpop.f32.mrf.mxu0
        %3123 = vdwg.mxu0
        %v3132 = vcombine.low %v2995, %v2997
        %v3133 = vcombine.low %v3036, %v3038
        %v3134 = vcombine.low %v3077, %v3079
        %v3135 = vcombine.low %v3118, %v3120
        %v3137 = vunpack.c.l.s4 1966171168
        %v3138 = vunpack.c.0.s8 %v3137
        %v3139 = vlaneseq
        %v3140 = vshrl.u32 %v3139, 7
        %v3141 = vsub.s32 %v3138, %v3140
        %v3142 = vrot.slane %v3132, %v3141
        %v3144 = vunpack.c.l.s4 1966171168
        %v3145 = vunpack.c.0.s8 %v3144
        %v3146 = vlaneseq
        %v3147 = vshrl.u32 %v3146, 7
        %v3148 = vsub.s32 %v3145, %v3147
        %v3149 = vrot.slane %v3133, %v3148
        %v3151 = vunpack.c.l.s4 1966171168
        %v3152 = vunpack.c.0.s8 %v3151
        %v3153 = vlaneseq
        %v3154 = vshrl.u32 %v3153, 7
        %v3155 = vsub.s32 %v3152, %v3154
        %v3156 = vrot.slane %v3134, %v3155
        %v3158 = vunpack.c.l.s4 1966171168
        %v3159 = vunpack.c.0.s8 %v3158
        %v3160 = vlaneseq
        %v3161 = vshrl.u32 %v3160, 7
        %v3162 = vsub.s32 %v3159, %v3161
        %v3163 = vrot.slane %v3135, %v3162
        %v3164 = vcombine.low %v3142, %v3149
        %v3165 = vcombine.low %v3156, %v3163
        %v3167 = vunpack.c.l.s4 1966171168
        %v3168 = vunpack.c.0.s8 %v3167
        %v3169 = vlaneseq
        %v3170 = vshrl.u32 %v3169, 7
        %v3171 = vsub.s32 %v3168, %v3170
        %v3172 = vrot.slane %v3164, %v3171
        %v3174 = vunpack.c.l.s4 1966171168
        %v3175 = vunpack.c.0.s8 %v3174
        %v3176 = vlaneseq
        %v3177 = vshrl.u32 %v3176, 7
        %v3178 = vsub.s32 %v3175, %v3177
        %v3179 = vrot.slane %v3165, %v3178
        %v3180 = vcombine.low %v3172, %v3179
        %v3182 = vadd.f32 %v2570, %v3180
        %s3183 = scalar_lea.vmem [#allocation14], 1024
        %v3184 = vld [vmem:[%s3183] sm:$0xff]
        %v3185 = vld [vmem:[%s3183 + $0x8] sm:$0xff]
        %v3186 = vld [vmem:[%s3183 + $0x10] sm:$0xff]
        %v3187 = vld [vmem:[%s3183 + $0x18] sm:$0xff]
        %v3188 = vld [vmem:[%s3183 + $0x20] sm:$0xff]
        %v3189 = vld [vmem:[%s3183 + $0x28] sm:$0xff]
        %v3190 = vld [vmem:[%s3183 + $0x30] sm:$0xff]
        %v3191 = vld [vmem:[%s3183 + $0x38] sm:$0xff]
        %v3192 = vld [vmem:[%s3183 + $0x40] sm:$0xff]
        %v3193 = vld [vmem:[%s3183 + $0x48] sm:$0xff]
        %v3194 = vld [vmem:[%s3183 + $0x50] sm:$0xff]
        %v3195 = vld [vmem:[%s3183 + $0x58] sm:$0xff]
        %v3196 = vld [vmem:[%s3183 + $0x60] sm:$0xff]
        %v3197 = vld [vmem:[%s3183 + $0x68] sm:$0xff]
        %v3198 = vld [vmem:[%s3183 + $0x70] sm:$0xff]
        %v3199 = vld [vmem:[%s3183 + $0x78] sm:$0xff]
        %v3200 = vld [vmem:[%s3183 + $0x80] sm:$0xff]
        %v3201 = vld [vmem:[%s3183 + $0x88] sm:$0xff]
        %v3202 = vld [vmem:[%s3183 + $0x90] sm:$0xff]
        %v3203 = vld [vmem:[%s3183 + $0x98] sm:$0xff]
        %v3204 = vld [vmem:[%s3183 + $0xa0] sm:$0xff]
        %v3205 = vld [vmem:[%s3183 + $0xa8] sm:$0xff]
        %v3206 = vld [vmem:[%s3183 + $0xb0] sm:$0xff]
        %v3207 = vld [vmem:[%s3183 + $0xb8] sm:$0xff]
        %v3208 = vld [vmem:[%s3183 + $0xc0] sm:$0xff]
        %v3209 = vld [vmem:[%s3183 + $0xc8] sm:$0xff]
        %v3210 = vld [vmem:[%s3183 + $0xd0] sm:$0xff]
        %v3211 = vld [vmem:[%s3183 + $0xd8] sm:$0xff]
        %v3212 = vld [vmem:[%s3183 + $0xe0] sm:$0xff]
        %v3213 = vld [vmem:[%s3183 + $0xe8] sm:$0xff]
        %v3214 = vld [vmem:[%s3183 + $0xf0] sm:$0xff]
        %v3215 = vld [vmem:[%s3183 + $0xf8] sm:$0xff]
        %v3216 = vld [vmem:[%s3183 + $0x100] sm:$0xff]
        %v3217 = vld [vmem:[%s3183 + $0x108] sm:$0xff]
        %v3218 = vld [vmem:[%s3183 + $0x110] sm:$0xff]
        %v3219 = vld [vmem:[%s3183 + $0x118] sm:$0xff]
        %v3220 = vld [vmem:[%s3183 + $0x120] sm:$0xff]
        %v3221 = vld [vmem:[%s3183 + $0x128] sm:$0xff]
        %v3222 = vld [vmem:[%s3183 + $0x130] sm:$0xff]
        %v3223 = vld [vmem:[%s3183 + $0x138] sm:$0xff]
        %v3224 = vld [vmem:[%s3183 + $0x140] sm:$0xff]
        %v3225 = vld [vmem:[%s3183 + $0x148] sm:$0xff]
        %v3226 = vld [vmem:[%s3183 + $0x150] sm:$0xff]
        %v3227 = vld [vmem:[%s3183 + $0x158] sm:$0xff]
        %v3228 = vld [vmem:[%s3183 + $0x160] sm:$0xff]
        %v3229 = vld [vmem:[%s3183 + $0x168] sm:$0xff]
        %v3230 = vld [vmem:[%s3183 + $0x170] sm:$0xff]
        %v3231 = vld [vmem:[%s3183 + $0x178] sm:$0xff]
        %v3232 = vld [vmem:[%s3183 + $0x180] sm:$0xff]
        %v3233 = vld [vmem:[%s3183 + $0x188] sm:$0xff]
        %v3234 = vld [vmem:[%s3183 + $0x190] sm:$0xff]
        %v3235 = vld [vmem:[%s3183 + $0x198] sm:$0xff]
        %v3236 = vld [vmem:[%s3183 + $0x1a0] sm:$0xff]
        %v3237 = vld [vmem:[%s3183 + $0x1a8] sm:$0xff]
        %v3238 = vld [vmem:[%s3183 + $0x1b0] sm:$0xff]
        %v3239 = vld [vmem:[%s3183 + $0x1b8] sm:$0xff]
        %v3240 = vld [vmem:[%s3183 + $0x1c0] sm:$0xff]
        %v3241 = vld [vmem:[%s3183 + $0x1c8] sm:$0xff]
        %v3242 = vld [vmem:[%s3183 + $0x1d0] sm:$0xff]
        %v3243 = vld [vmem:[%s3183 + $0x1d8] sm:$0xff]
        %v3244 = vld [vmem:[%s3183 + $0x1e0] sm:$0xff]
        %v3245 = vld [vmem:[%s3183 + $0x1e8] sm:$0xff]
        %v3246 = vld [vmem:[%s3183 + $0x1f0] sm:$0xff]
        %v3247 = vld [vmem:[%s3183 + $0x1f8] sm:$0xff]
        %v3249 = vrot.slane %v1963, 1
        %v3315 = vunpack.c.l.b16 %v3184
        %v3316 = vunpack.c.h.b16 %v3184
        %v3317 = vunpack.c.l.b16 %v3185
        %v3318 = vunpack.c.h.b16 %v3185
        %v3319 = vunpack.c.l.b16 %v3186
        %v3320 = vunpack.c.h.b16 %v3186
        %v3321 = vunpack.c.l.b16 %v3187
        %v3322 = vunpack.c.h.b16 %v3187
        %v3323 = vunpack.c.l.b16 %v3188
        %v3324 = vunpack.c.h.b16 %v3188
        %v3325 = vunpack.c.l.b16 %v3189
        %v3326 = vunpack.c.h.b16 %v3189
        %v3327 = vunpack.c.l.b16 %v3190
        %v3328 = vunpack.c.h.b16 %v3190
        %v3329 = vunpack.c.l.b16 %v3191
        %v3330 = vunpack.c.h.b16 %v3191
        %v3331 = vunpack.c.l.b16 %v3192
        %v3332 = vunpack.c.h.b16 %v3192
        %v3333 = vunpack.c.l.b16 %v3193
        %v3334 = vunpack.c.h.b16 %v3193
        %v3335 = vunpack.c.l.b16 %v3194
        %v3336 = vunpack.c.h.b16 %v3194
        %v3337 = vunpack.c.l.b16 %v3195
        %v3338 = vunpack.c.h.b16 %v3195
        %v3339 = vunpack.c.l.b16 %v3196
        %v3340 = vunpack.c.h.b16 %v3196
        %v3341 = vunpack.c.l.b16 %v3197
        %v3342 = vunpack.c.h.b16 %v3197
        %v3343 = vunpack.c.l.b16 %v3198
        %v3344 = vunpack.c.h.b16 %v3198
        %v3345 = vunpack.c.l.b16 %v3199
        %v3346 = vunpack.c.h.b16 %v3199
        %v3347 = vunpack.c.l.b16 %v3200
        %v3348 = vunpack.c.h.b16 %v3200
        %v3349 = vunpack.c.l.b16 %v3201
        %v3350 = vunpack.c.h.b16 %v3201
        %v3351 = vunpack.c.l.b16 %v3202
        %v3352 = vunpack.c.h.b16 %v3202
        %v3353 = vunpack.c.l.b16 %v3203
        %v3354 = vunpack.c.h.b16 %v3203
        %v3355 = vunpack.c.l.b16 %v3204
        %v3356 = vunpack.c.h.b16 %v3204
        %v3357 = vunpack.c.l.b16 %v3205
        %v3358 = vunpack.c.h.b16 %v3205
        %v3359 = vunpack.c.l.b16 %v3206
        %v3360 = vunpack.c.h.b16 %v3206
        %v3361 = vunpack.c.l.b16 %v3207
        %v3362 = vunpack.c.h.b16 %v3207
        %v3363 = vunpack.c.l.b16 %v3208
        %v3364 = vunpack.c.h.b16 %v3208
        %v3365 = vunpack.c.l.b16 %v3209
        %v3366 = vunpack.c.h.b16 %v3209
        %v3367 = vunpack.c.l.b16 %v3210
        %v3368 = vunpack.c.h.b16 %v3210
        %v3369 = vunpack.c.l.b16 %v3211
        %v3370 = vunpack.c.h.b16 %v3211
        %v3371 = vunpack.c.l.b16 %v3212
        %v3372 = vunpack.c.h.b16 %v3212
        %v3373 = vunpack.c.l.b16 %v3213
        %v3374 = vunpack.c.h.b16 %v3213
        %v3375 = vunpack.c.l.b16 %v3214
        %v3376 = vunpack.c.h.b16 %v3214
        %v3377 = vunpack.c.l.b16 %v3215
        %v3378 = vunpack.c.h.b16 %v3215
        %v3379 = vunpack.c.l.b16 %v3216
        %v3380 = vunpack.c.h.b16 %v3216
        %v3381 = vunpack.c.l.b16 %v3217
        %v3382 = vunpack.c.h.b16 %v3217
        %v3383 = vunpack.c.l.b16 %v3218
        %v3384 = vunpack.c.h.b16 %v3218
        %v3385 = vunpack.c.l.b16 %v3219
        %v3386 = vunpack.c.h.b16 %v3219
        %v3387 = vunpack.c.l.b16 %v3220
        %v3388 = vunpack.c.h.b16 %v3220
        %v3389 = vunpack.c.l.b16 %v3221
        %v3390 = vunpack.c.h.b16 %v3221
        %v3391 = vunpack.c.l.b16 %v3222
        %v3392 = vunpack.c.h.b16 %v3222
        %v3393 = vunpack.c.l.b16 %v3223
        %v3394 = vunpack.c.h.b16 %v3223
        %v3395 = vunpack.c.l.b16 %v3224
        %v3396 = vunpack.c.h.b16 %v3224
        %v3397 = vunpack.c.l.b16 %v3225
        %v3398 = vunpack.c.h.b16 %v3225
        %v3399 = vunpack.c.l.b16 %v3226
        %v3400 = vunpack.c.h.b16 %v3226
        %v3401 = vunpack.c.l.b16 %v3227
        %v3402 = vunpack.c.h.b16 %v3227
        %v3403 = vunpack.c.l.b16 %v3228
        %v3404 = vunpack.c.h.b16 %v3228
        %v3405 = vunpack.c.l.b16 %v3229
        %v3406 = vunpack.c.h.b16 %v3229
        %v3407 = vunpack.c.l.b16 %v3230
        %v3408 = vunpack.c.h.b16 %v3230
        %v3409 = vunpack.c.l.b16 %v3231
        %v3410 = vunpack.c.h.b16 %v3231
        %v3411 = vunpack.c.l.b16 %v3232
        %v3412 = vunpack.c.h.b16 %v3232
        %v3413 = vunpack.c.l.b16 %v3233
        %v3414 = vunpack.c.h.b16 %v3233
        %v3415 = vunpack.c.l.b16 %v3234
        %v3416 = vunpack.c.h.b16 %v3234
        %v3417 = vunpack.c.l.b16 %v3235
        %v3418 = vunpack.c.h.b16 %v3235
        %v3419 = vunpack.c.l.b16 %v3236
        %v3420 = vunpack.c.h.b16 %v3236
        %v3421 = vunpack.c.l.b16 %v3237
        %v3422 = vunpack.c.h.b16 %v3237
        %v3423 = vunpack.c.l.b16 %v3238
        %v3424 = vunpack.c.h.b16 %v3238
        %v3425 = vunpack.c.l.b16 %v3239
        %v3426 = vunpack.c.h.b16 %v3239
        %v3427 = vunpack.c.l.b16 %v3240
        %v3428 = vunpack.c.h.b16 %v3240
        %v3429 = vunpack.c.l.b16 %v3241
        %v3430 = vunpack.c.h.b16 %v3241
        %v3431 = vunpack.c.l.b16 %v3242
        %v3432 = vunpack.c.h.b16 %v3242
        %v3433 = vunpack.c.l.b16 %v3243
        %v3434 = vunpack.c.h.b16 %v3243
        %v3435 = vunpack.c.l.b16 %v3244
        %v3436 = vunpack.c.h.b16 %v3244
        %v3437 = vunpack.c.l.b16 %v3245
        %v3438 = vunpack.c.h.b16 %v3245
        %v3439 = vunpack.c.l.b16 %v3246
        %v3440 = vunpack.c.h.b16 %v3246
        %v3441 = vunpack.c.l.b16 %v3247
        %v3442 = vunpack.c.h.b16 %v3247
        %v3443 = vpack.c.b16 %v3323, %v3315
        %v3444 = vpack.c.b16 %v3324, %v3316
        %v3445 = vpack.c.b16 %v3325, %v3317
        %v3446 = vpack.c.b16 %v3326, %v3318
        %v3447 = vpack.c.b16 %v3327, %v3319
        %v3448 = vpack.c.b16 %v3328, %v3320
        %v3449 = vpack.c.b16 %v3329, %v3321
        %v3450 = vpack.c.b16 %v3330, %v3322
        %v3451 = vpack.c.b16 %v3339, %v3331
        %v3452 = vpack.c.b16 %v3340, %v3332
        %v3453 = vpack.c.b16 %v3341, %v3333
        %v3454 = vpack.c.b16 %v3342, %v3334
        %v3455 = vpack.c.b16 %v3343, %v3335
        %v3456 = vpack.c.b16 %v3344, %v3336
        %v3457 = vpack.c.b16 %v3345, %v3337
        %v3458 = vpack.c.b16 %v3346, %v3338
        %v3459 = vpack.c.b16 %v3355, %v3347
        %v3460 = vpack.c.b16 %v3356, %v3348
        %v3461 = vpack.c.b16 %v3357, %v3349
        %v3462 = vpack.c.b16 %v3358, %v3350
        %v3463 = vpack.c.b16 %v3359, %v3351
        %v3464 = vpack.c.b16 %v3360, %v3352
        %v3465 = vpack.c.b16 %v3361, %v3353
        %v3466 = vpack.c.b16 %v3362, %v3354
        %v3467 = vpack.c.b16 %v3371, %v3363
        %v3468 = vpack.c.b16 %v3372, %v3364
        %v3469 = vpack.c.b16 %v3373, %v3365
        %v3470 = vpack.c.b16 %v3374, %v3366
        %v3471 = vpack.c.b16 %v3375, %v3367
        %v3472 = vpack.c.b16 %v3376, %v3368
        %v3473 = vpack.c.b16 %v3377, %v3369
        %v3474 = vpack.c.b16 %v3378, %v3370
        %v3475 = vpack.c.b16 %v3387, %v3379
        %v3476 = vpack.c.b16 %v3388, %v3380
        %v3477 = vpack.c.b16 %v3389, %v3381
        %v3478 = vpack.c.b16 %v3390, %v3382
        %v3479 = vpack.c.b16 %v3391, %v3383
        %v3480 = vpack.c.b16 %v3392, %v3384
        %v3481 = vpack.c.b16 %v3393, %v3385
        %v3482 = vpack.c.b16 %v3394, %v3386
        %v3483 = vpack.c.b16 %v3403, %v3395
        %v3484 = vpack.c.b16 %v3404, %v3396
        %v3485 = vpack.c.b16 %v3405, %v3397
        %v3486 = vpack.c.b16 %v3406, %v3398
        %v3487 = vpack.c.b16 %v3407, %v3399
        %v3488 = vpack.c.b16 %v3408, %v3400
        %v3489 = vpack.c.b16 %v3409, %v3401
        %v3490 = vpack.c.b16 %v3410, %v3402
        %v3491 = vpack.c.b16 %v3419, %v3411
        %v3492 = vpack.c.b16 %v3420, %v3412
        %v3493 = vpack.c.b16 %v3421, %v3413
        %v3494 = vpack.c.b16 %v3422, %v3414
        %v3495 = vpack.c.b16 %v3423, %v3415
        %v3496 = vpack.c.b16 %v3424, %v3416
        %v3497 = vpack.c.b16 %v3425, %v3417
        %v3498 = vpack.c.b16 %v3426, %v3418
        %v3499 = vpack.c.b16 %v3435, %v3427
        %v3500 = vpack.c.b16 %v3436, %v3428
        %v3501 = vpack.c.b16 %v3437, %v3429
        %v3502 = vpack.c.b16 %v3438, %v3430
        %v3503 = vpack.c.b16 %v3439, %v3431
        %v3504 = vpack.c.b16 %v3440, %v3432
        %v3505 = vpack.c.b16 %v3441, %v3433
        %v3506 = vpack.c.b16 %v3442, %v3434
        %3571 = vmatprep.subr.bf16.mxu0 %v3500
        %3572 = vmatpush1.bf16.msra.mxu0 %v3499
        %3573 = vmatprep.subr.bf16.mxu0 %v3492
        %3574 = vmatpush1.bf16.msra.mxu0 %v3491
        %3575 = vmatprep.subr.bf16.mxu0 %v3484
        %3576 = vmatpush1.bf16.msra.mxu0 %v3483
        %3577 = vmatprep.subr.bf16.mxu0 %v3476
        %3578 = vmatpush1.bf16.msra.mxu0 %v3475
        %3579 = vmatprep.subr.bf16.mxu0 %v3468
        %3580 = vmatpush1.bf16.msra.mxu0 %v3467
        %3581 = vmatprep.subr.bf16.mxu0 %v3460
        %3582 = vmatpush1.bf16.msra.mxu0 %v3459
        %3583 = vmatprep.subr.bf16.mxu0 %v3452
        %3584 = vmatpush1.bf16.msra.mxu0 %v3451
        %3585 = vmatprep.subr.bf16.mxu0 %v3444
        %3586 = vmatpush1.bf16.msra.mxu0 %v3443
        %3587 = vmatprep.subr.bf16.mxu0 0
        %3588 = vmatpush2.bf16.msra.mxu0 0
        %3589 = vmatprep.subr.bf16.mxu0 0
        %3590 = vmatpush2.bf16.msra.mxu0 0
        %3591 = vmatprep.subr.bf16.mxu0 0
        %3592 = vmatpush2.bf16.msra.mxu0 0
        %3593 = vmatprep.subr.bf16.mxu0 0
        %3594 = vmatpush2.bf16.msra.mxu0 0
        %3595 = vmatprep.subr.bf16.mxu0 0
        %3596 = vmatpush2.bf16.msra.mxu0 0
        %3597 = vmatprep.subr.bf16.mxu0 0
        %3598 = vmatpush2.bf16.msra.mxu0 0
        %3599 = vmatprep.subr.bf16.mxu0 0
        %3600 = vmatpush2.bf16.msra.mxu0 0
        %3601 = vmatprep.subr.bf16.mxu0 0
        %3602 = vmatpush2.bf16.msra.mxu0 0
        %3603 = vmatprep.mubr.bf16.mxu0 0
        %3604 = vmatmul.mubr.bf16.gmra.mxu0 %v3249
        %v3605 = vpop.f32.mrf.mxu0
        %v3606 = vadd.f32 0.0, %v3605
        %v3607 = vpop.f32.mrf.mxu0
        %v3608 = vadd.f32 0.0, %v3607
        %v3609 = vpop.f32.mrf.mxu0
        %v3610 = vpop.f32.mrf.mxu0
        %3611 = vdwg.mxu0
        %3612 = vmatprep.subr.bf16.mxu0 %v3502
        %3613 = vmatpush1.bf16.msra.mxu0 %v3501
        %3614 = vmatprep.subr.bf16.mxu0 %v3494
        %3615 = vmatpush1.bf16.msra.mxu0 %v3493
        %3616 = vmatprep.subr.bf16.mxu0 %v3486
        %3617 = vmatpush1.bf16.msra.mxu0 %v3485
        %3618 = vmatprep.subr.bf16.mxu0 %v3478
        %3619 = vmatpush1.bf16.msra.mxu0 %v3477
        %3620 = vmatprep.subr.bf16.mxu0 %v3470
        %3621 = vmatpush1.bf16.msra.mxu0 %v3469
        %3622 = vmatprep.subr.bf16.mxu0 %v3462
        %3623 = vmatpush1.bf16.msra.mxu0 %v3461
        %3624 = vmatprep.subr.bf16.mxu0 %v3454
        %3625 = vmatpush1.bf16.msra.mxu0 %v3453
        %3626 = vmatprep.subr.bf16.mxu0 %v3446
        %3627 = vmatpush1.bf16.msra.mxu0 %v3445
        %3628 = vmatprep.subr.bf16.mxu0 0
        %3629 = vmatpush2.bf16.msra.mxu0 0
        %3630 = vmatprep.subr.bf16.mxu0 0
        %3631 = vmatpush2.bf16.msra.mxu0 0
        %3632 = vmatprep.subr.bf16.mxu0 0
        %3633 = vmatpush2.bf16.msra.mxu0 0
        %3634 = vmatprep.subr.bf16.mxu0 0
        %3635 = vmatpush2.bf16.msra.mxu0 0
        %3636 = vmatprep.subr.bf16.mxu0 0
        %3637 = vmatpush2.bf16.msra.mxu0 0
        %3638 = vmatprep.subr.bf16.mxu0 0
        %3639 = vmatpush2.bf16.msra.mxu0 0
        %3640 = vmatprep.subr.bf16.mxu0 0
        %3641 = vmatpush2.bf16.msra.mxu0 0
        %3642 = vmatprep.subr.bf16.mxu0 0
        %3643 = vmatpush2.bf16.msra.mxu0 0
        %3644 = vmatprep.mubr.bf16.mxu0 0
        %3645 = vmatmul.mubr.bf16.gmra.mxu0 %v3249
        %v3646 = vpop.f32.mrf.mxu0
        %v3647 = vadd.f32 0.0, %v3646
        %v3648 = vpop.f32.mrf.mxu0
        %v3649 = vadd.f32 0.0, %v3648
        %v3650 = vpop.f32.mrf.mxu0
        %v3651 = vpop.f32.mrf.mxu0
        %3652 = vdwg.mxu0
        %3653 = vmatprep.subr.bf16.mxu0 %v3504
        %3654 = vmatpush1.bf16.msra.mxu0 %v3503
        %3655 = vmatprep.subr.bf16.mxu0 %v3496
        %3656 = vmatpush1.bf16.msra.mxu0 %v3495
        %3657 = vmatprep.subr.bf16.mxu0 %v3488
        %3658 = vmatpush1.bf16.msra.mxu0 %v3487
        %3659 = vmatprep.subr.bf16.mxu0 %v3480
        %3660 = vmatpush1.bf16.msra.mxu0 %v3479
        %3661 = vmatprep.subr.bf16.mxu0 %v3472
        %3662 = vmatpush1.bf16.msra.mxu0 %v3471
        %3663 = vmatprep.subr.bf16.mxu0 %v3464
        %3664 = vmatpush1.bf16.msra.mxu0 %v3463
        %3665 = vmatprep.subr.bf16.mxu0 %v3456
        %3666 = vmatpush1.bf16.msra.mxu0 %v3455
        %3667 = vmatprep.subr.bf16.mxu0 %v3448
        %3668 = vmatpush1.bf16.msra.mxu0 %v3447
        %3669 = vmatprep.subr.bf16.mxu0 0
        %3670 = vmatpush2.bf16.msra.mxu0 0
        %3671 = vmatprep.subr.bf16.mxu0 0
        %3672 = vmatpush2.bf16.msra.mxu0 0
        %3673 = vmatprep.subr.bf16.mxu0 0
        %3674 = vmatpush2.bf16.msra.mxu0 0
        %3675 = vmatprep.subr.bf16.mxu0 0
        %3676 = vmatpush2.bf16.msra.mxu0 0
        %3677 = vmatprep.subr.bf16.mxu0 0
        %3678 = vmatpush2.bf16.msra.mxu0 0
        %3679 = vmatprep.subr.bf16.mxu0 0
        %3680 = vmatpush2.bf16.msra.mxu0 0
        %3681 = vmatprep.subr.bf16.mxu0 0
        %3682 = vmatpush2.bf16.msra.mxu0 0
        %3683 = vmatprep.subr.bf16.mxu0 0
        %3684 = vmatpush2.bf16.msra.mxu0 0
        %3685 = vmatprep.mubr.bf16.mxu0 0
        %3686 = vmatmul.mubr.bf16.gmra.mxu0 %v3249
        %v3687 = vpop.f32.mrf.mxu0
        %v3688 = vadd.f32 0.0, %v3687
        %v3689 = vpop.f32.mrf.mxu0
        %v3690 = vadd.f32 0.0, %v3689
        %v3691 = vpop.f32.mrf.mxu0
        %v3692 = vpop.f32.mrf.mxu0
        %3693 = vdwg.mxu0
        %3694 = vmatprep.subr.bf16.mxu0 %v3506
        %3695 = vmatpush1.bf16.msra.mxu0 %v3505
        %3696 = vmatprep.subr.bf16.mxu0 %v3498
        %3697 = vmatpush1.bf16.msra.mxu0 %v3497
        %3698 = vmatprep.subr.bf16.mxu0 %v3490
        %3699 = vmatpush1.bf16.msra.mxu0 %v3489
        %3700 = vmatprep.subr.bf16.mxu0 %v3482
        %3701 = vmatpush1.bf16.msra.mxu0 %v3481
        %3702 = vmatprep.subr.bf16.mxu0 %v3474
        %3703 = vmatpush1.bf16.msra.mxu0 %v3473
        %3704 = vmatprep.subr.bf16.mxu0 %v3466
        %3705 = vmatpush1.bf16.msra.mxu0 %v3465
        %3706 = vmatprep.subr.bf16.mxu0 %v3458
        %3707 = vmatpush1.bf16.msra.mxu0 %v3457
        %3708 = vmatprep.subr.bf16.mxu0 %v3450
        %3709 = vmatpush1.bf16.msra.mxu0 %v3449
        %3710 = vmatprep.subr.bf16.mxu0 0
        %3711 = vmatpush2.bf16.msra.mxu0 0
        %3712 = vmatprep.subr.bf16.mxu0 0
        %3713 = vmatpush2.bf16.msra.mxu0 0
        %3714 = vmatprep.subr.bf16.mxu0 0
        %3715 = vmatpush2.bf16.msra.mxu0 0
        %3716 = vmatprep.subr.bf16.mxu0 0
        %3717 = vmatpush2.bf16.msra.mxu0 0
        %3718 = vmatprep.subr.bf16.mxu0 0
        %3719 = vmatpush2.bf16.msra.mxu0 0
        %3720 = vmatprep.subr.bf16.mxu0 0
        %3721 = vmatpush2.bf16.msra.mxu0 0
        %3722 = vmatprep.subr.bf16.mxu0 0
        %3723 = vmatpush2.bf16.msra.mxu0 0
        %3724 = vmatprep.subr.bf16.mxu0 0
        %3725 = vmatpush2.bf16.msra.mxu0 0
        %3726 = vmatprep.mubr.bf16.mxu0 0
        %3727 = vmatmul.mubr.bf16.gmra.mxu0 %v3249
        %v3728 = vpop.f32.mrf.mxu0
        %v3729 = vadd.f32 0.0, %v3728
        %v3730 = vpop.f32.mrf.mxu0
        %v3731 = vadd.f32 0.0, %v3730
        %v3732 = vpop.f32.mrf.mxu0
        %v3733 = vpop.f32.mrf.mxu0
        %3734 = vdwg.mxu0
        %v3743 = vcombine.low %v3606, %v3608
        %v3744 = vcombine.low %v3647, %v3649
        %v3745 = vcombine.low %v3688, %v3690
        %v3746 = vcombine.low %v3729, %v3731
        %v3748 = vunpack.c.l.s4 1966171168
        %v3749 = vunpack.c.0.s8 %v3748
        %v3750 = vlaneseq
        %v3751 = vshrl.u32 %v3750, 7
        %v3752 = vsub.s32 %v3749, %v3751
        %v3753 = vrot.slane %v3743, %v3752
        %v3755 = vunpack.c.l.s4 1966171168
        %v3756 = vunpack.c.0.s8 %v3755
        %v3757 = vlaneseq
        %v3758 = vshrl.u32 %v3757, 7
        %v3759 = vsub.s32 %v3756, %v3758
        %v3760 = vrot.slane %v3744, %v3759
        %v3762 = vunpack.c.l.s4 1966171168
        %v3763 = vunpack.c.0.s8 %v3762
        %v3764 = vlaneseq
        %v3765 = vshrl.u32 %v3764, 7
        %v3766 = vsub.s32 %v3763, %v3765
        %v3767 = vrot.slane %v3745, %v3766
        %v3769 = vunpack.c.l.s4 1966171168
        %v3770 = vunpack.c.0.s8 %v3769
        %v3771 = vlaneseq
        %v3772 = vshrl.u32 %v3771, 7
        %v3773 = vsub.s32 %v3770, %v3772
        %v3774 = vrot.slane %v3746, %v3773
        %v3775 = vcombine.low %v3753, %v3760
        %v3776 = vcombine.low %v3767, %v3774
        %v3778 = vunpack.c.l.s4 1966171168
        %v3779 = vunpack.c.0.s8 %v3778
        %v3780 = vlaneseq
        %v3781 = vshrl.u32 %v3780, 7
        %v3782 = vsub.s32 %v3779, %v3781
        %v3783 = vrot.slane %v3775, %v3782
        %v3785 = vunpack.c.l.s4 1966171168
        %v3786 = vunpack.c.0.s8 %v3785
        %v3787 = vlaneseq
        %v3788 = vshrl.u32 %v3787, 7
        %v3789 = vsub.s32 %v3786, %v3788
        %v3790 = vrot.slane %v3776, %v3789
        %v3791 = vcombine.low %v3783, %v3790
        %v3793 = vadd.f32 %v3182, %v3791
        %s3794 = scalar_lea.vmem [#allocation14], 1536
        %v3795 = vld [vmem:[%s3794] sm:$0xff]
        %v3796 = vld [vmem:[%s3794 + $0x8] sm:$0xff]
        %v3797 = vld [vmem:[%s3794 + $0x10] sm:$0xff]
        %v3798 = vld [vmem:[%s3794 + $0x18] sm:$0xff]
        %v3799 = vld [vmem:[%s3794 + $0x20] sm:$0xff]
        %v3800 = vld [vmem:[%s3794 + $0x28] sm:$0xff]
        %v3801 = vld [vmem:[%s3794 + $0x30] sm:$0xff]
        %v3802 = vld [vmem:[%s3794 + $0x38] sm:$0xff]
        %v3803 = vld [vmem:[%s3794 + $0x40] sm:$0xff]
        %v3804 = vld [vmem:[%s3794 + $0x48] sm:$0xff]
        %v3805 = vld [vmem:[%s3794 + $0x50] sm:$0xff]
        %v3806 = vld [vmem:[%s3794 + $0x58] sm:$0xff]
        %v3807 = vld [vmem:[%s3794 + $0x60] sm:$0xff]
        %v3808 = vld [vmem:[%s3794 + $0x68] sm:$0xff]
        %v3809 = vld [vmem:[%s3794 + $0x70] sm:$0xff]
        %v3810 = vld [vmem:[%s3794 + $0x78] sm:$0xff]
        %v3811 = vld [vmem:[%s3794 + $0x80] sm:$0xff]
        %v3812 = vld [vmem:[%s3794 + $0x88] sm:$0xff]
        %v3813 = vld [vmem:[%s3794 + $0x90] sm:$0xff]
        %v3814 = vld [vmem:[%s3794 + $0x98] sm:$0xff]
        %v3815 = vld [vmem:[%s3794 + $0xa0] sm:$0xff]
        %v3816 = vld [vmem:[%s3794 + $0xa8] sm:$0xff]
        %v3817 = vld [vmem:[%s3794 + $0xb0] sm:$0xff]
        %v3818 = vld [vmem:[%s3794 + $0xb8] sm:$0xff]
        %v3819 = vld [vmem:[%s3794 + $0xc0] sm:$0xff]
        %v3820 = vld [vmem:[%s3794 + $0xc8] sm:$0xff]
        %v3821 = vld [vmem:[%s3794 + $0xd0] sm:$0xff]
        %v3822 = vld [vmem:[%s3794 + $0xd8] sm:$0xff]
        %v3823 = vld [vmem:[%s3794 + $0xe0] sm:$0xff]
        %v3824 = vld [vmem:[%s3794 + $0xe8] sm:$0xff]
        %v3825 = vld [vmem:[%s3794 + $0xf0] sm:$0xff]
        %v3826 = vld [vmem:[%s3794 + $0xf8] sm:$0xff]
        %v3827 = vld [vmem:[%s3794 + $0x100] sm:$0xff]
        %v3828 = vld [vmem:[%s3794 + $0x108] sm:$0xff]
        %v3829 = vld [vmem:[%s3794 + $0x110] sm:$0xff]
        %v3830 = vld [vmem:[%s3794 + $0x118] sm:$0xff]
        %v3831 = vld [vmem:[%s3794 + $0x120] sm:$0xff]
        %v3832 = vld [vmem:[%s3794 + $0x128] sm:$0xff]
        %v3833 = vld [vmem:[%s3794 + $0x130] sm:$0xff]
        %v3834 = vld [vmem:[%s3794 + $0x138] sm:$0xff]
        %v3835 = vld [vmem:[%s3794 + $0x140] sm:$0xff]
        %v3836 = vld [vmem:[%s3794 + $0x148] sm:$0xff]
        %v3837 = vld [vmem:[%s3794 + $0x150] sm:$0xff]
        %v3838 = vld [vmem:[%s3794 + $0x158] sm:$0xff]
        %v3839 = vld [vmem:[%s3794 + $0x160] sm:$0xff]
        %v3840 = vld [vmem:[%s3794 + $0x168] sm:$0xff]
        %v3841 = vld [vmem:[%s3794 + $0x170] sm:$0xff]
        %v3842 = vld [vmem:[%s3794 + $0x178] sm:$0xff]
        %v3843 = vld [vmem:[%s3794 + $0x180] sm:$0xff]
        %v3844 = vld [vmem:[%s3794 + $0x188] sm:$0xff]
        %v3845 = vld [vmem:[%s3794 + $0x190] sm:$0xff]
        %v3846 = vld [vmem:[%s3794 + $0x198] sm:$0xff]
        %v3847 = vld [vmem:[%s3794 + $0x1a0] sm:$0xff]
        %v3848 = vld [vmem:[%s3794 + $0x1a8] sm:$0xff]
        %v3849 = vld [vmem:[%s3794 + $0x1b0] sm:$0xff]
        %v3850 = vld [vmem:[%s3794 + $0x1b8] sm:$0xff]
        %v3851 = vld [vmem:[%s3794 + $0x1c0] sm:$0xff]
        %v3852 = vld [vmem:[%s3794 + $0x1c8] sm:$0xff]
        %v3853 = vld [vmem:[%s3794 + $0x1d0] sm:$0xff]
        %v3854 = vld [vmem:[%s3794 + $0x1d8] sm:$0xff]
        %v3855 = vld [vmem:[%s3794 + $0x1e0] sm:$0xff]
        %v3856 = vld [vmem:[%s3794 + $0x1e8] sm:$0xff]
        %v3857 = vld [vmem:[%s3794 + $0x1f0] sm:$0xff]
        %v3858 = vld [vmem:[%s3794 + $0x1f8] sm:$0xff]
        %v3859 = vrot.slane %v2637, 1
        %v3925 = vunpack.c.l.b16 %v3795
        %v3926 = vunpack.c.h.b16 %v3795
        %v3927 = vunpack.c.l.b16 %v3796
        %v3928 = vunpack.c.h.b16 %v3796
        %v3929 = vunpack.c.l.b16 %v3797
        %v3930 = vunpack.c.h.b16 %v3797
        %v3931 = vunpack.c.l.b16 %v3798
        %v3932 = vunpack.c.h.b16 %v3798
        %v3933 = vunpack.c.l.b16 %v3799
        %v3934 = vunpack.c.h.b16 %v3799
        %v3935 = vunpack.c.l.b16 %v3800
        %v3936 = vunpack.c.h.b16 %v3800
        %v3937 = vunpack.c.l.b16 %v3801
        %v3938 = vunpack.c.h.b16 %v3801
        %v3939 = vunpack.c.l.b16 %v3802
        %v3940 = vunpack.c.h.b16 %v3802
        %v3941 = vunpack.c.l.b16 %v3803
        %v3942 = vunpack.c.h.b16 %v3803
        %v3943 = vunpack.c.l.b16 %v3804
        %v3944 = vunpack.c.h.b16 %v3804
        %v3945 = vunpack.c.l.b16 %v3805
        %v3946 = vunpack.c.h.b16 %v3805
        %v3947 = vunpack.c.l.b16 %v3806
        %v3948 = vunpack.c.h.b16 %v3806
        %v3949 = vunpack.c.l.b16 %v3807
        %v3950 = vunpack.c.h.b16 %v3807
        %v3951 = vunpack.c.l.b16 %v3808
        %v3952 = vunpack.c.h.b16 %v3808
        %v3953 = vunpack.c.l.b16 %v3809
        %v3954 = vunpack.c.h.b16 %v3809
        %v3955 = vunpack.c.l.b16 %v3810
        %v3956 = vunpack.c.h.b16 %v3810
        %v3957 = vunpack.c.l.b16 %v3811
        %v3958 = vunpack.c.h.b16 %v3811
        %v3959 = vunpack.c.l.b16 %v3812
        %v3960 = vunpack.c.h.b16 %v3812
        %v3961 = vunpack.c.l.b16 %v3813
        %v3962 = vunpack.c.h.b16 %v3813
        %v3963 = vunpack.c.l.b16 %v3814
        %v3964 = vunpack.c.h.b16 %v3814
        %v3965 = vunpack.c.l.b16 %v3815
        %v3966 = vunpack.c.h.b16 %v3815
        %v3967 = vunpack.c.l.b16 %v3816
        %v3968 = vunpack.c.h.b16 %v3816
        %v3969 = vunpack.c.l.b16 %v3817
        %v3970 = vunpack.c.h.b16 %v3817
        %v3971 = vunpack.c.l.b16 %v3818
        %v3972 = vunpack.c.h.b16 %v3818
        %v3973 = vunpack.c.l.b16 %v3819
        %v3974 = vunpack.c.h.b16 %v3819
        %v3975 = vunpack.c.l.b16 %v3820
        %v3976 = vunpack.c.h.b16 %v3820
        %v3977 = vunpack.c.l.b16 %v3821
        %v3978 = vunpack.c.h.b16 %v3821
        %v3979 = vunpack.c.l.b16 %v3822
        %v3980 = vunpack.c.h.b16 %v3822
        %v3981 = vunpack.c.l.b16 %v3823
        %v3982 = vunpack.c.h.b16 %v3823
        %v3983 = vunpack.c.l.b16 %v3824
        %v3984 = vunpack.c.h.b16 %v3824
        %v3985 = vunpack.c.l.b16 %v3825
        %v3986 = vunpack.c.h.b16 %v3825
        %v3987 = vunpack.c.l.b16 %v3826
        %v3988 = vunpack.c.h.b16 %v3826
        %v3989 = vunpack.c.l.b16 %v3827
        %v3990 = vunpack.c.h.b16 %v3827
        %v3991 = vunpack.c.l.b16 %v3828
        %v3992 = vunpack.c.h.b16 %v3828
        %v3993 = vunpack.c.l.b16 %v3829
        %v3994 = vunpack.c.h.b16 %v3829
        %v3995 = vunpack.c.l.b16 %v3830
        %v3996 = vunpack.c.h.b16 %v3830
        %v3997 = vunpack.c.l.b16 %v3831
        %v3998 = vunpack.c.h.b16 %v3831
        %v3999 = vunpack.c.l.b16 %v3832
        %v4000 = vunpack.c.h.b16 %v3832
        %v4001 = vunpack.c.l.b16 %v3833
        %v4002 = vunpack.c.h.b16 %v3833
        %v4003 = vunpack.c.l.b16 %v3834
        %v4004 = vunpack.c.h.b16 %v3834
        %v4005 = vunpack.c.l.b16 %v3835
        %v4006 = vunpack.c.h.b16 %v3835
        %v4007 = vunpack.c.l.b16 %v3836
        %v4008 = vunpack.c.h.b16 %v3836
        %v4009 = vunpack.c.l.b16 %v3837
        %v4010 = vunpack.c.h.b16 %v3837
        %v4011 = vunpack.c.l.b16 %v3838
        %v4012 = vunpack.c.h.b16 %v3838
        %v4013 = vunpack.c.l.b16 %v3839
        %v4014 = vunpack.c.h.b16 %v3839
        %v4015 = vunpack.c.l.b16 %v3840
        %v4016 = vunpack.c.h.b16 %v3840
        %v4017 = vunpack.c.l.b16 %v3841
        %v4018 = vunpack.c.h.b16 %v3841
        %v4019 = vunpack.c.l.b16 %v3842
        %v4020 = vunpack.c.h.b16 %v3842
        %v4021 = vunpack.c.l.b16 %v3843
        %v4022 = vunpack.c.h.b16 %v3843
        %v4023 = vunpack.c.l.b16 %v3844
        %v4024 = vunpack.c.h.b16 %v3844
        %v4025 = vunpack.c.l.b16 %v3845
        %v4026 = vunpack.c.h.b16 %v3845
        %v4027 = vunpack.c.l.b16 %v3846
        %v4028 = vunpack.c.h.b16 %v3846
        %v4029 = vunpack.c.l.b16 %v3847
        %v4030 = vunpack.c.h.b16 %v3847
        %v4031 = vunpack.c.l.b16 %v3848
        %v4032 = vunpack.c.h.b16 %v3848
        %v4033 = vunpack.c.l.b16 %v3849
        %v4034 = vunpack.c.h.b16 %v3849
        %v4035 = vunpack.c.l.b16 %v3850
        %v4036 = vunpack.c.h.b16 %v3850
        %v4037 = vunpack.c.l.b16 %v3851
        %v4038 = vunpack.c.h.b16 %v3851
        %v4039 = vunpack.c.l.b16 %v3852
        %v4040 = vunpack.c.h.b16 %v3852
        %v4041 = vunpack.c.l.b16 %v3853
        %v4042 = vunpack.c.h.b16 %v3853
        %v4043 = vunpack.c.l.b16 %v3854
        %v4044 = vunpack.c.h.b16 %v3854
        %v4045 = vunpack.c.l.b16 %v3855
        %v4046 = vunpack.c.h.b16 %v3855
        %v4047 = vunpack.c.l.b16 %v3856
        %v4048 = vunpack.c.h.b16 %v3856
        %v4049 = vunpack.c.l.b16 %v3857
        %v4050 = vunpack.c.h.b16 %v3857
        %v4051 = vunpack.c.l.b16 %v3858
        %v4052 = vunpack.c.h.b16 %v3858
        %v4053 = vpack.c.b16 %v3933, %v3925
        %v4054 = vpack.c.b16 %v3934, %v3926
        %v4055 = vpack.c.b16 %v3935, %v3927
        %v4056 = vpack.c.b16 %v3936, %v3928
        %v4057 = vpack.c.b16 %v3937, %v3929
        %v4058 = vpack.c.b16 %v3938, %v3930
        %v4059 = vpack.c.b16 %v3939, %v3931
        %v4060 = vpack.c.b16 %v3940, %v3932
        %v4061 = vpack.c.b16 %v3949, %v3941
        %v4062 = vpack.c.b16 %v3950, %v3942
        %v4063 = vpack.c.b16 %v3951, %v3943
        %v4064 = vpack.c.b16 %v3952, %v3944
        %v4065 = vpack.c.b16 %v3953, %v3945
        %v4066 = vpack.c.b16 %v3954, %v3946
        %v4067 = vpack.c.b16 %v3955, %v3947
        %v4068 = vpack.c.b16 %v3956, %v3948
        %v4069 = vpack.c.b16 %v3965, %v3957
        %v4070 = vpack.c.b16 %v3966, %v3958
        %v4071 = vpack.c.b16 %v3967, %v3959
        %v4072 = vpack.c.b16 %v3968, %v3960
        %v4073 = vpack.c.b16 %v3969, %v3961
        %v4074 = vpack.c.b16 %v3970, %v3962
        %v4075 = vpack.c.b16 %v3971, %v3963
        %v4076 = vpack.c.b16 %v3972, %v3964
        %v4077 = vpack.c.b16 %v3981, %v3973
        %v4078 = vpack.c.b16 %v3982, %v3974
        %v4079 = vpack.c.b16 %v3983, %v3975
        %v4080 = vpack.c.b16 %v3984, %v3976
        %v4081 = vpack.c.b16 %v3985, %v3977
        %v4082 = vpack.c.b16 %v3986, %v3978
        %v4083 = vpack.c.b16 %v3987, %v3979
        %v4084 = vpack.c.b16 %v3988, %v3980
        %v4085 = vpack.c.b16 %v3997, %v3989
        %v4086 = vpack.c.b16 %v3998, %v3990
        %v4087 = vpack.c.b16 %v3999, %v3991
        %v4088 = vpack.c.b16 %v4000, %v3992
        %v4089 = vpack.c.b16 %v4001, %v3993
        %v4090 = vpack.c.b16 %v4002, %v3994
        %v4091 = vpack.c.b16 %v4003, %v3995
        %v4092 = vpack.c.b16 %v4004, %v3996
        %v4093 = vpack.c.b16 %v4013, %v4005
        %v4094 = vpack.c.b16 %v4014, %v4006
        %v4095 = vpack.c.b16 %v4015, %v4007
        %v4096 = vpack.c.b16 %v4016, %v4008
        %v4097 = vpack.c.b16 %v4017, %v4009
        %v4098 = vpack.c.b16 %v4018, %v4010
        %v4099 = vpack.c.b16 %v4019, %v4011
        %v4100 = vpack.c.b16 %v4020, %v4012
        %v4101 = vpack.c.b16 %v4029, %v4021
        %v4102 = vpack.c.b16 %v4030, %v4022
        %v4103 = vpack.c.b16 %v4031, %v4023
        %v4104 = vpack.c.b16 %v4032, %v4024
        %v4105 = vpack.c.b16 %v4033, %v4025
        %v4106 = vpack.c.b16 %v4034, %v4026
        %v4107 = vpack.c.b16 %v4035, %v4027
        %v4108 = vpack.c.b16 %v4036, %v4028
        %v4109 = vpack.c.b16 %v4045, %v4037
        %v4110 = vpack.c.b16 %v4046, %v4038
        %v4111 = vpack.c.b16 %v4047, %v4039
        %v4112 = vpack.c.b16 %v4048, %v4040
        %v4113 = vpack.c.b16 %v4049, %v4041
        %v4114 = vpack.c.b16 %v4050, %v4042
        %v4115 = vpack.c.b16 %v4051, %v4043
        %v4116 = vpack.c.b16 %v4052, %v4044
        %4181 = vmatprep.subr.bf16.mxu0 %v4110
        %4182 = vmatpush1.bf16.msra.mxu0 %v4109
        %4183 = vmatprep.subr.bf16.mxu0 %v4102
        %4184 = vmatpush1.bf16.msra.mxu0 %v4101
        %4185 = vmatprep.subr.bf16.mxu0 %v4094
        %4186 = vmatpush1.bf16.msra.mxu0 %v4093
        %4187 = vmatprep.subr.bf16.mxu0 %v4086
        %4188 = vmatpush1.bf16.msra.mxu0 %v4085
        %4189 = vmatprep.subr.bf16.mxu0 %v4078
        %4190 = vmatpush1.bf16.msra.mxu0 %v4077
        %4191 = vmatprep.subr.bf16.mxu0 %v4070
        %4192 = vmatpush1.bf16.msra.mxu0 %v4069
        %4193 = vmatprep.subr.bf16.mxu0 %v4062
        %4194 = vmatpush1.bf16.msra.mxu0 %v4061
        %4195 = vmatprep.subr.bf16.mxu0 %v4054
        %4196 = vmatpush1.bf16.msra.mxu0 %v4053
        %4197 = vmatprep.subr.bf16.mxu0 0
        %4198 = vmatpush2.bf16.msra.mxu0 0
        %4199 = vmatprep.subr.bf16.mxu0 0
        %4200 = vmatpush2.bf16.msra.mxu0 0
        %4201 = vmatprep.subr.bf16.mxu0 0
        %4202 = vmatpush2.bf16.msra.mxu0 0
        %4203 = vmatprep.subr.bf16.mxu0 0
        %4204 = vmatpush2.bf16.msra.mxu0 0
        %4205 = vmatprep.subr.bf16.mxu0 0
        %4206 = vmatpush2.bf16.msra.mxu0 0
        %4207 = vmatprep.subr.bf16.mxu0 0
        %4208 = vmatpush2.bf16.msra.mxu0 0
        %4209 = vmatprep.subr.bf16.mxu0 0
        %4210 = vmatpush2.bf16.msra.mxu0 0
        %4211 = vmatprep.subr.bf16.mxu0 0
        %4212 = vmatpush2.bf16.msra.mxu0 0
        %4213 = vmatprep.mubr.bf16.mxu0 0
        %4214 = vmatmul.mubr.bf16.gmra.mxu0 %v3859
        %v4215 = vpop.f32.mrf.mxu0
        %v4216 = vadd.f32 0.0, %v4215
        %v4217 = vpop.f32.mrf.mxu0
        %v4218 = vadd.f32 0.0, %v4217
        %v4219 = vpop.f32.mrf.mxu0
        %v4220 = vpop.f32.mrf.mxu0
        %4221 = vdwg.mxu0
        %4222 = vmatprep.subr.bf16.mxu0 %v4112
        %4223 = vmatpush1.bf16.msra.mxu0 %v4111
        %4224 = vmatprep.subr.bf16.mxu0 %v4104
        %4225 = vmatpush1.bf16.msra.mxu0 %v4103
        %4226 = vmatprep.subr.bf16.mxu0 %v4096
        %4227 = vmatpush1.bf16.msra.mxu0 %v4095
        %4228 = vmatprep.subr.bf16.mxu0 %v4088
        %4229 = vmatpush1.bf16.msra.mxu0 %v4087
        %4230 = vmatprep.subr.bf16.mxu0 %v4080
        %4231 = vmatpush1.bf16.msra.mxu0 %v4079
        %4232 = vmatprep.subr.bf16.mxu0 %v4072
        %4233 = vmatpush1.bf16.msra.mxu0 %v4071
        %4234 = vmatprep.subr.bf16.mxu0 %v4064
        %4235 = vmatpush1.bf16.msra.mxu0 %v4063
        %4236 = vmatprep.subr.bf16.mxu0 %v4056
        %4237 = vmatpush1.bf16.msra.mxu0 %v4055
        %4238 = vmatprep.subr.bf16.mxu0 0
        %4239 = vmatpush2.bf16.msra.mxu0 0
        %4240 = vmatprep.subr.bf16.mxu0 0
        %4241 = vmatpush2.bf16.msra.mxu0 0
        %4242 = vmatprep.subr.bf16.mxu0 0
        %4243 = vmatpush2.bf16.msra.mxu0 0
        %4244 = vmatprep.subr.bf16.mxu0 0
        %4245 = vmatpush2.bf16.msra.mxu0 0
        %4246 = vmatprep.subr.bf16.mxu0 0
        %4247 = vmatpush2.bf16.msra.mxu0 0
        %4248 = vmatprep.subr.bf16.mxu0 0
        %4249 = vmatpush2.bf16.msra.mxu0 0
        %4250 = vmatprep.subr.bf16.mxu0 0
        %4251 = vmatpush2.bf16.msra.mxu0 0
        %4252 = vmatprep.subr.bf16.mxu0 0
        %4253 = vmatpush2.bf16.msra.mxu0 0
        %4254 = vmatprep.mubr.bf16.mxu0 0
        %4255 = vmatmul.mubr.bf16.gmra.mxu0 %v3859
        %v4256 = vpop.f32.mrf.mxu0
        %v4257 = vadd.f32 0.0, %v4256
        %v4258 = vpop.f32.mrf.mxu0
        %v4259 = vadd.f32 0.0, %v4258
        %v4260 = vpop.f32.mrf.mxu0
        %v4261 = vpop.f32.mrf.mxu0
        %4262 = vdwg.mxu0
        %4263 = vmatprep.subr.bf16.mxu0 %v4114
        %4264 = vmatpush1.bf16.msra.mxu0 %v4113
        %4265 = vmatprep.subr.bf16.mxu0 %v4106
        %4266 = vmatpush1.bf16.msra.mxu0 %v4105
        %4267 = vmatprep.subr.bf16.mxu0 %v4098
        %4268 = vmatpush1.bf16.msra.mxu0 %v4097
        %4269 = vmatprep.subr.bf16.mxu0 %v4090
        %4270 = vmatpush1.bf16.msra.mxu0 %v4089
        %4271 = vmatprep.subr.bf16.mxu0 %v4082
        %4272 = vmatpush1.bf16.msra.mxu0 %v4081
        %4273 = vmatprep.subr.bf16.mxu0 %v4074
        %4274 = vmatpush1.bf16.msra.mxu0 %v4073
        %4275 = vmatprep.subr.bf16.mxu0 %v4066
        %4276 = vmatpush1.bf16.msra.mxu0 %v4065
        %4277 = vmatprep.subr.bf16.mxu0 %v4058
        %4278 = vmatpush1.bf16.msra.mxu0 %v4057
        %4279 = vmatprep.subr.bf16.mxu0 0
        %4280 = vmatpush2.bf16.msra.mxu0 0
        %4281 = vmatprep.subr.bf16.mxu0 0
        %4282 = vmatpush2.bf16.msra.mxu0 0
        %4283 = vmatprep.subr.bf16.mxu0 0
        %4284 = vmatpush2.bf16.msra.mxu0 0
        %4285 = vmatprep.subr.bf16.mxu0 0
        %4286 = vmatpush2.bf16.msra.mxu0 0
        %4287 = vmatprep.subr.bf16.mxu0 0
        %4288 = vmatpush2.bf16.msra.mxu0 0
        %4289 = vmatprep.subr.bf16.mxu0 0
        %4290 = vmatpush2.bf16.msra.mxu0 0
        %4291 = vmatprep.subr.bf16.mxu0 0
        %4292 = vmatpush2.bf16.msra.mxu0 0
        %4293 = vmatprep.subr.bf16.mxu0 0
        %4294 = vmatpush2.bf16.msra.mxu0 0
        %4295 = vmatprep.mubr.bf16.mxu0 0
        %4296 = vmatmul.mubr.bf16.gmra.mxu0 %v3859
        %v4297 = vpop.f32.mrf.mxu0
        %v4298 = vadd.f32 0.0, %v4297
        %v4299 = vpop.f32.mrf.mxu0
        %v4300 = vadd.f32 0.0, %v4299
        %v4301 = vpop.f32.mrf.mxu0
        %v4302 = vpop.f32.mrf.mxu0
        %4303 = vdwg.mxu0
        %4304 = vmatprep.subr.bf16.mxu0 %v4116
        %4305 = vmatpush1.bf16.msra.mxu0 %v4115
        %4306 = vmatprep.subr.bf16.mxu0 %v4108
        %4307 = vmatpush1.bf16.msra.mxu0 %v4107
        %4308 = vmatprep.subr.bf16.mxu0 %v4100
        %4309 = vmatpush1.bf16.msra.mxu0 %v4099
        %4310 = vmatprep.subr.bf16.mxu0 %v4092
        %4311 = vmatpush1.bf16.msra.mxu0 %v4091
        %4312 = vmatprep.subr.bf16.mxu0 %v4084
        %4313 = vmatpush1.bf16.msra.mxu0 %v4083
        %4314 = vmatprep.subr.bf16.mxu0 %v4076
        %4315 = vmatpush1.bf16.msra.mxu0 %v4075
        %4316 = vmatprep.subr.bf16.mxu0 %v4068
        %4317 = vmatpush1.bf16.msra.mxu0 %v4067
        %4318 = vmatprep.subr.bf16.mxu0 %v4060
        %4319 = vmatpush1.bf16.msra.mxu0 %v4059
        %4320 = vmatprep.subr.bf16.mxu0 0
        %4321 = vmatpush2.bf16.msra.mxu0 0
        %4322 = vmatprep.subr.bf16.mxu0 0
        %4323 = vmatpush2.bf16.msra.mxu0 0
        %4324 = vmatprep.subr.bf16.mxu0 0
        %4325 = vmatpush2.bf16.msra.mxu0 0
        %4326 = vmatprep.subr.bf16.mxu0 0
        %4327 = vmatpush2.bf16.msra.mxu0 0
        %4328 = vmatprep.subr.bf16.mxu0 0
        %4329 = vmatpush2.bf16.msra.mxu0 0
        %4330 = vmatprep.subr.bf16.mxu0 0
        %4331 = vmatpush2.bf16.msra.mxu0 0
        %4332 = vmatprep.subr.bf16.mxu0 0
        %4333 = vmatpush2.bf16.msra.mxu0 0
        %4334 = vmatprep.subr.bf16.mxu0 0
        %4335 = vmatpush2.bf16.msra.mxu0 0
        %4336 = vmatprep.mubr.bf16.mxu0 0
        %4337 = vmatmul.mubr.bf16.gmra.mxu0 %v3859
        %v4338 = vpop.f32.mrf.mxu0
        %v4339 = vadd.f32 0.0, %v4338
        %v4340 = vpop.f32.mrf.mxu0
        %v4341 = vadd.f32 0.0, %v4340
        %v4342 = vpop.f32.mrf.mxu0
        %v4343 = vpop.f32.mrf.mxu0
        %4344 = vdwg.mxu0
        %v4353 = vcombine.low %v4216, %v4218
        %v4354 = vcombine.low %v4257, %v4259
        %v4355 = vcombine.low %v4298, %v4300
        %v4356 = vcombine.low %v4339, %v4341
        %v4358 = vunpack.c.l.s4 1966171168
        %v4359 = vunpack.c.0.s8 %v4358
        %v4360 = vlaneseq
        %v4361 = vshrl.u32 %v4360, 7
        %v4362 = vsub.s32 %v4359, %v4361
        %v4363 = vrot.slane %v4353, %v4362
        %v4365 = vunpack.c.l.s4 1966171168
        %v4366 = vunpack.c.0.s8 %v4365
        %v4367 = vlaneseq
        %v4368 = vshrl.u32 %v4367, 7
        %v4369 = vsub.s32 %v4366, %v4368
        %v4370 = vrot.slane %v4354, %v4369
        %v4372 = vunpack.c.l.s4 1966171168
        %v4373 = vunpack.c.0.s8 %v4372
        %v4374 = vlaneseq
        %v4375 = vshrl.u32 %v4374, 7
        %v4376 = vsub.s32 %v4373, %v4375
        %v4377 = vrot.slane %v4355, %v4376
        %v4379 = vunpack.c.l.s4 1966171168
        %v4380 = vunpack.c.0.s8 %v4379
        %v4381 = vlaneseq
        %v4382 = vshrl.u32 %v4381, 7
        %v4383 = vsub.s32 %v4380, %v4382
        %v4384 = vrot.slane %v4356, %v4383
        %v4385 = vcombine.low %v4363, %v4370
        %v4386 = vcombine.low %v4377, %v4384
        %v4388 = vunpack.c.l.s4 1966171168
        %v4389 = vunpack.c.0.s8 %v4388
        %v4390 = vlaneseq
        %v4391 = vshrl.u32 %v4390, 7
        %v4392 = vsub.s32 %v4389, %v4391
        %v4393 = vrot.slane %v4385, %v4392
        %v4395 = vunpack.c.l.s4 1966171168
        %v4396 = vunpack.c.0.s8 %v4395
        %v4397 = vlaneseq
        %v4398 = vshrl.u32 %v4397, 7
        %v4399 = vsub.s32 %v4396, %v4398
        %v4400 = vrot.slane %v4386, %v4399
        %v4401 = vcombine.low %v4393, %v4400
        %v4403 = vadd.f32 %v3793, %v4401
        %s4404 = scalar_lea.vmem [#allocation14], 2048
        %v4405 = vld [vmem:[%s4404] sm:$0xff]
        %v4406 = vld [vmem:[%s4404 + $0x8] sm:$0xff]
        %v4407 = vld [vmem:[%s4404 + $0x10] sm:$0xff]
        %v4408 = vld [vmem:[%s4404 + $0x18] sm:$0xff]
        %v4409 = vld [vmem:[%s4404 + $0x20] sm:$0xff]
        %v4410 = vld [vmem:[%s4404 + $0x28] sm:$0xff]
        %v4411 = vld [vmem:[%s4404 + $0x30] sm:$0xff]
        %v4412 = vld [vmem:[%s4404 + $0x38] sm:$0xff]
        %v4413 = vld [vmem:[%s4404 + $0x40] sm:$0xff]
        %v4414 = vld [vmem:[%s4404 + $0x48] sm:$0xff]
        %v4415 = vld [vmem:[%s4404 + $0x50] sm:$0xff]
        %v4416 = vld [vmem:[%s4404 + $0x58] sm:$0xff]
        %v4417 = vld [vmem:[%s4404 + $0x60] sm:$0xff]
        %v4418 = vld [vmem:[%s4404 + $0x68] sm:$0xff]
        %v4419 = vld [vmem:[%s4404 + $0x70] sm:$0xff]
        %v4420 = vld [vmem:[%s4404 + $0x78] sm:$0xff]
        %v4421 = vld [vmem:[%s4404 + $0x80] sm:$0xff]
        %v4422 = vld [vmem:[%s4404 + $0x88] sm:$0xff]
        %v4423 = vld [vmem:[%s4404 + $0x90] sm:$0xff]
        %v4424 = vld [vmem:[%s4404 + $0x98] sm:$0xff]
        %v4425 = vld [vmem:[%s4404 + $0xa0] sm:$0xff]
        %v4426 = vld [vmem:[%s4404 + $0xa8] sm:$0xff]
        %v4427 = vld [vmem:[%s4404 + $0xb0] sm:$0xff]
        %v4428 = vld [vmem:[%s4404 + $0xb8] sm:$0xff]
        %v4429 = vld [vmem:[%s4404 + $0xc0] sm:$0xff]
        %v4430 = vld [vmem:[%s4404 + $0xc8] sm:$0xff]
        %v4431 = vld [vmem:[%s4404 + $0xd0] sm:$0xff]
        %v4432 = vld [vmem:[%s4404 + $0xd8] sm:$0xff]
        %v4433 = vld [vmem:[%s4404 + $0xe0] sm:$0xff]
        %v4434 = vld [vmem:[%s4404 + $0xe8] sm:$0xff]
        %v4435 = vld [vmem:[%s4404 + $0xf0] sm:$0xff]
        %v4436 = vld [vmem:[%s4404 + $0xf8] sm:$0xff]
        %v4437 = vld [vmem:[%s4404 + $0x100] sm:$0xff]
        %v4438 = vld [vmem:[%s4404 + $0x108] sm:$0xff]
        %v4439 = vld [vmem:[%s4404 + $0x110] sm:$0xff]
        %v4440 = vld [vmem:[%s4404 + $0x118] sm:$0xff]
        %v4441 = vld [vmem:[%s4404 + $0x120] sm:$0xff]
        %v4442 = vld [vmem:[%s4404 + $0x128] sm:$0xff]
        %v4443 = vld [vmem:[%s4404 + $0x130] sm:$0xff]
        %v4444 = vld [vmem:[%s4404 + $0x138] sm:$0xff]
        %v4445 = vld [vmem:[%s4404 + $0x140] sm:$0xff]
        %v4446 = vld [vmem:[%s4404 + $0x148] sm:$0xff]
        %v4447 = vld [vmem:[%s4404 + $0x150] sm:$0xff]
        %v4448 = vld [vmem:[%s4404 + $0x158] sm:$0xff]
        %v4449 = vld [vmem:[%s4404 + $0x160] sm:$0xff]
        %v4450 = vld [vmem:[%s4404 + $0x168] sm:$0xff]
        %v4451 = vld [vmem:[%s4404 + $0x170] sm:$0xff]
        %v4452 = vld [vmem:[%s4404 + $0x178] sm:$0xff]
        %v4453 = vld [vmem:[%s4404 + $0x180] sm:$0xff]
        %v4454 = vld [vmem:[%s4404 + $0x188] sm:$0xff]
        %v4455 = vld [vmem:[%s4404 + $0x190] sm:$0xff]
        %v4456 = vld [vmem:[%s4404 + $0x198] sm:$0xff]
        %v4457 = vld [vmem:[%s4404 + $0x1a0] sm:$0xff]
        %v4458 = vld [vmem:[%s4404 + $0x1a8] sm:$0xff]
        %v4459 = vld [vmem:[%s4404 + $0x1b0] sm:$0xff]
        %v4460 = vld [vmem:[%s4404 + $0x1b8] sm:$0xff]
        %v4461 = vld [vmem:[%s4404 + $0x1c0] sm:$0xff]
        %v4462 = vld [vmem:[%s4404 + $0x1c8] sm:$0xff]
        %v4463 = vld [vmem:[%s4404 + $0x1d0] sm:$0xff]
        %v4464 = vld [vmem:[%s4404 + $0x1d8] sm:$0xff]
        %v4465 = vld [vmem:[%s4404 + $0x1e0] sm:$0xff]
        %v4466 = vld [vmem:[%s4404 + $0x1e8] sm:$0xff]
        %v4467 = vld [vmem:[%s4404 + $0x1f0] sm:$0xff]
        %v4468 = vld [vmem:[%s4404 + $0x1f8] sm:$0xff]
        %v4469 = vrot.slane %v1963, 2
        %v4535 = vunpack.c.l.b16 %v4405
        %v4536 = vunpack.c.h.b16 %v4405
        %v4537 = vunpack.c.l.b16 %v4406
        %v4538 = vunpack.c.h.b16 %v4406
        %v4539 = vunpack.c.l.b16 %v4407
        %v4540 = vunpack.c.h.b16 %v4407
        %v4541 = vunpack.c.l.b16 %v4408
        %v4542 = vunpack.c.h.b16 %v4408
        %v4543 = vunpack.c.l.b16 %v4409
        %v4544 = vunpack.c.h.b16 %v4409
        %v4545 = vunpack.c.l.b16 %v4410
        %v4546 = vunpack.c.h.b16 %v4410
        %v4547 = vunpack.c.l.b16 %v4411
        %v4548 = vunpack.c.h.b16 %v4411
        %v4549 = vunpack.c.l.b16 %v4412
        %v4550 = vunpack.c.h.b16 %v4412
        %v4551 = vunpack.c.l.b16 %v4413
        %v4552 = vunpack.c.h.b16 %v4413
        %v4553 = vunpack.c.l.b16 %v4414
        %v4554 = vunpack.c.h.b16 %v4414
        %v4555 = vunpack.c.l.b16 %v4415
        %v4556 = vunpack.c.h.b16 %v4415
        %v4557 = vunpack.c.l.b16 %v4416
        %v4558 = vunpack.c.h.b16 %v4416
        %v4559 = vunpack.c.l.b16 %v4417
        %v4560 = vunpack.c.h.b16 %v4417
        %v4561 = vunpack.c.l.b16 %v4418
        %v4562 = vunpack.c.h.b16 %v4418
        %v4563 = vunpack.c.l.b16 %v4419
        %v4564 = vunpack.c.h.b16 %v4419
        %v4565 = vunpack.c.l.b16 %v4420
        %v4566 = vunpack.c.h.b16 %v4420
        %v4567 = vunpack.c.l.b16 %v4421
        %v4568 = vunpack.c.h.b16 %v4421
        %v4569 = vunpack.c.l.b16 %v4422
        %v4570 = vunpack.c.h.b16 %v4422
        %v4571 = vunpack.c.l.b16 %v4423
        %v4572 = vunpack.c.h.b16 %v4423
        %v4573 = vunpack.c.l.b16 %v4424
        %v4574 = vunpack.c.h.b16 %v4424
        %v4575 = vunpack.c.l.b16 %v4425
        %v4576 = vunpack.c.h.b16 %v4425
        %v4577 = vunpack.c.l.b16 %v4426
        %v4578 = vunpack.c.h.b16 %v4426
        %v4579 = vunpack.c.l.b16 %v4427
        %v4580 = vunpack.c.h.b16 %v4427
        %v4581 = vunpack.c.l.b16 %v4428
        %v4582 = vunpack.c.h.b16 %v4428
        %v4583 = vunpack.c.l.b16 %v4429
        %v4584 = vunpack.c.h.b16 %v4429
        %v4585 = vunpack.c.l.b16 %v4430
        %v4586 = vunpack.c.h.b16 %v4430
        %v4587 = vunpack.c.l.b16 %v4431
        %v4588 = vunpack.c.h.b16 %v4431
        %v4589 = vunpack.c.l.b16 %v4432
        %v4590 = vunpack.c.h.b16 %v4432
        %v4591 = vunpack.c.l.b16 %v4433
        %v4592 = vunpack.c.h.b16 %v4433
        %v4593 = vunpack.c.l.b16 %v4434
        %v4594 = vunpack.c.h.b16 %v4434
        %v4595 = vunpack.c.l.b16 %v4435
        %v4596 = vunpack.c.h.b16 %v4435
        %v4597 = vunpack.c.l.b16 %v4436
        %v4598 = vunpack.c.h.b16 %v4436
        %v4599 = vunpack.c.l.b16 %v4437
        %v4600 = vunpack.c.h.b16 %v4437
        %v4601 = vunpack.c.l.b16 %v4438
        %v4602 = vunpack.c.h.b16 %v4438
        %v4603 = vunpack.c.l.b16 %v4439
        %v4604 = vunpack.c.h.b16 %v4439
        %v4605 = vunpack.c.l.b16 %v4440
        %v4606 = vunpack.c.h.b16 %v4440
        %v4607 = vunpack.c.l.b16 %v4441
        %v4608 = vunpack.c.h.b16 %v4441
        %v4609 = vunpack.c.l.b16 %v4442
        %v4610 = vunpack.c.h.b16 %v4442
        %v4611 = vunpack.c.l.b16 %v4443
        %v4612 = vunpack.c.h.b16 %v4443
        %v4613 = vunpack.c.l.b16 %v4444
        %v4614 = vunpack.c.h.b16 %v4444
        %v4615 = vunpack.c.l.b16 %v4445
        %v4616 = vunpack.c.h.b16 %v4445
        %v4617 = vunpack.c.l.b16 %v4446
        %v4618 = vunpack.c.h.b16 %v4446
        %v4619 = vunpack.c.l.b16 %v4447
        %v4620 = vunpack.c.h.b16 %v4447
        %v4621 = vunpack.c.l.b16 %v4448
        %v4622 = vunpack.c.h.b16 %v4448
        %v4623 = vunpack.c.l.b16 %v4449
        %v4624 = vunpack.c.h.b16 %v4449
        %v4625 = vunpack.c.l.b16 %v4450
        %v4626 = vunpack.c.h.b16 %v4450
        %v4627 = vunpack.c.l.b16 %v4451
        %v4628 = vunpack.c.h.b16 %v4451
        %v4629 = vunpack.c.l.b16 %v4452
        %v4630 = vunpack.c.h.b16 %v4452
        %v4631 = vunpack.c.l.b16 %v4453
        %v4632 = vunpack.c.h.b16 %v4453
        %v4633 = vunpack.c.l.b16 %v4454
        %v4634 = vunpack.c.h.b16 %v4454
        %v4635 = vunpack.c.l.b16 %v4455
        %v4636 = vunpack.c.h.b16 %v4455
        %v4637 = vunpack.c.l.b16 %v4456
        %v4638 = vunpack.c.h.b16 %v4456
        %v4639 = vunpack.c.l.b16 %v4457
        %v4640 = vunpack.c.h.b16 %v4457
        %v4641 = vunpack.c.l.b16 %v4458
        %v4642 = vunpack.c.h.b16 %v4458
        %v4643 = vunpack.c.l.b16 %v4459
        %v4644 = vunpack.c.h.b16 %v4459
        %v4645 = vunpack.c.l.b16 %v4460
        %v4646 = vunpack.c.h.b16 %v4460
        %v4647 = vunpack.c.l.b16 %v4461
        %v4648 = vunpack.c.h.b16 %v4461
        %v4649 = vunpack.c.l.b16 %v4462
        %v4650 = vunpack.c.h.b16 %v4462
        %v4651 = vunpack.c.l.b16 %v4463
        %v4652 = vunpack.c.h.b16 %v4463
        %v4653 = vunpack.c.l.b16 %v4464
        %v4654 = vunpack.c.h.b16 %v4464
        %v4655 = vunpack.c.l.b16 %v4465
        %v4656 = vunpack.c.h.b16 %v4465
        %v4657 = vunpack.c.l.b16 %v4466
        %v4658 = vunpack.c.h.b16 %v4466
        %v4659 = vunpack.c.l.b16 %v4467
        %v4660 = vunpack.c.h.b16 %v4467
        %v4661 = vunpack.c.l.b16 %v4468
        %v4662 = vunpack.c.h.b16 %v4468
        %v4663 = vpack.c.b16 %v4543, %v4535
        %v4664 = vpack.c.b16 %v4544, %v4536
        %v4665 = vpack.c.b16 %v4545, %v4537
        %v4666 = vpack.c.b16 %v4546, %v4538
        %v4667 = vpack.c.b16 %v4547, %v4539
        %v4668 = vpack.c.b16 %v4548, %v4540
        %v4669 = vpack.c.b16 %v4549, %v4541
        %v4670 = vpack.c.b16 %v4550, %v4542
        %v4671 = vpack.c.b16 %v4559, %v4551
        %v4672 = vpack.c.b16 %v4560, %v4552
        %v4673 = vpack.c.b16 %v4561, %v4553
        %v4674 = vpack.c.b16 %v4562, %v4554
        %v4675 = vpack.c.b16 %v4563, %v4555
        %v4676 = vpack.c.b16 %v4564, %v4556
        %v4677 = vpack.c.b16 %v4565, %v4557
        %v4678 = vpack.c.b16 %v4566, %v4558
        %v4679 = vpack.c.b16 %v4575, %v4567
        %v4680 = vpack.c.b16 %v4576, %v4568
        %v4681 = vpack.c.b16 %v4577, %v4569
        %v4682 = vpack.c.b16 %v4578, %v4570
        %v4683 = vpack.c.b16 %v4579, %v4571
        %v4684 = vpack.c.b16 %v4580, %v4572
        %v4685 = vpack.c.b16 %v4581, %v4573
        %v4686 = vpack.c.b16 %v4582, %v4574
        %v4687 = vpack.c.b16 %v4591, %v4583
        %v4688 = vpack.c.b16 %v4592, %v4584
        %v4689 = vpack.c.b16 %v4593, %v4585
        %v4690 = vpack.c.b16 %v4594, %v4586
        %v4691 = vpack.c.b16 %v4595, %v4587
        %v4692 = vpack.c.b16 %v4596, %v4588
        %v4693 = vpack.c.b16 %v4597, %v4589
        %v4694 = vpack.c.b16 %v4598, %v4590
        %v4695 = vpack.c.b16 %v4607, %v4599
        %v4696 = vpack.c.b16 %v4608, %v4600
        %v4697 = vpack.c.b16 %v4609, %v4601
        %v4698 = vpack.c.b16 %v4610, %v4602
        %v4699 = vpack.c.b16 %v4611, %v4603
        %v4700 = vpack.c.b16 %v4612, %v4604
        %v4701 = vpack.c.b16 %v4613, %v4605
        %v4702 = vpack.c.b16 %v4614, %v4606
        %v4703 = vpack.c.b16 %v4623, %v4615
        %v4704 = vpack.c.b16 %v4624, %v4616
        %v4705 = vpack.c.b16 %v4625, %v4617
        %v4706 = vpack.c.b16 %v4626, %v4618
        %v4707 = vpack.c.b16 %v4627, %v4619
        %v4708 = vpack.c.b16 %v4628, %v4620
        %v4709 = vpack.c.b16 %v4629, %v4621
        %v4710 = vpack.c.b16 %v4630, %v4622
        %v4711 = vpack.c.b16 %v4639, %v4631
        %v4712 = vpack.c.b16 %v4640, %v4632
        %v4713 = vpack.c.b16 %v4641, %v4633
        %v4714 = vpack.c.b16 %v4642, %v4634
        %v4715 = vpack.c.b16 %v4643, %v4635
        %v4716 = vpack.c.b16 %v4644, %v4636
        %v4717 = vpack.c.b16 %v4645, %v4637
        %v4718 = vpack.c.b16 %v4646, %v4638
        %v4719 = vpack.c.b16 %v4655, %v4647
        %v4720 = vpack.c.b16 %v4656, %v4648
        %v4721 = vpack.c.b16 %v4657, %v4649
        %v4722 = vpack.c.b16 %v4658, %v4650
        %v4723 = vpack.c.b16 %v4659, %v4651
        %v4724 = vpack.c.b16 %v4660, %v4652
        %v4725 = vpack.c.b16 %v4661, %v4653
        %v4726 = vpack.c.b16 %v4662, %v4654
        %4791 = vmatprep.subr.bf16.mxu0 %v4720
        %4792 = vmatpush1.bf16.msra.mxu0 %v4719
        %4793 = vmatprep.subr.bf16.mxu0 %v4712
        %4794 = vmatpush1.bf16.msra.mxu0 %v4711
        %4795 = vmatprep.subr.bf16.mxu0 %v4704
        %4796 = vmatpush1.bf16.msra.mxu0 %v4703
        %4797 = vmatprep.subr.bf16.mxu0 %v4696
        %4798 = vmatpush1.bf16.msra.mxu0 %v4695
        %4799 = vmatprep.subr.bf16.mxu0 %v4688
        %4800 = vmatpush1.bf16.msra.mxu0 %v4687
        %4801 = vmatprep.subr.bf16.mxu0 %v4680
        %4802 = vmatpush1.bf16.msra.mxu0 %v4679
        %4803 = vmatprep.subr.bf16.mxu0 %v4672
        %4804 = vmatpush1.bf16.msra.mxu0 %v4671
        %4805 = vmatprep.subr.bf16.mxu0 %v4664
        %4806 = vmatpush1.bf16.msra.mxu0 %v4663
        %4807 = vmatprep.subr.bf16.mxu0 0
        %4808 = vmatpush2.bf16.msra.mxu0 0
        %4809 = vmatprep.subr.bf16.mxu0 0
        %4810 = vmatpush2.bf16.msra.mxu0 0
        %4811 = vmatprep.subr.bf16.mxu0 0
        %4812 = vmatpush2.bf16.msra.mxu0 0
        %4813 = vmatprep.subr.bf16.mxu0 0
        %4814 = vmatpush2.bf16.msra.mxu0 0
        %4815 = vmatprep.subr.bf16.mxu0 0
        %4816 = vmatpush2.bf16.msra.mxu0 0
        %4817 = vmatprep.subr.bf16.mxu0 0
        %4818 = vmatpush2.bf16.msra.mxu0 0
        %4819 = vmatprep.subr.bf16.mxu0 0
        %4820 = vmatpush2.bf16.msra.mxu0 0
        %4821 = vmatprep.subr.bf16.mxu0 0
        %4822 = vmatpush2.bf16.msra.mxu0 0
        %4823 = vmatprep.mubr.bf16.mxu0 0
        %4824 = vmatmul.mubr.bf16.gmra.mxu0 %v4469
        %v4825 = vpop.f32.mrf.mxu0
        %v4826 = vadd.f32 0.0, %v4825
        %v4827 = vpop.f32.mrf.mxu0
        %v4828 = vadd.f32 0.0, %v4827
        %v4829 = vpop.f32.mrf.mxu0
        %v4830 = vpop.f32.mrf.mxu0
        %4831 = vdwg.mxu0
        %4832 = vmatprep.subr.bf16.mxu0 %v4722
        %4833 = vmatpush1.bf16.msra.mxu0 %v4721
        %4834 = vmatprep.subr.bf16.mxu0 %v4714
        %4835 = vmatpush1.bf16.msra.mxu0 %v4713
        %4836 = vmatprep.subr.bf16.mxu0 %v4706
        %4837 = vmatpush1.bf16.msra.mxu0 %v4705
        %4838 = vmatprep.subr.bf16.mxu0 %v4698
        %4839 = vmatpush1.bf16.msra.mxu0 %v4697
        %4840 = vmatprep.subr.bf16.mxu0 %v4690
        %4841 = vmatpush1.bf16.msra.mxu0 %v4689
        %4842 = vmatprep.subr.bf16.mxu0 %v4682
        %4843 = vmatpush1.bf16.msra.mxu0 %v4681
        %4844 = vmatprep.subr.bf16.mxu0 %v4674
        %4845 = vmatpush1.bf16.msra.mxu0 %v4673
        %4846 = vmatprep.subr.bf16.mxu0 %v4666
        %4847 = vmatpush1.bf16.msra.mxu0 %v4665
        %4848 = vmatprep.subr.bf16.mxu0 0
        %4849 = vmatpush2.bf16.msra.mxu0 0
        %4850 = vmatprep.subr.bf16.mxu0 0
        %4851 = vmatpush2.bf16.msra.mxu0 0
        %4852 = vmatprep.subr.bf16.mxu0 0
        %4853 = vmatpush2.bf16.msra.mxu0 0
        %4854 = vmatprep.subr.bf16.mxu0 0
        %4855 = vmatpush2.bf16.msra.mxu0 0
        %4856 = vmatprep.subr.bf16.mxu0 0
        %4857 = vmatpush2.bf16.msra.mxu0 0
        %4858 = vmatprep.subr.bf16.mxu0 0
        %4859 = vmatpush2.bf16.msra.mxu0 0
        %4860 = vmatprep.subr.bf16.mxu0 0
        %4861 = vmatpush2.bf16.msra.mxu0 0
        %4862 = vmatprep.subr.bf16.mxu0 0
        %4863 = vmatpush2.bf16.msra.mxu0 0
        %4864 = vmatprep.mubr.bf16.mxu0 0
        %4865 = vmatmul.mubr.bf16.gmra.mxu0 %v4469
        %v4866 = vpop.f32.mrf.mxu0
        %v4867 = vadd.f32 0.0, %v4866
        %v4868 = vpop.f32.mrf.mxu0
        %v4869 = vadd.f32 0.0, %v4868
        %v4870 = vpop.f32.mrf.mxu0
        %v4871 = vpop.f32.mrf.mxu0
        %4872 = vdwg.mxu0
        %4873 = vmatprep.subr.bf16.mxu0 %v4724
        %4874 = vmatpush1.bf16.msra.mxu0 %v4723
        %4875 = vmatprep.subr.bf16.mxu0 %v4716
        %4876 = vmatpush1.bf16.msra.mxu0 %v4715
        %4877 = vmatprep.subr.bf16.mxu0 %v4708
        %4878 = vmatpush1.bf16.msra.mxu0 %v4707
        %4879 = vmatprep.subr.bf16.mxu0 %v4700
        %4880 = vmatpush1.bf16.msra.mxu0 %v4699
        %4881 = vmatprep.subr.bf16.mxu0 %v4692
        %4882 = vmatpush1.bf16.msra.mxu0 %v4691
        %4883 = vmatprep.subr.bf16.mxu0 %v4684
        %4884 = vmatpush1.bf16.msra.mxu0 %v4683
        %4885 = vmatprep.subr.bf16.mxu0 %v4676
        %4886 = vmatpush1.bf16.msra.mxu0 %v4675
        %4887 = vmatprep.subr.bf16.mxu0 %v4668
        %4888 = vmatpush1.bf16.msra.mxu0 %v4667
        %4889 = vmatprep.subr.bf16.mxu0 0
        %4890 = vmatpush2.bf16.msra.mxu0 0
        %4891 = vmatprep.subr.bf16.mxu0 0
        %4892 = vmatpush2.bf16.msra.mxu0 0
        %4893 = vmatprep.subr.bf16.mxu0 0
        %4894 = vmatpush2.bf16.msra.mxu0 0
        %4895 = vmatprep.subr.bf16.mxu0 0
        %4896 = vmatpush2.bf16.msra.mxu0 0
        %4897 = vmatprep.subr.bf16.mxu0 0
        %4898 = vmatpush2.bf16.msra.mxu0 0
        %4899 = vmatprep.subr.bf16.mxu0 0
        %4900 = vmatpush2.bf16.msra.mxu0 0
        %4901 = vmatprep.subr.bf16.mxu0 0
        %4902 = vmatpush2.bf16.msra.mxu0 0
        %4903 = vmatprep.subr.bf16.mxu0 0
        %4904 = vmatpush2.bf16.msra.mxu0 0
        %4905 = vmatprep.mubr.bf16.mxu0 0
        %4906 = vmatmul.mubr.bf16.gmra.mxu0 %v4469
        %v4907 = vpop.f32.mrf.mxu0
        %v4908 = vadd.f32 0.0, %v4907
        %v4909 = vpop.f32.mrf.mxu0
        %v4910 = vadd.f32 0.0, %v4909
        %v4911 = vpop.f32.mrf.mxu0
        %v4912 = vpop.f32.mrf.mxu0
        %4913 = vdwg.mxu0
        %4914 = vmatprep.subr.bf16.mxu0 %v4726
        %4915 = vmatpush1.bf16.msra.mxu0 %v4725
        %4916 = vmatprep.subr.bf16.mxu0 %v4718
        %4917 = vmatpush1.bf16.msra.mxu0 %v4717
        %4918 = vmatprep.subr.bf16.mxu0 %v4710
        %4919 = vmatpush1.bf16.msra.mxu0 %v4709
        %4920 = vmatprep.subr.bf16.mxu0 %v4702
        %4921 = vmatpush1.bf16.msra.mxu0 %v4701
        %4922 = vmatprep.subr.bf16.mxu0 %v4694
        %4923 = vmatpush1.bf16.msra.mxu0 %v4693
        %4924 = vmatprep.subr.bf16.mxu0 %v4686
        %4925 = vmatpush1.bf16.msra.mxu0 %v4685
        %4926 = vmatprep.subr.bf16.mxu0 %v4678
        %4927 = vmatpush1.bf16.msra.mxu0 %v4677
        %4928 = vmatprep.subr.bf16.mxu0 %v4670
        %4929 = vmatpush1.bf16.msra.mxu0 %v4669
        %4930 = vmatprep.subr.bf16.mxu0 0
        %4931 = vmatpush2.bf16.msra.mxu0 0
        %4932 = vmatprep.subr.bf16.mxu0 0
        %4933 = vmatpush2.bf16.msra.mxu0 0
        %4934 = vmatprep.subr.bf16.mxu0 0
        %4935 = vmatpush2.bf16.msra.mxu0 0
        %4936 = vmatprep.subr.bf16.mxu0 0
        %4937 = vmatpush2.bf16.msra.mxu0 0
        %4938 = vmatprep.subr.bf16.mxu0 0
        %4939 = vmatpush2.bf16.msra.mxu0 0
        %4940 = vmatprep.subr.bf16.mxu0 0
        %4941 = vmatpush2.bf16.msra.mxu0 0
        %4942 = vmatprep.subr.bf16.mxu0 0
        %4943 = vmatpush2.bf16.msra.mxu0 0
        %4944 = vmatprep.subr.bf16.mxu0 0
        %4945 = vmatpush2.bf16.msra.mxu0 0
        %4946 = vmatprep.mubr.bf16.mxu0 0
        %4947 = vmatmul.mubr.bf16.gmra.mxu0 %v4469
        %v4948 = vpop.f32.mrf.mxu0
        %v4949 = vadd.f32 0.0, %v4948
        %v4950 = vpop.f32.mrf.mxu0
        %v4951 = vadd.f32 0.0, %v4950
        %v4952 = vpop.f32.mrf.mxu0
        %v4953 = vpop.f32.mrf.mxu0
        %4954 = vdwg.mxu0
        %v4963 = vcombine.low %v4826, %v4828
        %v4964 = vcombine.low %v4867, %v4869
        %v4965 = vcombine.low %v4908, %v4910
        %v4966 = vcombine.low %v4949, %v4951
        %v4968 = vunpack.c.l.s4 1966171168
        %v4969 = vunpack.c.0.s8 %v4968
        %v4970 = vlaneseq
        %v4971 = vshrl.u32 %v4970, 7
        %v4972 = vsub.s32 %v4969, %v4971
        %v4973 = vrot.slane %v4963, %v4972
        %v4975 = vunpack.c.l.s4 1966171168
        %v4976 = vunpack.c.0.s8 %v4975
        %v4977 = vlaneseq
        %v4978 = vshrl.u32 %v4977, 7
        %v4979 = vsub.s32 %v4976, %v4978
        %v4980 = vrot.slane %v4964, %v4979
        %v4982 = vunpack.c.l.s4 1966171168
        %v4983 = vunpack.c.0.s8 %v4982
        %v4984 = vlaneseq
        %v4985 = vshrl.u32 %v4984, 7
        %v4986 = vsub.s32 %v4983, %v4985
        %v4987 = vrot.slane %v4965, %v4986
        %v4989 = vunpack.c.l.s4 1966171168
        %v4990 = vunpack.c.0.s8 %v4989
        %v4991 = vlaneseq
        %v4992 = vshrl.u32 %v4991, 7
        %v4993 = vsub.s32 %v4990, %v4992
        %v4994 = vrot.slane %v4966, %v4993
        %v4995 = vcombine.low %v4973, %v4980
        %v4996 = vcombine.low %v4987, %v4994
        %v4998 = vunpack.c.l.s4 1966171168
        %v4999 = vunpack.c.0.s8 %v4998
        %v5000 = vlaneseq
        %v5001 = vshrl.u32 %v5000, 7
        %v5002 = vsub.s32 %v4999, %v5001
        %v5003 = vrot.slane %v4995, %v5002
        %v5005 = vunpack.c.l.s4 1966171168
        %v5006 = vunpack.c.0.s8 %v5005
        %v5007 = vlaneseq
        %v5008 = vshrl.u32 %v5007, 7
        %v5009 = vsub.s32 %v5006, %v5008
        %v5010 = vrot.slane %v4996, %v5009
        %v5011 = vcombine.low %v5003, %v5010
        %v5013 = vadd.f32 %v4403, %v5011
        %s5014 = scalar_lea.vmem [#allocation14], 2560
        %v5015 = vld [vmem:[%s5014] sm:$0xff]
        %v5016 = vld [vmem:[%s5014 + $0x8] sm:$0xff]
        %v5017 = vld [vmem:[%s5014 + $0x10] sm:$0xff]
        %v5018 = vld [vmem:[%s5014 + $0x18] sm:$0xff]
        %v5019 = vld [vmem:[%s5014 + $0x20] sm:$0xff]
        %v5020 = vld [vmem:[%s5014 + $0x28] sm:$0xff]
        %v5021 = vld [vmem:[%s5014 + $0x30] sm:$0xff]
        %v5022 = vld [vmem:[%s5014 + $0x38] sm:$0xff]
        %v5023 = vld [vmem:[%s5014 + $0x40] sm:$0xff]
        %v5024 = vld [vmem:[%s5014 + $0x48] sm:$0xff]
        %v5025 = vld [vmem:[%s5014 + $0x50] sm:$0xff]
        %v5026 = vld [vmem:[%s5014 + $0x58] sm:$0xff]
        %v5027 = vld [vmem:[%s5014 + $0x60] sm:$0xff]
        %v5028 = vld [vmem:[%s5014 + $0x68] sm:$0xff]
        %v5029 = vld [vmem:[%s5014 + $0x70] sm:$0xff]
        %v5030 = vld [vmem:[%s5014 + $0x78] sm:$0xff]
        %v5031 = vld [vmem:[%s5014 + $0x80] sm:$0xff]
        %v5032 = vld [vmem:[%s5014 + $0x88] sm:$0xff]
        %v5033 = vld [vmem:[%s5014 + $0x90] sm:$0xff]
        %v5034 = vld [vmem:[%s5014 + $0x98] sm:$0xff]
        %v5035 = vld [vmem:[%s5014 + $0xa0] sm:$0xff]
        %v5036 = vld [vmem:[%s5014 + $0xa8] sm:$0xff]
        %v5037 = vld [vmem:[%s5014 + $0xb0] sm:$0xff]
        %v5038 = vld [vmem:[%s5014 + $0xb8] sm:$0xff]
        %v5039 = vld [vmem:[%s5014 + $0xc0] sm:$0xff]
        %v5040 = vld [vmem:[%s5014 + $0xc8] sm:$0xff]
        %v5041 = vld [vmem:[%s5014 + $0xd0] sm:$0xff]
        %v5042 = vld [vmem:[%s5014 + $0xd8] sm:$0xff]
        %v5043 = vld [vmem:[%s5014 + $0xe0] sm:$0xff]
        %v5044 = vld [vmem:[%s5014 + $0xe8] sm:$0xff]
        %v5045 = vld [vmem:[%s5014 + $0xf0] sm:$0xff]
        %v5046 = vld [vmem:[%s5014 + $0xf8] sm:$0xff]
        %v5047 = vld [vmem:[%s5014 + $0x100] sm:$0xff]
        %v5048 = vld [vmem:[%s5014 + $0x108] sm:$0xff]
        %v5049 = vld [vmem:[%s5014 + $0x110] sm:$0xff]
        %v5050 = vld [vmem:[%s5014 + $0x118] sm:$0xff]
        %v5051 = vld [vmem:[%s5014 + $0x120] sm:$0xff]
        %v5052 = vld [vmem:[%s5014 + $0x128] sm:$0xff]
        %v5053 = vld [vmem:[%s5014 + $0x130] sm:$0xff]
        %v5054 = vld [vmem:[%s5014 + $0x138] sm:$0xff]
        %v5055 = vld [vmem:[%s5014 + $0x140] sm:$0xff]
        %v5056 = vld [vmem:[%s5014 + $0x148] sm:$0xff]
        %v5057 = vld [vmem:[%s5014 + $0x150] sm:$0xff]
        %v5058 = vld [vmem:[%s5014 + $0x158] sm:$0xff]
        %v5059 = vld [vmem:[%s5014 + $0x160] sm:$0xff]
        %v5060 = vld [vmem:[%s5014 + $0x168] sm:$0xff]
        %v5061 = vld [vmem:[%s5014 + $0x170] sm:$0xff]
        %v5062 = vld [vmem:[%s5014 + $0x178] sm:$0xff]
        %v5063 = vld [vmem:[%s5014 + $0x180] sm:$0xff]
        %v5064 = vld [vmem:[%s5014 + $0x188] sm:$0xff]
        %v5065 = vld [vmem:[%s5014 + $0x190] sm:$0xff]
        %v5066 = vld [vmem:[%s5014 + $0x198] sm:$0xff]
        %v5067 = vld [vmem:[%s5014 + $0x1a0] sm:$0xff]
        %v5068 = vld [vmem:[%s5014 + $0x1a8] sm:$0xff]
        %v5069 = vld [vmem:[%s5014 + $0x1b0] sm:$0xff]
        %v5070 = vld [vmem:[%s5014 + $0x1b8] sm:$0xff]
        %v5071 = vld [vmem:[%s5014 + $0x1c0] sm:$0xff]
        %v5072 = vld [vmem:[%s5014 + $0x1c8] sm:$0xff]
        %v5073 = vld [vmem:[%s5014 + $0x1d0] sm:$0xff]
        %v5074 = vld [vmem:[%s5014 + $0x1d8] sm:$0xff]
        %v5075 = vld [vmem:[%s5014 + $0x1e0] sm:$0xff]
        %v5076 = vld [vmem:[%s5014 + $0x1e8] sm:$0xff]
        %v5077 = vld [vmem:[%s5014 + $0x1f0] sm:$0xff]
        %v5078 = vld [vmem:[%s5014 + $0x1f8] sm:$0xff]
        %v5079 = vrot.slane %v2637, 2
        %v5145 = vunpack.c.l.b16 %v5015
        %v5146 = vunpack.c.h.b16 %v5015
        %v5147 = vunpack.c.l.b16 %v5016
        %v5148 = vunpack.c.h.b16 %v5016
        %v5149 = vunpack.c.l.b16 %v5017
        %v5150 = vunpack.c.h.b16 %v5017
        %v5151 = vunpack.c.l.b16 %v5018
        %v5152 = vunpack.c.h.b16 %v5018
        %v5153 = vunpack.c.l.b16 %v5019
        %v5154 = vunpack.c.h.b16 %v5019
        %v5155 = vunpack.c.l.b16 %v5020
        %v5156 = vunpack.c.h.b16 %v5020
        %v5157 = vunpack.c.l.b16 %v5021
        %v5158 = vunpack.c.h.b16 %v5021
        %v5159 = vunpack.c.l.b16 %v5022
        %v5160 = vunpack.c.h.b16 %v5022
        %v5161 = vunpack.c.l.b16 %v5023
        %v5162 = vunpack.c.h.b16 %v5023
        %v5163 = vunpack.c.l.b16 %v5024
        %v5164 = vunpack.c.h.b16 %v5024
        %v5165 = vunpack.c.l.b16 %v5025
        %v5166 = vunpack.c.h.b16 %v5025
        %v5167 = vunpack.c.l.b16 %v5026
        %v5168 = vunpack.c.h.b16 %v5026
        %v5169 = vunpack.c.l.b16 %v5027
        %v5170 = vunpack.c.h.b16 %v5027
        %v5171 = vunpack.c.l.b16 %v5028
        %v5172 = vunpack.c.h.b16 %v5028
        %v5173 = vunpack.c.l.b16 %v5029
        %v5174 = vunpack.c.h.b16 %v5029
        %v5175 = vunpack.c.l.b16 %v5030
        %v5176 = vunpack.c.h.b16 %v5030
        %v5177 = vunpack.c.l.b16 %v5031
        %v5178 = vunpack.c.h.b16 %v5031
        %v5179 = vunpack.c.l.b16 %v5032
        %v5180 = vunpack.c.h.b16 %v5032
        %v5181 = vunpack.c.l.b16 %v5033
        %v5182 = vunpack.c.h.b16 %v5033
        %v5183 = vunpack.c.l.b16 %v5034
        %v5184 = vunpack.c.h.b16 %v5034
        %v5185 = vunpack.c.l.b16 %v5035
        %v5186 = vunpack.c.h.b16 %v5035
        %v5187 = vunpack.c.l.b16 %v5036
        %v5188 = vunpack.c.h.b16 %v5036
        %v5189 = vunpack.c.l.b16 %v5037
        %v5190 = vunpack.c.h.b16 %v5037
        %v5191 = vunpack.c.l.b16 %v5038
        %v5192 = vunpack.c.h.b16 %v5038
        %v5193 = vunpack.c.l.b16 %v5039
        %v5194 = vunpack.c.h.b16 %v5039
        %v5195 = vunpack.c.l.b16 %v5040
        %v5196 = vunpack.c.h.b16 %v5040
        %v5197 = vunpack.c.l.b16 %v5041
        %v5198 = vunpack.c.h.b16 %v5041
        %v5199 = vunpack.c.l.b16 %v5042
        %v5200 = vunpack.c.h.b16 %v5042
        %v5201 = vunpack.c.l.b16 %v5043
        %v5202 = vunpack.c.h.b16 %v5043
        %v5203 = vunpack.c.l.b16 %v5044
        %v5204 = vunpack.c.h.b16 %v5044
        %v5205 = vunpack.c.l.b16 %v5045
        %v5206 = vunpack.c.h.b16 %v5045
        %v5207 = vunpack.c.l.b16 %v5046
        %v5208 = vunpack.c.h.b16 %v5046
        %v5209 = vunpack.c.l.b16 %v5047
        %v5210 = vunpack.c.h.b16 %v5047
        %v5211 = vunpack.c.l.b16 %v5048
        %v5212 = vunpack.c.h.b16 %v5048
        %v5213 = vunpack.c.l.b16 %v5049
        %v5214 = vunpack.c.h.b16 %v5049
        %v5215 = vunpack.c.l.b16 %v5050
        %v5216 = vunpack.c.h.b16 %v5050
        %v5217 = vunpack.c.l.b16 %v5051
        %v5218 = vunpack.c.h.b16 %v5051
        %v5219 = vunpack.c.l.b16 %v5052
        %v5220 = vunpack.c.h.b16 %v5052
        %v5221 = vunpack.c.l.b16 %v5053
        %v5222 = vunpack.c.h.b16 %v5053
        %v5223 = vunpack.c.l.b16 %v5054
        %v5224 = vunpack.c.h.b16 %v5054
        %v5225 = vunpack.c.l.b16 %v5055
        %v5226 = vunpack.c.h.b16 %v5055
        %v5227 = vunpack.c.l.b16 %v5056
        %v5228 = vunpack.c.h.b16 %v5056
        %v5229 = vunpack.c.l.b16 %v5057
        %v5230 = vunpack.c.h.b16 %v5057
        %v5231 = vunpack.c.l.b16 %v5058
        %v5232 = vunpack.c.h.b16 %v5058
        %v5233 = vunpack.c.l.b16 %v5059
        %v5234 = vunpack.c.h.b16 %v5059
        %v5235 = vunpack.c.l.b16 %v5060
        %v5236 = vunpack.c.h.b16 %v5060
        %v5237 = vunpack.c.l.b16 %v5061
        %v5238 = vunpack.c.h.b16 %v5061
        %v5239 = vunpack.c.l.b16 %v5062
        %v5240 = vunpack.c.h.b16 %v5062
        %v5241 = vunpack.c.l.b16 %v5063
        %v5242 = vunpack.c.h.b16 %v5063
        %v5243 = vunpack.c.l.b16 %v5064
        %v5244 = vunpack.c.h.b16 %v5064
        %v5245 = vunpack.c.l.b16 %v5065
        %v5246 = vunpack.c.h.b16 %v5065
        %v5247 = vunpack.c.l.b16 %v5066
        %v5248 = vunpack.c.h.b16 %v5066
        %v5249 = vunpack.c.l.b16 %v5067
        %v5250 = vunpack.c.h.b16 %v5067
        %v5251 = vunpack.c.l.b16 %v5068
        %v5252 = vunpack.c.h.b16 %v5068
        %v5253 = vunpack.c.l.b16 %v5069
        %v5254 = vunpack.c.h.b16 %v5069
        %v5255 = vunpack.c.l.b16 %v5070
        %v5256 = vunpack.c.h.b16 %v5070
        %v5257 = vunpack.c.l.b16 %v5071
        %v5258 = vunpack.c.h.b16 %v5071
        %v5259 = vunpack.c.l.b16 %v5072
        %v5260 = vunpack.c.h.b16 %v5072
        %v5261 = vunpack.c.l.b16 %v5073
        %v5262 = vunpack.c.h.b16 %v5073
        %v5263 = vunpack.c.l.b16 %v5074
        %v5264 = vunpack.c.h.b16 %v5074
        %v5265 = vunpack.c.l.b16 %v5075
        %v5266 = vunpack.c.h.b16 %v5075
        %v5267 = vunpack.c.l.b16 %v5076
        %v5268 = vunpack.c.h.b16 %v5076
        %v5269 = vunpack.c.l.b16 %v5077
        %v5270 = vunpack.c.h.b16 %v5077
        %v5271 = vunpack.c.l.b16 %v5078
        %v5272 = vunpack.c.h.b16 %v5078
        %v5273 = vpack.c.b16 %v5153, %v5145
        %v5274 = vpack.c.b16 %v5154, %v5146
        %v5275 = vpack.c.b16 %v5155, %v5147
        %v5276 = vpack.c.b16 %v5156, %v5148
        %v5277 = vpack.c.b16 %v5157, %v5149
        %v5278 = vpack.c.b16 %v5158, %v5150
        %v5279 = vpack.c.b16 %v5159, %v5151
        %v5280 = vpack.c.b16 %v5160, %v5152
        %v5281 = vpack.c.b16 %v5169, %v5161
        %v5282 = vpack.c.b16 %v5170, %v5162
        %v5283 = vpack.c.b16 %v5171, %v5163
        %v5284 = vpack.c.b16 %v5172, %v5164
        %v5285 = vpack.c.b16 %v5173, %v5165
        %v5286 = vpack.c.b16 %v5174, %v5166
        %v5287 = vpack.c.b16 %v5175, %v5167
        %v5288 = vpack.c.b16 %v5176, %v5168
        %v5289 = vpack.c.b16 %v5185, %v5177
        %v5290 = vpack.c.b16 %v5186, %v5178
        %v5291 = vpack.c.b16 %v5187, %v5179
        %v5292 = vpack.c.b16 %v5188, %v5180
        %v5293 = vpack.c.b16 %v5189, %v5181
        %v5294 = vpack.c.b16 %v5190, %v5182
        %v5295 = vpack.c.b16 %v5191, %v5183
        %v5296 = vpack.c.b16 %v5192, %v5184
        %v5297 = vpack.c.b16 %v5201, %v5193
        %v5298 = vpack.c.b16 %v5202, %v5194
        %v5299 = vpack.c.b16 %v5203, %v5195
        %v5300 = vpack.c.b16 %v5204, %v5196
        %v5301 = vpack.c.b16 %v5205, %v5197
        %v5302 = vpack.c.b16 %v5206, %v5198
        %v5303 = vpack.c.b16 %v5207, %v5199
        %v5304 = vpack.c.b16 %v5208, %v5200
        %v5305 = vpack.c.b16 %v5217, %v5209
        %v5306 = vpack.c.b16 %v5218, %v5210
        %v5307 = vpack.c.b16 %v5219, %v5211
        %v5308 = vpack.c.b16 %v5220, %v5212
        %v5309 = vpack.c.b16 %v5221, %v5213
        %v5310 = vpack.c.b16 %v5222, %v5214
        %v5311 = vpack.c.b16 %v5223, %v5215
        %v5312 = vpack.c.b16 %v5224, %v5216
        %v5313 = vpack.c.b16 %v5233, %v5225
        %v5314 = vpack.c.b16 %v5234, %v5226
        %v5315 = vpack.c.b16 %v5235, %v5227
        %v5316 = vpack.c.b16 %v5236, %v5228
        %v5317 = vpack.c.b16 %v5237, %v5229
        %v5318 = vpack.c.b16 %v5238, %v5230
        %v5319 = vpack.c.b16 %v5239, %v5231
        %v5320 = vpack.c.b16 %v5240, %v5232
        %v5321 = vpack.c.b16 %v5249, %v5241
        %v5322 = vpack.c.b16 %v5250, %v5242
        %v5323 = vpack.c.b16 %v5251, %v5243
        %v5324 = vpack.c.b16 %v5252, %v5244
        %v5325 = vpack.c.b16 %v5253, %v5245
        %v5326 = vpack.c.b16 %v5254, %v5246
        %v5327 = vpack.c.b16 %v5255, %v5247
        %v5328 = vpack.c.b16 %v5256, %v5248
        %v5329 = vpack.c.b16 %v5265, %v5257
        %v5330 = vpack.c.b16 %v5266, %v5258
        %v5331 = vpack.c.b16 %v5267, %v5259
        %v5332 = vpack.c.b16 %v5268, %v5260
        %v5333 = vpack.c.b16 %v5269, %v5261
        %v5334 = vpack.c.b16 %v5270, %v5262
        %v5335 = vpack.c.b16 %v5271, %v5263
        %v5336 = vpack.c.b16 %v5272, %v5264
        %5401 = vmatprep.subr.bf16.mxu0 %v5330
        %5402 = vmatpush1.bf16.msra.mxu0 %v5329
        %5403 = vmatprep.subr.bf16.mxu0 %v5322
        %5404 = vmatpush1.bf16.msra.mxu0 %v5321
        %5405 = vmatprep.subr.bf16.mxu0 %v5314
        %5406 = vmatpush1.bf16.msra.mxu0 %v5313
        %5407 = vmatprep.subr.bf16.mxu0 %v5306
        %5408 = vmatpush1.bf16.msra.mxu0 %v5305
        %5409 = vmatprep.subr.bf16.mxu0 %v5298
        %5410 = vmatpush1.bf16.msra.mxu0 %v5297
        %5411 = vmatprep.subr.bf16.mxu0 %v5290
        %5412 = vmatpush1.bf16.msra.mxu0 %v5289
        %5413 = vmatprep.subr.bf16.mxu0 %v5282
        %5414 = vmatpush1.bf16.msra.mxu0 %v5281
        %5415 = vmatprep.subr.bf16.mxu0 %v5274
        %5416 = vmatpush1.bf16.msra.mxu0 %v5273
        %5417 = vmatprep.subr.bf16.mxu0 0
        %5418 = vmatpush2.bf16.msra.mxu0 0
        %5419 = vmatprep.subr.bf16.mxu0 0
        %5420 = vmatpush2.bf16.msra.mxu0 0
        %5421 = vmatprep.subr.bf16.mxu0 0
        %5422 = vmatpush2.bf16.msra.mxu0 0
        %5423 = vmatprep.subr.bf16.mxu0 0
        %5424 = vmatpush2.bf16.msra.mxu0 0
        %5425 = vmatprep.subr.bf16.mxu0 0
        %5426 = vmatpush2.bf16.msra.mxu0 0
        %5427 = vmatprep.subr.bf16.mxu0 0
        %5428 = vmatpush2.bf16.msra.mxu0 0
        %5429 = vmatprep.subr.bf16.mxu0 0
        %5430 = vmatpush2.bf16.msra.mxu0 0
        %5431 = vmatprep.subr.bf16.mxu0 0
        %5432 = vmatpush2.bf16.msra.mxu0 0
        %5433 = vmatprep.mubr.bf16.mxu0 0
        %5434 = vmatmul.mubr.bf16.gmra.mxu0 %v5079
        %v5435 = vpop.f32.mrf.mxu0
        %v5436 = vadd.f32 0.0, %v5435
        %v5437 = vpop.f32.mrf.mxu0
        %v5438 = vadd.f32 0.0, %v5437
        %v5439 = vpop.f32.mrf.mxu0
        %v5440 = vpop.f32.mrf.mxu0
        %5441 = vdwg.mxu0
        %5442 = vmatprep.subr.bf16.mxu0 %v5332
        %5443 = vmatpush1.bf16.msra.mxu0 %v5331
        %5444 = vmatprep.subr.bf16.mxu0 %v5324
        %5445 = vmatpush1.bf16.msra.mxu0 %v5323
        %5446 = vmatprep.subr.bf16.mxu0 %v5316
        %5447 = vmatpush1.bf16.msra.mxu0 %v5315
        %5448 = vmatprep.subr.bf16.mxu0 %v5308
        %5449 = vmatpush1.bf16.msra.mxu0 %v5307
        %5450 = vmatprep.subr.bf16.mxu0 %v5300
        %5451 = vmatpush1.bf16.msra.mxu0 %v5299
        %5452 = vmatprep.subr.bf16.mxu0 %v5292
        %5453 = vmatpush1.bf16.msra.mxu0 %v5291
        %5454 = vmatprep.subr.bf16.mxu0 %v5284
        %5455 = vmatpush1.bf16.msra.mxu0 %v5283
        %5456 = vmatprep.subr.bf16.mxu0 %v5276
        %5457 = vmatpush1.bf16.msra.mxu0 %v5275
        %5458 = vmatprep.subr.bf16.mxu0 0
        %5459 = vmatpush2.bf16.msra.mxu0 0
        %5460 = vmatprep.subr.bf16.mxu0 0
        %5461 = vmatpush2.bf16.msra.mxu0 0
        %5462 = vmatprep.subr.bf16.mxu0 0
        %5463 = vmatpush2.bf16.msra.mxu0 0
        %5464 = vmatprep.subr.bf16.mxu0 0
        %5465 = vmatpush2.bf16.msra.mxu0 0
        %5466 = vmatprep.subr.bf16.mxu0 0
        %5467 = vmatpush2.bf16.msra.mxu0 0
        %5468 = vmatprep.subr.bf16.mxu0 0
        %5469 = vmatpush2.bf16.msra.mxu0 0
        %5470 = vmatprep.subr.bf16.mxu0 0
        %5471 = vmatpush2.bf16.msra.mxu0 0
        %5472 = vmatprep.subr.bf16.mxu0 0
        %5473 = vmatpush2.bf16.msra.mxu0 0
        %5474 = vmatprep.mubr.bf16.mxu0 0
        %5475 = vmatmul.mubr.bf16.gmra.mxu0 %v5079
        %v5476 = vpop.f32.mrf.mxu0
        %v5477 = vadd.f32 0.0, %v5476
        %v5478 = vpop.f32.mrf.mxu0
        %v5479 = vadd.f32 0.0, %v5478
        %v5480 = vpop.f32.mrf.mxu0
        %v5481 = vpop.f32.mrf.mxu0
        %5482 = vdwg.mxu0
        %5483 = vmatprep.subr.bf16.mxu0 %v5334
        %5484 = vmatpush1.bf16.msra.mxu0 %v5333
        %5485 = vmatprep.subr.bf16.mxu0 %v5326
        %5486 = vmatpush1.bf16.msra.mxu0 %v5325
        %5487 = vmatprep.subr.bf16.mxu0 %v5318
        %5488 = vmatpush1.bf16.msra.mxu0 %v5317
        %5489 = vmatprep.subr.bf16.mxu0 %v5310
        %5490 = vmatpush1.bf16.msra.mxu0 %v5309
        %5491 = vmatprep.subr.bf16.mxu0 %v5302
        %5492 = vmatpush1.bf16.msra.mxu0 %v5301
        %5493 = vmatprep.subr.bf16.mxu0 %v5294
        %5494 = vmatpush1.bf16.msra.mxu0 %v5293
        %5495 = vmatprep.subr.bf16.mxu0 %v5286
        %5496 = vmatpush1.bf16.msra.mxu0 %v5285
        %5497 = vmatprep.subr.bf16.mxu0 %v5278
        %5498 = vmatpush1.bf16.msra.mxu0 %v5277
        %5499 = vmatprep.subr.bf16.mxu0 0
        %5500 = vmatpush2.bf16.msra.mxu0 0
        %5501 = vmatprep.subr.bf16.mxu0 0
        %5502 = vmatpush2.bf16.msra.mxu0 0
        %5503 = vmatprep.subr.bf16.mxu0 0
        %5504 = vmatpush2.bf16.msra.mxu0 0
        %5505 = vmatprep.subr.bf16.mxu0 0
        %5506 = vmatpush2.bf16.msra.mxu0 0
        %5507 = vmatprep.subr.bf16.mxu0 0
        %5508 = vmatpush2.bf16.msra.mxu0 0
        %5509 = vmatprep.subr.bf16.mxu0 0
        %5510 = vmatpush2.bf16.msra.mxu0 0
        %5511 = vmatprep.subr.bf16.mxu0 0
        %5512 = vmatpush2.bf16.msra.mxu0 0
        %5513 = vmatprep.subr.bf16.mxu0 0
        %5514 = vmatpush2.bf16.msra.mxu0 0
        %5515 = vmatprep.mubr.bf16.mxu0 0
        %5516 = vmatmul.mubr.bf16.gmra.mxu0 %v5079
        %v5517 = vpop.f32.mrf.mxu0
        %v5518 = vadd.f32 0.0, %v5517
        %v5519 = vpop.f32.mrf.mxu0
        %v5520 = vadd.f32 0.0, %v5519
        %v5521 = vpop.f32.mrf.mxu0
        %v5522 = vpop.f32.mrf.mxu0
        %5523 = vdwg.mxu0
        %5524 = vmatprep.subr.bf16.mxu0 %v5336
        %5525 = vmatpush1.bf16.msra.mxu0 %v5335
        %5526 = vmatprep.subr.bf16.mxu0 %v5328
        %5527 = vmatpush1.bf16.msra.mxu0 %v5327
        %5528 = vmatprep.subr.bf16.mxu0 %v5320
        %5529 = vmatpush1.bf16.msra.mxu0 %v5319
        %5530 = vmatprep.subr.bf16.mxu0 %v5312
        %5531 = vmatpush1.bf16.msra.mxu0 %v5311
        %5532 = vmatprep.subr.bf16.mxu0 %v5304
        %5533 = vmatpush1.bf16.msra.mxu0 %v5303
        %5534 = vmatprep.subr.bf16.mxu0 %v5296
        %5535 = vmatpush1.bf16.msra.mxu0 %v5295
        %5536 = vmatprep.subr.bf16.mxu0 %v5288
        %5537 = vmatpush1.bf16.msra.mxu0 %v5287
        %5538 = vmatprep.subr.bf16.mxu0 %v5280
        %5539 = vmatpush1.bf16.msra.mxu0 %v5279
        %5540 = vmatprep.subr.bf16.mxu0 0
        %5541 = vmatpush2.bf16.msra.mxu0 0
        %5542 = vmatprep.subr.bf16.mxu0 0
        %5543 = vmatpush2.bf16.msra.mxu0 0
        %5544 = vmatprep.subr.bf16.mxu0 0
        %5545 = vmatpush2.bf16.msra.mxu0 0
        %5546 = vmatprep.subr.bf16.mxu0 0
        %5547 = vmatpush2.bf16.msra.mxu0 0
        %5548 = vmatprep.subr.bf16.mxu0 0
        %5549 = vmatpush2.bf16.msra.mxu0 0
        %5550 = vmatprep.subr.bf16.mxu0 0
        %5551 = vmatpush2.bf16.msra.mxu0 0
        %5552 = vmatprep.subr.bf16.mxu0 0
        %5553 = vmatpush2.bf16.msra.mxu0 0
        %5554 = vmatprep.subr.bf16.mxu0 0
        %5555 = vmatpush2.bf16.msra.mxu0 0
        %5556 = vmatprep.mubr.bf16.mxu0 0
        %5557 = vmatmul.mubr.bf16.gmra.mxu0 %v5079
        %v5558 = vpop.f32.mrf.mxu0
        %v5559 = vadd.f32 0.0, %v5558
        %v5560 = vpop.f32.mrf.mxu0
        %v5561 = vadd.f32 0.0, %v5560
        %v5562 = vpop.f32.mrf.mxu0
        %v5563 = vpop.f32.mrf.mxu0
        %5564 = vdwg.mxu0
        %v5573 = vcombine.low %v5436, %v5438
        %v5574 = vcombine.low %v5477, %v5479
        %v5575 = vcombine.low %v5518, %v5520
        %v5576 = vcombine.low %v5559, %v5561
        %v5578 = vunpack.c.l.s4 1966171168
        %v5579 = vunpack.c.0.s8 %v5578
        %v5580 = vlaneseq
        %v5581 = vshrl.u32 %v5580, 7
        %v5582 = vsub.s32 %v5579, %v5581
        %v5583 = vrot.slane %v5573, %v5582
        %v5585 = vunpack.c.l.s4 1966171168
        %v5586 = vunpack.c.0.s8 %v5585
        %v5587 = vlaneseq
        %v5588 = vshrl.u32 %v5587, 7
        %v5589 = vsub.s32 %v5586, %v5588
        %v5590 = vrot.slane %v5574, %v5589
        %v5592 = vunpack.c.l.s4 1966171168
        %v5593 = vunpack.c.0.s8 %v5592
        %v5594 = vlaneseq
        %v5595 = vshrl.u32 %v5594, 7
        %v5596 = vsub.s32 %v5593, %v5595
        %v5597 = vrot.slane %v5575, %v5596
        %v5599 = vunpack.c.l.s4 1966171168
        %v5600 = vunpack.c.0.s8 %v5599
        %v5601 = vlaneseq
        %v5602 = vshrl.u32 %v5601, 7
        %v5603 = vsub.s32 %v5600, %v5602
        %v5604 = vrot.slane %v5576, %v5603
        %v5605 = vcombine.low %v5583, %v5590
        %v5606 = vcombine.low %v5597, %v5604
        %v5608 = vunpack.c.l.s4 1966171168
        %v5609 = vunpack.c.0.s8 %v5608
        %v5610 = vlaneseq
        %v5611 = vshrl.u32 %v5610, 7
        %v5612 = vsub.s32 %v5609, %v5611
        %v5613 = vrot.slane %v5605, %v5612
        %v5615 = vunpack.c.l.s4 1966171168
        %v5616 = vunpack.c.0.s8 %v5615
        %v5617 = vlaneseq
        %v5618 = vshrl.u32 %v5617, 7
        %v5619 = vsub.s32 %v5616, %v5618
        %v5620 = vrot.slane %v5606, %v5619
        %v5621 = vcombine.low %v5613, %v5620
        %v5623 = vadd.f32 %v5013, %v5621
        %s5624 = scalar_lea.vmem [#allocation14], 3072
        %v5625 = vld [vmem:[%s5624] sm:$0xff]
        %v5626 = vld [vmem:[%s5624 + $0x8] sm:$0xff]
        %v5627 = vld [vmem:[%s5624 + $0x10] sm:$0xff]
        %v5628 = vld [vmem:[%s5624 + $0x18] sm:$0xff]
        %v5629 = vld [vmem:[%s5624 + $0x20] sm:$0xff]
        %v5630 = vld [vmem:[%s5624 + $0x28] sm:$0xff]
        %v5631 = vld [vmem:[%s5624 + $0x30] sm:$0xff]
        %v5632 = vld [vmem:[%s5624 + $0x38] sm:$0xff]
        %v5633 = vld [vmem:[%s5624 + $0x40] sm:$0xff]
        %v5634 = vld [vmem:[%s5624 + $0x48] sm:$0xff]
        %v5635 = vld [vmem:[%s5624 + $0x50] sm:$0xff]
        %v5636 = vld [vmem:[%s5624 + $0x58] sm:$0xff]
        %v5637 = vld [vmem:[%s5624 + $0x60] sm:$0xff]
        %v5638 = vld [vmem:[%s5624 + $0x68] sm:$0xff]
        %v5639 = vld [vmem:[%s5624 + $0x70] sm:$0xff]
        %v5640 = vld [vmem:[%s5624 + $0x78] sm:$0xff]
        %v5641 = vld [vmem:[%s5624 + $0x80] sm:$0xff]
        %v5642 = vld [vmem:[%s5624 + $0x88] sm:$0xff]
        %v5643 = vld [vmem:[%s5624 + $0x90] sm:$0xff]
        %v5644 = vld [vmem:[%s5624 + $0x98] sm:$0xff]
        %v5645 = vld [vmem:[%s5624 + $0xa0] sm:$0xff]
        %v5646 = vld [vmem:[%s5624 + $0xa8] sm:$0xff]
        %v5647 = vld [vmem:[%s5624 + $0xb0] sm:$0xff]
        %v5648 = vld [vmem:[%s5624 + $0xb8] sm:$0xff]
        %v5649 = vld [vmem:[%s5624 + $0xc0] sm:$0xff]
        %v5650 = vld [vmem:[%s5624 + $0xc8] sm:$0xff]
        %v5651 = vld [vmem:[%s5624 + $0xd0] sm:$0xff]
        %v5652 = vld [vmem:[%s5624 + $0xd8] sm:$0xff]
        %v5653 = vld [vmem:[%s5624 + $0xe0] sm:$0xff]
        %v5654 = vld [vmem:[%s5624 + $0xe8] sm:$0xff]
        %v5655 = vld [vmem:[%s5624 + $0xf0] sm:$0xff]
        %v5656 = vld [vmem:[%s5624 + $0xf8] sm:$0xff]
        %v5657 = vld [vmem:[%s5624 + $0x100] sm:$0xff]
        %v5658 = vld [vmem:[%s5624 + $0x108] sm:$0xff]
        %v5659 = vld [vmem:[%s5624 + $0x110] sm:$0xff]
        %v5660 = vld [vmem:[%s5624 + $0x118] sm:$0xff]
        %v5661 = vld [vmem:[%s5624 + $0x120] sm:$0xff]
        %v5662 = vld [vmem:[%s5624 + $0x128] sm:$0xff]
        %v5663 = vld [vmem:[%s5624 + $0x130] sm:$0xff]
        %v5664 = vld [vmem:[%s5624 + $0x138] sm:$0xff]
        %v5665 = vld [vmem:[%s5624 + $0x140] sm:$0xff]
        %v5666 = vld [vmem:[%s5624 + $0x148] sm:$0xff]
        %v5667 = vld [vmem:[%s5624 + $0x150] sm:$0xff]
        %v5668 = vld [vmem:[%s5624 + $0x158] sm:$0xff]
        %v5669 = vld [vmem:[%s5624 + $0x160] sm:$0xff]
        %v5670 = vld [vmem:[%s5624 + $0x168] sm:$0xff]
        %v5671 = vld [vmem:[%s5624 + $0x170] sm:$0xff]
        %v5672 = vld [vmem:[%s5624 + $0x178] sm:$0xff]
        %v5673 = vld [vmem:[%s5624 + $0x180] sm:$0xff]
        %v5674 = vld [vmem:[%s5624 + $0x188] sm:$0xff]
        %v5675 = vld [vmem:[%s5624 + $0x190] sm:$0xff]
        %v5676 = vld [vmem:[%s5624 + $0x198] sm:$0xff]
        %v5677 = vld [vmem:[%s5624 + $0x1a0] sm:$0xff]
        %v5678 = vld [vmem:[%s5624 + $0x1a8] sm:$0xff]
        %v5679 = vld [vmem:[%s5624 + $0x1b0] sm:$0xff]
        %v5680 = vld [vmem:[%s5624 + $0x1b8] sm:$0xff]
        %v5681 = vld [vmem:[%s5624 + $0x1c0] sm:$0xff]
        %v5682 = vld [vmem:[%s5624 + $0x1c8] sm:$0xff]
        %v5683 = vld [vmem:[%s5624 + $0x1d0] sm:$0xff]
        %v5684 = vld [vmem:[%s5624 + $0x1d8] sm:$0xff]
        %v5685 = vld [vmem:[%s5624 + $0x1e0] sm:$0xff]
        %v5686 = vld [vmem:[%s5624 + $0x1e8] sm:$0xff]
        %v5687 = vld [vmem:[%s5624 + $0x1f0] sm:$0xff]
        %v5688 = vld [vmem:[%s5624 + $0x1f8] sm:$0xff]
        %v5689 = vrot.slane %v1963, 3
        %v5755 = vunpack.c.l.b16 %v5625
        %v5756 = vunpack.c.h.b16 %v5625
        %v5757 = vunpack.c.l.b16 %v5626
        %v5758 = vunpack.c.h.b16 %v5626
        %v5759 = vunpack.c.l.b16 %v5627
        %v5760 = vunpack.c.h.b16 %v5627
        %v5761 = vunpack.c.l.b16 %v5628
        %v5762 = vunpack.c.h.b16 %v5628
        %v5763 = vunpack.c.l.b16 %v5629
        %v5764 = vunpack.c.h.b16 %v5629
        %v5765 = vunpack.c.l.b16 %v5630
        %v5766 = vunpack.c.h.b16 %v5630
        %v5767 = vunpack.c.l.b16 %v5631
        %v5768 = vunpack.c.h.b16 %v5631
        %v5769 = vunpack.c.l.b16 %v5632
        %v5770 = vunpack.c.h.b16 %v5632
        %v5771 = vunpack.c.l.b16 %v5633
        %v5772 = vunpack.c.h.b16 %v5633
        %v5773 = vunpack.c.l.b16 %v5634
        %v5774 = vunpack.c.h.b16 %v5634
        %v5775 = vunpack.c.l.b16 %v5635
        %v5776 = vunpack.c.h.b16 %v5635
        %v5777 = vunpack.c.l.b16 %v5636
        %v5778 = vunpack.c.h.b16 %v5636
        %v5779 = vunpack.c.l.b16 %v5637
        %v5780 = vunpack.c.h.b16 %v5637
        %v5781 = vunpack.c.l.b16 %v5638
        %v5782 = vunpack.c.h.b16 %v5638
        %v5783 = vunpack.c.l.b16 %v5639
        %v5784 = vunpack.c.h.b16 %v5639
        %v5785 = vunpack.c.l.b16 %v5640
        %v5786 = vunpack.c.h.b16 %v5640
        %v5787 = vunpack.c.l.b16 %v5641
        %v5788 = vunpack.c.h.b16 %v5641
        %v5789 = vunpack.c.l.b16 %v5642
        %v5790 = vunpack.c.h.b16 %v5642
        %v5791 = vunpack.c.l.b16 %v5643
        %v5792 = vunpack.c.h.b16 %v5643
        %v5793 = vunpack.c.l.b16 %v5644
        %v5794 = vunpack.c.h.b16 %v5644
        %v5795 = vunpack.c.l.b16 %v5645
        %v5796 = vunpack.c.h.b16 %v5645
        %v5797 = vunpack.c.l.b16 %v5646
        %v5798 = vunpack.c.h.b16 %v5646
        %v5799 = vunpack.c.l.b16 %v5647
        %v5800 = vunpack.c.h.b16 %v5647
        %v5801 = vunpack.c.l.b16 %v5648
        %v5802 = vunpack.c.h.b16 %v5648
        %v5803 = vunpack.c.l.b16 %v5649
        %v5804 = vunpack.c.h.b16 %v5649
        %v5805 = vunpack.c.l.b16 %v5650
        %v5806 = vunpack.c.h.b16 %v5650
        %v5807 = vunpack.c.l.b16 %v5651
        %v5808 = vunpack.c.h.b16 %v5651
        %v5809 = vunpack.c.l.b16 %v5652
        %v5810 = vunpack.c.h.b16 %v5652
        %v5811 = vunpack.c.l.b16 %v5653
        %v5812 = vunpack.c.h.b16 %v5653
        %v5813 = vunpack.c.l.b16 %v5654
        %v5814 = vunpack.c.h.b16 %v5654
        %v5815 = vunpack.c.l.b16 %v5655
        %v5816 = vunpack.c.h.b16 %v5655
        %v5817 = vunpack.c.l.b16 %v5656
        %v5818 = vunpack.c.h.b16 %v5656
        %v5819 = vunpack.c.l.b16 %v5657
        %v5820 = vunpack.c.h.b16 %v5657
        %v5821 = vunpack.c.l.b16 %v5658
        %v5822 = vunpack.c.h.b16 %v5658
        %v5823 = vunpack.c.l.b16 %v5659
        %v5824 = vunpack.c.h.b16 %v5659
        %v5825 = vunpack.c.l.b16 %v5660
        %v5826 = vunpack.c.h.b16 %v5660
        %v5827 = vunpack.c.l.b16 %v5661
        %v5828 = vunpack.c.h.b16 %v5661
        %v5829 = vunpack.c.l.b16 %v5662
        %v5830 = vunpack.c.h.b16 %v5662
        %v5831 = vunpack.c.l.b16 %v5663
        %v5832 = vunpack.c.h.b16 %v5663
        %v5833 = vunpack.c.l.b16 %v5664
        %v5834 = vunpack.c.h.b16 %v5664
        %v5835 = vunpack.c.l.b16 %v5665
        %v5836 = vunpack.c.h.b16 %v5665
        %v5837 = vunpack.c.l.b16 %v5666
        %v5838 = vunpack.c.h.b16 %v5666
        %v5839 = vunpack.c.l.b16 %v5667
        %v5840 = vunpack.c.h.b16 %v5667
        %v5841 = vunpack.c.l.b16 %v5668
        %v5842 = vunpack.c.h.b16 %v5668
        %v5843 = vunpack.c.l.b16 %v5669
        %v5844 = vunpack.c.h.b16 %v5669
        %v5845 = vunpack.c.l.b16 %v5670
        %v5846 = vunpack.c.h.b16 %v5670
        %v5847 = vunpack.c.l.b16 %v5671
        %v5848 = vunpack.c.h.b16 %v5671
        %v5849 = vunpack.c.l.b16 %v5672
        %v5850 = vunpack.c.h.b16 %v5672
        %v5851 = vunpack.c.l.b16 %v5673
        %v5852 = vunpack.c.h.b16 %v5673
        %v5853 = vunpack.c.l.b16 %v5674
        %v5854 = vunpack.c.h.b16 %v5674
        %v5855 = vunpack.c.l.b16 %v5675
        %v5856 = vunpack.c.h.b16 %v5675
        %v5857 = vunpack.c.l.b16 %v5676
        %v5858 = vunpack.c.h.b16 %v5676
        %v5859 = vunpack.c.l.b16 %v5677
        %v5860 = vunpack.c.h.b16 %v5677
        %v5861 = vunpack.c.l.b16 %v5678
        %v5862 = vunpack.c.h.b16 %v5678
        %v5863 = vunpack.c.l.b16 %v5679
        %v5864 = vunpack.c.h.b16 %v5679
        %v5865 = vunpack.c.l.b16 %v5680
        %v5866 = vunpack.c.h.b16 %v5680
        %v5867 = vunpack.c.l.b16 %v5681
        %v5868 = vunpack.c.h.b16 %v5681
        %v5869 = vunpack.c.l.b16 %v5682
        %v5870 = vunpack.c.h.b16 %v5682
        %v5871 = vunpack.c.l.b16 %v5683
        %v5872 = vunpack.c.h.b16 %v5683
        %v5873 = vunpack.c.l.b16 %v5684
        %v5874 = vunpack.c.h.b16 %v5684
        %v5875 = vunpack.c.l.b16 %v5685
        %v5876 = vunpack.c.h.b16 %v5685
        %v5877 = vunpack.c.l.b16 %v5686
        %v5878 = vunpack.c.h.b16 %v5686
        %v5879 = vunpack.c.l.b16 %v5687
        %v5880 = vunpack.c.h.b16 %v5687
        %v5881 = vunpack.c.l.b16 %v5688
        %v5882 = vunpack.c.h.b16 %v5688
        %v5883 = vpack.c.b16 %v5763, %v5755
        %v5884 = vpack.c.b16 %v5764, %v5756
        %v5885 = vpack.c.b16 %v5765, %v5757
        %v5886 = vpack.c.b16 %v5766, %v5758
        %v5887 = vpack.c.b16 %v5767, %v5759
        %v5888 = vpack.c.b16 %v5768, %v5760
        %v5889 = vpack.c.b16 %v5769, %v5761
        %v5890 = vpack.c.b16 %v5770, %v5762
        %v5891 = vpack.c.b16 %v5779, %v5771
        %v5892 = vpack.c.b16 %v5780, %v5772
        %v5893 = vpack.c.b16 %v5781, %v5773
        %v5894 = vpack.c.b16 %v5782, %v5774
        %v5895 = vpack.c.b16 %v5783, %v5775
        %v5896 = vpack.c.b16 %v5784, %v5776
        %v5897 = vpack.c.b16 %v5785, %v5777
        %v5898 = vpack.c.b16 %v5786, %v5778
        %v5899 = vpack.c.b16 %v5795, %v5787
        %v5900 = vpack.c.b16 %v5796, %v5788
        %v5901 = vpack.c.b16 %v5797, %v5789
        %v5902 = vpack.c.b16 %v5798, %v5790
        %v5903 = vpack.c.b16 %v5799, %v5791
        %v5904 = vpack.c.b16 %v5800, %v5792
        %v5905 = vpack.c.b16 %v5801, %v5793
        %v5906 = vpack.c.b16 %v5802, %v5794
        %v5907 = vpack.c.b16 %v5811, %v5803
        %v5908 = vpack.c.b16 %v5812, %v5804
        %v5909 = vpack.c.b16 %v5813, %v5805
        %v5910 = vpack.c.b16 %v5814, %v5806
        %v5911 = vpack.c.b16 %v5815, %v5807
        %v5912 = vpack.c.b16 %v5816, %v5808
        %v5913 = vpack.c.b16 %v5817, %v5809
        %v5914 = vpack.c.b16 %v5818, %v5810
        %v5915 = vpack.c.b16 %v5827, %v5819
        %v5916 = vpack.c.b16 %v5828, %v5820
        %v5917 = vpack.c.b16 %v5829, %v5821
        %v5918 = vpack.c.b16 %v5830, %v5822
        %v5919 = vpack.c.b16 %v5831, %v5823
        %v5920 = vpack.c.b16 %v5832, %v5824
        %v5921 = vpack.c.b16 %v5833, %v5825
        %v5922 = vpack.c.b16 %v5834, %v5826
        %v5923 = vpack.c.b16 %v5843, %v5835
        %v5924 = vpack.c.b16 %v5844, %v5836
        %v5925 = vpack.c.b16 %v5845, %v5837
        %v5926 = vpack.c.b16 %v5846, %v5838
        %v5927 = vpack.c.b16 %v5847, %v5839
        %v5928 = vpack.c.b16 %v5848, %v5840
        %v5929 = vpack.c.b16 %v5849, %v5841
        %v5930 = vpack.c.b16 %v5850, %v5842
        %v5931 = vpack.c.b16 %v5859, %v5851
        %v5932 = vpack.c.b16 %v5860, %v5852
        %v5933 = vpack.c.b16 %v5861, %v5853
        %v5934 = vpack.c.b16 %v5862, %v5854
        %v5935 = vpack.c.b16 %v5863, %v5855
        %v5936 = vpack.c.b16 %v5864, %v5856
        %v5937 = vpack.c.b16 %v5865, %v5857
        %v5938 = vpack.c.b16 %v5866, %v5858
        %v5939 = vpack.c.b16 %v5875, %v5867
        %v5940 = vpack.c.b16 %v5876, %v5868
        %v5941 = vpack.c.b16 %v5877, %v5869
        %v5942 = vpack.c.b16 %v5878, %v5870
        %v5943 = vpack.c.b16 %v5879, %v5871
        %v5944 = vpack.c.b16 %v5880, %v5872
        %v5945 = vpack.c.b16 %v5881, %v5873
        %v5946 = vpack.c.b16 %v5882, %v5874
        %6011 = vmatprep.subr.bf16.mxu0 %v5940
        %6012 = vmatpush1.bf16.msra.mxu0 %v5939
        %6013 = vmatprep.subr.bf16.mxu0 %v5932
        %6014 = vmatpush1.bf16.msra.mxu0 %v5931
        %6015 = vmatprep.subr.bf16.mxu0 %v5924
        %6016 = vmatpush1.bf16.msra.mxu0 %v5923
        %6017 = vmatprep.subr.bf16.mxu0 %v5916
        %6018 = vmatpush1.bf16.msra.mxu0 %v5915
        %6019 = vmatprep.subr.bf16.mxu0 %v5908
        %6020 = vmatpush1.bf16.msra.mxu0 %v5907
        %6021 = vmatprep.subr.bf16.mxu0 %v5900
        %6022 = vmatpush1.bf16.msra.mxu0 %v5899
        %6023 = vmatprep.subr.bf16.mxu0 %v5892
        %6024 = vmatpush1.bf16.msra.mxu0 %v5891
        %6025 = vmatprep.subr.bf16.mxu0 %v5884
        %6026 = vmatpush1.bf16.msra.mxu0 %v5883
        %6027 = vmatprep.subr.bf16.mxu0 0
        %6028 = vmatpush2.bf16.msra.mxu0 0
        %6029 = vmatprep.subr.bf16.mxu0 0
        %6030 = vmatpush2.bf16.msra.mxu0 0
        %6031 = vmatprep.subr.bf16.mxu0 0
        %6032 = vmatpush2.bf16.msra.mxu0 0
        %6033 = vmatprep.subr.bf16.mxu0 0
        %6034 = vmatpush2.bf16.msra.mxu0 0
        %6035 = vmatprep.subr.bf16.mxu0 0
        %6036 = vmatpush2.bf16.msra.mxu0 0
        %6037 = vmatprep.subr.bf16.mxu0 0
        %6038 = vmatpush2.bf16.msra.mxu0 0
        %6039 = vmatprep.subr.bf16.mxu0 0
        %6040 = vmatpush2.bf16.msra.mxu0 0
        %6041 = vmatprep.subr.bf16.mxu0 0
        %6042 = vmatpush2.bf16.msra.mxu0 0
        %6043 = vmatprep.mubr.bf16.mxu0 0
        %6044 = vmatmul.mubr.bf16.gmra.mxu0 %v5689
        %v6045 = vpop.f32.mrf.mxu0
        %v6046 = vadd.f32 0.0, %v6045
        %v6047 = vpop.f32.mrf.mxu0
        %v6048 = vadd.f32 0.0, %v6047
        %v6049 = vpop.f32.mrf.mxu0
        %v6050 = vpop.f32.mrf.mxu0
        %6051 = vdwg.mxu0
        %6052 = vmatprep.subr.bf16.mxu0 %v5942
        %6053 = vmatpush1.bf16.msra.mxu0 %v5941
        %6054 = vmatprep.subr.bf16.mxu0 %v5934
        %6055 = vmatpush1.bf16.msra.mxu0 %v5933
        %6056 = vmatprep.subr.bf16.mxu0 %v5926
        %6057 = vmatpush1.bf16.msra.mxu0 %v5925
        %6058 = vmatprep.subr.bf16.mxu0 %v5918
        %6059 = vmatpush1.bf16.msra.mxu0 %v5917
        %6060 = vmatprep.subr.bf16.mxu0 %v5910
        %6061 = vmatpush1.bf16.msra.mxu0 %v5909
        %6062 = vmatprep.subr.bf16.mxu0 %v5902
        %6063 = vmatpush1.bf16.msra.mxu0 %v5901
        %6064 = vmatprep.subr.bf16.mxu0 %v5894
        %6065 = vmatpush1.bf16.msra.mxu0 %v5893
        %6066 = vmatprep.subr.bf16.mxu0 %v5886
        %6067 = vmatpush1.bf16.msra.mxu0 %v5885
        %6068 = vmatprep.subr.bf16.mxu0 0
        %6069 = vmatpush2.bf16.msra.mxu0 0
        %6070 = vmatprep.subr.bf16.mxu0 0
        %6071 = vmatpush2.bf16.msra.mxu0 0
        %6072 = vmatprep.subr.bf16.mxu0 0
        %6073 = vmatpush2.bf16.msra.mxu0 0
        %6074 = vmatprep.subr.bf16.mxu0 0
        %6075 = vmatpush2.bf16.msra.mxu0 0
        %6076 = vmatprep.subr.bf16.mxu0 0
        %6077 = vmatpush2.bf16.msra.mxu0 0
        %6078 = vmatprep.subr.bf16.mxu0 0
        %6079 = vmatpush2.bf16.msra.mxu0 0
        %6080 = vmatprep.subr.bf16.mxu0 0
        %6081 = vmatpush2.bf16.msra.mxu0 0
        %6082 = vmatprep.subr.bf16.mxu0 0
        %6083 = vmatpush2.bf16.msra.mxu0 0
        %6084 = vmatprep.mubr.bf16.mxu0 0
        %6085 = vmatmul.mubr.bf16.gmra.mxu0 %v5689
        %v6086 = vpop.f32.mrf.mxu0
        %v6087 = vadd.f32 0.0, %v6086
        %v6088 = vpop.f32.mrf.mxu0
        %v6089 = vadd.f32 0.0, %v6088
        %v6090 = vpop.f32.mrf.mxu0
        %v6091 = vpop.f32.mrf.mxu0
        %6092 = vdwg.mxu0
        %6093 = vmatprep.subr.bf16.mxu0 %v5944
        %6094 = vmatpush1.bf16.msra.mxu0 %v5943
        %6095 = vmatprep.subr.bf16.mxu0 %v5936
        %6096 = vmatpush1.bf16.msra.mxu0 %v5935
        %6097 = vmatprep.subr.bf16.mxu0 %v5928
        %6098 = vmatpush1.bf16.msra.mxu0 %v5927
        %6099 = vmatprep.subr.bf16.mxu0 %v5920
        %6100 = vmatpush1.bf16.msra.mxu0 %v5919
        %6101 = vmatprep.subr.bf16.mxu0 %v5912
        %6102 = vmatpush1.bf16.msra.mxu0 %v5911
        %6103 = vmatprep.subr.bf16.mxu0 %v5904
        %6104 = vmatpush1.bf16.msra.mxu0 %v5903
        %6105 = vmatprep.subr.bf16.mxu0 %v5896
        %6106 = vmatpush1.bf16.msra.mxu0 %v5895
        %6107 = vmatprep.subr.bf16.mxu0 %v5888
        %6108 = vmatpush1.bf16.msra.mxu0 %v5887
        %6109 = vmatprep.subr.bf16.mxu0 0
        %6110 = vmatpush2.bf16.msra.mxu0 0
        %6111 = vmatprep.subr.bf16.mxu0 0
        %6112 = vmatpush2.bf16.msra.mxu0 0
        %6113 = vmatprep.subr.bf16.mxu0 0
        %6114 = vmatpush2.bf16.msra.mxu0 0
        %6115 = vmatprep.subr.bf16.mxu0 0
        %6116 = vmatpush2.bf16.msra.mxu0 0
        %6117 = vmatprep.subr.bf16.mxu0 0
        %6118 = vmatpush2.bf16.msra.mxu0 0
        %6119 = vmatprep.subr.bf16.mxu0 0
        %6120 = vmatpush2.bf16.msra.mxu0 0
        %6121 = vmatprep.subr.bf16.mxu0 0
        %6122 = vmatpush2.bf16.msra.mxu0 0
        %6123 = vmatprep.subr.bf16.mxu0 0
        %6124 = vmatpush2.bf16.msra.mxu0 0
        %6125 = vmatprep.mubr.bf16.mxu0 0
        %6126 = vmatmul.mubr.bf16.gmra.mxu0 %v5689
        %v6127 = vpop.f32.mrf.mxu0
        %v6128 = vadd.f32 0.0, %v6127
        %v6129 = vpop.f32.mrf.mxu0
        %v6130 = vadd.f32 0.0, %v6129
        %v6131 = vpop.f32.mrf.mxu0
        %v6132 = vpop.f32.mrf.mxu0
        %6133 = vdwg.mxu0
        %6134 = vmatprep.subr.bf16.mxu0 %v5946
        %6135 = vmatpush1.bf16.msra.mxu0 %v5945
        %6136 = vmatprep.subr.bf16.mxu0 %v5938
        %6137 = vmatpush1.bf16.msra.mxu0 %v5937
        %6138 = vmatprep.subr.bf16.mxu0 %v5930
        %6139 = vmatpush1.bf16.msra.mxu0 %v5929
        %6140 = vmatprep.subr.bf16.mxu0 %v5922
        %6141 = vmatpush1.bf16.msra.mxu0 %v5921
        %6142 = vmatprep.subr.bf16.mxu0 %v5914
        %6143 = vmatpush1.bf16.msra.mxu0 %v5913
        %6144 = vmatprep.subr.bf16.mxu0 %v5906
        %6145 = vmatpush1.bf16.msra.mxu0 %v5905
        %6146 = vmatprep.subr.bf16.mxu0 %v5898
        %6147 = vmatpush1.bf16.msra.mxu0 %v5897
        %6148 = vmatprep.subr.bf16.mxu0 %v5890
        %6149 = vmatpush1.bf16.msra.mxu0 %v5889
        %6150 = vmatprep.subr.bf16.mxu0 0
        %6151 = vmatpush2.bf16.msra.mxu0 0
        %6152 = vmatprep.subr.bf16.mxu0 0
        %6153 = vmatpush2.bf16.msra.mxu0 0
        %6154 = vmatprep.subr.bf16.mxu0 0
        %6155 = vmatpush2.bf16.msra.mxu0 0
        %6156 = vmatprep.subr.bf16.mxu0 0
        %6157 = vmatpush2.bf16.msra.mxu0 0
        %6158 = vmatprep.subr.bf16.mxu0 0
        %6159 = vmatpush2.bf16.msra.mxu0 0
        %6160 = vmatprep.subr.bf16.mxu0 0
        %6161 = vmatpush2.bf16.msra.mxu0 0
        %6162 = vmatprep.subr.bf16.mxu0 0
        %6163 = vmatpush2.bf16.msra.mxu0 0
        %6164 = vmatprep.subr.bf16.mxu0 0
        %6165 = vmatpush2.bf16.msra.mxu0 0
        %6166 = vmatprep.mubr.bf16.mxu0 0
        %6167 = vmatmul.mubr.bf16.gmra.mxu0 %v5689
        %v6168 = vpop.f32.mrf.mxu0
        %v6169 = vadd.f32 0.0, %v6168
        %v6170 = vpop.f32.mrf.mxu0
        %v6171 = vadd.f32 0.0, %v6170
        %v6172 = vpop.f32.mrf.mxu0
        %v6173 = vpop.f32.mrf.mxu0
        %6174 = vdwg.mxu0
        %v6183 = vcombine.low %v6046, %v6048
        %v6184 = vcombine.low %v6087, %v6089
        %v6185 = vcombine.low %v6128, %v6130
        %v6186 = vcombine.low %v6169, %v6171
        %v6188 = vunpack.c.l.s4 1966171168
        %v6189 = vunpack.c.0.s8 %v6188
        %v6190 = vlaneseq
        %v6191 = vshrl.u32 %v6190, 7
        %v6192 = vsub.s32 %v6189, %v6191
        %v6193 = vrot.slane %v6183, %v6192
        %v6195 = vunpack.c.l.s4 1966171168
        %v6196 = vunpack.c.0.s8 %v6195
        %v6197 = vlaneseq
        %v6198 = vshrl.u32 %v6197, 7
        %v6199 = vsub.s32 %v6196, %v6198
        %v6200 = vrot.slane %v6184, %v6199
        %v6202 = vunpack.c.l.s4 1966171168
        %v6203 = vunpack.c.0.s8 %v6202
        %v6204 = vlaneseq
        %v6205 = vshrl.u32 %v6204, 7
        %v6206 = vsub.s32 %v6203, %v6205
        %v6207 = vrot.slane %v6185, %v6206
        %v6209 = vunpack.c.l.s4 1966171168
        %v6210 = vunpack.c.0.s8 %v6209
        %v6211 = vlaneseq
        %v6212 = vshrl.u32 %v6211, 7
        %v6213 = vsub.s32 %v6210, %v6212
        %v6214 = vrot.slane %v6186, %v6213
        %v6215 = vcombine.low %v6193, %v6200
        %v6216 = vcombine.low %v6207, %v6214
        %v6218 = vunpack.c.l.s4 1966171168
        %v6219 = vunpack.c.0.s8 %v6218
        %v6220 = vlaneseq
        %v6221 = vshrl.u32 %v6220, 7
        %v6222 = vsub.s32 %v6219, %v6221
        %v6223 = vrot.slane %v6215, %v6222
        %v6225 = vunpack.c.l.s4 1966171168
        %v6226 = vunpack.c.0.s8 %v6225
        %v6227 = vlaneseq
        %v6228 = vshrl.u32 %v6227, 7
        %v6229 = vsub.s32 %v6226, %v6228
        %v6230 = vrot.slane %v6216, %v6229
        %v6231 = vcombine.low %v6223, %v6230
        %v6233 = vadd.f32 %v5623, %v6231
        %s6234 = scalar_lea.vmem [#allocation14], 3584
        %v6235 = vld [vmem:[%s6234] sm:$0xff]
        %v6236 = vld [vmem:[%s6234 + $0x8] sm:$0xff]
        %v6237 = vld [vmem:[%s6234 + $0x10] sm:$0xff]
        %v6238 = vld [vmem:[%s6234 + $0x18] sm:$0xff]
        %v6239 = vld [vmem:[%s6234 + $0x20] sm:$0xff]
        %v6240 = vld [vmem:[%s6234 + $0x28] sm:$0xff]
        %v6241 = vld [vmem:[%s6234 + $0x30] sm:$0xff]
        %v6242 = vld [vmem:[%s6234 + $0x38] sm:$0xff]
        %v6243 = vld [vmem:[%s6234 + $0x40] sm:$0xff]
        %v6244 = vld [vmem:[%s6234 + $0x48] sm:$0xff]
        %v6245 = vld [vmem:[%s6234 + $0x50] sm:$0xff]
        %v6246 = vld [vmem:[%s6234 + $0x58] sm:$0xff]
        %v6247 = vld [vmem:[%s6234 + $0x60] sm:$0xff]
        %v6248 = vld [vmem:[%s6234 + $0x68] sm:$0xff]
        %v6249 = vld [vmem:[%s6234 + $0x70] sm:$0xff]
        %v6250 = vld [vmem:[%s6234 + $0x78] sm:$0xff]
        %v6251 = vld [vmem:[%s6234 + $0x80] sm:$0xff]
        %v6252 = vld [vmem:[%s6234 + $0x88] sm:$0xff]
        %v6253 = vld [vmem:[%s6234 + $0x90] sm:$0xff]
        %v6254 = vld [vmem:[%s6234 + $0x98] sm:$0xff]
        %v6255 = vld [vmem:[%s6234 + $0xa0] sm:$0xff]
        %v6256 = vld [vmem:[%s6234 + $0xa8] sm:$0xff]
        %v6257 = vld [vmem:[%s6234 + $0xb0] sm:$0xff]
        %v6258 = vld [vmem:[%s6234 + $0xb8] sm:$0xff]
        %v6259 = vld [vmem:[%s6234 + $0xc0] sm:$0xff]
        %v6260 = vld [vmem:[%s6234 + $0xc8] sm:$0xff]
        %v6261 = vld [vmem:[%s6234 + $0xd0] sm:$0xff]
        %v6262 = vld [vmem:[%s6234 + $0xd8] sm:$0xff]
        %v6263 = vld [vmem:[%s6234 + $0xe0] sm:$0xff]
        %v6264 = vld [vmem:[%s6234 + $0xe8] sm:$0xff]
        %v6265 = vld [vmem:[%s6234 + $0xf0] sm:$0xff]
        %v6266 = vld [vmem:[%s6234 + $0xf8] sm:$0xff]
        %v6267 = vld [vmem:[%s6234 + $0x100] sm:$0xff]
        %v6268 = vld [vmem:[%s6234 + $0x108] sm:$0xff]
        %v6269 = vld [vmem:[%s6234 + $0x110] sm:$0xff]
        %v6270 = vld [vmem:[%s6234 + $0x118] sm:$0xff]
        %v6271 = vld [vmem:[%s6234 + $0x120] sm:$0xff]
        %v6272 = vld [vmem:[%s6234 + $0x128] sm:$0xff]
        %v6273 = vld [vmem:[%s6234 + $0x130] sm:$0xff]
        %v6274 = vld [vmem:[%s6234 + $0x138] sm:$0xff]
        %v6275 = vld [vmem:[%s6234 + $0x140] sm:$0xff]
        %v6276 = vld [vmem:[%s6234 + $0x148] sm:$0xff]
        %v6277 = vld [vmem:[%s6234 + $0x150] sm:$0xff]
        %v6278 = vld [vmem:[%s6234 + $0x158] sm:$0xff]
        %v6279 = vld [vmem:[%s6234 + $0x160] sm:$0xff]
        %v6280 = vld [vmem:[%s6234 + $0x168] sm:$0xff]
        %v6281 = vld [vmem:[%s6234 + $0x170] sm:$0xff]
        %v6282 = vld [vmem:[%s6234 + $0x178] sm:$0xff]
        %v6283 = vld [vmem:[%s6234 + $0x180] sm:$0xff]
        %v6284 = vld [vmem:[%s6234 + $0x188] sm:$0xff]
        %v6285 = vld [vmem:[%s6234 + $0x190] sm:$0xff]
        %v6286 = vld [vmem:[%s6234 + $0x198] sm:$0xff]
        %v6287 = vld [vmem:[%s6234 + $0x1a0] sm:$0xff]
        %v6288 = vld [vmem:[%s6234 + $0x1a8] sm:$0xff]
        %v6289 = vld [vmem:[%s6234 + $0x1b0] sm:$0xff]
        %v6290 = vld [vmem:[%s6234 + $0x1b8] sm:$0xff]
        %v6291 = vld [vmem:[%s6234 + $0x1c0] sm:$0xff]
        %v6292 = vld [vmem:[%s6234 + $0x1c8] sm:$0xff]
        %v6293 = vld [vmem:[%s6234 + $0x1d0] sm:$0xff]
        %v6294 = vld [vmem:[%s6234 + $0x1d8] sm:$0xff]
        %v6295 = vld [vmem:[%s6234 + $0x1e0] sm:$0xff]
        %v6296 = vld [vmem:[%s6234 + $0x1e8] sm:$0xff]
        %v6297 = vld [vmem:[%s6234 + $0x1f0] sm:$0xff]
        %v6298 = vld [vmem:[%s6234 + $0x1f8] sm:$0xff]
        %v6299 = vrot.slane %v2637, 3
        %v6365 = vunpack.c.l.b16 %v6235
        %v6366 = vunpack.c.h.b16 %v6235
        %v6367 = vunpack.c.l.b16 %v6236
        %v6368 = vunpack.c.h.b16 %v6236
        %v6369 = vunpack.c.l.b16 %v6237
        %v6370 = vunpack.c.h.b16 %v6237
        %v6371 = vunpack.c.l.b16 %v6238
        %v6372 = vunpack.c.h.b16 %v6238
        %v6373 = vunpack.c.l.b16 %v6239
        %v6374 = vunpack.c.h.b16 %v6239
        %v6375 = vunpack.c.l.b16 %v6240
        %v6376 = vunpack.c.h.b16 %v6240
        %v6377 = vunpack.c.l.b16 %v6241
        %v6378 = vunpack.c.h.b16 %v6241
        %v6379 = vunpack.c.l.b16 %v6242
        %v6380 = vunpack.c.h.b16 %v6242
        %v6381 = vunpack.c.l.b16 %v6243
        %v6382 = vunpack.c.h.b16 %v6243
        %v6383 = vunpack.c.l.b16 %v6244
        %v6384 = vunpack.c.h.b16 %v6244
        %v6385 = vunpack.c.l.b16 %v6245
        %v6386 = vunpack.c.h.b16 %v6245
        %v6387 = vunpack.c.l.b16 %v6246
        %v6388 = vunpack.c.h.b16 %v6246
        %v6389 = vunpack.c.l.b16 %v6247
        %v6390 = vunpack.c.h.b16 %v6247
        %v6391 = vunpack.c.l.b16 %v6248
        %v6392 = vunpack.c.h.b16 %v6248
        %v6393 = vunpack.c.l.b16 %v6249
        %v6394 = vunpack.c.h.b16 %v6249
        %v6395 = vunpack.c.l.b16 %v6250
        %v6396 = vunpack.c.h.b16 %v6250
        %v6397 = vunpack.c.l.b16 %v6251
        %v6398 = vunpack.c.h.b16 %v6251
        %v6399 = vunpack.c.l.b16 %v6252
        %v6400 = vunpack.c.h.b16 %v6252
        %v6401 = vunpack.c.l.b16 %v6253
        %v6402 = vunpack.c.h.b16 %v6253
        %v6403 = vunpack.c.l.b16 %v6254
        %v6404 = vunpack.c.h.b16 %v6254
        %v6405 = vunpack.c.l.b16 %v6255
        %v6406 = vunpack.c.h.b16 %v6255
        %v6407 = vunpack.c.l.b16 %v6256
        %v6408 = vunpack.c.h.b16 %v6256
        %v6409 = vunpack.c.l.b16 %v6257
        %v6410 = vunpack.c.h.b16 %v6257
        %v6411 = vunpack.c.l.b16 %v6258
        %v6412 = vunpack.c.h.b16 %v6258
        %v6413 = vunpack.c.l.b16 %v6259
        %v6414 = vunpack.c.h.b16 %v6259
        %v6415 = vunpack.c.l.b16 %v6260
        %v6416 = vunpack.c.h.b16 %v6260
        %v6417 = vunpack.c.l.b16 %v6261
        %v6418 = vunpack.c.h.b16 %v6261
        %v6419 = vunpack.c.l.b16 %v6262
        %v6420 = vunpack.c.h.b16 %v6262
        %v6421 = vunpack.c.l.b16 %v6263
        %v6422 = vunpack.c.h.b16 %v6263
        %v6423 = vunpack.c.l.b16 %v6264
        %v6424 = vunpack.c.h.b16 %v6264
        %v6425 = vunpack.c.l.b16 %v6265
        %v6426 = vunpack.c.h.b16 %v6265
        %v6427 = vunpack.c.l.b16 %v6266
        %v6428 = vunpack.c.h.b16 %v6266
        %v6429 = vunpack.c.l.b16 %v6267
        %v6430 = vunpack.c.h.b16 %v6267
        %v6431 = vunpack.c.l.b16 %v6268
        %v6432 = vunpack.c.h.b16 %v6268
        %v6433 = vunpack.c.l.b16 %v6269
        %v6434 = vunpack.c.h.b16 %v6269
        %v6435 = vunpack.c.l.b16 %v6270
        %v6436 = vunpack.c.h.b16 %v6270
        %v6437 = vunpack.c.l.b16 %v6271
        %v6438 = vunpack.c.h.b16 %v6271
        %v6439 = vunpack.c.l.b16 %v6272
        %v6440 = vunpack.c.h.b16 %v6272
        %v6441 = vunpack.c.l.b16 %v6273
        %v6442 = vunpack.c.h.b16 %v6273
        %v6443 = vunpack.c.l.b16 %v6274
        %v6444 = vunpack.c.h.b16 %v6274
        %v6445 = vunpack.c.l.b16 %v6275
        %v6446 = vunpack.c.h.b16 %v6275
        %v6447 = vunpack.c.l.b16 %v6276
        %v6448 = vunpack.c.h.b16 %v6276
        %v6449 = vunpack.c.l.b16 %v6277
        %v6450 = vunpack.c.h.b16 %v6277
        %v6451 = vunpack.c.l.b16 %v6278
        %v6452 = vunpack.c.h.b16 %v6278
        %v6453 = vunpack.c.l.b16 %v6279
        %v6454 = vunpack.c.h.b16 %v6279
        %v6455 = vunpack.c.l.b16 %v6280
        %v6456 = vunpack.c.h.b16 %v6280
        %v6457 = vunpack.c.l.b16 %v6281
        %v6458 = vunpack.c.h.b16 %v6281
        %v6459 = vunpack.c.l.b16 %v6282
        %v6460 = vunpack.c.h.b16 %v6282
        %v6461 = vunpack.c.l.b16 %v6283
        %v6462 = vunpack.c.h.b16 %v6283
        %v6463 = vunpack.c.l.b16 %v6284
        %v6464 = vunpack.c.h.b16 %v6284
        %v6465 = vunpack.c.l.b16 %v6285
        %v6466 = vunpack.c.h.b16 %v6285
        %v6467 = vunpack.c.l.b16 %v6286
        %v6468 = vunpack.c.h.b16 %v6286
        %v6469 = vunpack.c.l.b16 %v6287
        %v6470 = vunpack.c.h.b16 %v6287
        %v6471 = vunpack.c.l.b16 %v6288
        %v6472 = vunpack.c.h.b16 %v6288
        %v6473 = vunpack.c.l.b16 %v6289
        %v6474 = vunpack.c.h.b16 %v6289
        %v6475 = vunpack.c.l.b16 %v6290
        %v6476 = vunpack.c.h.b16 %v6290
        %v6477 = vunpack.c.l.b16 %v6291
        %v6478 = vunpack.c.h.b16 %v6291
        %v6479 = vunpack.c.l.b16 %v6292
        %v6480 = vunpack.c.h.b16 %v6292
        %v6481 = vunpack.c.l.b16 %v6293
        %v6482 = vunpack.c.h.b16 %v6293
        %v6483 = vunpack.c.l.b16 %v6294
        %v6484 = vunpack.c.h.b16 %v6294
        %v6485 = vunpack.c.l.b16 %v6295
        %v6486 = vunpack.c.h.b16 %v6295
        %v6487 = vunpack.c.l.b16 %v6296
        %v6488 = vunpack.c.h.b16 %v6296
        %v6489 = vunpack.c.l.b16 %v6297
        %v6490 = vunpack.c.h.b16 %v6297
        %v6491 = vunpack.c.l.b16 %v6298
        %v6492 = vunpack.c.h.b16 %v6298
        %v6493 = vpack.c.b16 %v6373, %v6365
        %v6494 = vpack.c.b16 %v6374, %v6366
        %v6495 = vpack.c.b16 %v6375, %v6367
        %v6496 = vpack.c.b16 %v6376, %v6368
        %v6497 = vpack.c.b16 %v6377, %v6369
        %v6498 = vpack.c.b16 %v6378, %v6370
        %v6499 = vpack.c.b16 %v6379, %v6371
        %v6500 = vpack.c.b16 %v6380, %v6372
        %v6501 = vpack.c.b16 %v6389, %v6381
        %v6502 = vpack.c.b16 %v6390, %v6382
        %v6503 = vpack.c.b16 %v6391, %v6383
        %v6504 = vpack.c.b16 %v6392, %v6384
        %v6505 = vpack.c.b16 %v6393, %v6385
        %v6506 = vpack.c.b16 %v6394, %v6386
        %v6507 = vpack.c.b16 %v6395, %v6387
        %v6508 = vpack.c.b16 %v6396, %v6388
        %v6509 = vpack.c.b16 %v6405, %v6397
        %v6510 = vpack.c.b16 %v6406, %v6398
        %v6511 = vpack.c.b16 %v6407, %v6399
        %v6512 = vpack.c.b16 %v6408, %v6400
        %v6513 = vpack.c.b16 %v6409, %v6401
        %v6514 = vpack.c.b16 %v6410, %v6402
        %v6515 = vpack.c.b16 %v6411, %v6403
        %v6516 = vpack.c.b16 %v6412, %v6404
        %v6517 = vpack.c.b16 %v6421, %v6413
        %v6518 = vpack.c.b16 %v6422, %v6414
        %v6519 = vpack.c.b16 %v6423, %v6415
        %v6520 = vpack.c.b16 %v6424, %v6416
        %v6521 = vpack.c.b16 %v6425, %v6417
        %v6522 = vpack.c.b16 %v6426, %v6418
        %v6523 = vpack.c.b16 %v6427, %v6419
        %v6524 = vpack.c.b16 %v6428, %v6420
        %v6525 = vpack.c.b16 %v6437, %v6429
        %v6526 = vpack.c.b16 %v6438, %v6430
        %v6527 = vpack.c.b16 %v6439, %v6431
        %v6528 = vpack.c.b16 %v6440, %v6432
        %v6529 = vpack.c.b16 %v6441, %v6433
        %v6530 = vpack.c.b16 %v6442, %v6434
        %v6531 = vpack.c.b16 %v6443, %v6435
        %v6532 = vpack.c.b16 %v6444, %v6436
        %v6533 = vpack.c.b16 %v6453, %v6445
        %v6534 = vpack.c.b16 %v6454, %v6446
        %v6535 = vpack.c.b16 %v6455, %v6447
        %v6536 = vpack.c.b16 %v6456, %v6448
        %v6537 = vpack.c.b16 %v6457, %v6449
        %v6538 = vpack.c.b16 %v6458, %v6450
        %v6539 = vpack.c.b16 %v6459, %v6451
        %v6540 = vpack.c.b16 %v6460, %v6452
        %v6541 = vpack.c.b16 %v6469, %v6461
        %v6542 = vpack.c.b16 %v6470, %v6462
        %v6543 = vpack.c.b16 %v6471, %v6463
        %v6544 = vpack.c.b16 %v6472, %v6464
        %v6545 = vpack.c.b16 %v6473, %v6465
        %v6546 = vpack.c.b16 %v6474, %v6466
        %v6547 = vpack.c.b16 %v6475, %v6467
        %v6548 = vpack.c.b16 %v6476, %v6468
        %v6549 = vpack.c.b16 %v6485, %v6477
        %v6550 = vpack.c.b16 %v6486, %v6478
        %v6551 = vpack.c.b16 %v6487, %v6479
        %v6552 = vpack.c.b16 %v6488, %v6480
        %v6553 = vpack.c.b16 %v6489, %v6481
        %v6554 = vpack.c.b16 %v6490, %v6482
        %v6555 = vpack.c.b16 %v6491, %v6483
        %v6556 = vpack.c.b16 %v6492, %v6484
        %6621 = vmatprep.subr.bf16.mxu0 %v6550
        %6622 = vmatpush1.bf16.msra.mxu0 %v6549
        %6623 = vmatprep.subr.bf16.mxu0 %v6542
        %6624 = vmatpush1.bf16.msra.mxu0 %v6541
        %6625 = vmatprep.subr.bf16.mxu0 %v6534
        %6626 = vmatpush1.bf16.msra.mxu0 %v6533
        %6627 = vmatprep.subr.bf16.mxu0 %v6526
        %6628 = vmatpush1.bf16.msra.mxu0 %v6525
        %6629 = vmatprep.subr.bf16.mxu0 %v6518
        %6630 = vmatpush1.bf16.msra.mxu0 %v6517
        %6631 = vmatprep.subr.bf16.mxu0 %v6510
        %6632 = vmatpush1.bf16.msra.mxu0 %v6509
        %6633 = vmatprep.subr.bf16.mxu0 %v6502
        %6634 = vmatpush1.bf16.msra.mxu0 %v6501
        %6635 = vmatprep.subr.bf16.mxu0 %v6494
        %6636 = vmatpush1.bf16.msra.mxu0 %v6493
        %6637 = vmatprep.subr.bf16.mxu0 0
        %6638 = vmatpush2.bf16.msra.mxu0 0
        %6639 = vmatprep.subr.bf16.mxu0 0
        %6640 = vmatpush2.bf16.msra.mxu0 0
        %6641 = vmatprep.subr.bf16.mxu0 0
        %6642 = vmatpush2.bf16.msra.mxu0 0
        %6643 = vmatprep.subr.bf16.mxu0 0
        %6644 = vmatpush2.bf16.msra.mxu0 0
        %6645 = vmatprep.subr.bf16.mxu0 0
        %6646 = vmatpush2.bf16.msra.mxu0 0
        %6647 = vmatprep.subr.bf16.mxu0 0
        %6648 = vmatpush2.bf16.msra.mxu0 0
        %6649 = vmatprep.subr.bf16.mxu0 0
        %6650 = vmatpush2.bf16.msra.mxu0 0
        %6651 = vmatprep.subr.bf16.mxu0 0
        %6652 = vmatpush2.bf16.msra.mxu0 0
        %6653 = vmatprep.mubr.bf16.mxu0 0
        %6654 = vmatmul.mubr.bf16.gmra.mxu0 %v6299
        %v6655 = vpop.f32.mrf.mxu0
        %v6656 = vadd.f32 0.0, %v6655
        %v6657 = vpop.f32.mrf.mxu0
        %v6658 = vadd.f32 0.0, %v6657
        %v6659 = vpop.f32.mrf.mxu0
        %v6660 = vpop.f32.mrf.mxu0
        %6661 = vdwg.mxu0
        %6662 = vmatprep.subr.bf16.mxu0 %v6552
        %6663 = vmatpush1.bf16.msra.mxu0 %v6551
        %6664 = vmatprep.subr.bf16.mxu0 %v6544
        %6665 = vmatpush1.bf16.msra.mxu0 %v6543
        %6666 = vmatprep.subr.bf16.mxu0 %v6536
        %6667 = vmatpush1.bf16.msra.mxu0 %v6535
        %6668 = vmatprep.subr.bf16.mxu0 %v6528
        %6669 = vmatpush1.bf16.msra.mxu0 %v6527
        %6670 = vmatprep.subr.bf16.mxu0 %v6520
        %6671 = vmatpush1.bf16.msra.mxu0 %v6519
        %6672 = vmatprep.subr.bf16.mxu0 %v6512
        %6673 = vmatpush1.bf16.msra.mxu0 %v6511
        %6674 = vmatprep.subr.bf16.mxu0 %v6504
        %6675 = vmatpush1.bf16.msra.mxu0 %v6503
        %6676 = vmatprep.subr.bf16.mxu0 %v6496
        %6677 = vmatpush1.bf16.msra.mxu0 %v6495
        %6678 = vmatprep.subr.bf16.mxu0 0
        %6679 = vmatpush2.bf16.msra.mxu0 0
        %6680 = vmatprep.subr.bf16.mxu0 0
        %6681 = vmatpush2.bf16.msra.mxu0 0
        %6682 = vmatprep.subr.bf16.mxu0 0
        %6683 = vmatpush2.bf16.msra.mxu0 0
        %6684 = vmatprep.subr.bf16.mxu0 0
        %6685 = vmatpush2.bf16.msra.mxu0 0
        %6686 = vmatprep.subr.bf16.mxu0 0
        %6687 = vmatpush2.bf16.msra.mxu0 0
        %6688 = vmatprep.subr.bf16.mxu0 0
        %6689 = vmatpush2.bf16.msra.mxu0 0
        %6690 = vmatprep.subr.bf16.mxu0 0
        %6691 = vmatpush2.bf16.msra.mxu0 0
        %6692 = vmatprep.subr.bf16.mxu0 0
        %6693 = vmatpush2.bf16.msra.mxu0 0
        %6694 = vmatprep.mubr.bf16.mxu0 0
        %6695 = vmatmul.mubr.bf16.gmra.mxu0 %v6299
        %v6696 = vpop.f32.mrf.mxu0
        %v6697 = vadd.f32 0.0, %v6696
        %v6698 = vpop.f32.mrf.mxu0
        %v6699 = vadd.f32 0.0, %v6698
        %v6700 = vpop.f32.mrf.mxu0
        %v6701 = vpop.f32.mrf.mxu0
        %6702 = vdwg.mxu0
        %6703 = vmatprep.subr.bf16.mxu0 %v6554
        %6704 = vmatpush1.bf16.msra.mxu0 %v6553
        %6705 = vmatprep.subr.bf16.mxu0 %v6546
        %6706 = vmatpush1.bf16.msra.mxu0 %v6545
        %6707 = vmatprep.subr.bf16.mxu0 %v6538
        %6708 = vmatpush1.bf16.msra.mxu0 %v6537
        %6709 = vmatprep.subr.bf16.mxu0 %v6530
        %6710 = vmatpush1.bf16.msra.mxu0 %v6529
        %6711 = vmatprep.subr.bf16.mxu0 %v6522
        %6712 = vmatpush1.bf16.msra.mxu0 %v6521
        %6713 = vmatprep.subr.bf16.mxu0 %v6514
        %6714 = vmatpush1.bf16.msra.mxu0 %v6513
        %6715 = vmatprep.subr.bf16.mxu0 %v6506
        %6716 = vmatpush1.bf16.msra.mxu0 %v6505
        %6717 = vmatprep.subr.bf16.mxu0 %v6498
        %6718 = vmatpush1.bf16.msra.mxu0 %v6497
        %6719 = vmatprep.subr.bf16.mxu0 0
        %6720 = vmatpush2.bf16.msra.mxu0 0
        %6721 = vmatprep.subr.bf16.mxu0 0
        %6722 = vmatpush2.bf16.msra.mxu0 0
        %6723 = vmatprep.subr.bf16.mxu0 0
        %6724 = vmatpush2.bf16.msra.mxu0 0
        %6725 = vmatprep.subr.bf16.mxu0 0
        %6726 = vmatpush2.bf16.msra.mxu0 0
        %6727 = vmatprep.subr.bf16.mxu0 0
        %6728 = vmatpush2.bf16.msra.mxu0 0
        %6729 = vmatprep.subr.bf16.mxu0 0
        %6730 = vmatpush2.bf16.msra.mxu0 0
        %6731 = vmatprep.subr.bf16.mxu0 0
        %6732 = vmatpush2.bf16.msra.mxu0 0
        %6733 = vmatprep.subr.bf16.mxu0 0
        %6734 = vmatpush2.bf16.msra.mxu0 0
        %6735 = vmatprep.mubr.bf16.mxu0 0
        %6736 = vmatmul.mubr.bf16.gmra.mxu0 %v6299
        %v6737 = vpop.f32.mrf.mxu0
        %v6738 = vadd.f32 0.0, %v6737
        %v6739 = vpop.f32.mrf.mxu0
        %v6740 = vadd.f32 0.0, %v6739
        %v6741 = vpop.f32.mrf.mxu0
        %v6742 = vpop.f32.mrf.mxu0
        %6743 = vdwg.mxu0
        %6744 = vmatprep.subr.bf16.mxu0 %v6556
        %6745 = vmatpush1.bf16.msra.mxu0 %v6555
        %6746 = vmatprep.subr.bf16.mxu0 %v6548
        %6747 = vmatpush1.bf16.msra.mxu0 %v6547
        %6748 = vmatprep.subr.bf16.mxu0 %v6540
        %6749 = vmatpush1.bf16.msra.mxu0 %v6539
        %6750 = vmatprep.subr.bf16.mxu0 %v6532
        %6751 = vmatpush1.bf16.msra.mxu0 %v6531
        %6752 = vmatprep.subr.bf16.mxu0 %v6524
        %6753 = vmatpush1.bf16.msra.mxu0 %v6523
        %6754 = vmatprep.subr.bf16.mxu0 %v6516
        %6755 = vmatpush1.bf16.msra.mxu0 %v6515
        %6756 = vmatprep.subr.bf16.mxu0 %v6508
        %6757 = vmatpush1.bf16.msra.mxu0 %v6507
        %6758 = vmatprep.subr.bf16.mxu0 %v6500
        %6759 = vmatpush1.bf16.msra.mxu0 %v6499
        %6760 = vmatprep.subr.bf16.mxu0 0
        %6761 = vmatpush2.bf16.msra.mxu0 0
        %6762 = vmatprep.subr.bf16.mxu0 0
        %6763 = vmatpush2.bf16.msra.mxu0 0
        %6764 = vmatprep.subr.bf16.mxu0 0
        %6765 = vmatpush2.bf16.msra.mxu0 0
        %6766 = vmatprep.subr.bf16.mxu0 0
        %6767 = vmatpush2.bf16.msra.mxu0 0
        %6768 = vmatprep.subr.bf16.mxu0 0
        %6769 = vmatpush2.bf16.msra.mxu0 0
        %6770 = vmatprep.subr.bf16.mxu0 0
        %6771 = vmatpush2.bf16.msra.mxu0 0
        %6772 = vmatprep.subr.bf16.mxu0 0
        %6773 = vmatpush2.bf16.msra.mxu0 0
        %6774 = vmatprep.subr.bf16.mxu0 0
        %6775 = vmatpush2.bf16.msra.mxu0 0
        %6776 = vmatprep.mubr.bf16.mxu0 0
        %6777 = vmatmul.mubr.bf16.gmra.mxu0 %v6299
        %v6778 = vpop.f32.mrf.mxu0
        %v6779 = vadd.f32 0.0, %v6778
        %v6780 = vpop.f32.mrf.mxu0
        %v6781 = vadd.f32 0.0, %v6780
        %v6782 = vpop.f32.mrf.mxu0
        %v6783 = vpop.f32.mrf.mxu0
        %6784 = vdwg.mxu0
        %v6793 = vcombine.low %v6656, %v6658
        %v6794 = vcombine.low %v6697, %v6699
        %v6795 = vcombine.low %v6738, %v6740
        %v6796 = vcombine.low %v6779, %v6781
        %v6798 = vunpack.c.l.s4 1966171168
        %v6799 = vunpack.c.0.s8 %v6798
        %v6800 = vlaneseq
        %v6801 = vshrl.u32 %v6800, 7
        %v6802 = vsub.s32 %v6799, %v6801
        %v6803 = vrot.slane %v6793, %v6802
        %v6805 = vunpack.c.l.s4 1966171168
        %v6806 = vunpack.c.0.s8 %v6805
        %v6807 = vlaneseq
        %v6808 = vshrl.u32 %v6807, 7
        %v6809 = vsub.s32 %v6806, %v6808
        %v6810 = vrot.slane %v6794, %v6809
        %v6812 = vunpack.c.l.s4 1966171168
        %v6813 = vunpack.c.0.s8 %v6812
        %v6814 = vlaneseq
        %v6815 = vshrl.u32 %v6814, 7
        %v6816 = vsub.s32 %v6813, %v6815
        %v6817 = vrot.slane %v6795, %v6816
        %v6819 = vunpack.c.l.s4 1966171168
        %v6820 = vunpack.c.0.s8 %v6819
        %v6821 = vlaneseq
        %v6822 = vshrl.u32 %v6821, 7
        %v6823 = vsub.s32 %v6820, %v6822
        %v6824 = vrot.slane %v6796, %v6823
        %v6825 = vcombine.low %v6803, %v6810
        %v6826 = vcombine.low %v6817, %v6824
        %v6828 = vunpack.c.l.s4 1966171168
        %v6829 = vunpack.c.0.s8 %v6828
        %v6830 = vlaneseq
        %v6831 = vshrl.u32 %v6830, 7
        %v6832 = vsub.s32 %v6829, %v6831
        %v6833 = vrot.slane %v6825, %v6832
        %v6835 = vunpack.c.l.s4 1966171168
        %v6836 = vunpack.c.0.s8 %v6835
        %v6837 = vlaneseq
        %v6838 = vshrl.u32 %v6837, 7
        %v6839 = vsub.s32 %v6836, %v6838
        %v6840 = vrot.slane %v6826, %v6839
        %v6841 = vcombine.low %v6833, %v6840
        %v6843 = vadd.f32 %v6233, %v6841
        %v6844 = vmax.f32 %v6843, 0.0
        %v6846 = vlaneseq
        %v6847 = vshrl.u32 %v6846, 7
        %v6848 = vsub.s32 0, %v6847
        %v6849 = vrot.slane %v6844, %v6848
        %v6850 = vlaneseq
        %v6851 = vshrl.u32 %v6850, 7
        %v6852 = vsub.s32 1, %v6851
        %v6853 = vrot.slane %v6844, %v6852
        %v6854 = vlaneseq
        %v6855 = vshrl.u32 %v6854, 7
        %v6856 = vsub.s32 2, %v6855
        %v6857 = vrot.slane %v6844, %v6856
        %v6858 = vlaneseq
        %v6859 = vshrl.u32 %v6858, 7
        %v6860 = vsub.s32 3, %v6859
        %v6861 = vrot.slane %v6844, %v6860
        %v6862 = vlaneseq
        %v6863 = vshrl.u32 %v6862, 7
        %v6864 = vsub.s32 4, %v6863
        %v6865 = vrot.slane %v6844, %v6864
        %v6866 = vlaneseq
        %v6867 = vshrl.u32 %v6866, 7
        %v6868 = vsub.s32 5, %v6867
        %v6869 = vrot.slane %v6844, %v6868
        %v6870 = vlaneseq
        %v6871 = vshrl.u32 %v6870, 7
        %v6872 = vsub.s32 6, %v6871
        %v6873 = vrot.slane %v6844, %v6872
        %v6874 = vlaneseq
        %v6875 = vshrl.u32 %v6874, 7
        %v6876 = vsub.s32 7, %v6875
        %v6877 = vrot.slane %v6844, %v6876
        %v6886 = vpack.c.bf16 %v6849, %v6849
        %v6887 = vpack.c.bf16 %v6853, %v6853
        %v6888 = vpack.c.bf16 %v6857, %v6857
        %v6889 = vpack.c.bf16 %v6861, %v6861
        %v6890 = vpack.c.bf16 %v6865, %v6865
        %v6891 = vpack.c.bf16 %v6869, %v6869
        %v6892 = vpack.c.bf16 %v6873, %v6873
        %v6893 = vpack.c.bf16 %v6877, %v6877
        %v6894 = vld [vmem:[#allocation17] sm:$0xff]
        %v6895 = vld [vmem:[#allocation17 + $0x8] sm:$0xff]
        %v6896 = vld [vmem:[#allocation17 + $0x10] sm:$0xff]
        %v6897 = vld [vmem:[#allocation17 + $0x18] sm:$0xff]
        %v6898 = vld [vmem:[#allocation17 + $0x20] sm:$0xff]
        %v6899 = vld [vmem:[#allocation17 + $0x28] sm:$0xff]
        %v6900 = vld [vmem:[#allocation17 + $0x30] sm:$0xff]
        %v6901 = vld [vmem:[#allocation17 + $0x38] sm:$0xff]
        %v6902 = vld [vmem:[#allocation17 + $0x40] sm:$0xff]
        %v6903 = vld [vmem:[#allocation17 + $0x48] sm:$0xff]
        %v6904 = vld [vmem:[#allocation17 + $0x50] sm:$0xff]
        %v6905 = vld [vmem:[#allocation17 + $0x58] sm:$0xff]
        %v6906 = vld [vmem:[#allocation17 + $0x60] sm:$0xff]
        %v6907 = vld [vmem:[#allocation17 + $0x68] sm:$0xff]
        %v6908 = vld [vmem:[#allocation17 + $0x70] sm:$0xff]
        %v6909 = vld [vmem:[#allocation17 + $0x78] sm:$0xff]
        %v6910 = vld [vmem:[#allocation17 + $0x80] sm:$0xff]
        %v6911 = vld [vmem:[#allocation17 + $0x88] sm:$0xff]
        %v6912 = vld [vmem:[#allocation17 + $0x90] sm:$0xff]
        %v6913 = vld [vmem:[#allocation17 + $0x98] sm:$0xff]
        %v6914 = vld [vmem:[#allocation17 + $0xa0] sm:$0xff]
        %v6915 = vld [vmem:[#allocation17 + $0xa8] sm:$0xff]
        %v6916 = vld [vmem:[#allocation17 + $0xb0] sm:$0xff]
        %v6917 = vld [vmem:[#allocation17 + $0xb8] sm:$0xff]
        %v6918 = vld [vmem:[#allocation17 + $0xc0] sm:$0xff]
        %v6919 = vld [vmem:[#allocation17 + $0xc8] sm:$0xff]
        %v6920 = vld [vmem:[#allocation17 + $0xd0] sm:$0xff]
        %v6921 = vld [vmem:[#allocation17 + $0xd8] sm:$0xff]
        %v6922 = vld [vmem:[#allocation17 + $0xe0] sm:$0xff]
        %v6923 = vld [vmem:[#allocation17 + $0xe8] sm:$0xff]
        %v6924 = vld [vmem:[#allocation17 + $0xf0] sm:$0xff]
        %v6925 = vld [vmem:[#allocation17 + $0xf8] sm:$0xff]
        %v6926 = vld [vmem:[#allocation17 + $0x100] sm:$0xff]
        %v6927 = vld [vmem:[#allocation17 + $0x108] sm:$0xff]
        %v6928 = vld [vmem:[#allocation17 + $0x110] sm:$0xff]
        %v6929 = vld [vmem:[#allocation17 + $0x118] sm:$0xff]
        %v6930 = vld [vmem:[#allocation17 + $0x120] sm:$0xff]
        %v6931 = vld [vmem:[#allocation17 + $0x128] sm:$0xff]
        %v6932 = vld [vmem:[#allocation17 + $0x130] sm:$0xff]
        %v6933 = vld [vmem:[#allocation17 + $0x138] sm:$0xff]
        %v6934 = vld [vmem:[#allocation17 + $0x140] sm:$0xff]
        %v6935 = vld [vmem:[#allocation17 + $0x148] sm:$0xff]
        %v6936 = vld [vmem:[#allocation17 + $0x150] sm:$0xff]
        %v6937 = vld [vmem:[#allocation17 + $0x158] sm:$0xff]
        %v6938 = vld [vmem:[#allocation17 + $0x160] sm:$0xff]
        %v6939 = vld [vmem:[#allocation17 + $0x168] sm:$0xff]
        %v6940 = vld [vmem:[#allocation17 + $0x170] sm:$0xff]
        %v6941 = vld [vmem:[#allocation17 + $0x178] sm:$0xff]
        %v6942 = vld [vmem:[#allocation17 + $0x180] sm:$0xff]
        %v6943 = vld [vmem:[#allocation17 + $0x188] sm:$0xff]
        %v6944 = vld [vmem:[#allocation17 + $0x190] sm:$0xff]
        %v6945 = vld [vmem:[#allocation17 + $0x198] sm:$0xff]
        %v6946 = vld [vmem:[#allocation17 + $0x1a0] sm:$0xff]
        %v6947 = vld [vmem:[#allocation17 + $0x1a8] sm:$0xff]
        %v6948 = vld [vmem:[#allocation17 + $0x1b0] sm:$0xff]
        %v6949 = vld [vmem:[#allocation17 + $0x1b8] sm:$0xff]
        %v6950 = vld [vmem:[#allocation17 + $0x1c0] sm:$0xff]
        %v6951 = vld [vmem:[#allocation17 + $0x1c8] sm:$0xff]
        %v6952 = vld [vmem:[#allocation17 + $0x1d0] sm:$0xff]
        %v6953 = vld [vmem:[#allocation17 + $0x1d8] sm:$0xff]
        %v6954 = vld [vmem:[#allocation17 + $0x1e0] sm:$0xff]
        %v6955 = vld [vmem:[#allocation17 + $0x1e8] sm:$0xff]
        %v6956 = vld [vmem:[#allocation17 + $0x1f0] sm:$0xff]
        %v6957 = vld [vmem:[#allocation17 + $0x1f8] sm:$0xff]
        %v6958 = vld [vmem:[#allocation17 + $0x200] sm:$0xff]
        %v6959 = vld [vmem:[#allocation17 + $0x208] sm:$0xff]
        %v6960 = vld [vmem:[#allocation17 + $0x210] sm:$0xff]
        %v6961 = vld [vmem:[#allocation17 + $0x218] sm:$0xff]
        %v6962 = vld [vmem:[#allocation17 + $0x220] sm:$0xff]
        %v6963 = vld [vmem:[#allocation17 + $0x228] sm:$0xff]
        %v6964 = vld [vmem:[#allocation17 + $0x230] sm:$0xff]
        %v6965 = vld [vmem:[#allocation17 + $0x238] sm:$0xff]
        %v6966 = vld [vmem:[#allocation17 + $0x240] sm:$0xff]
        %v6967 = vld [vmem:[#allocation17 + $0x248] sm:$0xff]
        %v6968 = vld [vmem:[#allocation17 + $0x250] sm:$0xff]
        %v6969 = vld [vmem:[#allocation17 + $0x258] sm:$0xff]
        %v6970 = vld [vmem:[#allocation17 + $0x260] sm:$0xff]
        %v6971 = vld [vmem:[#allocation17 + $0x268] sm:$0xff]
        %v6972 = vld [vmem:[#allocation17 + $0x270] sm:$0xff]
        %v6973 = vld [vmem:[#allocation17 + $0x278] sm:$0xff]
        %v6974 = vld [vmem:[#allocation17 + $0x280] sm:$0xff]
        %v6975 = vld [vmem:[#allocation17 + $0x288] sm:$0xff]
        %v6976 = vld [vmem:[#allocation17 + $0x290] sm:$0xff]
        %v6977 = vld [vmem:[#allocation17 + $0x298] sm:$0xff]
        %v6978 = vld [vmem:[#allocation17 + $0x2a0] sm:$0xff]
        %v6979 = vld [vmem:[#allocation17 + $0x2a8] sm:$0xff]
        %v6980 = vld [vmem:[#allocation17 + $0x2b0] sm:$0xff]
        %v6981 = vld [vmem:[#allocation17 + $0x2b8] sm:$0xff]
        %v6982 = vld [vmem:[#allocation17 + $0x2c0] sm:$0xff]
        %v6983 = vld [vmem:[#allocation17 + $0x2c8] sm:$0xff]
        %v6984 = vld [vmem:[#allocation17 + $0x2d0] sm:$0xff]
        %v6985 = vld [vmem:[#allocation17 + $0x2d8] sm:$0xff]
        %v6986 = vld [vmem:[#allocation17 + $0x2e0] sm:$0xff]
        %v6987 = vld [vmem:[#allocation17 + $0x2e8] sm:$0xff]
        %v6988 = vld [vmem:[#allocation17 + $0x2f0] sm:$0xff]
        %v6989 = vld [vmem:[#allocation17 + $0x2f8] sm:$0xff]
        %v6990 = vld [vmem:[#allocation17 + $0x300] sm:$0xff]
        %v6991 = vld [vmem:[#allocation17 + $0x308] sm:$0xff]
        %v6992 = vld [vmem:[#allocation17 + $0x310] sm:$0xff]
        %v6993 = vld [vmem:[#allocation17 + $0x318] sm:$0xff]
        %v6994 = vld [vmem:[#allocation17 + $0x320] sm:$0xff]
        %v6995 = vld [vmem:[#allocation17 + $0x328] sm:$0xff]
        %v6996 = vld [vmem:[#allocation17 + $0x330] sm:$0xff]
        %v6997 = vld [vmem:[#allocation17 + $0x338] sm:$0xff]
        %v6998 = vld [vmem:[#allocation17 + $0x340] sm:$0xff]
        %v6999 = vld [vmem:[#allocation17 + $0x348] sm:$0xff]
        %v7000 = vld [vmem:[#allocation17 + $0x350] sm:$0xff]
        %v7001 = vld [vmem:[#allocation17 + $0x358] sm:$0xff]
        %v7002 = vld [vmem:[#allocation17 + $0x360] sm:$0xff]
        %v7003 = vld [vmem:[#allocation17 + $0x368] sm:$0xff]
        %v7004 = vld [vmem:[#allocation17 + $0x370] sm:$0xff]
        %v7005 = vld [vmem:[#allocation17 + $0x378] sm:$0xff]
        %v7006 = vld [vmem:[#allocation17 + $0x380] sm:$0xff]
        %v7007 = vld [vmem:[#allocation17 + $0x388] sm:$0xff]
        %v7008 = vld [vmem:[#allocation17 + $0x390] sm:$0xff]
        %v7009 = vld [vmem:[#allocation17 + $0x398] sm:$0xff]
        %v7010 = vld [vmem:[#allocation17 + $0x3a0] sm:$0xff]
        %v7011 = vld [vmem:[#allocation17 + $0x3a8] sm:$0xff]
        %v7012 = vld [vmem:[#allocation17 + $0x3b0] sm:$0xff]
        %v7013 = vld [vmem:[#allocation17 + $0x3b8] sm:$0xff]
        %v7014 = vld [vmem:[#allocation17 + $0x3c0] sm:$0xff]
        %v7015 = vld [vmem:[#allocation17 + $0x3c8] sm:$0xff]
        %v7016 = vld [vmem:[#allocation17 + $0x3d0] sm:$0xff]
        %v7017 = vld [vmem:[#allocation17 + $0x3d8] sm:$0xff]
        %v7018 = vld [vmem:[#allocation17 + $0x3e0] sm:$0xff]
        %v7019 = vld [vmem:[#allocation17 + $0x3e8] sm:$0xff]
        %v7020 = vld [vmem:[#allocation17 + $0x3f0] sm:$0xff]
        %v7021 = vld [vmem:[#allocation17 + $0x3f8] sm:$0xff]
        %v7022 = vld [vmem:[#allocation17 + $0x400] sm:$0xff]
        %v7023 = vld [vmem:[#allocation17 + $0x408] sm:$0xff]
        %v7024 = vld [vmem:[#allocation17 + $0x410] sm:$0xff]
        %v7025 = vld [vmem:[#allocation17 + $0x418] sm:$0xff]
        %v7026 = vld [vmem:[#allocation17 + $0x420] sm:$0xff]
        %v7027 = vld [vmem:[#allocation17 + $0x428] sm:$0xff]
        %v7028 = vld [vmem:[#allocation17 + $0x430] sm:$0xff]
        %v7029 = vld [vmem:[#allocation17 + $0x438] sm:$0xff]
        %v7030 = vld [vmem:[#allocation17 + $0x440] sm:$0xff]
        %v7031 = vld [vmem:[#allocation17 + $0x448] sm:$0xff]
        %v7032 = vld [vmem:[#allocation17 + $0x450] sm:$0xff]
        %v7033 = vld [vmem:[#allocation17 + $0x458] sm:$0xff]
        %v7034 = vld [vmem:[#allocation17 + $0x460] sm:$0xff]
        %v7035 = vld [vmem:[#allocation17 + $0x468] sm:$0xff]
        %v7036 = vld [vmem:[#allocation17 + $0x470] sm:$0xff]
        %v7037 = vld [vmem:[#allocation17 + $0x478] sm:$0xff]
        %v7038 = vld [vmem:[#allocation17 + $0x480] sm:$0xff]
        %v7039 = vld [vmem:[#allocation17 + $0x488] sm:$0xff]
        %v7040 = vld [vmem:[#allocation17 + $0x490] sm:$0xff]
        %v7041 = vld [vmem:[#allocation17 + $0x498] sm:$0xff]
        %v7042 = vld [vmem:[#allocation17 + $0x4a0] sm:$0xff]
        %v7043 = vld [vmem:[#allocation17 + $0x4a8] sm:$0xff]
        %v7044 = vld [vmem:[#allocation17 + $0x4b0] sm:$0xff]
        %v7045 = vld [vmem:[#allocation17 + $0x4b8] sm:$0xff]
        %v7046 = vld [vmem:[#allocation17 + $0x4c0] sm:$0xff]
        %v7047 = vld [vmem:[#allocation17 + $0x4c8] sm:$0xff]
        %v7048 = vld [vmem:[#allocation17 + $0x4d0] sm:$0xff]
        %v7049 = vld [vmem:[#allocation17 + $0x4d8] sm:$0xff]
        %v7050 = vld [vmem:[#allocation17 + $0x4e0] sm:$0xff]
        %v7051 = vld [vmem:[#allocation17 + $0x4e8] sm:$0xff]
        %v7052 = vld [vmem:[#allocation17 + $0x4f0] sm:$0xff]
        %v7053 = vld [vmem:[#allocation17 + $0x4f8] sm:$0xff]
        %v7054 = vld [vmem:[#allocation17 + $0x500] sm:$0xff]
        %v7055 = vld [vmem:[#allocation17 + $0x508] sm:$0xff]
        %v7056 = vld [vmem:[#allocation17 + $0x510] sm:$0xff]
        %v7057 = vld [vmem:[#allocation17 + $0x518] sm:$0xff]
        %v7058 = vld [vmem:[#allocation17 + $0x520] sm:$0xff]
        %v7059 = vld [vmem:[#allocation17 + $0x528] sm:$0xff]
        %v7060 = vld [vmem:[#allocation17 + $0x530] sm:$0xff]
        %v7061 = vld [vmem:[#allocation17 + $0x538] sm:$0xff]
        %v7062 = vld [vmem:[#allocation17 + $0x540] sm:$0xff]
        %v7063 = vld [vmem:[#allocation17 + $0x548] sm:$0xff]
        %v7064 = vld [vmem:[#allocation17 + $0x550] sm:$0xff]
        %v7065 = vld [vmem:[#allocation17 + $0x558] sm:$0xff]
        %v7066 = vld [vmem:[#allocation17 + $0x560] sm:$0xff]
        %v7067 = vld [vmem:[#allocation17 + $0x568] sm:$0xff]
        %v7068 = vld [vmem:[#allocation17 + $0x570] sm:$0xff]
        %v7069 = vld [vmem:[#allocation17 + $0x578] sm:$0xff]
        %v7070 = vld [vmem:[#allocation17 + $0x580] sm:$0xff]
        %v7071 = vld [vmem:[#allocation17 + $0x588] sm:$0xff]
        %v7072 = vld [vmem:[#allocation17 + $0x590] sm:$0xff]
        %v7073 = vld [vmem:[#allocation17 + $0x598] sm:$0xff]
        %v7074 = vld [vmem:[#allocation17 + $0x5a0] sm:$0xff]
        %v7075 = vld [vmem:[#allocation17 + $0x5a8] sm:$0xff]
        %v7076 = vld [vmem:[#allocation17 + $0x5b0] sm:$0xff]
        %v7077 = vld [vmem:[#allocation17 + $0x5b8] sm:$0xff]
        %v7078 = vld [vmem:[#allocation17 + $0x5c0] sm:$0xff]
        %v7079 = vld [vmem:[#allocation17 + $0x5c8] sm:$0xff]
        %v7080 = vld [vmem:[#allocation17 + $0x5d0] sm:$0xff]
        %v7081 = vld [vmem:[#allocation17 + $0x5d8] sm:$0xff]
        %v7082 = vld [vmem:[#allocation17 + $0x5e0] sm:$0xff]
        %v7083 = vld [vmem:[#allocation17 + $0x5e8] sm:$0xff]
        %v7084 = vld [vmem:[#allocation17 + $0x5f0] sm:$0xff]
        %v7085 = vld [vmem:[#allocation17 + $0x5f8] sm:$0xff]
        %v7086 = vld [vmem:[#allocation17 + $0x600] sm:$0xff]
        %v7087 = vld [vmem:[#allocation17 + $0x608] sm:$0xff]
        %v7088 = vld [vmem:[#allocation17 + $0x610] sm:$0xff]
        %v7089 = vld [vmem:[#allocation17 + $0x618] sm:$0xff]
        %v7090 = vld [vmem:[#allocation17 + $0x620] sm:$0xff]
        %v7091 = vld [vmem:[#allocation17 + $0x628] sm:$0xff]
        %v7092 = vld [vmem:[#allocation17 + $0x630] sm:$0xff]
        %v7093 = vld [vmem:[#allocation17 + $0x638] sm:$0xff]
        %v7094 = vld [vmem:[#allocation17 + $0x640] sm:$0xff]
        %v7095 = vld [vmem:[#allocation17 + $0x648] sm:$0xff]
        %v7096 = vld [vmem:[#allocation17 + $0x650] sm:$0xff]
        %v7097 = vld [vmem:[#allocation17 + $0x658] sm:$0xff]
        %v7098 = vld [vmem:[#allocation17 + $0x660] sm:$0xff]
        %v7099 = vld [vmem:[#allocation17 + $0x668] sm:$0xff]
        %v7100 = vld [vmem:[#allocation17 + $0x670] sm:$0xff]
        %v7101 = vld [vmem:[#allocation17 + $0x678] sm:$0xff]
        %v7102 = vld [vmem:[#allocation17 + $0x680] sm:$0xff]
        %v7103 = vld [vmem:[#allocation17 + $0x688] sm:$0xff]
        %v7104 = vld [vmem:[#allocation17 + $0x690] sm:$0xff]
        %v7105 = vld [vmem:[#allocation17 + $0x698] sm:$0xff]
        %v7106 = vld [vmem:[#allocation17 + $0x6a0] sm:$0xff]
        %v7107 = vld [vmem:[#allocation17 + $0x6a8] sm:$0xff]
        %v7108 = vld [vmem:[#allocation17 + $0x6b0] sm:$0xff]
        %v7109 = vld [vmem:[#allocation17 + $0x6b8] sm:$0xff]
        %v7110 = vld [vmem:[#allocation17 + $0x6c0] sm:$0xff]
        %v7111 = vld [vmem:[#allocation17 + $0x6c8] sm:$0xff]
        %v7112 = vld [vmem:[#allocation17 + $0x6d0] sm:$0xff]
        %v7113 = vld [vmem:[#allocation17 + $0x6d8] sm:$0xff]
        %v7114 = vld [vmem:[#allocation17 + $0x6e0] sm:$0xff]
        %v7115 = vld [vmem:[#allocation17 + $0x6e8] sm:$0xff]
        %v7116 = vld [vmem:[#allocation17 + $0x6f0] sm:$0xff]
        %v7117 = vld [vmem:[#allocation17 + $0x6f8] sm:$0xff]
        %v7118 = vld [vmem:[#allocation17 + $0x700] sm:$0xff]
        %v7119 = vld [vmem:[#allocation17 + $0x708] sm:$0xff]
        %v7120 = vld [vmem:[#allocation17 + $0x710] sm:$0xff]
        %v7121 = vld [vmem:[#allocation17 + $0x718] sm:$0xff]
        %v7122 = vld [vmem:[#allocation17 + $0x720] sm:$0xff]
        %v7123 = vld [vmem:[#allocation17 + $0x728] sm:$0xff]
        %v7124 = vld [vmem:[#allocation17 + $0x730] sm:$0xff]
        %v7125 = vld [vmem:[#allocation17 + $0x738] sm:$0xff]
        %v7126 = vld [vmem:[#allocation17 + $0x740] sm:$0xff]
        %v7127 = vld [vmem:[#allocation17 + $0x748] sm:$0xff]
        %v7128 = vld [vmem:[#allocation17 + $0x750] sm:$0xff]
        %v7129 = vld [vmem:[#allocation17 + $0x758] sm:$0xff]
        %v7130 = vld [vmem:[#allocation17 + $0x760] sm:$0xff]
        %v7131 = vld [vmem:[#allocation17 + $0x768] sm:$0xff]
        %v7132 = vld [vmem:[#allocation17 + $0x770] sm:$0xff]
        %v7133 = vld [vmem:[#allocation17 + $0x778] sm:$0xff]
        %v7134 = vld [vmem:[#allocation17 + $0x780] sm:$0xff]
        %v7135 = vld [vmem:[#allocation17 + $0x788] sm:$0xff]
        %v7136 = vld [vmem:[#allocation17 + $0x790] sm:$0xff]
        %v7137 = vld [vmem:[#allocation17 + $0x798] sm:$0xff]
        %v7138 = vld [vmem:[#allocation17 + $0x7a0] sm:$0xff]
        %v7139 = vld [vmem:[#allocation17 + $0x7a8] sm:$0xff]
        %v7140 = vld [vmem:[#allocation17 + $0x7b0] sm:$0xff]
        %v7141 = vld [vmem:[#allocation17 + $0x7b8] sm:$0xff]
        %v7142 = vld [vmem:[#allocation17 + $0x7c0] sm:$0xff]
        %v7143 = vld [vmem:[#allocation17 + $0x7c8] sm:$0xff]
        %v7144 = vld [vmem:[#allocation17 + $0x7d0] sm:$0xff]
        %v7145 = vld [vmem:[#allocation17 + $0x7d8] sm:$0xff]
        %v7146 = vld [vmem:[#allocation17 + $0x7e0] sm:$0xff]
        %v7147 = vld [vmem:[#allocation17 + $0x7e8] sm:$0xff]
        %v7148 = vld [vmem:[#allocation17 + $0x7f0] sm:$0xff]
        %v7149 = vld [vmem:[#allocation17 + $0x7f8] sm:$0xff]
        %v7150 = vld [vmem:[#allocation18] sm:$0xf]
        %v7407 = vunpack.c.l.b16 %v6894
        %v7408 = vunpack.c.h.b16 %v6894
        %v7409 = vunpack.c.l.b16 %v6895
        %v7410 = vunpack.c.h.b16 %v6895
        %v7411 = vunpack.c.l.b16 %v6896
        %v7412 = vunpack.c.h.b16 %v6896
        %v7413 = vunpack.c.l.b16 %v6897
        %v7414 = vunpack.c.h.b16 %v6897
        %v7415 = vunpack.c.l.b16 %v6898
        %v7416 = vunpack.c.h.b16 %v6898
        %v7417 = vunpack.c.l.b16 %v6899
        %v7418 = vunpack.c.h.b16 %v6899
        %v7419 = vunpack.c.l.b16 %v6900
        %v7420 = vunpack.c.h.b16 %v6900
        %v7421 = vunpack.c.l.b16 %v6901
        %v7422 = vunpack.c.h.b16 %v6901
        %v7423 = vunpack.c.l.b16 %v6902
        %v7424 = vunpack.c.h.b16 %v6902
        %v7425 = vunpack.c.l.b16 %v6903
        %v7426 = vunpack.c.h.b16 %v6903
        %v7427 = vunpack.c.l.b16 %v6904
        %v7428 = vunpack.c.h.b16 %v6904
        %v7429 = vunpack.c.l.b16 %v6905
        %v7430 = vunpack.c.h.b16 %v6905
        %v7431 = vunpack.c.l.b16 %v6906
        %v7432 = vunpack.c.h.b16 %v6906
        %v7433 = vunpack.c.l.b16 %v6907
        %v7434 = vunpack.c.h.b16 %v6907
        %v7435 = vunpack.c.l.b16 %v6908
        %v7436 = vunpack.c.h.b16 %v6908
        %v7437 = vunpack.c.l.b16 %v6909
        %v7438 = vunpack.c.h.b16 %v6909
        %v7439 = vunpack.c.l.b16 %v6910
        %v7440 = vunpack.c.h.b16 %v6910
        %v7441 = vunpack.c.l.b16 %v6911
        %v7442 = vunpack.c.h.b16 %v6911
        %v7443 = vunpack.c.l.b16 %v6912
        %v7444 = vunpack.c.h.b16 %v6912
        %v7445 = vunpack.c.l.b16 %v6913
        %v7446 = vunpack.c.h.b16 %v6913
        %v7447 = vunpack.c.l.b16 %v6914
        %v7448 = vunpack.c.h.b16 %v6914
        %v7449 = vunpack.c.l.b16 %v6915
        %v7450 = vunpack.c.h.b16 %v6915
        %v7451 = vunpack.c.l.b16 %v6916
        %v7452 = vunpack.c.h.b16 %v6916
        %v7453 = vunpack.c.l.b16 %v6917
        %v7454 = vunpack.c.h.b16 %v6917
        %v7455 = vunpack.c.l.b16 %v6918
        %v7456 = vunpack.c.h.b16 %v6918
        %v7457 = vunpack.c.l.b16 %v6919
        %v7458 = vunpack.c.h.b16 %v6919
        %v7459 = vunpack.c.l.b16 %v6920
        %v7460 = vunpack.c.h.b16 %v6920
        %v7461 = vunpack.c.l.b16 %v6921
        %v7462 = vunpack.c.h.b16 %v6921
        %v7463 = vunpack.c.l.b16 %v6922
        %v7464 = vunpack.c.h.b16 %v6922
        %v7465 = vunpack.c.l.b16 %v6923
        %v7466 = vunpack.c.h.b16 %v6923
        %v7467 = vunpack.c.l.b16 %v6924
        %v7468 = vunpack.c.h.b16 %v6924
        %v7469 = vunpack.c.l.b16 %v6925
        %v7470 = vunpack.c.h.b16 %v6925
        %v7471 = vunpack.c.l.b16 %v6926
        %v7472 = vunpack.c.h.b16 %v6926
        %v7473 = vunpack.c.l.b16 %v6927
        %v7474 = vunpack.c.h.b16 %v6927
        %v7475 = vunpack.c.l.b16 %v6928
        %v7476 = vunpack.c.h.b16 %v6928
        %v7477 = vunpack.c.l.b16 %v6929
        %v7478 = vunpack.c.h.b16 %v6929
        %v7479 = vunpack.c.l.b16 %v6930
        %v7480 = vunpack.c.h.b16 %v6930
        %v7481 = vunpack.c.l.b16 %v6931
        %v7482 = vunpack.c.h.b16 %v6931
        %v7483 = vunpack.c.l.b16 %v6932
        %v7484 = vunpack.c.h.b16 %v6932
        %v7485 = vunpack.c.l.b16 %v6933
        %v7486 = vunpack.c.h.b16 %v6933
        %v7487 = vunpack.c.l.b16 %v6934
        %v7488 = vunpack.c.h.b16 %v6934
        %v7489 = vunpack.c.l.b16 %v6935
        %v7490 = vunpack.c.h.b16 %v6935
        %v7491 = vunpack.c.l.b16 %v6936
        %v7492 = vunpack.c.h.b16 %v6936
        %v7493 = vunpack.c.l.b16 %v6937
        %v7494 = vunpack.c.h.b16 %v6937
        %v7495 = vunpack.c.l.b16 %v6938
        %v7496 = vunpack.c.h.b16 %v6938
        %v7497 = vunpack.c.l.b16 %v6939
        %v7498 = vunpack.c.h.b16 %v6939
        %v7499 = vunpack.c.l.b16 %v6940
        %v7500 = vunpack.c.h.b16 %v6940
        %v7501 = vunpack.c.l.b16 %v6941
        %v7502 = vunpack.c.h.b16 %v6941
        %v7503 = vunpack.c.l.b16 %v6942
        %v7504 = vunpack.c.h.b16 %v6942
        %v7505 = vunpack.c.l.b16 %v6943
        %v7506 = vunpack.c.h.b16 %v6943
        %v7507 = vunpack.c.l.b16 %v6944
        %v7508 = vunpack.c.h.b16 %v6944
        %v7509 = vunpack.c.l.b16 %v6945
        %v7510 = vunpack.c.h.b16 %v6945
        %v7511 = vunpack.c.l.b16 %v6946
        %v7512 = vunpack.c.h.b16 %v6946
        %v7513 = vunpack.c.l.b16 %v6947
        %v7514 = vunpack.c.h.b16 %v6947
        %v7515 = vunpack.c.l.b16 %v6948
        %v7516 = vunpack.c.h.b16 %v6948
        %v7517 = vunpack.c.l.b16 %v6949
        %v7518 = vunpack.c.h.b16 %v6949
        %v7519 = vunpack.c.l.b16 %v6950
        %v7520 = vunpack.c.h.b16 %v6950
        %v7521 = vunpack.c.l.b16 %v6951
        %v7522 = vunpack.c.h.b16 %v6951
        %v7523 = vunpack.c.l.b16 %v6952
        %v7524 = vunpack.c.h.b16 %v6952
        %v7525 = vunpack.c.l.b16 %v6953
        %v7526 = vunpack.c.h.b16 %v6953
        %v7527 = vunpack.c.l.b16 %v6954
        %v7528 = vunpack.c.h.b16 %v6954
        %v7529 = vunpack.c.l.b16 %v6955
        %v7530 = vunpack.c.h.b16 %v6955
        %v7531 = vunpack.c.l.b16 %v6956
        %v7532 = vunpack.c.h.b16 %v6956
        %v7533 = vunpack.c.l.b16 %v6957
        %v7534 = vunpack.c.h.b16 %v6957
        %v7535 = vunpack.c.l.b16 %v6958
        %v7536 = vunpack.c.h.b16 %v6958
        %v7537 = vunpack.c.l.b16 %v6959
        %v7538 = vunpack.c.h.b16 %v6959
        %v7539 = vunpack.c.l.b16 %v6960
        %v7540 = vunpack.c.h.b16 %v6960
        %v7541 = vunpack.c.l.b16 %v6961
        %v7542 = vunpack.c.h.b16 %v6961
        %v7543 = vunpack.c.l.b16 %v6962
        %v7544 = vunpack.c.h.b16 %v6962
        %v7545 = vunpack.c.l.b16 %v6963
        %v7546 = vunpack.c.h.b16 %v6963
        %v7547 = vunpack.c.l.b16 %v6964
        %v7548 = vunpack.c.h.b16 %v6964
        %v7549 = vunpack.c.l.b16 %v6965
        %v7550 = vunpack.c.h.b16 %v6965
        %v7551 = vunpack.c.l.b16 %v6966
        %v7552 = vunpack.c.h.b16 %v6966
        %v7553 = vunpack.c.l.b16 %v6967
        %v7554 = vunpack.c.h.b16 %v6967
        %v7555 = vunpack.c.l.b16 %v6968
        %v7556 = vunpack.c.h.b16 %v6968
        %v7557 = vunpack.c.l.b16 %v6969
        %v7558 = vunpack.c.h.b16 %v6969
        %v7559 = vunpack.c.l.b16 %v6970
        %v7560 = vunpack.c.h.b16 %v6970
        %v7561 = vunpack.c.l.b16 %v6971
        %v7562 = vunpack.c.h.b16 %v6971
        %v7563 = vunpack.c.l.b16 %v6972
        %v7564 = vunpack.c.h.b16 %v6972
        %v7565 = vunpack.c.l.b16 %v6973
        %v7566 = vunpack.c.h.b16 %v6973
        %v7567 = vunpack.c.l.b16 %v6974
        %v7568 = vunpack.c.h.b16 %v6974
        %v7569 = vunpack.c.l.b16 %v6975
        %v7570 = vunpack.c.h.b16 %v6975
        %v7571 = vunpack.c.l.b16 %v6976
        %v7572 = vunpack.c.h.b16 %v6976
        %v7573 = vunpack.c.l.b16 %v6977
        %v7574 = vunpack.c.h.b16 %v6977
        %v7575 = vunpack.c.l.b16 %v6978
        %v7576 = vunpack.c.h.b16 %v6978
        %v7577 = vunpack.c.l.b16 %v6979
        %v7578 = vunpack.c.h.b16 %v6979
        %v7579 = vunpack.c.l.b16 %v6980
        %v7580 = vunpack.c.h.b16 %v6980
        %v7581 = vunpack.c.l.b16 %v6981
        %v7582 = vunpack.c.h.b16 %v6981
        %v7583 = vunpack.c.l.b16 %v6982
        %v7584 = vunpack.c.h.b16 %v6982
        %v7585 = vunpack.c.l.b16 %v6983
        %v7586 = vunpack.c.h.b16 %v6983
        %v7587 = vunpack.c.l.b16 %v6984
        %v7588 = vunpack.c.h.b16 %v6984
        %v7589 = vunpack.c.l.b16 %v6985
        %v7590 = vunpack.c.h.b16 %v6985
        %v7591 = vunpack.c.l.b16 %v6986
        %v7592 = vunpack.c.h.b16 %v6986
        %v7593 = vunpack.c.l.b16 %v6987
        %v7594 = vunpack.c.h.b16 %v6987
        %v7595 = vunpack.c.l.b16 %v6988
        %v7596 = vunpack.c.h.b16 %v6988
        %v7597 = vunpack.c.l.b16 %v6989
        %v7598 = vunpack.c.h.b16 %v6989
        %v7599 = vunpack.c.l.b16 %v6990
        %v7600 = vunpack.c.h.b16 %v6990
        %v7601 = vunpack.c.l.b16 %v6991
        %v7602 = vunpack.c.h.b16 %v6991
        %v7603 = vunpack.c.l.b16 %v6992
        %v7604 = vunpack.c.h.b16 %v6992
        %v7605 = vunpack.c.l.b16 %v6993
        %v7606 = vunpack.c.h.b16 %v6993
        %v7607 = vunpack.c.l.b16 %v6994
        %v7608 = vunpack.c.h.b16 %v6994
        %v7609 = vunpack.c.l.b16 %v6995
        %v7610 = vunpack.c.h.b16 %v6995
        %v7611 = vunpack.c.l.b16 %v6996
        %v7612 = vunpack.c.h.b16 %v6996
        %v7613 = vunpack.c.l.b16 %v6997
        %v7614 = vunpack.c.h.b16 %v6997
        %v7615 = vunpack.c.l.b16 %v6998
        %v7616 = vunpack.c.h.b16 %v6998
        %v7617 = vunpack.c.l.b16 %v6999
        %v7618 = vunpack.c.h.b16 %v6999
        %v7619 = vunpack.c.l.b16 %v7000
        %v7620 = vunpack.c.h.b16 %v7000
        %v7621 = vunpack.c.l.b16 %v7001
        %v7622 = vunpack.c.h.b16 %v7001
        %v7623 = vunpack.c.l.b16 %v7002
        %v7624 = vunpack.c.h.b16 %v7002
        %v7625 = vunpack.c.l.b16 %v7003
        %v7626 = vunpack.c.h.b16 %v7003
        %v7627 = vunpack.c.l.b16 %v7004
        %v7628 = vunpack.c.h.b16 %v7004
        %v7629 = vunpack.c.l.b16 %v7005
        %v7630 = vunpack.c.h.b16 %v7005
        %v7631 = vunpack.c.l.b16 %v7006
        %v7632 = vunpack.c.h.b16 %v7006
        %v7633 = vunpack.c.l.b16 %v7007
        %v7634 = vunpack.c.h.b16 %v7007
        %v7635 = vunpack.c.l.b16 %v7008
        %v7636 = vunpack.c.h.b16 %v7008
        %v7637 = vunpack.c.l.b16 %v7009
        %v7638 = vunpack.c.h.b16 %v7009
        %v7639 = vunpack.c.l.b16 %v7010
        %v7640 = vunpack.c.h.b16 %v7010
        %v7641 = vunpack.c.l.b16 %v7011
        %v7642 = vunpack.c.h.b16 %v7011
        %v7643 = vunpack.c.l.b16 %v7012
        %v7644 = vunpack.c.h.b16 %v7012
        %v7645 = vunpack.c.l.b16 %v7013
        %v7646 = vunpack.c.h.b16 %v7013
        %v7647 = vunpack.c.l.b16 %v7014
        %v7648 = vunpack.c.h.b16 %v7014
        %v7649 = vunpack.c.l.b16 %v7015
        %v7650 = vunpack.c.h.b16 %v7015
        %v7651 = vunpack.c.l.b16 %v7016
        %v7652 = vunpack.c.h.b16 %v7016
        %v7653 = vunpack.c.l.b16 %v7017
        %v7654 = vunpack.c.h.b16 %v7017
        %v7655 = vunpack.c.l.b16 %v7018
        %v7656 = vunpack.c.h.b16 %v7018
        %v7657 = vunpack.c.l.b16 %v7019
        %v7658 = vunpack.c.h.b16 %v7019
        %v7659 = vunpack.c.l.b16 %v7020
        %v7660 = vunpack.c.h.b16 %v7020
        %v7661 = vunpack.c.l.b16 %v7021
        %v7662 = vunpack.c.h.b16 %v7021
        %v7663 = vunpack.c.l.b16 %v7022
        %v7664 = vunpack.c.h.b16 %v7022
        %v7665 = vunpack.c.l.b16 %v7023
        %v7666 = vunpack.c.h.b16 %v7023
        %v7667 = vunpack.c.l.b16 %v7024
        %v7668 = vunpack.c.h.b16 %v7024
        %v7669 = vunpack.c.l.b16 %v7025
        %v7670 = vunpack.c.h.b16 %v7025
        %v7671 = vunpack.c.l.b16 %v7026
        %v7672 = vunpack.c.h.b16 %v7026
        %v7673 = vunpack.c.l.b16 %v7027
        %v7674 = vunpack.c.h.b16 %v7027
        %v7675 = vunpack.c.l.b16 %v7028
        %v7676 = vunpack.c.h.b16 %v7028
        %v7677 = vunpack.c.l.b16 %v7029
        %v7678 = vunpack.c.h.b16 %v7029
        %v7679 = vunpack.c.l.b16 %v7030
        %v7680 = vunpack.c.h.b16 %v7030
        %v7681 = vunpack.c.l.b16 %v7031
        %v7682 = vunpack.c.h.b16 %v7031
        %v7683 = vunpack.c.l.b16 %v7032
        %v7684 = vunpack.c.h.b16 %v7032
        %v7685 = vunpack.c.l.b16 %v7033
        %v7686 = vunpack.c.h.b16 %v7033
        %v7687 = vunpack.c.l.b16 %v7034
        %v7688 = vunpack.c.h.b16 %v7034
        %v7689 = vunpack.c.l.b16 %v7035
        %v7690 = vunpack.c.h.b16 %v7035
        %v7691 = vunpack.c.l.b16 %v7036
        %v7692 = vunpack.c.h.b16 %v7036
        %v7693 = vunpack.c.l.b16 %v7037
        %v7694 = vunpack.c.h.b16 %v7037
        %v7695 = vunpack.c.l.b16 %v7038
        %v7696 = vunpack.c.h.b16 %v7038
        %v7697 = vunpack.c.l.b16 %v7039
        %v7698 = vunpack.c.h.b16 %v7039
        %v7699 = vunpack.c.l.b16 %v7040
        %v7700 = vunpack.c.h.b16 %v7040
        %v7701 = vunpack.c.l.b16 %v7041
        %v7702 = vunpack.c.h.b16 %v7041
        %v7703 = vunpack.c.l.b16 %v7042
        %v7704 = vunpack.c.h.b16 %v7042
        %v7705 = vunpack.c.l.b16 %v7043
        %v7706 = vunpack.c.h.b16 %v7043
        %v7707 = vunpack.c.l.b16 %v7044
        %v7708 = vunpack.c.h.b16 %v7044
        %v7709 = vunpack.c.l.b16 %v7045
        %v7710 = vunpack.c.h.b16 %v7045
        %v7711 = vunpack.c.l.b16 %v7046
        %v7712 = vunpack.c.h.b16 %v7046
        %v7713 = vunpack.c.l.b16 %v7047
        %v7714 = vunpack.c.h.b16 %v7047
        %v7715 = vunpack.c.l.b16 %v7048
        %v7716 = vunpack.c.h.b16 %v7048
        %v7717 = vunpack.c.l.b16 %v7049
        %v7718 = vunpack.c.h.b16 %v7049
        %v7719 = vunpack.c.l.b16 %v7050
        %v7720 = vunpack.c.h.b16 %v7050
        %v7721 = vunpack.c.l.b16 %v7051
        %v7722 = vunpack.c.h.b16 %v7051
        %v7723 = vunpack.c.l.b16 %v7052
        %v7724 = vunpack.c.h.b16 %v7052
        %v7725 = vunpack.c.l.b16 %v7053
        %v7726 = vunpack.c.h.b16 %v7053
        %v7727 = vunpack.c.l.b16 %v7054
        %v7728 = vunpack.c.h.b16 %v7054
        %v7729 = vunpack.c.l.b16 %v7055
        %v7730 = vunpack.c.h.b16 %v7055
        %v7731 = vunpack.c.l.b16 %v7056
        %v7732 = vunpack.c.h.b16 %v7056
        %v7733 = vunpack.c.l.b16 %v7057
        %v7734 = vunpack.c.h.b16 %v7057
        %v7735 = vunpack.c.l.b16 %v7058
        %v7736 = vunpack.c.h.b16 %v7058
        %v7737 = vunpack.c.l.b16 %v7059
        %v7738 = vunpack.c.h.b16 %v7059
        %v7739 = vunpack.c.l.b16 %v7060
        %v7740 = vunpack.c.h.b16 %v7060
        %v7741 = vunpack.c.l.b16 %v7061
        %v7742 = vunpack.c.h.b16 %v7061
        %v7743 = vunpack.c.l.b16 %v7062
        %v7744 = vunpack.c.h.b16 %v7062
        %v7745 = vunpack.c.l.b16 %v7063
        %v7746 = vunpack.c.h.b16 %v7063
        %v7747 = vunpack.c.l.b16 %v7064
        %v7748 = vunpack.c.h.b16 %v7064
        %v7749 = vunpack.c.l.b16 %v7065
        %v7750 = vunpack.c.h.b16 %v7065
        %v7751 = vunpack.c.l.b16 %v7066
        %v7752 = vunpack.c.h.b16 %v7066
        %v7753 = vunpack.c.l.b16 %v7067
        %v7754 = vunpack.c.h.b16 %v7067
        %v7755 = vunpack.c.l.b16 %v7068
        %v7756 = vunpack.c.h.b16 %v7068
        %v7757 = vunpack.c.l.b16 %v7069
        %v7758 = vunpack.c.h.b16 %v7069
        %v7759 = vunpack.c.l.b16 %v7070
        %v7760 = vunpack.c.h.b16 %v7070
        %v7761 = vunpack.c.l.b16 %v7071
        %v7762 = vunpack.c.h.b16 %v7071
        %v7763 = vunpack.c.l.b16 %v7072
        %v7764 = vunpack.c.h.b16 %v7072
        %v7765 = vunpack.c.l.b16 %v7073
        %v7766 = vunpack.c.h.b16 %v7073
        %v7767 = vunpack.c.l.b16 %v7074
        %v7768 = vunpack.c.h.b16 %v7074
        %v7769 = vunpack.c.l.b16 %v7075
        %v7770 = vunpack.c.h.b16 %v7075
        %v7771 = vunpack.c.l.b16 %v7076
        %v7772 = vunpack.c.h.b16 %v7076
        %v7773 = vunpack.c.l.b16 %v7077
        %v7774 = vunpack.c.h.b16 %v7077
        %v7775 = vunpack.c.l.b16 %v7078
        %v7776 = vunpack.c.h.b16 %v7078
        %v7777 = vunpack.c.l.b16 %v7079
        %v7778 = vunpack.c.h.b16 %v7079
        %v7779 = vunpack.c.l.b16 %v7080
        %v7780 = vunpack.c.h.b16 %v7080
        %v7781 = vunpack.c.l.b16 %v7081
        %v7782 = vunpack.c.h.b16 %v7081
        %v7783 = vunpack.c.l.b16 %v7082
        %v7784 = vunpack.c.h.b16 %v7082
        %v7785 = vunpack.c.l.b16 %v7083
        %v7786 = vunpack.c.h.b16 %v7083
        %v7787 = vunpack.c.l.b16 %v7084
        %v7788 = vunpack.c.h.b16 %v7084
        %v7789 = vunpack.c.l.b16 %v7085
        %v7790 = vunpack.c.h.b16 %v7085
        %v7791 = vunpack.c.l.b16 %v7086
        %v7792 = vunpack.c.h.b16 %v7086
        %v7793 = vunpack.c.l.b16 %v7087
        %v7794 = vunpack.c.h.b16 %v7087
        %v7795 = vunpack.c.l.b16 %v7088
        %v7796 = vunpack.c.h.b16 %v7088
        %v7797 = vunpack.c.l.b16 %v7089
        %v7798 = vunpack.c.h.b16 %v7089
        %v7799 = vunpack.c.l.b16 %v7090
        %v7800 = vunpack.c.h.b16 %v7090
        %v7801 = vunpack.c.l.b16 %v7091
        %v7802 = vunpack.c.h.b16 %v7091
        %v7803 = vunpack.c.l.b16 %v7092
        %v7804 = vunpack.c.h.b16 %v7092
        %v7805 = vunpack.c.l.b16 %v7093
        %v7806 = vunpack.c.h.b16 %v7093
        %v7807 = vunpack.c.l.b16 %v7094
        %v7808 = vunpack.c.h.b16 %v7094
        %v7809 = vunpack.c.l.b16 %v7095
        %v7810 = vunpack.c.h.b16 %v7095
        %v7811 = vunpack.c.l.b16 %v7096
        %v7812 = vunpack.c.h.b16 %v7096
        %v7813 = vunpack.c.l.b16 %v7097
        %v7814 = vunpack.c.h.b16 %v7097
        %v7815 = vunpack.c.l.b16 %v7098
        %v7816 = vunpack.c.h.b16 %v7098
        %v7817 = vunpack.c.l.b16 %v7099
        %v7818 = vunpack.c.h.b16 %v7099
        %v7819 = vunpack.c.l.b16 %v7100
        %v7820 = vunpack.c.h.b16 %v7100
        %v7821 = vunpack.c.l.b16 %v7101
        %v7822 = vunpack.c.h.b16 %v7101
        %v7823 = vunpack.c.l.b16 %v7102
        %v7824 = vunpack.c.h.b16 %v7102
        %v7825 = vunpack.c.l.b16 %v7103
        %v7826 = vunpack.c.h.b16 %v7103
        %v7827 = vunpack.c.l.b16 %v7104
        %v7828 = vunpack.c.h.b16 %v7104
        %v7829 = vunpack.c.l.b16 %v7105
        %v7830 = vunpack.c.h.b16 %v7105
        %v7831 = vunpack.c.l.b16 %v7106
        %v7832 = vunpack.c.h.b16 %v7106
        %v7833 = vunpack.c.l.b16 %v7107
        %v7834 = vunpack.c.h.b16 %v7107
        %v7835 = vunpack.c.l.b16 %v7108
        %v7836 = vunpack.c.h.b16 %v7108
        %v7837 = vunpack.c.l.b16 %v7109
        %v7838 = vunpack.c.h.b16 %v7109
        %v7839 = vunpack.c.l.b16 %v7110
        %v7840 = vunpack.c.h.b16 %v7110
        %v7841 = vunpack.c.l.b16 %v7111
        %v7842 = vunpack.c.h.b16 %v7111
        %v7843 = vunpack.c.l.b16 %v7112
        %v7844 = vunpack.c.h.b16 %v7112
        %v7845 = vunpack.c.l.b16 %v7113
        %v7846 = vunpack.c.h.b16 %v7113
        %v7847 = vunpack.c.l.b16 %v7114
        %v7848 = vunpack.c.h.b16 %v7114
        %v7849 = vunpack.c.l.b16 %v7115
        %v7850 = vunpack.c.h.b16 %v7115
        %v7851 = vunpack.c.l.b16 %v7116
        %v7852 = vunpack.c.h.b16 %v7116
        %v7853 = vunpack.c.l.b16 %v7117
        %v7854 = vunpack.c.h.b16 %v7117
        %v7855 = vunpack.c.l.b16 %v7118
        %v7856 = vunpack.c.h.b16 %v7118
        %v7857 = vunpack.c.l.b16 %v7119
        %v7858 = vunpack.c.h.b16 %v7119
        %v7859 = vunpack.c.l.b16 %v7120
        %v7860 = vunpack.c.h.b16 %v7120
        %v7861 = vunpack.c.l.b16 %v7121
        %v7862 = vunpack.c.h.b16 %v7121
        %v7863 = vunpack.c.l.b16 %v7122
        %v7864 = vunpack.c.h.b16 %v7122
        %v7865 = vunpack.c.l.b16 %v7123
        %v7866 = vunpack.c.h.b16 %v7123
        %v7867 = vunpack.c.l.b16 %v7124
        %v7868 = vunpack.c.h.b16 %v7124
        %v7869 = vunpack.c.l.b16 %v7125
        %v7870 = vunpack.c.h.b16 %v7125
        %v7871 = vunpack.c.l.b16 %v7126
        %v7872 = vunpack.c.h.b16 %v7126
        %v7873 = vunpack.c.l.b16 %v7127
        %v7874 = vunpack.c.h.b16 %v7127
        %v7875 = vunpack.c.l.b16 %v7128
        %v7876 = vunpack.c.h.b16 %v7128
        %v7877 = vunpack.c.l.b16 %v7129
        %v7878 = vunpack.c.h.b16 %v7129
        %v7879 = vunpack.c.l.b16 %v7130
        %v7880 = vunpack.c.h.b16 %v7130
        %v7881 = vunpack.c.l.b16 %v7131
        %v7882 = vunpack.c.h.b16 %v7131
        %v7883 = vunpack.c.l.b16 %v7132
        %v7884 = vunpack.c.h.b16 %v7132
        %v7885 = vunpack.c.l.b16 %v7133
        %v7886 = vunpack.c.h.b16 %v7133
        %v7887 = vunpack.c.l.b16 %v7134
        %v7888 = vunpack.c.h.b16 %v7134
        %v7889 = vunpack.c.l.b16 %v7135
        %v7890 = vunpack.c.h.b16 %v7135
        %v7891 = vunpack.c.l.b16 %v7136
        %v7892 = vunpack.c.h.b16 %v7136
        %v7893 = vunpack.c.l.b16 %v7137
        %v7894 = vunpack.c.h.b16 %v7137
        %v7895 = vunpack.c.l.b16 %v7138
        %v7896 = vunpack.c.h.b16 %v7138
        %v7897 = vunpack.c.l.b16 %v7139
        %v7898 = vunpack.c.h.b16 %v7139
        %v7899 = vunpack.c.l.b16 %v7140
        %v7900 = vunpack.c.h.b16 %v7140
        %v7901 = vunpack.c.l.b16 %v7141
        %v7902 = vunpack.c.h.b16 %v7141
        %v7903 = vunpack.c.l.b16 %v7142
        %v7904 = vunpack.c.h.b16 %v7142
        %v7905 = vunpack.c.l.b16 %v7143
        %v7906 = vunpack.c.h.b16 %v7143
        %v7907 = vunpack.c.l.b16 %v7144
        %v7908 = vunpack.c.h.b16 %v7144
        %v7909 = vunpack.c.l.b16 %v7145
        %v7910 = vunpack.c.h.b16 %v7145
        %v7911 = vunpack.c.l.b16 %v7146
        %v7912 = vunpack.c.h.b16 %v7146
        %v7913 = vunpack.c.l.b16 %v7147
        %v7914 = vunpack.c.h.b16 %v7147
        %v7915 = vunpack.c.l.b16 %v7148
        %v7916 = vunpack.c.h.b16 %v7148
        %v7917 = vunpack.c.l.b16 %v7149
        %v7918 = vunpack.c.h.b16 %v7149
        %v7919 = vpack.c.b16 %v7411, %v7407
        %v7920 = vpack.c.b16 %v7412, %v7408
        %v7921 = vpack.c.b16 %v7413, %v7409
        %v7922 = vpack.c.b16 %v7414, %v7410
        %v7923 = vpack.c.b16 %v7419, %v7415
        %v7924 = vpack.c.b16 %v7420, %v7416
        %v7925 = vpack.c.b16 %v7421, %v7417
        %v7926 = vpack.c.b16 %v7422, %v7418
        %v7927 = vpack.c.b16 %v7427, %v7423
        %v7928 = vpack.c.b16 %v7428, %v7424
        %v7929 = vpack.c.b16 %v7429, %v7425
        %v7930 = vpack.c.b16 %v7430, %v7426
        %v7931 = vpack.c.b16 %v7435, %v7431
        %v7932 = vpack.c.b16 %v7436, %v7432
        %v7933 = vpack.c.b16 %v7437, %v7433
        %v7934 = vpack.c.b16 %v7438, %v7434
        %v7935 = vpack.c.b16 %v7443, %v7439
        %v7936 = vpack.c.b16 %v7444, %v7440
        %v7937 = vpack.c.b16 %v7445, %v7441
        %v7938 = vpack.c.b16 %v7446, %v7442
        %v7939 = vpack.c.b16 %v7451, %v7447
        %v7940 = vpack.c.b16 %v7452, %v7448
        %v7941 = vpack.c.b16 %v7453, %v7449
        %v7942 = vpack.c.b16 %v7454, %v7450
        %v7943 = vpack.c.b16 %v7459, %v7455
        %v7944 = vpack.c.b16 %v7460, %v7456
        %v7945 = vpack.c.b16 %v7461, %v7457
        %v7946 = vpack.c.b16 %v7462, %v7458
        %v7947 = vpack.c.b16 %v7467, %v7463
        %v7948 = vpack.c.b16 %v7468, %v7464
        %v7949 = vpack.c.b16 %v7469, %v7465
        %v7950 = vpack.c.b16 %v7470, %v7466
        %v7951 = vpack.c.b16 %v7475, %v7471
        %v7952 = vpack.c.b16 %v7476, %v7472
        %v7953 = vpack.c.b16 %v7477, %v7473
        %v7954 = vpack.c.b16 %v7478, %v7474
        %v7955 = vpack.c.b16 %v7483, %v7479
        %v7956 = vpack.c.b16 %v7484, %v7480
        %v7957 = vpack.c.b16 %v7485, %v7481
        %v7958 = vpack.c.b16 %v7486, %v7482
        %v7959 = vpack.c.b16 %v7491, %v7487
        %v7960 = vpack.c.b16 %v7492, %v7488
        %v7961 = vpack.c.b16 %v7493, %v7489
        %v7962 = vpack.c.b16 %v7494, %v7490
        %v7963 = vpack.c.b16 %v7499, %v7495
        %v7964 = vpack.c.b16 %v7500, %v7496
        %v7965 = vpack.c.b16 %v7501, %v7497
        %v7966 = vpack.c.b16 %v7502, %v7498
        %v7967 = vpack.c.b16 %v7507, %v7503
        %v7968 = vpack.c.b16 %v7508, %v7504
        %v7969 = vpack.c.b16 %v7509, %v7505
        %v7970 = vpack.c.b16 %v7510, %v7506
        %v7971 = vpack.c.b16 %v7515, %v7511
        %v7972 = vpack.c.b16 %v7516, %v7512
        %v7973 = vpack.c.b16 %v7517, %v7513
        %v7974 = vpack.c.b16 %v7518, %v7514
        %v7975 = vpack.c.b16 %v7523, %v7519
        %v7976 = vpack.c.b16 %v7524, %v7520
        %v7977 = vpack.c.b16 %v7525, %v7521
        %v7978 = vpack.c.b16 %v7526, %v7522
        %v7979 = vpack.c.b16 %v7531, %v7527
        %v7980 = vpack.c.b16 %v7532, %v7528
        %v7981 = vpack.c.b16 %v7533, %v7529
        %v7982 = vpack.c.b16 %v7534, %v7530
        %v7983 = vpack.c.b16 %v7539, %v7535
        %v7984 = vpack.c.b16 %v7540, %v7536
        %v7985 = vpack.c.b16 %v7541, %v7537
        %v7986 = vpack.c.b16 %v7542, %v7538
        %v7987 = vpack.c.b16 %v7547, %v7543
        %v7988 = vpack.c.b16 %v7548, %v7544
        %v7989 = vpack.c.b16 %v7549, %v7545
        %v7990 = vpack.c.b16 %v7550, %v7546
        %v7991 = vpack.c.b16 %v7555, %v7551
        %v7992 = vpack.c.b16 %v7556, %v7552
        %v7993 = vpack.c.b16 %v7557, %v7553
        %v7994 = vpack.c.b16 %v7558, %v7554
        %v7995 = vpack.c.b16 %v7563, %v7559
        %v7996 = vpack.c.b16 %v7564, %v7560
        %v7997 = vpack.c.b16 %v7565, %v7561
        %v7998 = vpack.c.b16 %v7566, %v7562
        %v7999 = vpack.c.b16 %v7571, %v7567
        %v8000 = vpack.c.b16 %v7572, %v7568
        %v8001 = vpack.c.b16 %v7573, %v7569
        %v8002 = vpack.c.b16 %v7574, %v7570
        %v8003 = vpack.c.b16 %v7579, %v7575
        %v8004 = vpack.c.b16 %v7580, %v7576
        %v8005 = vpack.c.b16 %v7581, %v7577
        %v8006 = vpack.c.b16 %v7582, %v7578
        %v8007 = vpack.c.b16 %v7587, %v7583
        %v8008 = vpack.c.b16 %v7588, %v7584
        %v8009 = vpack.c.b16 %v7589, %v7585
        %v8010 = vpack.c.b16 %v7590, %v7586
        %v8011 = vpack.c.b16 %v7595, %v7591
        %v8012 = vpack.c.b16 %v7596, %v7592
        %v8013 = vpack.c.b16 %v7597, %v7593
        %v8014 = vpack.c.b16 %v7598, %v7594
        %v8015 = vpack.c.b16 %v7603, %v7599
        %v8016 = vpack.c.b16 %v7604, %v7600
        %v8017 = vpack.c.b16 %v7605, %v7601
        %v8018 = vpack.c.b16 %v7606, %v7602
        %v8019 = vpack.c.b16 %v7611, %v7607
        %v8020 = vpack.c.b16 %v7612, %v7608
        %v8021 = vpack.c.b16 %v7613, %v7609
        %v8022 = vpack.c.b16 %v7614, %v7610
        %v8023 = vpack.c.b16 %v7619, %v7615
        %v8024 = vpack.c.b16 %v7620, %v7616
        %v8025 = vpack.c.b16 %v7621, %v7617
        %v8026 = vpack.c.b16 %v7622, %v7618
        %v8027 = vpack.c.b16 %v7627, %v7623
        %v8028 = vpack.c.b16 %v7628, %v7624
        %v8029 = vpack.c.b16 %v7629, %v7625
        %v8030 = vpack.c.b16 %v7630, %v7626
        %v8031 = vpack.c.b16 %v7635, %v7631
        %v8032 = vpack.c.b16 %v7636, %v7632
        %v8033 = vpack.c.b16 %v7637, %v7633
        %v8034 = vpack.c.b16 %v7638, %v7634
        %v8035 = vpack.c.b16 %v7643, %v7639
        %v8036 = vpack.c.b16 %v7644, %v7640
        %v8037 = vpack.c.b16 %v7645, %v7641
        %v8038 = vpack.c.b16 %v7646, %v7642
        %v8039 = vpack.c.b16 %v7651, %v7647
        %v8040 = vpack.c.b16 %v7652, %v7648
        %v8041 = vpack.c.b16 %v7653, %v7649
        %v8042 = vpack.c.b16 %v7654, %v7650
        %v8043 = vpack.c.b16 %v7659, %v7655
        %v8044 = vpack.c.b16 %v7660, %v7656
        %v8045 = vpack.c.b16 %v7661, %v7657
        %v8046 = vpack.c.b16 %v7662, %v7658
        %v8047 = vpack.c.b16 %v7667, %v7663
        %v8048 = vpack.c.b16 %v7668, %v7664
        %v8049 = vpack.c.b16 %v7669, %v7665
        %v8050 = vpack.c.b16 %v7670, %v7666
        %v8051 = vpack.c.b16 %v7675, %v7671
        %v8052 = vpack.c.b16 %v7676, %v7672
        %v8053 = vpack.c.b16 %v7677, %v7673
        %v8054 = vpack.c.b16 %v7678, %v7674
        %v8055 = vpack.c.b16 %v7683, %v7679
        %v8056 = vpack.c.b16 %v7684, %v7680
        %v8057 = vpack.c.b16 %v7685, %v7681
        %v8058 = vpack.c.b16 %v7686, %v7682
        %v8059 = vpack.c.b16 %v7691, %v7687
        %v8060 = vpack.c.b16 %v7692, %v7688
        %v8061 = vpack.c.b16 %v7693, %v7689
        %v8062 = vpack.c.b16 %v7694, %v7690
        %v8063 = vpack.c.b16 %v7699, %v7695
        %v8064 = vpack.c.b16 %v7700, %v7696
        %v8065 = vpack.c.b16 %v7701, %v7697
        %v8066 = vpack.c.b16 %v7702, %v7698
        %v8067 = vpack.c.b16 %v7707, %v7703
        %v8068 = vpack.c.b16 %v7708, %v7704
        %v8069 = vpack.c.b16 %v7709, %v7705
        %v8070 = vpack.c.b16 %v7710, %v7706
        %v8071 = vpack.c.b16 %v7715, %v7711
        %v8072 = vpack.c.b16 %v7716, %v7712
        %v8073 = vpack.c.b16 %v7717, %v7713
        %v8074 = vpack.c.b16 %v7718, %v7714
        %v8075 = vpack.c.b16 %v7723, %v7719
        %v8076 = vpack.c.b16 %v7724, %v7720
        %v8077 = vpack.c.b16 %v7725, %v7721
        %v8078 = vpack.c.b16 %v7726, %v7722
        %v8079 = vpack.c.b16 %v7731, %v7727
        %v8080 = vpack.c.b16 %v7732, %v7728
        %v8081 = vpack.c.b16 %v7733, %v7729
        %v8082 = vpack.c.b16 %v7734, %v7730
        %v8083 = vpack.c.b16 %v7739, %v7735
        %v8084 = vpack.c.b16 %v7740, %v7736
        %v8085 = vpack.c.b16 %v7741, %v7737
        %v8086 = vpack.c.b16 %v7742, %v7738
        %v8087 = vpack.c.b16 %v7747, %v7743
        %v8088 = vpack.c.b16 %v7748, %v7744
        %v8089 = vpack.c.b16 %v7749, %v7745
        %v8090 = vpack.c.b16 %v7750, %v7746
        %v8091 = vpack.c.b16 %v7755, %v7751
        %v8092 = vpack.c.b16 %v7756, %v7752
        %v8093 = vpack.c.b16 %v7757, %v7753
        %v8094 = vpack.c.b16 %v7758, %v7754
        %v8095 = vpack.c.b16 %v7763, %v7759
        %v8096 = vpack.c.b16 %v7764, %v7760
        %v8097 = vpack.c.b16 %v7765, %v7761
        %v8098 = vpack.c.b16 %v7766, %v7762
        %v8099 = vpack.c.b16 %v7771, %v7767
        %v8100 = vpack.c.b16 %v7772, %v7768
        %v8101 = vpack.c.b16 %v7773, %v7769
        %v8102 = vpack.c.b16 %v7774, %v7770
        %v8103 = vpack.c.b16 %v7779, %v7775
        %v8104 = vpack.c.b16 %v7780, %v7776
        %v8105 = vpack.c.b16 %v7781, %v7777
        %v8106 = vpack.c.b16 %v7782, %v7778
        %v8107 = vpack.c.b16 %v7787, %v7783
        %v8108 = vpack.c.b16 %v7788, %v7784
        %v8109 = vpack.c.b16 %v7789, %v7785
        %v8110 = vpack.c.b16 %v7790, %v7786
        %v8111 = vpack.c.b16 %v7795, %v7791
        %v8112 = vpack.c.b16 %v7796, %v7792
        %v8113 = vpack.c.b16 %v7797, %v7793
        %v8114 = vpack.c.b16 %v7798, %v7794
        %v8115 = vpack.c.b16 %v7803, %v7799
        %v8116 = vpack.c.b16 %v7804, %v7800
        %v8117 = vpack.c.b16 %v7805, %v7801
        %v8118 = vpack.c.b16 %v7806, %v7802
        %v8119 = vpack.c.b16 %v7811, %v7807
        %v8120 = vpack.c.b16 %v7812, %v7808
        %v8121 = vpack.c.b16 %v7813, %v7809
        %v8122 = vpack.c.b16 %v7814, %v7810
        %v8123 = vpack.c.b16 %v7819, %v7815
        %v8124 = vpack.c.b16 %v7820, %v7816
        %v8125 = vpack.c.b16 %v7821, %v7817
        %v8126 = vpack.c.b16 %v7822, %v7818
        %v8127 = vpack.c.b16 %v7827, %v7823
        %v8128 = vpack.c.b16 %v7828, %v7824
        %v8129 = vpack.c.b16 %v7829, %v7825
        %v8130 = vpack.c.b16 %v7830, %v7826
        %v8131 = vpack.c.b16 %v7835, %v7831
        %v8132 = vpack.c.b16 %v7836, %v7832
        %v8133 = vpack.c.b16 %v7837, %v7833
        %v8134 = vpack.c.b16 %v7838, %v7834
        %v8135 = vpack.c.b16 %v7843, %v7839
        %v8136 = vpack.c.b16 %v7844, %v7840
        %v8137 = vpack.c.b16 %v7845, %v7841
        %v8138 = vpack.c.b16 %v7846, %v7842
        %v8139 = vpack.c.b16 %v7851, %v7847
        %v8140 = vpack.c.b16 %v7852, %v7848
        %v8141 = vpack.c.b16 %v7853, %v7849
        %v8142 = vpack.c.b16 %v7854, %v7850
        %v8143 = vpack.c.b16 %v7859, %v7855
        %v8144 = vpack.c.b16 %v7860, %v7856
        %v8145 = vpack.c.b16 %v7861, %v7857
        %v8146 = vpack.c.b16 %v7862, %v7858
        %v8147 = vpack.c.b16 %v7867, %v7863
        %v8148 = vpack.c.b16 %v7868, %v7864
        %v8149 = vpack.c.b16 %v7869, %v7865
        %v8150 = vpack.c.b16 %v7870, %v7866
        %v8151 = vpack.c.b16 %v7875, %v7871
        %v8152 = vpack.c.b16 %v7876, %v7872
        %v8153 = vpack.c.b16 %v7877, %v7873
        %v8154 = vpack.c.b16 %v7878, %v7874
        %v8155 = vpack.c.b16 %v7883, %v7879
        %v8156 = vpack.c.b16 %v7884, %v7880
        %v8157 = vpack.c.b16 %v7885, %v7881
        %v8158 = vpack.c.b16 %v7886, %v7882
        %v8159 = vpack.c.b16 %v7891, %v7887
        %v8160 = vpack.c.b16 %v7892, %v7888
        %v8161 = vpack.c.b16 %v7893, %v7889
        %v8162 = vpack.c.b16 %v7894, %v7890
        %v8163 = vpack.c.b16 %v7899, %v7895
        %v8164 = vpack.c.b16 %v7900, %v7896
        %v8165 = vpack.c.b16 %v7901, %v7897
        %v8166 = vpack.c.b16 %v7902, %v7898
        %v8167 = vpack.c.b16 %v7907, %v7903
        %v8168 = vpack.c.b16 %v7908, %v7904
        %v8169 = vpack.c.b16 %v7909, %v7905
        %v8170 = vpack.c.b16 %v7910, %v7906
        %v8171 = vpack.c.b16 %v7915, %v7911
        %v8172 = vpack.c.b16 %v7916, %v7912
        %v8173 = vpack.c.b16 %v7917, %v7913
        %v8174 = vpack.c.b16 %v7918, %v7914
        %v8432 = vlaneseq
        %v8433 = vshrl.u32 %v8432, 7
        %v8434 = vsub.s32 0, %v8433
        %v8435 = vrot.slane %v7150, %v8434
        %v8436 = vlaneseq
        %v8437 = vshrl.u32 %v8436, 7
        %v8438 = vsub.s32 1, %v8437
        %v8439 = vrot.slane %v7150, %v8438
        %v8440 = vlaneseq
        %v8441 = vshrl.u32 %v8440, 7
        %v8442 = vsub.s32 2, %v8441
        %v8443 = vrot.slane %v7150, %v8442
        %v8444 = vlaneseq
        %v8445 = vshrl.u32 %v8444, 7
        %v8446 = vsub.s32 3, %v8445
        %v8447 = vrot.slane %v7150, %v8446
        %8452 = vmatprep.subr.bf16.mxu0 %v7948
        %8453 = vmatpush1.bf16.msra.mxu0 %v7947
        %8454 = vmatprep.subr.bf16.mxu0 %v7944
        %8455 = vmatpush1.bf16.msra.mxu0 %v7943
        %8456 = vmatprep.subr.bf16.mxu0 %v7940
        %8457 = vmatpush1.bf16.msra.mxu0 %v7939
        %8458 = vmatprep.subr.bf16.mxu0 %v7936
        %8459 = vmatpush1.bf16.msra.mxu0 %v7935
        %8460 = vmatprep.subr.bf16.mxu0 %v7932
        %8461 = vmatpush1.bf16.msra.mxu0 %v7931
        %8462 = vmatprep.subr.bf16.mxu0 %v7928
        %8463 = vmatpush1.bf16.msra.mxu0 %v7927
        %8464 = vmatprep.subr.bf16.mxu0 %v7924
        %8465 = vmatpush1.bf16.msra.mxu0 %v7923
        %8466 = vmatprep.subr.bf16.mxu0 %v7920
        %8467 = vmatpush1.bf16.msra.mxu0 %v7919
        %8468 = vmatprep.subr.bf16.mxu0 %v7980
        %8469 = vmatpush2.bf16.msra.mxu0 %v7979
        %8470 = vmatprep.subr.bf16.mxu0 %v7976
        %8471 = vmatpush2.bf16.msra.mxu0 %v7975
        %8472 = vmatprep.subr.bf16.mxu0 %v7972
        %8473 = vmatpush2.bf16.msra.mxu0 %v7971
        %8474 = vmatprep.subr.bf16.mxu0 %v7968
        %8475 = vmatpush2.bf16.msra.mxu0 %v7967
        %8476 = vmatprep.subr.bf16.mxu0 %v7964
        %8477 = vmatpush2.bf16.msra.mxu0 %v7963
        %8478 = vmatprep.subr.bf16.mxu0 %v7960
        %8479 = vmatpush2.bf16.msra.mxu0 %v7959
        %8480 = vmatprep.subr.bf16.mxu0 %v7956
        %8481 = vmatpush2.bf16.msra.mxu0 %v7955
        %8482 = vmatprep.subr.bf16.mxu0 %v7952
        %8483 = vmatpush2.bf16.msra.mxu0 %v7951
        %8484 = vmatprep.mubr.bf16.mxu0 %v6887
        %8485 = vmatmul.mubr.bf16.gmra.mxu0 %v6886
        %v8486 = vpop.f32.mrf.mxu0
        %v8487 = vadd.f32 %v8435, %v8486
        %v8488 = vpop.f32.mrf.mxu0
        %v8489 = vadd.f32 %v8439, %v8488
        %v8490 = vpop.f32.mrf.mxu0
        %v8491 = vpop.f32.mrf.mxu0
        %8492 = vdwg.mxu0
        %8493 = vmatprep.subr.bf16.mxu0 %v8012
        %8494 = vmatpush1.bf16.msra.mxu0 %v8011
        %8495 = vmatprep.subr.bf16.mxu0 %v8008
        %8496 = vmatpush1.bf16.msra.mxu0 %v8007
        %8497 = vmatprep.subr.bf16.mxu0 %v8004
        %8498 = vmatpush1.bf16.msra.mxu0 %v8003
        %8499 = vmatprep.subr.bf16.mxu0 %v8000
        %8500 = vmatpush1.bf16.msra.mxu0 %v7999
        %8501 = vmatprep.subr.bf16.mxu0 %v7996
        %8502 = vmatpush1.bf16.msra.mxu0 %v7995
        %8503 = vmatprep.subr.bf16.mxu0 %v7992
        %8504 = vmatpush1.bf16.msra.mxu0 %v7991
        %8505 = vmatprep.subr.bf16.mxu0 %v7988
        %8506 = vmatpush1.bf16.msra.mxu0 %v7987
        %8507 = vmatprep.subr.bf16.mxu0 %v7984
        %8508 = vmatpush1.bf16.msra.mxu0 %v7983
        %8509 = vmatprep.subr.bf16.mxu0 %v8044
        %8510 = vmatpush2.bf16.msra.mxu0 %v8043
        %8511 = vmatprep.subr.bf16.mxu0 %v8040
        %8512 = vmatpush2.bf16.msra.mxu0 %v8039
        %8513 = vmatprep.subr.bf16.mxu0 %v8036
        %8514 = vmatpush2.bf16.msra.mxu0 %v8035
        %8515 = vmatprep.subr.bf16.mxu0 %v8032
        %8516 = vmatpush2.bf16.msra.mxu0 %v8031
        %8517 = vmatprep.subr.bf16.mxu0 %v8028
        %8518 = vmatpush2.bf16.msra.mxu0 %v8027
        %8519 = vmatprep.subr.bf16.mxu0 %v8024
        %8520 = vmatpush2.bf16.msra.mxu0 %v8023
        %8521 = vmatprep.subr.bf16.mxu0 %v8020
        %8522 = vmatpush2.bf16.msra.mxu0 %v8019
        %8523 = vmatprep.subr.bf16.mxu0 %v8016
        %8524 = vmatpush2.bf16.msra.mxu0 %v8015
        %8525 = vmatprep.mubr.bf16.mxu0 %v6889
        %8526 = vmatmul.mubr.bf16.gmra.mxu0 %v6888
        %v8527 = vpop.f32.mrf.mxu0
        %v8528 = vadd.f32 %v8487, %v8527
        %v8529 = vpop.f32.mrf.mxu0
        %v8530 = vadd.f32 %v8489, %v8529
        %v8531 = vpop.f32.mrf.mxu0
        %v8532 = vpop.f32.mrf.mxu0
        %8533 = vdwg.mxu0
        %8534 = vmatprep.subr.bf16.mxu0 %v8076
        %8535 = vmatpush1.bf16.msra.mxu0 %v8075
        %8536 = vmatprep.subr.bf16.mxu0 %v8072
        %8537 = vmatpush1.bf16.msra.mxu0 %v8071
        %8538 = vmatprep.subr.bf16.mxu0 %v8068
        %8539 = vmatpush1.bf16.msra.mxu0 %v8067
        %8540 = vmatprep.subr.bf16.mxu0 %v8064
        %8541 = vmatpush1.bf16.msra.mxu0 %v8063
        %8542 = vmatprep.subr.bf16.mxu0 %v8060
        %8543 = vmatpush1.bf16.msra.mxu0 %v8059
        %8544 = vmatprep.subr.bf16.mxu0 %v8056
        %8545 = vmatpush1.bf16.msra.mxu0 %v8055
        %8546 = vmatprep.subr.bf16.mxu0 %v8052
        %8547 = vmatpush1.bf16.msra.mxu0 %v8051
        %8548 = vmatprep.subr.bf16.mxu0 %v8048
        %8549 = vmatpush1.bf16.msra.mxu0 %v8047
        %8550 = vmatprep.subr.bf16.mxu0 %v8108
        %8551 = vmatpush2.bf16.msra.mxu0 %v8107
        %8552 = vmatprep.subr.bf16.mxu0 %v8104
        %8553 = vmatpush2.bf16.msra.mxu0 %v8103
        %8554 = vmatprep.subr.bf16.mxu0 %v8100
        %8555 = vmatpush2.bf16.msra.mxu0 %v8099
        %8556 = vmatprep.subr.bf16.mxu0 %v8096
        %8557 = vmatpush2.bf16.msra.mxu0 %v8095
        %8558 = vmatprep.subr.bf16.mxu0 %v8092
        %8559 = vmatpush2.bf16.msra.mxu0 %v8091
        %8560 = vmatprep.subr.bf16.mxu0 %v8088
        %8561 = vmatpush2.bf16.msra.mxu0 %v8087
        %8562 = vmatprep.subr.bf16.mxu0 %v8084
        %8563 = vmatpush2.bf16.msra.mxu0 %v8083
        %8564 = vmatprep.subr.bf16.mxu0 %v8080
        %8565 = vmatpush2.bf16.msra.mxu0 %v8079
        %8566 = vmatprep.mubr.bf16.mxu0 %v6891
        %8567 = vmatmul.mubr.bf16.gmra.mxu0 %v6890
        %v8568 = vpop.f32.mrf.mxu0
        %v8569 = vadd.f32 %v8528, %v8568
        %v8570 = vpop.f32.mrf.mxu0
        %v8571 = vadd.f32 %v8530, %v8570
        %v8572 = vpop.f32.mrf.mxu0
        %v8573 = vpop.f32.mrf.mxu0
        %8574 = vdwg.mxu0
        %8575 = vmatprep.subr.bf16.mxu0 %v8140
        %8576 = vmatpush1.bf16.msra.mxu0 %v8139
        %8577 = vmatprep.subr.bf16.mxu0 %v8136
        %8578 = vmatpush1.bf16.msra.mxu0 %v8135
        %8579 = vmatprep.subr.bf16.mxu0 %v8132
        %8580 = vmatpush1.bf16.msra.mxu0 %v8131
        %8581 = vmatprep.subr.bf16.mxu0 %v8128
        %8582 = vmatpush1.bf16.msra.mxu0 %v8127
        %8583 = vmatprep.subr.bf16.mxu0 %v8124
        %8584 = vmatpush1.bf16.msra.mxu0 %v8123
        %8585 = vmatprep.subr.bf16.mxu0 %v8120
        %8586 = vmatpush1.bf16.msra.mxu0 %v8119
        %8587 = vmatprep.subr.bf16.mxu0 %v8116
        %8588 = vmatpush1.bf16.msra.mxu0 %v8115
        %8589 = vmatprep.subr.bf16.mxu0 %v8112
        %8590 = vmatpush1.bf16.msra.mxu0 %v8111
        %8591 = vmatprep.subr.bf16.mxu0 %v8172
        %8592 = vmatpush2.bf16.msra.mxu0 %v8171
        %8593 = vmatprep.subr.bf16.mxu0 %v8168
        %8594 = vmatpush2.bf16.msra.mxu0 %v8167
        %8595 = vmatprep.subr.bf16.mxu0 %v8164
        %8596 = vmatpush2.bf16.msra.mxu0 %v8163
        %8597 = vmatprep.subr.bf16.mxu0 %v8160
        %8598 = vmatpush2.bf16.msra.mxu0 %v8159
        %8599 = vmatprep.subr.bf16.mxu0 %v8156
        %8600 = vmatpush2.bf16.msra.mxu0 %v8155
        %8601 = vmatprep.subr.bf16.mxu0 %v8152
        %8602 = vmatpush2.bf16.msra.mxu0 %v8151
        %8603 = vmatprep.subr.bf16.mxu0 %v8148
        %8604 = vmatpush2.bf16.msra.mxu0 %v8147
        %8605 = vmatprep.subr.bf16.mxu0 %v8144
        %8606 = vmatpush2.bf16.msra.mxu0 %v8143
        %8607 = vmatprep.mubr.bf16.mxu0 %v6893
        %8608 = vmatmul.mubr.bf16.gmra.mxu0 %v6892
        %v8609 = vpop.f32.mrf.mxu0
        %v8610 = vadd.f32 %v8569, %v8609
        %v8611 = vpop.f32.mrf.mxu0
        %v8612 = vadd.f32 %v8571, %v8611
        %v8613 = vpop.f32.mrf.mxu0
        %v8614 = vpop.f32.mrf.mxu0
        %8615 = vdwg.mxu0
        %8616 = vmatprep.subr.bf16.mxu0 %v7950
        %8617 = vmatpush1.bf16.msra.mxu0 %v7949
        %8618 = vmatprep.subr.bf16.mxu0 %v7946
        %8619 = vmatpush1.bf16.msra.mxu0 %v7945
        %8620 = vmatprep.subr.bf16.mxu0 %v7942
        %8621 = vmatpush1.bf16.msra.mxu0 %v7941
        %8622 = vmatprep.subr.bf16.mxu0 %v7938
        %8623 = vmatpush1.bf16.msra.mxu0 %v7937
        %8624 = vmatprep.subr.bf16.mxu0 %v7934
        %8625 = vmatpush1.bf16.msra.mxu0 %v7933
        %8626 = vmatprep.subr.bf16.mxu0 %v7930
        %8627 = vmatpush1.bf16.msra.mxu0 %v7929
        %8628 = vmatprep.subr.bf16.mxu0 %v7926
        %8629 = vmatpush1.bf16.msra.mxu0 %v7925
        %8630 = vmatprep.subr.bf16.mxu0 %v7922
        %8631 = vmatpush1.bf16.msra.mxu0 %v7921
        %8632 = vmatprep.subr.bf16.mxu0 %v7982
        %8633 = vmatpush2.bf16.msra.mxu0 %v7981
        %8634 = vmatprep.subr.bf16.mxu0 %v7978
        %8635 = vmatpush2.bf16.msra.mxu0 %v7977
        %8636 = vmatprep.subr.bf16.mxu0 %v7974
        %8637 = vmatpush2.bf16.msra.mxu0 %v7973
        %8638 = vmatprep.subr.bf16.mxu0 %v7970
        %8639 = vmatpush2.bf16.msra.mxu0 %v7969
        %8640 = vmatprep.subr.bf16.mxu0 %v7966
        %8641 = vmatpush2.bf16.msra.mxu0 %v7965
        %8642 = vmatprep.subr.bf16.mxu0 %v7962
        %8643 = vmatpush2.bf16.msra.mxu0 %v7961
        %8644 = vmatprep.subr.bf16.mxu0 %v7958
        %8645 = vmatpush2.bf16.msra.mxu0 %v7957
        %8646 = vmatprep.subr.bf16.mxu0 %v7954
        %8647 = vmatpush2.bf16.msra.mxu0 %v7953
        %8648 = vmatprep.mubr.bf16.mxu0 %v6887
        %8649 = vmatmul.mubr.bf16.gmra.mxu0 %v6886
        %v8650 = vpop.f32.mrf.mxu0
        %v8651 = vadd.f32 %v8443, %v8650
        %v8652 = vpop.f32.mrf.mxu0
        %v8653 = vadd.f32 %v8447, %v8652
        %v8654 = vpop.f32.mrf.mxu0
        %v8655 = vpop.f32.mrf.mxu0
        %8656 = vdwg.mxu0
        %8657 = vmatprep.subr.bf16.mxu0 %v8014
        %8658 = vmatpush1.bf16.msra.mxu0 %v8013
        %8659 = vmatprep.subr.bf16.mxu0 %v8010
        %8660 = vmatpush1.bf16.msra.mxu0 %v8009
        %8661 = vmatprep.subr.bf16.mxu0 %v8006
        %8662 = vmatpush1.bf16.msra.mxu0 %v8005
        %8663 = vmatprep.subr.bf16.mxu0 %v8002
        %8664 = vmatpush1.bf16.msra.mxu0 %v8001
        %8665 = vmatprep.subr.bf16.mxu0 %v7998
        %8666 = vmatpush1.bf16.msra.mxu0 %v7997
        %8667 = vmatprep.subr.bf16.mxu0 %v7994
        %8668 = vmatpush1.bf16.msra.mxu0 %v7993
        %8669 = vmatprep.subr.bf16.mxu0 %v7990
        %8670 = vmatpush1.bf16.msra.mxu0 %v7989
        %8671 = vmatprep.subr.bf16.mxu0 %v7986
        %8672 = vmatpush1.bf16.msra.mxu0 %v7985
        %8673 = vmatprep.subr.bf16.mxu0 %v8046
        %8674 = vmatpush2.bf16.msra.mxu0 %v8045
        %8675 = vmatprep.subr.bf16.mxu0 %v8042
        %8676 = vmatpush2.bf16.msra.mxu0 %v8041
        %8677 = vmatprep.subr.bf16.mxu0 %v8038
        %8678 = vmatpush2.bf16.msra.mxu0 %v8037
        %8679 = vmatprep.subr.bf16.mxu0 %v8034
        %8680 = vmatpush2.bf16.msra.mxu0 %v8033
        %8681 = vmatprep.subr.bf16.mxu0 %v8030
        %8682 = vmatpush2.bf16.msra.mxu0 %v8029
        %8683 = vmatprep.subr.bf16.mxu0 %v8026
        %8684 = vmatpush2.bf16.msra.mxu0 %v8025
        %8685 = vmatprep.subr.bf16.mxu0 %v8022
        %8686 = vmatpush2.bf16.msra.mxu0 %v8021
        %8687 = vmatprep.subr.bf16.mxu0 %v8018
        %8688 = vmatpush2.bf16.msra.mxu0 %v8017
        %8689 = vmatprep.mubr.bf16.mxu0 %v6889
        %8690 = vmatmul.mubr.bf16.gmra.mxu0 %v6888
        %v8691 = vpop.f32.mrf.mxu0
        %v8692 = vadd.f32 %v8651, %v8691
        %v8693 = vpop.f32.mrf.mxu0
        %v8694 = vadd.f32 %v8653, %v8693
        %v8695 = vpop.f32.mrf.mxu0
        %v8696 = vpop.f32.mrf.mxu0
        %8697 = vdwg.mxu0
        %8698 = vmatprep.subr.bf16.mxu0 %v8078
        %8699 = vmatpush1.bf16.msra.mxu0 %v8077
        %8700 = vmatprep.subr.bf16.mxu0 %v8074
        %8701 = vmatpush1.bf16.msra.mxu0 %v8073
        %8702 = vmatprep.subr.bf16.mxu0 %v8070
        %8703 = vmatpush1.bf16.msra.mxu0 %v8069
        %8704 = vmatprep.subr.bf16.mxu0 %v8066
        %8705 = vmatpush1.bf16.msra.mxu0 %v8065
        %8706 = vmatprep.subr.bf16.mxu0 %v8062
        %8707 = vmatpush1.bf16.msra.mxu0 %v8061
        %8708 = vmatprep.subr.bf16.mxu0 %v8058
        %8709 = vmatpush1.bf16.msra.mxu0 %v8057
        %8710 = vmatprep.subr.bf16.mxu0 %v8054
        %8711 = vmatpush1.bf16.msra.mxu0 %v8053
        %8712 = vmatprep.subr.bf16.mxu0 %v8050
        %8713 = vmatpush1.bf16.msra.mxu0 %v8049
        %8714 = vmatprep.subr.bf16.mxu0 %v8110
        %8715 = vmatpush2.bf16.msra.mxu0 %v8109
        %8716 = vmatprep.subr.bf16.mxu0 %v8106
        %8717 = vmatpush2.bf16.msra.mxu0 %v8105
        %8718 = vmatprep.subr.bf16.mxu0 %v8102
        %8719 = vmatpush2.bf16.msra.mxu0 %v8101
        %8720 = vmatprep.subr.bf16.mxu0 %v8098
        %8721 = vmatpush2.bf16.msra.mxu0 %v8097
        %8722 = vmatprep.subr.bf16.mxu0 %v8094
        %8723 = vmatpush2.bf16.msra.mxu0 %v8093
        %8724 = vmatprep.subr.bf16.mxu0 %v8090
        %8725 = vmatpush2.bf16.msra.mxu0 %v8089
        %8726 = vmatprep.subr.bf16.mxu0 %v8086
        %8727 = vmatpush2.bf16.msra.mxu0 %v8085
        %8728 = vmatprep.subr.bf16.mxu0 %v8082
        %8729 = vmatpush2.bf16.msra.mxu0 %v8081
        %8730 = vmatprep.mubr.bf16.mxu0 %v6891
        %8731 = vmatmul.mubr.bf16.gmra.mxu0 %v6890
        %v8732 = vpop.f32.mrf.mxu0
        %v8733 = vadd.f32 %v8692, %v8732
        %v8734 = vpop.f32.mrf.mxu0
        %v8735 = vadd.f32 %v8694, %v8734
        %v8736 = vpop.f32.mrf.mxu0
        %v8737 = vpop.f32.mrf.mxu0
        %8738 = vdwg.mxu0
        %8739 = vmatprep.subr.bf16.mxu0 %v8142
        %8740 = vmatpush1.bf16.msra.mxu0 %v8141
        %8741 = vmatprep.subr.bf16.mxu0 %v8138
        %8742 = vmatpush1.bf16.msra.mxu0 %v8137
        %8743 = vmatprep.subr.bf16.mxu0 %v8134
        %8744 = vmatpush1.bf16.msra.mxu0 %v8133
        %8745 = vmatprep.subr.bf16.mxu0 %v8130
        %8746 = vmatpush1.bf16.msra.mxu0 %v8129
        %8747 = vmatprep.subr.bf16.mxu0 %v8126
        %8748 = vmatpush1.bf16.msra.mxu0 %v8125
        %8749 = vmatprep.subr.bf16.mxu0 %v8122
        %8750 = vmatpush1.bf16.msra.mxu0 %v8121
        %8751 = vmatprep.subr.bf16.mxu0 %v8118
        %8752 = vmatpush1.bf16.msra.mxu0 %v8117
        %8753 = vmatprep.subr.bf16.mxu0 %v8114
        %8754 = vmatpush1.bf16.msra.mxu0 %v8113
        %8755 = vmatprep.subr.bf16.mxu0 %v8174
        %8756 = vmatpush2.bf16.msra.mxu0 %v8173
        %8757 = vmatprep.subr.bf16.mxu0 %v8170
        %8758 = vmatpush2.bf16.msra.mxu0 %v8169
        %8759 = vmatprep.subr.bf16.mxu0 %v8166
        %8760 = vmatpush2.bf16.msra.mxu0 %v8165
        %8761 = vmatprep.subr.bf16.mxu0 %v8162
        %8762 = vmatpush2.bf16.msra.mxu0 %v8161
        %8763 = vmatprep.subr.bf16.mxu0 %v8158
        %8764 = vmatpush2.bf16.msra.mxu0 %v8157
        %8765 = vmatprep.subr.bf16.mxu0 %v8154
        %8766 = vmatpush2.bf16.msra.mxu0 %v8153
        %8767 = vmatprep.subr.bf16.mxu0 %v8150
        %8768 = vmatpush2.bf16.msra.mxu0 %v8149
        %8769 = vmatprep.subr.bf16.mxu0 %v8146
        %8770 = vmatpush2.bf16.msra.mxu0 %v8145
        %8771 = vmatprep.mubr.bf16.mxu0 %v6893
        %8772 = vmatmul.mubr.bf16.gmra.mxu0 %v6892
        %v8773 = vpop.f32.mrf.mxu0
        %v8774 = vadd.f32 %v8733, %v8773
        %v8775 = vpop.f32.mrf.mxu0
        %v8776 = vadd.f32 %v8735, %v8775
        %v8777 = vpop.f32.mrf.mxu0
        %v8778 = vpop.f32.mrf.mxu0
        %8779 = vdwg.mxu0
        %v8780 = vmax.f32 %v8610, 0.0
        %v8781 = vmax.f32 %v8612, 0.0
        %v8782 = vmax.f32 %v8774, 0.0
        %v8783 = vmax.f32 %v8776, 0.0
        %v8784 = vpack.c.bf16 %v8780, %v8780
        %v8785 = vpack.c.bf16 %v8781, %v8781
        %v8786 = vpack.c.bf16 %v8782, %v8782
        %v8787 = vpack.c.bf16 %v8783, %v8783
        %v8788 = vld [vmem:[%s13] sm:$0xf]
        %v8789 = vld [vmem:[%s13 + $0x4] sm:$0xf]
        %v8790 = vld [vmem:[%s13 + $0x8] sm:$0xf]
        %v8791 = vld [vmem:[%s13 + $0xc] sm:$0xf]
        %v8792 = vld [vmem:[%s13 + $0x10] sm:$0xf]
        %v8793 = vld [vmem:[%s13 + $0x14] sm:$0xf]
        %v8794 = vld [vmem:[%s13 + $0x18] sm:$0xf]
        %v8795 = vld [vmem:[%s13 + $0x1c] sm:$0xf]
        %v8796 = vld [vmem:[%s13 + $0x20] sm:$0xf]
        %v8797 = vld [vmem:[%s13 + $0x24] sm:$0xf]
        %v8798 = vld [vmem:[%s13 + $0x28] sm:$0xf]
        %v8799 = vld [vmem:[%s13 + $0x2c] sm:$0xf]
        %v8800 = vld [vmem:[%s13 + $0x30] sm:$0xf]
        %v8801 = vld [vmem:[%s13 + $0x34] sm:$0xf]
        %v8802 = vld [vmem:[%s13 + $0x38] sm:$0xf]
        %v8803 = vld [vmem:[%s13 + $0x3c] sm:$0xf]
        %v8804 = vld [vmem:[%s13 + $0x40] sm:$0xf]
        %v8805 = vld [vmem:[%s13 + $0x44] sm:$0xf]
        %v8806 = vld [vmem:[%s13 + $0x48] sm:$0xf]
        %v8807 = vld [vmem:[%s13 + $0x4c] sm:$0xf]
        %v8808 = vld [vmem:[%s13 + $0x50] sm:$0xf]
        %v8809 = vld [vmem:[%s13 + $0x54] sm:$0xf]
        %v8810 = vld [vmem:[%s13 + $0x58] sm:$0xf]
        %v8811 = vld [vmem:[%s13 + $0x5c] sm:$0xf]
        %v8812 = vld [vmem:[%s13 + $0x60] sm:$0xf]
        %v8813 = vld [vmem:[%s13 + $0x64] sm:$0xf]
        %v8814 = vld [vmem:[%s13 + $0x68] sm:$0xf]
        %v8815 = vld [vmem:[%s13 + $0x6c] sm:$0xf]
        %v8816 = vld [vmem:[%s13 + $0x70] sm:$0xf]
        %v8817 = vld [vmem:[%s13 + $0x74] sm:$0xf]
        %v8818 = vld [vmem:[%s13 + $0x78] sm:$0xf]
        %v8819 = vld [vmem:[%s13 + $0x7c] sm:$0xf]
        %v8820 = vld [vmem:[%s13 + $0x80] sm:$0xf]
        %v8821 = vld [vmem:[%s13 + $0x84] sm:$0xf]
        %v8822 = vld [vmem:[%s13 + $0x88] sm:$0xf]
        %v8823 = vld [vmem:[%s13 + $0x8c] sm:$0xf]
        %v8824 = vld [vmem:[%s13 + $0x90] sm:$0xf]
        %v8825 = vld [vmem:[%s13 + $0x94] sm:$0xf]
        %v8826 = vld [vmem:[%s13 + $0x98] sm:$0xf]
        %v8827 = vld [vmem:[%s13 + $0x9c] sm:$0xf]
        %v8828 = vld [vmem:[%s13 + $0xa0] sm:$0xf]
        %v8829 = vld [vmem:[%s13 + $0xa4] sm:$0xf]
        %v8830 = vld [vmem:[%s13 + $0xa8] sm:$0xf]
        %v8831 = vld [vmem:[%s13 + $0xac] sm:$0xf]
        %v8832 = vld [vmem:[%s13 + $0xb0] sm:$0xf]
        %v8833 = vld [vmem:[%s13 + $0xb4] sm:$0xf]
        %v8834 = vld [vmem:[%s13 + $0xb8] sm:$0xf]
        %v8835 = vld [vmem:[%s13 + $0xbc] sm:$0xf]
        %v8836 = vld [vmem:[%s13 + $0xc0] sm:$0xf]
        %v8837 = vld [vmem:[%s13 + $0xc4] sm:$0xf]
        %v8838 = vld [vmem:[%s13 + $0xc8] sm:$0xf]
        %v8839 = vld [vmem:[%s13 + $0xcc] sm:$0xf]
        %v8840 = vld [vmem:[%s13 + $0xd0] sm:$0xf]
        %v8841 = vld [vmem:[%s13 + $0xd4] sm:$0xf]
        %v8842 = vld [vmem:[%s13 + $0xd8] sm:$0xf]
        %v8843 = vld [vmem:[%s13 + $0xdc] sm:$0xf]
        %v8844 = vld [vmem:[%s13 + $0xe0] sm:$0xf]
        %v8845 = vld [vmem:[%s13 + $0xe4] sm:$0xf]
        %v8846 = vld [vmem:[%s13 + $0xe8] sm:$0xf]
        %v8847 = vld [vmem:[%s13 + $0xec] sm:$0xf]
        %v8848 = vld [vmem:[%s13 + $0xf0] sm:$0xf]
        %v8849 = vld [vmem:[%s13 + $0xf4] sm:$0xf]
        %v8850 = vld [vmem:[%s13 + $0xf8] sm:$0xf]
        %v8851 = vld [vmem:[%s13 + $0xfc] sm:$0xf]
        %v8852 = vld [vmem:[#allocation20] sm:$0x1]
        %v8917 = vunpack.c.l.b16 %v8788
        %v8918 = vunpack.c.l.b16 %v8789
        %v8919 = vunpack.c.l.b16 %v8790
        %v8920 = vunpack.c.l.b16 %v8791
        %v8921 = vunpack.c.l.b16 %v8792
        %v8922 = vunpack.c.l.b16 %v8793
        %v8923 = vunpack.c.l.b16 %v8794
        %v8924 = vunpack.c.l.b16 %v8795
        %v8925 = vunpack.c.l.b16 %v8796
        %v8926 = vunpack.c.l.b16 %v8797
        %v8927 = vunpack.c.l.b16 %v8798
        %v8928 = vunpack.c.l.b16 %v8799
        %v8929 = vunpack.c.l.b16 %v8800
        %v8930 = vunpack.c.l.b16 %v8801
        %v8931 = vunpack.c.l.b16 %v8802
        %v8932 = vunpack.c.l.b16 %v8803
        %v8933 = vunpack.c.l.b16 %v8804
        %v8934 = vunpack.c.l.b16 %v8805
        %v8935 = vunpack.c.l.b16 %v8806
        %v8936 = vunpack.c.l.b16 %v8807
        %v8937 = vunpack.c.l.b16 %v8808
        %v8938 = vunpack.c.l.b16 %v8809
        %v8939 = vunpack.c.l.b16 %v8810
        %v8940 = vunpack.c.l.b16 %v8811
        %v8941 = vunpack.c.l.b16 %v8812
        %v8942 = vunpack.c.l.b16 %v8813
        %v8943 = vunpack.c.l.b16 %v8814
        %v8944 = vunpack.c.l.b16 %v8815
        %v8945 = vunpack.c.l.b16 %v8816
        %v8946 = vunpack.c.l.b16 %v8817
        %v8947 = vunpack.c.l.b16 %v8818
        %v8948 = vunpack.c.l.b16 %v8819
        %v8949 = vunpack.c.l.b16 %v8820
        %v8950 = vunpack.c.l.b16 %v8821
        %v8951 = vunpack.c.l.b16 %v8822
        %v8952 = vunpack.c.l.b16 %v8823
        %v8953 = vunpack.c.l.b16 %v8824
        %v8954 = vunpack.c.l.b16 %v8825
        %v8955 = vunpack.c.l.b16 %v8826
        %v8956 = vunpack.c.l.b16 %v8827
        %v8957 = vunpack.c.l.b16 %v8828
        %v8958 = vunpack.c.l.b16 %v8829
        %v8959 = vunpack.c.l.b16 %v8830
        %v8960 = vunpack.c.l.b16 %v8831
        %v8961 = vunpack.c.l.b16 %v8832
        %v8962 = vunpack.c.l.b16 %v8833
        %v8963 = vunpack.c.l.b16 %v8834
        %v8964 = vunpack.c.l.b16 %v8835
        %v8965 = vunpack.c.l.b16 %v8836
        %v8966 = vunpack.c.l.b16 %v8837
        %v8967 = vunpack.c.l.b16 %v8838
        %v8968 = vunpack.c.l.b16 %v8839
        %v8969 = vunpack.c.l.b16 %v8840
        %v8970 = vunpack.c.l.b16 %v8841
        %v8971 = vunpack.c.l.b16 %v8842
        %v8972 = vunpack.c.l.b16 %v8843
        %v8973 = vunpack.c.l.b16 %v8844
        %v8974 = vunpack.c.l.b16 %v8845
        %v8975 = vunpack.c.l.b16 %v8846
        %v8976 = vunpack.c.l.b16 %v8847
        %v8977 = vunpack.c.l.b16 %v8848
        %v8978 = vunpack.c.l.b16 %v8849
        %v8979 = vunpack.c.l.b16 %v8850
        %v8980 = vunpack.c.l.b16 %v8851
        %v8981 = vpack.c.b16 %v8918, %v8917
        %v8982 = vpack.c.b16 %v8920, %v8919
        %v8983 = vpack.c.b16 %v8922, %v8921
        %v8984 = vpack.c.b16 %v8924, %v8923
        %v8985 = vpack.c.b16 %v8926, %v8925
        %v8986 = vpack.c.b16 %v8928, %v8927
        %v8987 = vpack.c.b16 %v8930, %v8929
        %v8988 = vpack.c.b16 %v8932, %v8931
        %v8989 = vpack.c.b16 %v8934, %v8933
        %v8990 = vpack.c.b16 %v8936, %v8935
        %v8991 = vpack.c.b16 %v8938, %v8937
        %v8992 = vpack.c.b16 %v8940, %v8939
        %v8993 = vpack.c.b16 %v8942, %v8941
        %v8994 = vpack.c.b16 %v8944, %v8943
        %v8995 = vpack.c.b16 %v8946, %v8945
        %v8996 = vpack.c.b16 %v8948, %v8947
        %v8997 = vpack.c.b16 %v8950, %v8949
        %v8998 = vpack.c.b16 %v8952, %v8951
        %v8999 = vpack.c.b16 %v8954, %v8953
        %v9000 = vpack.c.b16 %v8956, %v8955
        %v9001 = vpack.c.b16 %v8958, %v8957
        %v9002 = vpack.c.b16 %v8960, %v8959
        %v9003 = vpack.c.b16 %v8962, %v8961
        %v9004 = vpack.c.b16 %v8964, %v8963
        %v9005 = vpack.c.b16 %v8966, %v8965
        %v9006 = vpack.c.b16 %v8968, %v8967
        %v9007 = vpack.c.b16 %v8970, %v8969
        %v9008 = vpack.c.b16 %v8972, %v8971
        %v9009 = vpack.c.b16 %v8974, %v8973
        %v9010 = vpack.c.b16 %v8976, %v8975
        %v9011 = vpack.c.b16 %v8978, %v8977
        %v9012 = vpack.c.b16 %v8980, %v8979
        %9045 = vmatprep.subr.bf16.mxu0 0
        %9046 = vmatpush1.bf16.msra.mxu0 %v8988
        %9047 = vmatprep.subr.bf16.mxu0 0
        %9048 = vmatpush1.bf16.msra.mxu0 %v8987
        %9049 = vmatprep.subr.bf16.mxu0 0
        %9050 = vmatpush1.bf16.msra.mxu0 %v8986
        %9051 = vmatprep.subr.bf16.mxu0 0
        %9052 = vmatpush1.bf16.msra.mxu0 %v8985
        %9053 = vmatprep.subr.bf16.mxu0 0
        %9054 = vmatpush1.bf16.msra.mxu0 %v8984
        %9055 = vmatprep.subr.bf16.mxu0 0
        %9056 = vmatpush1.bf16.msra.mxu0 %v8983
        %9057 = vmatprep.subr.bf16.mxu0 0
        %9058 = vmatpush1.bf16.msra.mxu0 %v8982
        %9059 = vmatprep.subr.bf16.mxu0 0
        %9060 = vmatpush1.bf16.msra.mxu0 %v8981
        %9061 = vmatprep.subr.bf16.mxu0 0
        %9062 = vmatpush2.bf16.msra.mxu0 %v8996
        %9063 = vmatprep.subr.bf16.mxu0 0
        %9064 = vmatpush2.bf16.msra.mxu0 %v8995
        %9065 = vmatprep.subr.bf16.mxu0 0
        %9066 = vmatpush2.bf16.msra.mxu0 %v8994
        %9067 = vmatprep.subr.bf16.mxu0 0
        %9068 = vmatpush2.bf16.msra.mxu0 %v8993
        %9069 = vmatprep.subr.bf16.mxu0 0
        %9070 = vmatpush2.bf16.msra.mxu0 %v8992
        %9071 = vmatprep.subr.bf16.mxu0 0
        %9072 = vmatpush2.bf16.msra.mxu0 %v8991
        %9073 = vmatprep.subr.bf16.mxu0 0
        %9074 = vmatpush2.bf16.msra.mxu0 %v8990
        %9075 = vmatprep.subr.bf16.mxu0 0
        %9076 = vmatpush2.bf16.msra.mxu0 %v8989
        %9077 = vmatprep.mubr.bf16.mxu0 %v8785
        %9078 = vmatmul.mubr.bf16.gmra.mxu0 %v8784
        %v9079 = vpop.f32.mrf.mxu0
        %v9080 = vadd.f32 %v8852, %v9079
        %v9081 = vpop.f32.mrf.mxu0
        %v9082 = vpop.f32.mrf.mxu0
        %v9083 = vpop.f32.mrf.mxu0
        %9084 = vdwg.mxu0
        %9085 = vmatprep.subr.bf16.mxu0 0
        %9086 = vmatpush1.bf16.msra.mxu0 %v9004
        %9087 = vmatprep.subr.bf16.mxu0 0
        %9088 = vmatpush1.bf16.msra.mxu0 %v9003
        %9089 = vmatprep.subr.bf16.mxu0 0
        %9090 = vmatpush1.bf16.msra.mxu0 %v9002
        %9091 = vmatprep.subr.bf16.mxu0 0
        %9092 = vmatpush1.bf16.msra.mxu0 %v9001
        %9093 = vmatprep.subr.bf16.mxu0 0
        %9094 = vmatpush1.bf16.msra.mxu0 %v9000
        %9095 = vmatprep.subr.bf16.mxu0 0
        %9096 = vmatpush1.bf16.msra.mxu0 %v8999
        %9097 = vmatprep.subr.bf16.mxu0 0
        %9098 = vmatpush1.bf16.msra.mxu0 %v8998
        %9099 = vmatprep.subr.bf16.mxu0 0
        %9100 = vmatpush1.bf16.msra.mxu0 %v8997
        %9101 = vmatprep.subr.bf16.mxu0 0
        %9102 = vmatpush2.bf16.msra.mxu0 %v9012
        %9103 = vmatprep.subr.bf16.mxu0 0
        %9104 = vmatpush2.bf16.msra.mxu0 %v9011
        %9105 = vmatprep.subr.bf16.mxu0 0
        %9106 = vmatpush2.bf16.msra.mxu0 %v9010
        %9107 = vmatprep.subr.bf16.mxu0 0
        %9108 = vmatpush2.bf16.msra.mxu0 %v9009
        %9109 = vmatprep.subr.bf16.mxu0 0
        %9110 = vmatpush2.bf16.msra.mxu0 %v9008
        %9111 = vmatprep.subr.bf16.mxu0 0
        %9112 = vmatpush2.bf16.msra.mxu0 %v9007
        %9113 = vmatprep.subr.bf16.mxu0 0
        %9114 = vmatpush2.bf16.msra.mxu0 %v9006
        %9115 = vmatprep.subr.bf16.mxu0 0
        %9116 = vmatpush2.bf16.msra.mxu0 %v9005
        %9117 = vmatprep.mubr.bf16.mxu0 %v8787
        %9118 = vmatmul.mubr.bf16.gmra.mxu0 %v8786
        %v9119 = vpop.f32.mrf.mxu0
        %v9120 = vadd.f32 %v9080, %v9119
        %v9121 = vpop.f32.mrf.mxu0
        %v9122 = vpop.f32.mrf.mxu0
        %v9123 = vpop.f32.mrf.mxu0
        %9124 = vdwg.mxu0
        %v9125 = vxor.u32 %v9120, 2147483648
        %v9126 = vmul.f32 %v9125, 1.442695
        %v9127 = vpow.pop %v9126
        %v9128 = vadd.f32 %v9127, 1.0
        %v9129 = vrcp.pop %v9128
        %v9130 = vmul.f32 1.0, %v9129
        %vm9131 = vcmask 196608
        %9132 = vst.msk [vmem:[%s645] sm:$0x1] %vm9131, %v9130
        %s9133 = sand.u32 %s368, 1
        %s9134 = scalar_lea.sflag [#allocation5], %s9133
        %s9135 = sand.u32 %s368, 1
        %s9136 = scalar_lea.vmem [#allocation21], %s9135
        // Predicated region
        $region125: #{_lambda_.1} parent=79 // pred_check
          %p9137 = pneg %p378
        $region126: #{_lambda_.1} parent=79 // pred_check_branch
          %9139 = sbr.rel (%p9137) target = $region128
        $region127: #{_lambda_.1} parent=79 // pred_region
          %s9141 = ssub.s32 16, 16
          %9142 = vsyncadd %s9134, %s9141
          %s9143 = smul.addr %s35, 16
          %s9144 = scalar_lea.hbm %s15, %s9143
          %s9146 = sshll.u32 %s9136, 4
          %s9147 = int_to_ptr.vmem [resolvable:$true] %s9146
          %9149 = dma.vmem_to_hbm [thread:$0]  %s9147, 16, %s9144, %s9134
        $region128: #{_lambda_.1} parent=79 // pred_fallthru
          _
      $region80: #{_lambda_.1} parent=5 // pred_fallthru
        _
      %p9150 = scmp.le.s32.totalorder 2, %s30
      // Predicated region
      $region129: #{_lambda_.1} parent=5 // pred_check
        %p9151 = pneg %p9150
      $region130: #{_lambda_.1} parent=5 // pred_check_branch
        %9153 = sbr.rel (%p9151) target = $region132
      $region131: #{_lambda_.1} parent=5 // pred_region
        %s9154 = ssub.s32 %s30, 2
        // Predicated region
        $region133: #{_lambda_.1} parent=131 // pred_check
          %p9155 = pneg %p384
        $region134: #{_lambda_.1} parent=131 // pred_check_branch
          %9157 = sbr.rel (%p9155) target = $region136
        $region135: #{_lambda_.1} parent=131 // pred_region
          %s9158 = sand.u32 %s369, 1
          %s9159 = scalar_lea.sflag [#allocation5], %s9158
          %s9160 = sand.u32 %s369, 1
          %s9161 = scalar_lea.vmem [#allocation21], %s9160
          %9162 = dma.done %s9159, 16
        $region136: #{_lambda_.1} parent=131 // pred_fallthru
          _
      $region132: #{_lambda_.1} parent=5 // pred_fallthru
        _
    $region6: #{_lambda_.1} parent=1 // loop_footer
      %s34 = sadd.s32 1, %s30
    $region7: #{_lambda_.1} parent=1 // loop_footer_branch
      %29 = sbr.rel target = $region3
    $region8: #{_lambda_.1} parent=1 // loop_exit
      _
    %9163 = vsyncpa [#allocation4], 1
    %s9164 = scalar_lea.sflag [#allocation4], 1
    %9165 = vsyncpa %s9164, 1
    %9166 = vsyncpa [#allocation7], 1
    %9167 = vsyncpa [#allocation10], 1
    %9168 = vsyncpa [#allocation13], 1
    %9169 = vsyncpa [#allocation16], 1
    %9170 = vsyncpa [#allocation19], 1
    %9171 = vsyncpa [#allocation5], 1
    %s9172 = scalar_lea.sflag [#allocation5], 1
    %9173 = vsyncpa %s9172, 1

</llo_original>
